<compile_context>
chip_gen: v5e
topology: v5e:2x2
jax: 0.10.0
libtpu: 0.0.40
codegen_flags: <defaults>
</compile_context>

<pallas_src>
import jax
import jax.numpy as jnp
from jax.experimental import pallas as pl
from jax.experimental.pallas import tpu as pltpu


# -----------------------------------------------------------------------------
# Fused Pallas kernel: whole network for one batch block of NB samples.
# -----------------------------------------------------------------------------
def _cnn_fused_kernel(p1_ref, w1_ref, b1_ref, w2_ref, b2_ref,
                      wf1_ref, bf1_ref, wf2_ref, bf2_ref, o_ref):
    # p1_ref : (4, NB*192, 32) bf16  conv1 im2col patches, corner-block ordered
    #                                (f=dy*2+dx, rows = b*192 + h'*16 + w', K=25->32)
    # w1_ref : (32, 32)   bf16       conv1 weight, K padded 25->32
    # b1_ref : (1, 32)    f32
    # w2_ref : (25, 32, 64) bf16     conv2 weight, one (Cin,Cout) slab per 5x5 tap
    # b2_ref : (1, 64)    f32
    # wf1_ref: (1024, 512) bf16      fc1 weight, rows in (h',w',c) = HWC order
    # bf1_ref: (1, 512)   f32
    # wf2_ref: (512, 128) bf16       fc2 weight, Cout padded 10->128
    # bf2_ref: (1, 128)   f32
    # o_ref  : (NB, 128)  f32        lane-dense logits (cols 10..127 are zero)
    f32 = jnp.float32
    bf16 = jnp.bfloat16
    NB = o_ref.shape[0]

    # ---- conv1: 4 corner matmuls; maxpool1 == max over the 4 corners -------------
    w1 = w1_ref[...]
    m = jnp.dot(p1_ref[0], w1, preferred_element_type=f32)
    for f in range(1, 4):
        m = jnp.maximum(m, jnp.dot(p1_ref[f], w1, preferred_element_type=f32))
    a1 = jnp.maximum(m + b1_ref[...], 0.0)          # (NB*192, 32) pooled+ReLU'd map
    # rows = b*192 + h'*16 + w'  (w' = 0..11 valid, 12..15 are zero-padded dummies)
    x1 = a1.reshape(NB, 12, 16, 32)                 # pooled conv1 map, in VMEM only

    # ---- conv2: in-kernel im2col as 25 shifted-window matmuls --------------------
    acc = jnp.zeros((NB * 64, 64), f32)             # rows = b*64 + oh*8 + ow
    for di in range(5):
        for dj in range(5):
            win = x1[:, di:di + 8, dj:dj + 8, :]    # (NB, 8, 8, 32)
            lhs = win.reshape(NB * 64, 32).astype(bf16)
            acc = acc + jnp.dot(lhs, w2_ref[di * 5 + dj],
                                preferred_element_type=f32)
    a2 = jnp.maximum(acc + b2_ref[...], 0.0)        # (NB*64, 64)
    x2 = a2.reshape(NB, 8, 8, 64)

    # ---- maxpool2 + flatten + fc1, fused as 16 chunked matmuls -------------------
    h = jnp.zeros((NB, 512), f32)
    for hp in range(4):
        for wp in range(4):
            m4 = jnp.maximum(
                jnp.maximum(x2[:, 2 * hp, 2 * wp, :], x2[:, 2 * hp, 2 * wp + 1, :]),
                jnp.maximum(x2[:, 2 * hp + 1, 2 * wp, :], x2[:, 2 * hp + 1, 2 * wp + 1, :]))
            k0 = (hp * 4 + wp) * 64
            h = h + jnp.dot(m4.astype(bf16), wf1_ref[k0:k0 + 64, :],
                            preferred_element_type=f32)
    h = jnp.maximum(h + bf1_ref[...], 0.0)          # (NB, 512)

    # ---- fc2 (output padded to 128 lanes -> unmasked, lane-dense store) ----------
    out = jnp.dot(h.astype(bf16), wf2_ref[...], preferred_element_type=f32)
    o_ref[...] = (out + bf2_ref[...]).astype(o_ref.dtype)


# -----------------------------------------------------------------------------
# Plain-JAX glue (layout only): conv1 im2col patches in corner-block order.
# -----------------------------------------------------------------------------
def _conv1_corner_patches(x_hw):
    # x_hw: (N, 28, 28) f32  ->  (4, N*192, 32)
    # corner f = dy*2 + dx ; row = b*192 + h'*16 + w' ; K = (di*5 + dj), padded to 32.
    N = x_hw.shape[0]
    taps = []
    for di in range(5):
        for dj in range(5):
            taps.append(x_hw[:, di:di + 24, dj:dj + 24])
    p = jnp.stack(taps, axis=-1)                                  # (N, 24, 24, 25)
    p = jnp.pad(p, ((0, 0), (0, 0), (0, 0), (0, 7)))              # K 25 -> 32
    corners = []
    for dy in (0, 1):
        for dx in (0, 1):
            c = p[:, dy::2, dx::2, :]                             # (N, 12, 12, 32)
            c = jnp.pad(c, ((0, 0), (0, 0), (0, 4), (0, 0)))      # W' 12 -> 16 (dummy)
            corners.append(c.reshape(N, 192, 32))
    return jnp.stack(corners, axis=0).reshape(4, N * 192, 32)


def _prep_params(p):
    bf16 = jnp.bfloat16
    w1 = jnp.pad(p["w1"].reshape(25, 32), ((0, 7), (0, 0))).astype(bf16)   # (32, 32)
    b1 = p["b1"].reshape(1, 32).astype(jnp.float32)
    w2 = p["w2"].reshape(25, 32, 64).astype(bf16)                          # (25,32,64)
    b2 = p["b2"].reshape(1, 64).astype(jnp.float32)
    wf1 = p["wf1"].astype(bf16)                                            # (1024,512)
    bf1 = p["bf1"].reshape(1, 512).astype(jnp.float32)
    wf2 = jnp.pad(p["wf2"], ((0, 0), (0, 118))).astype(bf16)               # (512,128)
    bf2 = jnp.pad(p["bf2"], (0, 118)).reshape(1, 128).astype(jnp.float32)
    return w1, b1, w2, b2, wf1, bf1, wf2, bf2


def cnn_forward(x_nchw, p):
    # x_nchw: (N, 1, 28, 28) f32 -> logits (N, 10) f32
    N = x_nchw.shape[0]
    NB = 8 if N % 8 == 0 else N          # batch block; satisfies (8,128) block rules
    grid = (N // NB,)

    patches = _conv1_corner_patches(x_nchw[:, 0, :, :]).astype(jnp.bfloat16)
    w1, b1, w2, b2, wf1, bf1, wf2, bf2 = _prep_params(p)

    out = pl.pallas_call(
        _cnn_fused_kernel,
        out_shape=jax.ShapeDtypeStruct((N, 128), jnp.float32),
        grid=grid,
        in_specs=[
            pl.BlockSpec((4, NB * 192, 32), lambda g: (0, g, 0)),   # patches per block
            pl.BlockSpec((32, 32), lambda g: (0, 0)),               # weights: constant
            pl.BlockSpec((1, 32), lambda g: (0, 0)),                #  index_maps keep
            pl.BlockSpec((25, 32, 64), lambda g: (0, 0, 0)),        #  them VMEM-resident
            pl.BlockSpec((1, 64), lambda g: (0, 0)),
            pl.BlockSpec((1024, 512), lambda g: (0, 0)),
            pl.BlockSpec((1, 512), lambda g: (0, 0)),
            pl.BlockSpec((512, 128), lambda g: (0, 0)),
            pl.BlockSpec((1, 128), lambda g: (0, 0)),
        ],
        out_specs=pl.BlockSpec((NB, 128), lambda g: (g, 0)),
        compiler_params=pltpu.CompilerParams(
            dimension_semantics=("parallel",)),
    )(patches, w1, b1, w2, b2, wf1, bf1, wf2, bf2)
    return out[:, :10]


# -----------------------------------------------------------------------------
# Pure-JAX reference (correctness check only; f32 throughout).
# -----------------------------------------------------------------------------
def cnn_reference(x_nchw, p):
    x = jnp.transpose(x_nchw, (0, 2, 3, 1))

    def conv(x, w, b):
        y = jax.lax.conv_general_dilated(
            x, w, window_strides=(1, 1), padding="VALID",
            dimension_numbers=("NHWC", "HWIO", "NHWC"))
        return jnp.maximum(y + b, 0.0)

    def pool(x):
        return jax.lax.reduce_window(x, -jnp.inf, jax.lax.max,
                                     (1, 2, 2, 1), (1, 2, 2, 1), "VALID")

    h = pool(conv(x, p["w1"], p["b1"]))
    h = pool(conv(h, p["w2"], p["b2"]))
    h = h.reshape(h.shape[0], -1)            # NHWC flatten (wf1 rows are HWC-ordered)
    h = jnp.maximum(h @ p["wf1"] + p["bf1"], 0.0)
    return h @ p["wf2"] + p["bf2"]


# -----------------------------------------------------------------------------
def init_params(key):
    ks = jax.random.split(key, 8)
    s = 0.05
    return {
        # conv1: Conv2d(1, 32, k=5)  -> HWIO
        "w1": s * jax.random.normal(ks[0], (5, 5, 1, 32), jnp.float32),
        "b1": s * jax.random.normal(ks[1], (32,), jnp.float32),
        # conv2: Conv2d(32, 64, k=5) -> HWIO
        "w2": s * jax.random.normal(ks[2], (5, 5, 32, 64), jnp.float32),
        "b2": s * jax.random.normal(ks[3], (64,), jnp.float32),
        # fc1: Linear(1024, 512) stored [in, out] with input rows in (H, W, C) order.
        # (PyTorch fc1.weight would convert via transpose + CHW->HWC row permutation.)
        "wf1": s * jax.random.normal(ks[4], (1024, 512), jnp.float32),
        "bf1": s * jax.random.normal(ks[5], (512,), jnp.float32),
        # fc2: Linear(512, 10) stored [in, out]
        "wf2": s * jax.random.normal(ks[6], (512, 10), jnp.float32),
        "bf2": s * jax.random.normal(ks[7], (10,), jnp.float32),
    }


if __name__ == "__main__":
    key = jax.random.PRNGKey(0)
    k_x, k_p = jax.random.split(key)
    params = init_params(k_p)
    # FashionMNIST-shaped input (28x28 is required by fc1's 1024 input dim).
    x = jax.random.normal(k_x, (2, 1, 28, 28), jnp.float32)

    out = jax.block_until_ready(jax.jit(cnn_forward)(x, params))
    assert out.shape == (2, 10), out.shape

    ref = jax.block_until_ready(jax.jit(cnn_reference)(x, params))
    max_err = float(jnp.max(jnp.abs(out - ref)))
    # bf16 matmul operands (f32 accumulation) account for the tolerance.
    assert max_err < 1e-1, f"mismatch vs reference: {max_err}"

    print("KERNEL_OK")
</pallas_src>

<mosaic_0001>
module attributes {stable_mosaic.version = 11 : i64} {
  func.func @_cnn_fused_kernel(%arg0: i32, %arg1: memref<4x384x32xbf16, #tpu.memory_space<vmem>>, %arg2: memref<32x32xbf16, #tpu.memory_space<vmem>>, %arg3: memref<1x32xf32, #tpu.memory_space<vmem>>, %arg4: memref<25x32x64xbf16, #tpu.memory_space<vmem>>, %arg5: memref<1x64xf32, #tpu.memory_space<vmem>>, %arg6: memref<1024x512xbf16, #tpu.memory_space<vmem>>, %arg7: memref<1x512xf32, #tpu.memory_space<vmem>>, %arg8: memref<512x128xbf16, #tpu.memory_space<vmem>>, %arg9: memref<1x128xf32, #tpu.memory_space<vmem>>, %arg10: memref<2x128xf32, #tpu.memory_space<vmem>>) attributes {dimension_semantics = [#tpu.dimension_semantics<parallel>], iteration_bounds = array<i64: 1>, scalar_prefetch = 0 : i64, scratch_operands = 0 : i64, tpu.core_type = #tpu.core_type<tc>, window_params = [{transform_indices = @transform_0, window_bounds = array<i64: 4, 384, 32>}, {pipeline_mode = #tpu.pipeline_mode<synchronous>, transform_indices = @transform_1, window_bounds = array<i64: 32, 32>}, {pipeline_mode = #tpu.pipeline_mode<synchronous>, transform_indices = @transform_2, window_bounds = array<i64: 1, 32>}, {pipeline_mode = #tpu.pipeline_mode<synchronous>, transform_indices = @transform_3, window_bounds = array<i64: 25, 32, 64>}, {pipeline_mode = #tpu.pipeline_mode<synchronous>, transform_indices = @transform_4, window_bounds = array<i64: 1, 64>}, {pipeline_mode = #tpu.pipeline_mode<synchronous>, transform_indices = @transform_5, window_bounds = array<i64: 1024, 512>}, {pipeline_mode = #tpu.pipeline_mode<synchronous>, transform_indices = @transform_6, window_bounds = array<i64: 1, 512>}, {pipeline_mode = #tpu.pipeline_mode<synchronous>, transform_indices = @transform_7, window_bounds = array<i64: 512, 128>}, {pipeline_mode = #tpu.pipeline_mode<synchronous>, transform_indices = @transform_8, window_bounds = array<i64: 1, 128>}, {transform_indices = @transform_9, window_bounds = array<i64: 2, 128>}]} {
    %c0 = arith.constant 0 : index
    %c0_0 = arith.constant 0 : index
    %0 = vector.load %arg2[%c0, %c0_0] : memref<32x32xbf16, #tpu.memory_space<vmem>>, vector<32x32xbf16>
    %c0_1 = arith.constant 0 : index
    %c0_2 = arith.constant 0 : index
    %c0_3 = arith.constant 0 : index
    %1 = vector.load %arg1[%c0_1, %c0_2, %c0_3] : memref<4x384x32xbf16, #tpu.memory_space<vmem>>, vector<1x384x32xbf16>
    %2 = vector.shape_cast %1 : vector<1x384x32xbf16> to vector<384x32xbf16>
    %cst = arith.constant dense<0.000000e+00> : vector<384x32xf32>
    %3 = tpu.matmul %2, %0, %cst {dimension_numbers = #tpu.dot_dimension_numbers<[1], [0], [0], [1], [0, 0, 1, 1], [], []>} : vector<384x32xbf16>, vector<32x32xbf16>, vector<384x32xf32> -> vector<384x32xf32>
    %c1 = arith.constant 1 : index
    %c0_4 = arith.constant 0 : index
    %c0_5 = arith.constant 0 : index
    %4 = vector.load %arg1[%c1, %c0_4, %c0_5] : memref<4x384x32xbf16, #tpu.memory_space<vmem>>, vector<1x384x32xbf16>
    %5 = vector.shape_cast %4 : vector<1x384x32xbf16> to vector<384x32xbf16>
    %cst_6 = arith.constant dense<0.000000e+00> : vector<384x32xf32>
    %6 = tpu.matmul %5, %0, %cst_6 {dimension_numbers = #tpu.dot_dimension_numbers<[1], [0], [0], [1], [0, 0, 1, 1], [], []>} : vector<384x32xbf16>, vector<32x32xbf16>, vector<384x32xf32> -> vector<384x32xf32>
    %7 = arith.maximumf %3, %6 : vector<384x32xf32>
    %c2 = arith.constant 2 : index
    %c0_7 = arith.constant 0 : index
    %c0_8 = arith.constant 0 : index
    %8 = vector.load %arg1[%c2, %c0_7, %c0_8] : memref<4x384x32xbf16, #tpu.memory_space<vmem>>, vector<1x384x32xbf16>
    %9 = vector.shape_cast %8 : vector<1x384x32xbf16> to vector<384x32xbf16>
    %cst_9 = arith.constant dense<0.000000e+00> : vector<384x32xf32>
    %10 = tpu.matmul %9, %0, %cst_9 {dimension_numbers = #tpu.dot_dimension_numbers<[1], [0], [0], [1], [0, 0, 1, 1], [], []>} : vector<384x32xbf16>, vector<32x32xbf16>, vector<384x32xf32> -> vector<384x32xf32>
    %11 = arith.maximumf %7, %10 : vector<384x32xf32>
    %c3 = arith.constant 3 : index
    %c0_10 = arith.constant 0 : index
    %c0_11 = arith.constant 0 : index
    %12 = vector.load %arg1[%c3, %c0_10, %c0_11] : memref<4x384x32xbf16, #tpu.memory_space<vmem>>, vector<1x384x32xbf16>
    %13 = vector.shape_cast %12 : vector<1x384x32xbf16> to vector<384x32xbf16>
    %cst_12 = arith.constant dense<0.000000e+00> : vector<384x32xf32>
    %14 = tpu.matmul %13, %0, %cst_12 {dimension_numbers = #tpu.dot_dimension_numbers<[1], [0], [0], [1], [0, 0, 1, 1], [], []>} : vector<384x32xbf16>, vector<32x32xbf16>, vector<384x32xf32> -> vector<384x32xf32>
    %15 = arith.maximumf %11, %14 : vector<384x32xf32>
    %c0_13 = arith.constant 0 : index
    %c0_14 = arith.constant 0 : index
    %16 = vector.load %arg3[%c0_13, %c0_14] : memref<1x32xf32, #tpu.memory_space<vmem>>, vector<1x32xf32>
    %17 = vector.broadcast %16 : vector<1x32xf32> to vector<384x32xf32>
    %18 = arith.addf %15, %17 : vector<384x32xf32>
    %cst_15 = arith.constant 0.000000e+00 : f32
    %19 = vector.broadcast %cst_15 : f32 to vector<384x32xf32>
    %20 = arith.maximumf %18, %19 : vector<384x32xf32>
    %21 = vector.shape_cast %20 : vector<384x32xf32> to vector<2x12x16x32xf32>
    %cst_16 = arith.constant 0.000000e+00 : f32
    %22 = vector.broadcast %cst_16 : f32 to vector<128x64xf32>
    %23 = vector.extract_strided_slice %21 {offsets = [0, 0, 0, 0], sizes = [2, 8, 8, 32], strides = [1, 1, 1, 1]} : vector<2x12x16x32xf32> to vector<2x8x8x32xf32>
    %24 = vector.shape_cast %23 : vector<2x8x8x32xf32> to vector<128x32xf32>
    %25 = arith.truncf %24 : vector<128x32xf32> to vector<128x32xbf16>
    %c0_17 = arith.constant 0 : index
    %c0_18 = arith.constant 0 : index
    %c0_19 = arith.constant 0 : index
    %26 = vector.load %arg4[%c0_17, %c0_18, %c0_19] : memref<25x32x64xbf16, #tpu.memory_space<vmem>>, vector<1x32x64xbf16>
    %27 = vector.shape_cast %26 : vector<1x32x64xbf16> to vector<32x64xbf16>
    %cst_20 = arith.constant dense<0.000000e+00> : vector<128x64xf32>
    %28 = tpu.matmul %25, %27, %cst_20 {dimension_numbers = #tpu.dot_dimension_numbers<[1], [0], [0], [1], [0, 0, 1, 1], [], []>} : vector<128x32xbf16>, vector<32x64xbf16>, vector<128x64xf32> -> vector<128x64xf32>
    %29 = arith.addf %22, %28 : vector<128x64xf32>
    %30 = vector.extract_strided_slice %21 {offsets = [0, 0, 1, 0], sizes = [2, 8, 8, 32], strides = [1, 1, 1, 1]} : vector<2x12x16x32xf32> to vector<2x8x8x32xf32>
    %31 = vector.shape_cast %30 : vector<2x8x8x32xf32> to vector<128x32xf32>
    %32 = arith.truncf %31 : vector<128x32xf32> to vector<128x32xbf16>
    %c1_21 = arith.constant 1 : index
    %c0_22 = arith.constant 0 : index
    %c0_23 = arith.constant 0 : index
    %33 = vector.load %arg4[%c1_21, %c0_22, %c0_23] : memref<25x32x64xbf16, #tpu.memory_space<vmem>>, vector<1x32x64xbf16>
    %34 = vector.shape_cast %33 : vector<1x32x64xbf16> to vector<32x64xbf16>
    %cst_24 = arith.constant dense<0.000000e+00> : vector<128x64xf32>
    %35 = tpu.matmul %32, %34, %cst_24 {dimension_numbers = #tpu.dot_dimension_numbers<[1], [0], [0], [1], [0, 0, 1, 1], [], []>} : vector<128x32xbf16>, vector<32x64xbf16>, vector<128x64xf32> -> vector<128x64xf32>
    %36 = arith.addf %29, %35 : vector<128x64xf32>
    %37 = vector.extract_strided_slice %21 {offsets = [0, 0, 2, 0], sizes = [2, 8, 8, 32], strides = [1, 1, 1, 1]} : vector<2x12x16x32xf32> to vector<2x8x8x32xf32>
    %38 = vector.shape_cast %37 : vector<2x8x8x32xf32> to vector<128x32xf32>
    %39 = arith.truncf %38 : vector<128x32xf32> to vector<128x32xbf16>
    %c2_25 = arith.constant 2 : index
    %c0_26 = arith.constant 0 : index
    %c0_27 = arith.constant 0 : index
    %40 = vector.load %arg4[%c2_25, %c0_26, %c0_27] : memref<25x32x64xbf16, #tpu.memory_space<vmem>>, vector<1x32x64xbf16>
    %41 = vector.shape_cast %40 : vector<1x32x64xbf16> to vector<32x64xbf16>
    %cst_28 = arith.constant dense<0.000000e+00> : vector<128x64xf32>
    %42 = tpu.matmul %39, %41, %cst_28 {dimension_numbers = #tpu.dot_dimension_numbers<[1], [0], [0], [1], [0, 0, 1, 1], [], []>} : vector<128x32xbf16>, vector<32x64xbf16>, vector<128x64xf32> -> vector<128x64xf32>
    %43 = arith.addf %36, %42 : vector<128x64xf32>
    %44 = vector.extract_strided_slice %21 {offsets = [0, 0, 3, 0], sizes = [2, 8, 8, 32], strides = [1, 1, 1, 1]} : vector<2x12x16x32xf32> to vector<2x8x8x32xf32>
    %45 = vector.shape_cast %44 : vector<2x8x8x32xf32> to vector<128x32xf32>
    %46 = arith.truncf %45 : vector<128x32xf32> to vector<128x32xbf16>
    %c3_29 = arith.constant 3 : index
    %c0_30 = arith.constant 0 : index
    %c0_31 = arith.constant 0 : index
    %47 = vector.load %arg4[%c3_29, %c0_30, %c0_31] : memref<25x32x64xbf16, #tpu.memory_space<vmem>>, vector<1x32x64xbf16>
    %48 = vector.shape_cast %47 : vector<1x32x64xbf16> to vector<32x64xbf16>
    %cst_32 = arith.constant dense<0.000000e+00> : vector<128x64xf32>
    %49 = tpu.matmul %46, %48, %cst_32 {dimension_numbers = #tpu.dot_dimension_numbers<[1], [0], [0], [1], [0, 0, 1, 1], [], []>} : vector<128x32xbf16>, vector<32x64xbf16>, vector<128x64xf32> -> vector<128x64xf32>
    %50 = arith.addf %43, %49 : vector<128x64xf32>
    %51 = vector.extract_strided_slice %21 {offsets = [0, 0, 4, 0], sizes = [2, 8, 8, 32], strides = [1, 1, 1, 1]} : vector<2x12x16x32xf32> to vector<2x8x8x32xf32>
    %52 = vector.shape_cast %51 : vector<2x8x8x32xf32> to vector<128x32xf32>
    %53 = arith.truncf %52 : vector<128x32xf32> to vector<128x32xbf16>
    %c4 = arith.constant 4 : index
    %c0_33 = arith.constant 0 : index
    %c0_34 = arith.constant 0 : index
    %54 = vector.load %arg4[%c4, %c0_33, %c0_34] : memref<25x32x64xbf16, #tpu.memory_space<vmem>>, vector<1x32x64xbf16>
    %55 = vector.shape_cast %54 : vector<1x32x64xbf16> to vector<32x64xbf16>
    %cst_35 = arith.constant dense<0.000000e+00> : vector<128x64xf32>
    %56 = tpu.matmul %53, %55, %cst_35 {dimension_numbers = #tpu.dot_dimension_numbers<[1], [0], [0], [1], [0, 0, 1, 1], [], []>} : vector<128x32xbf16>, vector<32x64xbf16>, vector<128x64xf32> -> vector<128x64xf32>
    %57 = arith.addf %50, %56 : vector<128x64xf32>
    %58 = vector.extract_strided_slice %21 {offsets = [0, 1, 0, 0], sizes = [2, 8, 8, 32], strides = [1, 1, 1, 1]} : vector<2x12x16x32xf32> to vector<2x8x8x32xf32>
    %59 = vector.shape_cast %58 : vector<2x8x8x32xf32> to vector<128x32xf32>
    %60 = arith.truncf %59 : vector<128x32xf32> to vector<128x32xbf16>
    %c5 = arith.constant 5 : index
    %c0_36 = arith.constant 0 : index
    %c0_37 = arith.constant 0 : index
    %61 = vector.load %arg4[%c5, %c0_36, %c0_37] : memref<25x32x64xbf16, #tpu.memory_space<vmem>>, vector<1x32x64xbf16>
    %62 = vector.shape_cast %61 : vector<1x32x64xbf16> to vector<32x64xbf16>
    %cst_38 = arith.constant dense<0.000000e+00> : vector<128x64xf32>
    %63 = tpu.matmul %60, %62, %cst_38 {dimension_numbers = #tpu.dot_dimension_numbers<[1], [0], [0], [1], [0, 0, 1, 1], [], []>} : vector<128x32xbf16>, vector<32x64xbf16>, vector<128x64xf32> -> vector<128x64xf32>
    %64 = arith.addf %57, %63 : vector<128x64xf32>
    %65 = vector.extract_strided_slice %21 {offsets = [0, 1, 1, 0], sizes = [2, 8, 8, 32], strides = [1, 1, 1, 1]} : vector<2x12x16x32xf32> to vector<2x8x8x32xf32>
    %66 = vector.shape_cast %65 : vector<2x8x8x32xf32> to vector<128x32xf32>
    %67 = arith.truncf %66 : vector<128x32xf32> to vector<128x32xbf16>
    %c6 = arith.constant 6 : index
    %c0_39 = arith.constant 0 : index
    %c0_40 = arith.constant 0 : index
    %68 = vector.load %arg4[%c6, %c0_39, %c0_40] : memref<25x32x64xbf16, #tpu.memory_space<vmem>>, vector<1x32x64xbf16>
    %69 = vector.shape_cast %68 : vector<1x32x64xbf16> to vector<32x64xbf16>
    %cst_41 = arith.constant dense<0.000000e+00> : vector<128x64xf32>
    %70 = tpu.matmul %67, %69, %cst_41 {dimension_numbers = #tpu.dot_dimension_numbers<[1], [0], [0], [1], [0, 0, 1, 1], [], []>} : vector<128x32xbf16>, vector<32x64xbf16>, vector<128x64xf32> -> vector<128x64xf32>
    %71 = arith.addf %64, %70 : vector<128x64xf32>
    %72 = vector.extract_strided_slice %21 {offsets = [0, 1, 2, 0], sizes = [2, 8, 8, 32], strides = [1, 1, 1, 1]} : vector<2x12x16x32xf32> to vector<2x8x8x32xf32>
    %73 = vector.shape_cast %72 : vector<2x8x8x32xf32> to vector<128x32xf32>
    %74 = arith.truncf %73 : vector<128x32xf32> to vector<128x32xbf16>
    %c7 = arith.constant 7 : index
    %c0_42 = arith.constant 0 : index
    %c0_43 = arith.constant 0 : index
    %75 = vector.load %arg4[%c7, %c0_42, %c0_43] : memref<25x32x64xbf16, #tpu.memory_space<vmem>>, vector<1x32x64xbf16>
    %76 = vector.shape_cast %75 : vector<1x32x64xbf16> to vector<32x64xbf16>
    %cst_44 = arith.constant dense<0.000000e+00> : vector<128x64xf32>
    %77 = tpu.matmul %74, %76, %cst_44 {dimension_numbers = #tpu.dot_dimension_numbers<[1], [0], [0], [1], [0, 0, 1, 1], [], []>} : vector<128x32xbf16>, vector<32x64xbf16>, vector<128x64xf32> -> vector<128x64xf32>
    %78 = arith.addf %71, %77 : vector<128x64xf32>
    %79 = vector.extract_strided_slice %21 {offsets = [0, 1, 3, 0], sizes = [2, 8, 8, 32], strides = [1, 1, 1, 1]} : vector<2x12x16x32xf32> to vector<2x8x8x32xf32>
    %80 = vector.shape_cast %79 : vector<2x8x8x32xf32> to vector<128x32xf32>
    %81 = arith.truncf %80 : vector<128x32xf32> to vector<128x32xbf16>
    %c8 = arith.constant 8 : index
    %c0_45 = arith.constant 0 : index
    %c0_46 = arith.constant 0 : index
    %82 = vector.load %arg4[%c8, %c0_45, %c0_46] : memref<25x32x64xbf16, #tpu.memory_space<vmem>>, vector<1x32x64xbf16>
    %83 = vector.shape_cast %82 : vector<1x32x64xbf16> to vector<32x64xbf16>
    %cst_47 = arith.constant dense<0.000000e+00> : vector<128x64xf32>
    %84 = tpu.matmul %81, %83, %cst_47 {dimension_numbers = #tpu.dot_dimension_numbers<[1], [0], [0], [1], [0, 0, 1, 1], [], []>} : vector<128x32xbf16>, vector<32x64xbf16>, vector<128x64xf32> -> vector<128x64xf32>
    %85 = arith.addf %78, %84 : vector<128x64xf32>
    %86 = vector.extract_strided_slice %21 {offsets = [0, 1, 4, 0], sizes = [2, 8, 8, 32], strides = [1, 1, 1, 1]} : vector<2x12x16x32xf32> to vector<2x8x8x32xf32>
    %87 = vector.shape_cast %86 : vector<2x8x8x32xf32> to vector<128x32xf32>
    %88 = arith.truncf %87 : vector<128x32xf32> to vector<128x32xbf16>
    %c9 = arith.constant 9 : index
    %c0_48 = arith.constant 0 : index
    %c0_49 = arith.constant 0 : index
    %89 = vector.load %arg4[%c9, %c0_48, %c0_49] : memref<25x32x64xbf16, #tpu.memory_space<vmem>>, vector<1x32x64xbf16>
    %90 = vector.shape_cast %89 : vector<1x32x64xbf16> to vector<32x64xbf16>
    %cst_50 = arith.constant dense<0.000000e+00> : vector<128x64xf32>
    %91 = tpu.matmul %88, %90, %cst_50 {dimension_numbers = #tpu.dot_dimension_numbers<[1], [0], [0], [1], [0, 0, 1, 1], [], []>} : vector<128x32xbf16>, vector<32x64xbf16>, vector<128x64xf32> -> vector<128x64xf32>
    %92 = arith.addf %85, %91 : vector<128x64xf32>
    %93 = vector.extract_strided_slice %21 {offsets = [0, 2, 0, 0], sizes = [2, 8, 8, 32], strides = [1, 1, 1, 1]} : vector<2x12x16x32xf32> to vector<2x8x8x32xf32>
    %94 = vector.shape_cast %93 : vector<2x8x8x32xf32> to vector<128x32xf32>
    %95 = arith.truncf %94 : vector<128x32xf32> to vector<128x32xbf16>
    %c10 = arith.constant 10 : index
    %c0_51 = arith.constant 0 : index
    %c0_52 = arith.constant 0 : index
    %96 = vector.load %arg4[%c10, %c0_51, %c0_52] : memref<25x32x64xbf16, #tpu.memory_space<vmem>>, vector<1x32x64xbf16>
    %97 = vector.shape_cast %96 : vector<1x32x64xbf16> to vector<32x64xbf16>
    %cst_53 = arith.constant dense<0.000000e+00> : vector<128x64xf32>
    %98 = tpu.matmul %95, %97, %cst_53 {dimension_numbers = #tpu.dot_dimension_numbers<[1], [0], [0], [1], [0, 0, 1, 1], [], []>} : vector<128x32xbf16>, vector<32x64xbf16>, vector<128x64xf32> -> vector<128x64xf32>
    %99 = arith.addf %92, %98 : vector<128x64xf32>
    %100 = vector.extract_strided_slice %21 {offsets = [0, 2, 1, 0], sizes = [2, 8, 8, 32], strides = [1, 1, 1, 1]} : vector<2x12x16x32xf32> to vector<2x8x8x32xf32>
    %101 = vector.shape_cast %100 : vector<2x8x8x32xf32> to vector<128x32xf32>
    %102 = arith.truncf %101 : vector<128x32xf32> to vector<128x32xbf16>
    %c11 = arith.constant 11 : index
    %c0_54 = arith.constant 0 : index
    %c0_55 = arith.constant 0 : index
    %103 = vector.load %arg4[%c11, %c0_54, %c0_55] : memref<25x32x64xbf16, #tpu.memory_space<vmem>>, vector<1x32x64xbf16>
    %104 = vector.shape_cast %103 : vector<1x32x64xbf16> to vector<32x64xbf16>
    %cst_56 = arith.constant dense<0.000000e+00> : vector<128x64xf32>
    %105 = tpu.matmul %102, %104, %cst_56 {dimension_numbers = #tpu.dot_dimension_numbers<[1], [0], [0], [1], [0, 0, 1, 1], [], []>} : vector<128x32xbf16>, vector<32x64xbf16>, vector<128x64xf32> -> vector<128x64xf32>
    %106 = arith.addf %99, %105 : vector<128x64xf32>
    %107 = vector.extract_strided_slice %21 {offsets = [0, 2, 2, 0], sizes = [2, 8, 8, 32], strides = [1, 1, 1, 1]} : vector<2x12x16x32xf32> to vector<2x8x8x32xf32>
    %108 = vector.shape_cast %107 : vector<2x8x8x32xf32> to vector<128x32xf32>
    %109 = arith.truncf %108 : vector<128x32xf32> to vector<128x32xbf16>
    %c12 = arith.constant 12 : index
    %c0_57 = arith.constant 0 : index
    %c0_58 = arith.constant 0 : index
    %110 = vector.load %arg4[%c12, %c0_57, %c0_58] : memref<25x32x64xbf16, #tpu.memory_space<vmem>>, vector<1x32x64xbf16>
    %111 = vector.shape_cast %110 : vector<1x32x64xbf16> to vector<32x64xbf16>
    %cst_59 = arith.constant dense<0.000000e+00> : vector<128x64xf32>
    %112 = tpu.matmul %109, %111, %cst_59 {dimension_numbers = #tpu.dot_dimension_numbers<[1], [0], [0], [1], [0, 0, 1, 1], [], []>} : vector<128x32xbf16>, vector<32x64xbf16>, vector<128x64xf32> -> vector<128x64xf32>
    %113 = arith.addf %106, %112 : vector<128x64xf32>
    %114 = vector.extract_strided_slice %21 {offsets = [0, 2, 3, 0], sizes = [2, 8, 8, 32], strides = [1, 1, 1, 1]} : vector<2x12x16x32xf32> to vector<2x8x8x32xf32>
    %115 = vector.shape_cast %114 : vector<2x8x8x32xf32> to vector<128x32xf32>
    %116 = arith.truncf %115 : vector<128x32xf32> to vector<128x32xbf16>
    %c13 = arith.constant 13 : index
    %c0_60 = arith.constant 0 : index
    %c0_61 = arith.constant 0 : index
    %117 = vector.load %arg4[%c13, %c0_60, %c0_61] : memref<25x32x64xbf16, #tpu.memory_space<vmem>>, vector<1x32x64xbf16>
    %118 = vector.shape_cast %117 : vector<1x32x64xbf16> to vector<32x64xbf16>
    %cst_62 = arith.constant dense<0.000000e+00> : vector<128x64xf32>
    %119 = tpu.matmul %116, %118, %cst_62 {dimension_numbers = #tpu.dot_dimension_numbers<[1], [0], [0], [1], [0, 0, 1, 1], [], []>} : vector<128x32xbf16>, vector<32x64xbf16>, vector<128x64xf32> -> vector<128x64xf32>
    %120 = arith.addf %113, %119 : vector<128x64xf32>
    %121 = vector.extract_strided_slice %21 {offsets = [0, 2, 4, 0], sizes = [2, 8, 8, 32], strides = [1, 1, 1, 1]} : vector<2x12x16x32xf32> to vector<2x8x8x32xf32>
    %122 = vector.shape_cast %121 : vector<2x8x8x32xf32> to vector<128x32xf32>
    %123 = arith.truncf %122 : vector<128x32xf32> to vector<128x32xbf16>
    %c14 = arith.constant 14 : index
    %c0_63 = arith.constant 0 : index
    %c0_64 = arith.constant 0 : index
    %124 = vector.load %arg4[%c14, %c0_63, %c0_64] : memref<25x32x64xbf16, #tpu.memory_space<vmem>>, vector<1x32x64xbf16>
    %125 = vector.shape_cast %124 : vector<1x32x64xbf16> to vector<32x64xbf16>
    %cst_65 = arith.constant dense<0.000000e+00> : vector<128x64xf32>
    %126 = tpu.matmul %123, %125, %cst_65 {dimension_numbers = #tpu.dot_dimension_numbers<[1], [0], [0], [1], [0, 0, 1, 1], [], []>} : vector<128x32xbf16>, vector<32x64xbf16>, vector<128x64xf32> -> vector<128x64xf32>
    %127 = arith.addf %120, %126 : vector<128x64xf32>
    %128 = vector.extract_strided_slice %21 {offsets = [0, 3, 0, 0], sizes = [2, 8, 8, 32], strides = [1, 1, 1, 1]} : vector<2x12x16x32xf32> to vector<2x8x8x32xf32>
    %129 = vector.shape_cast %128 : vector<2x8x8x32xf32> to vector<128x32xf32>
    %130 = arith.truncf %129 : vector<128x32xf32> to vector<128x32xbf16>
    %c15 = arith.constant 15 : index
    %c0_66 = arith.constant 0 : index
    %c0_67 = arith.constant 0 : index
    %131 = vector.load %arg4[%c15, %c0_66, %c0_67] : memref<25x32x64xbf16, #tpu.memory_space<vmem>>, vector<1x32x64xbf16>
    %132 = vector.shape_cast %131 : vector<1x32x64xbf16> to vector<32x64xbf16>
    %cst_68 = arith.constant dense<0.000000e+00> : vector<128x64xf32>
    %133 = tpu.matmul %130, %132, %cst_68 {dimension_numbers = #tpu.dot_dimension_numbers<[1], [0], [0], [1], [0, 0, 1, 1], [], []>} : vector<128x32xbf16>, vector<32x64xbf16>, vector<128x64xf32> -> vector<128x64xf32>
    %134 = arith.addf %127, %133 : vector<128x64xf32>
    %135 = vector.extract_strided_slice %21 {offsets = [0, 3, 1, 0], sizes = [2, 8, 8, 32], strides = [1, 1, 1, 1]} : vector<2x12x16x32xf32> to vector<2x8x8x32xf32>
    %136 = vector.shape_cast %135 : vector<2x8x8x32xf32> to vector<128x32xf32>
    %137 = arith.truncf %136 : vector<128x32xf32> to vector<128x32xbf16>
    %c16 = arith.constant 16 : index
    %c0_69 = arith.constant 0 : index
    %c0_70 = arith.constant 0 : index
    %138 = vector.load %arg4[%c16, %c0_69, %c0_70] : memref<25x32x64xbf16, #tpu.memory_space<vmem>>, vector<1x32x64xbf16>
    %139 = vector.shape_cast %138 : vector<1x32x64xbf16> to vector<32x64xbf16>
    %cst_71 = arith.constant dense<0.000000e+00> : vector<128x64xf32>
    %140 = tpu.matmul %137, %139, %cst_71 {dimension_numbers = #tpu.dot_dimension_numbers<[1], [0], [0], [1], [0, 0, 1, 1], [], []>} : vector<128x32xbf16>, vector<32x64xbf16>, vector<128x64xf32> -> vector<128x64xf32>
    %141 = arith.addf %134, %140 : vector<128x64xf32>
    %142 = vector.extract_strided_slice %21 {offsets = [0, 3, 2, 0], sizes = [2, 8, 8, 32], strides = [1, 1, 1, 1]} : vector<2x12x16x32xf32> to vector<2x8x8x32xf32>
    %143 = vector.shape_cast %142 : vector<2x8x8x32xf32> to vector<128x32xf32>
    %144 = arith.truncf %143 : vector<128x32xf32> to vector<128x32xbf16>
    %c17 = arith.constant 17 : index
    %c0_72 = arith.constant 0 : index
    %c0_73 = arith.constant 0 : index
    %145 = vector.load %arg4[%c17, %c0_72, %c0_73] : memref<25x32x64xbf16, #tpu.memory_space<vmem>>, vector<1x32x64xbf16>
    %146 = vector.shape_cast %145 : vector<1x32x64xbf16> to vector<32x64xbf16>
    %cst_74 = arith.constant dense<0.000000e+00> : vector<128x64xf32>
    %147 = tpu.matmul %144, %146, %cst_74 {dimension_numbers = #tpu.dot_dimension_numbers<[1], [0], [0], [1], [0, 0, 1, 1], [], []>} : vector<128x32xbf16>, vector<32x64xbf16>, vector<128x64xf32> -> vector<128x64xf32>
    %148 = arith.addf %141, %147 : vector<128x64xf32>
    %149 = vector.extract_strided_slice %21 {offsets = [0, 3, 3, 0], sizes = [2, 8, 8, 32], strides = [1, 1, 1, 1]} : vector<2x12x16x32xf32> to vector<2x8x8x32xf32>
    %150 = vector.shape_cast %149 : vector<2x8x8x32xf32> to vector<128x32xf32>
    %151 = arith.truncf %150 : vector<128x32xf32> to vector<128x32xbf16>
    %c18 = arith.constant 18 : index
    %c0_75 = arith.constant 0 : index
    %c0_76 = arith.constant 0 : index
    %152 = vector.load %arg4[%c18, %c0_75, %c0_76] : memref<25x32x64xbf16, #tpu.memory_space<vmem>>, vector<1x32x64xbf16>
    %153 = vector.shape_cast %152 : vector<1x32x64xbf16> to vector<32x64xbf16>
    %cst_77 = arith.constant dense<0.000000e+00> : vector<128x64xf32>
    %154 = tpu.matmul %151, %153, %cst_77 {dimension_numbers = #tpu.dot_dimension_numbers<[1], [0], [0], [1], [0, 0, 1, 1], [], []>} : vector<128x32xbf16>, vector<32x64xbf16>, vector<128x64xf32> -> vector<128x64xf32>
    %155 = arith.addf %148, %154 : vector<128x64xf32>
    %156 = vector.extract_strided_slice %21 {offsets = [0, 3, 4, 0], sizes = [2, 8, 8, 32], strides = [1, 1, 1, 1]} : vector<2x12x16x32xf32> to vector<2x8x8x32xf32>
    %157 = vector.shape_cast %156 : vector<2x8x8x32xf32> to vector<128x32xf32>
    %158 = arith.truncf %157 : vector<128x32xf32> to vector<128x32xbf16>
    %c19 = arith.constant 19 : index
    %c0_78 = arith.constant 0 : index
    %c0_79 = arith.constant 0 : index
    %159 = vector.load %arg4[%c19, %c0_78, %c0_79] : memref<25x32x64xbf16, #tpu.memory_space<vmem>>, vector<1x32x64xbf16>
    %160 = vector.shape_cast %159 : vector<1x32x64xbf16> to vector<32x64xbf16>
    %cst_80 = arith.constant dense<0.000000e+00> : vector<128x64xf32>
    %161 = tpu.matmul %158, %160, %cst_80 {dimension_numbers = #tpu.dot_dimension_numbers<[1], [0], [0], [1], [0, 0, 1, 1], [], []>} : vector<128x32xbf16>, vector<32x64xbf16>, vector<128x64xf32> -> vector<128x64xf32>
    %162 = arith.addf %155, %161 : vector<128x64xf32>
    %163 = vector.extract_strided_slice %21 {offsets = [0, 4, 0, 0], sizes = [2, 8, 8, 32], strides = [1, 1, 1, 1]} : vector<2x12x16x32xf32> to vector<2x8x8x32xf32>
    %164 = vector.shape_cast %163 : vector<2x8x8x32xf32> to vector<128x32xf32>
    %165 = arith.truncf %164 : vector<128x32xf32> to vector<128x32xbf16>
    %c20 = arith.constant 20 : index
    %c0_81 = arith.constant 0 : index
    %c0_82 = arith.constant 0 : index
    %166 = vector.load %arg4[%c20, %c0_81, %c0_82] : memref<25x32x64xbf16, #tpu.memory_space<vmem>>, vector<1x32x64xbf16>
    %167 = vector.shape_cast %166 : vector<1x32x64xbf16> to vector<32x64xbf16>
    %cst_83 = arith.constant dense<0.000000e+00> : vector<128x64xf32>
    %168 = tpu.matmul %165, %167, %cst_83 {dimension_numbers = #tpu.dot_dimension_numbers<[1], [0], [0], [1], [0, 0, 1, 1], [], []>} : vector<128x32xbf16>, vector<32x64xbf16>, vector<128x64xf32> -> vector<128x64xf32>
    %169 = arith.addf %162, %168 : vector<128x64xf32>
    %170 = vector.extract_strided_slice %21 {offsets = [0, 4, 1, 0], sizes = [2, 8, 8, 32], strides = [1, 1, 1, 1]} : vector<2x12x16x32xf32> to vector<2x8x8x32xf32>
    %171 = vector.shape_cast %170 : vector<2x8x8x32xf32> to vector<128x32xf32>
    %172 = arith.truncf %171 : vector<128x32xf32> to vector<128x32xbf16>
    %c21 = arith.constant 21 : index
    %c0_84 = arith.constant 0 : index
    %c0_85 = arith.constant 0 : index
    %173 = vector.load %arg4[%c21, %c0_84, %c0_85] : memref<25x32x64xbf16, #tpu.memory_space<vmem>>, vector<1x32x64xbf16>
    %174 = vector.shape_cast %173 : vector<1x32x64xbf16> to vector<32x64xbf16>
    %cst_86 = arith.constant dense<0.000000e+00> : vector<128x64xf32>
    %175 = tpu.matmul %172, %174, %cst_86 {dimension_numbers = #tpu.dot_dimension_numbers<[1], [0], [0], [1], [0, 0, 1, 1], [], []>} : vector<128x32xbf16>, vector<32x64xbf16>, vector<128x64xf32> -> vector<128x64xf32>
    %176 = arith.addf %169, %175 : vector<128x64xf32>
    %177 = vector.extract_strided_slice %21 {offsets = [0, 4, 2, 0], sizes = [2, 8, 8, 32], strides = [1, 1, 1, 1]} : vector<2x12x16x32xf32> to vector<2x8x8x32xf32>
    %178 = vector.shape_cast %177 : vector<2x8x8x32xf32> to vector<128x32xf32>
    %179 = arith.truncf %178 : vector<128x32xf32> to vector<128x32xbf16>
    %c22 = arith.constant 22 : index
    %c0_87 = arith.constant 0 : index
    %c0_88 = arith.constant 0 : index
    %180 = vector.load %arg4[%c22, %c0_87, %c0_88] : memref<25x32x64xbf16, #tpu.memory_space<vmem>>, vector<1x32x64xbf16>
    %181 = vector.shape_cast %180 : vector<1x32x64xbf16> to vector<32x64xbf16>
    %cst_89 = arith.constant dense<0.000000e+00> : vector<128x64xf32>
    %182 = tpu.matmul %179, %181, %cst_89 {dimension_numbers = #tpu.dot_dimension_numbers<[1], [0], [0], [1], [0, 0, 1, 1], [], []>} : vector<128x32xbf16>, vector<32x64xbf16>, vector<128x64xf32> -> vector<128x64xf32>
    %183 = arith.addf %176, %182 : vector<128x64xf32>
    %184 = vector.extract_strided_slice %21 {offsets = [0, 4, 3, 0], sizes = [2, 8, 8, 32], strides = [1, 1, 1, 1]} : vector<2x12x16x32xf32> to vector<2x8x8x32xf32>
    %185 = vector.shape_cast %184 : vector<2x8x8x32xf32> to vector<128x32xf32>
    %186 = arith.truncf %185 : vector<128x32xf32> to vector<128x32xbf16>
    %c23 = arith.constant 23 : index
    %c0_90 = arith.constant 0 : index
    %c0_91 = arith.constant 0 : index
    %187 = vector.load %arg4[%c23, %c0_90, %c0_91] : memref<25x32x64xbf16, #tpu.memory_space<vmem>>, vector<1x32x64xbf16>
    %188 = vector.shape_cast %187 : vector<1x32x64xbf16> to vector<32x64xbf16>
    %cst_92 = arith.constant dense<0.000000e+00> : vector<128x64xf32>
    %189 = tpu.matmul %186, %188, %cst_92 {dimension_numbers = #tpu.dot_dimension_numbers<[1], [0], [0], [1], [0, 0, 1, 1], [], []>} : vector<128x32xbf16>, vector<32x64xbf16>, vector<128x64xf32> -> vector<128x64xf32>
    %190 = arith.addf %183, %189 : vector<128x64xf32>
    %191 = vector.extract_strided_slice %21 {offsets = [0, 4, 4, 0], sizes = [2, 8, 8, 32], strides = [1, 1, 1, 1]} : vector<2x12x16x32xf32> to vector<2x8x8x32xf32>
    %192 = vector.shape_cast %191 : vector<2x8x8x32xf32> to vector<128x32xf32>
    %193 = arith.truncf %192 : vector<128x32xf32> to vector<128x32xbf16>
    %c24 = arith.constant 24 : index
    %c0_93 = arith.constant 0 : index
    %c0_94 = arith.constant 0 : index
    %194 = vector.load %arg4[%c24, %c0_93, %c0_94] : memref<25x32x64xbf16, #tpu.memory_space<vmem>>, vector<1x32x64xbf16>
    %195 = vector.shape_cast %194 : vector<1x32x64xbf16> to vector<32x64xbf16>
    %cst_95 = arith.constant dense<0.000000e+00> : vector<128x64xf32>
    %196 = tpu.matmul %193, %195, %cst_95 {dimension_numbers = #tpu.dot_dimension_numbers<[1], [0], [0], [1], [0, 0, 1, 1], [], []>} : vector<128x32xbf16>, vector<32x64xbf16>, vector<128x64xf32> -> vector<128x64xf32>
    %197 = arith.addf %190, %196 : vector<128x64xf32>
    %c0_96 = arith.constant 0 : index
    %c0_97 = arith.constant 0 : index
    %198 = vector.load %arg5[%c0_96, %c0_97] : memref<1x64xf32, #tpu.memory_space<vmem>>, vector<1x64xf32>
    %199 = vector.broadcast %198 : vector<1x64xf32> to vector<128x64xf32>
    %200 = arith.addf %197, %199 : vector<128x64xf32>
    %cst_98 = arith.constant 0.000000e+00 : f32
    %201 = vector.broadcast %cst_98 : f32 to vector<128x64xf32>
    %202 = arith.maximumf %200, %201 : vector<128x64xf32>
    %203 = vector.shape_cast %202 : vector<128x64xf32> to vector<2x8x8x64xf32>
    %cst_99 = arith.constant 0.000000e+00 : f32
    %204 = vector.broadcast %cst_99 : f32 to vector<2x512xf32>
    %205 = vector.extract_strided_slice %203 {offsets = [0, 0, 0, 0], sizes = [2, 1, 1, 64], strides = [1, 1, 1, 1]} : vector<2x8x8x64xf32> to vector<2x1x1x64xf32>
    %206 = vector.shape_cast %205 : vector<2x1x1x64xf32> to vector<2x64xf32>
    %207 = vector.extract_strided_slice %203 {offsets = [0, 0, 1, 0], sizes = [2, 1, 1, 64], strides = [1, 1, 1, 1]} : vector<2x8x8x64xf32> to vector<2x1x1x64xf32>
    %208 = vector.shape_cast %207 : vector<2x1x1x64xf32> to vector<2x64xf32>
    %209 = arith.maximumf %206, %208 : vector<2x64xf32>
    %210 = vector.extract_strided_slice %203 {offsets = [0, 1, 0, 0], sizes = [2, 1, 1, 64], strides = [1, 1, 1, 1]} : vector<2x8x8x64xf32> to vector<2x1x1x64xf32>
    %211 = vector.shape_cast %210 : vector<2x1x1x64xf32> to vector<2x64xf32>
    %212 = vector.extract_strided_slice %203 {offsets = [0, 1, 1, 0], sizes = [2, 1, 1, 64], strides = [1, 1, 1, 1]} : vector<2x8x8x64xf32> to vector<2x1x1x64xf32>
    %213 = vector.shape_cast %212 : vector<2x1x1x64xf32> to vector<2x64xf32>
    %214 = arith.maximumf %211, %213 : vector<2x64xf32>
    %215 = arith.maximumf %209, %214 : vector<2x64xf32>
    %216 = arith.truncf %215 : vector<2x64xf32> to vector<2x64xbf16>
    %c0_100 = arith.constant 0 : index
    %c0_101 = arith.constant 0 : index
    %217 = vector.load %arg6[%c0_100, %c0_101] : memref<1024x512xbf16, #tpu.memory_space<vmem>>, vector<64x512xbf16>
    %cst_102 = arith.constant dense<0.000000e+00> : vector<2x512xf32>
    %218 = tpu.matmul %216, %217, %cst_102 {dimension_numbers = #tpu.dot_dimension_numbers<[1], [0], [0], [1], [0, 0, 1, 1], [], []>} : vector<2x64xbf16>, vector<64x512xbf16>, vector<2x512xf32> -> vector<2x512xf32>
    %219 = arith.addf %204, %218 : vector<2x512xf32>
    %220 = vector.extract_strided_slice %203 {offsets = [0, 0, 2, 0], sizes = [2, 1, 1, 64], strides = [1, 1, 1, 1]} : vector<2x8x8x64xf32> to vector<2x1x1x64xf32>
    %221 = vector.shape_cast %220 : vector<2x1x1x64xf32> to vector<2x64xf32>
    %222 = vector.extract_strided_slice %203 {offsets = [0, 0, 3, 0], sizes = [2, 1, 1, 64], strides = [1, 1, 1, 1]} : vector<2x8x8x64xf32> to vector<2x1x1x64xf32>
    %223 = vector.shape_cast %222 : vector<2x1x1x64xf32> to vector<2x64xf32>
    %224 = arith.maximumf %221, %223 : vector<2x64xf32>
    %225 = vector.extract_strided_slice %203 {offsets = [0, 1, 2, 0], sizes = [2, 1, 1, 64], strides = [1, 1, 1, 1]} : vector<2x8x8x64xf32> to vector<2x1x1x64xf32>
    %226 = vector.shape_cast %225 : vector<2x1x1x64xf32> to vector<2x64xf32>
    %227 = vector.extract_strided_slice %203 {offsets = [0, 1, 3, 0], sizes = [2, 1, 1, 64], strides = [1, 1, 1, 1]} : vector<2x8x8x64xf32> to vector<2x1x1x64xf32>
    %228 = vector.shape_cast %227 : vector<2x1x1x64xf32> to vector<2x64xf32>
    %229 = arith.maximumf %226, %228 : vector<2x64xf32>
    %230 = arith.maximumf %224, %229 : vector<2x64xf32>
    %231 = arith.truncf %230 : vector<2x64xf32> to vector<2x64xbf16>
    %c64 = arith.constant 64 : index
    %c0_103 = arith.constant 0 : index
    %232 = vector.load %arg6[%c64, %c0_103] : memref<1024x512xbf16, #tpu.memory_space<vmem>>, vector<64x512xbf16>
    %cst_104 = arith.constant dense<0.000000e+00> : vector<2x512xf32>
    %233 = tpu.matmul %231, %232, %cst_104 {dimension_numbers = #tpu.dot_dimension_numbers<[1], [0], [0], [1], [0, 0, 1, 1], [], []>} : vector<2x64xbf16>, vector<64x512xbf16>, vector<2x512xf32> -> vector<2x512xf32>
    %234 = arith.addf %219, %233 : vector<2x512xf32>
    %235 = vector.extract_strided_slice %203 {offsets = [0, 0, 4, 0], sizes = [2, 1, 1, 64], strides = [1, 1, 1, 1]} : vector<2x8x8x64xf32> to vector<2x1x1x64xf32>
    %236 = vector.shape_cast %235 : vector<2x1x1x64xf32> to vector<2x64xf32>
    %237 = vector.extract_strided_slice %203 {offsets = [0, 0, 5, 0], sizes = [2, 1, 1, 64], strides = [1, 1, 1, 1]} : vector<2x8x8x64xf32> to vector<2x1x1x64xf32>
    %238 = vector.shape_cast %237 : vector<2x1x1x64xf32> to vector<2x64xf32>
    %239 = arith.maximumf %236, %238 : vector<2x64xf32>
    %240 = vector.extract_strided_slice %203 {offsets = [0, 1, 4, 0], sizes = [2, 1, 1, 64], strides = [1, 1, 1, 1]} : vector<2x8x8x64xf32> to vector<2x1x1x64xf32>
    %241 = vector.shape_cast %240 : vector<2x1x1x64xf32> to vector<2x64xf32>
    %242 = vector.extract_strided_slice %203 {offsets = [0, 1, 5, 0], sizes = [2, 1, 1, 64], strides = [1, 1, 1, 1]} : vector<2x8x8x64xf32> to vector<2x1x1x64xf32>
    %243 = vector.shape_cast %242 : vector<2x1x1x64xf32> to vector<2x64xf32>
    %244 = arith.maximumf %241, %243 : vector<2x64xf32>
    %245 = arith.maximumf %239, %244 : vector<2x64xf32>
    %246 = arith.truncf %245 : vector<2x64xf32> to vector<2x64xbf16>
    %c128 = arith.constant 128 : index
    %c0_105 = arith.constant 0 : index
    %247 = vector.load %arg6[%c128, %c0_105] : memref<1024x512xbf16, #tpu.memory_space<vmem>>, vector<64x512xbf16>
    %cst_106 = arith.constant dense<0.000000e+00> : vector<2x512xf32>
    %248 = tpu.matmul %246, %247, %cst_106 {dimension_numbers = #tpu.dot_dimension_numbers<[1], [0], [0], [1], [0, 0, 1, 1], [], []>} : vector<2x64xbf16>, vector<64x512xbf16>, vector<2x512xf32> -> vector<2x512xf32>
    %249 = arith.addf %234, %248 : vector<2x512xf32>
    %250 = vector.extract_strided_slice %203 {offsets = [0, 0, 6, 0], sizes = [2, 1, 1, 64], strides = [1, 1, 1, 1]} : vector<2x8x8x64xf32> to vector<2x1x1x64xf32>
    %251 = vector.shape_cast %250 : vector<2x1x1x64xf32> to vector<2x64xf32>
    %252 = vector.extract_strided_slice %203 {offsets = [0, 0, 7, 0], sizes = [2, 1, 1, 64], strides = [1, 1, 1, 1]} : vector<2x8x8x64xf32> to vector<2x1x1x64xf32>
    %253 = vector.shape_cast %252 : vector<2x1x1x64xf32> to vector<2x64xf32>
    %254 = arith.maximumf %251, %253 : vector<2x64xf32>
    %255 = vector.extract_strided_slice %203 {offsets = [0, 1, 6, 0], sizes = [2, 1, 1, 64], strides = [1, 1, 1, 1]} : vector<2x8x8x64xf32> to vector<2x1x1x64xf32>
    %256 = vector.shape_cast %255 : vector<2x1x1x64xf32> to vector<2x64xf32>
    %257 = vector.extract_strided_slice %203 {offsets = [0, 1, 7, 0], sizes = [2, 1, 1, 64], strides = [1, 1, 1, 1]} : vector<2x8x8x64xf32> to vector<2x1x1x64xf32>
    %258 = vector.shape_cast %257 : vector<2x1x1x64xf32> to vector<2x64xf32>
    %259 = arith.maximumf %256, %258 : vector<2x64xf32>
    %260 = arith.maximumf %254, %259 : vector<2x64xf32>
    %261 = arith.truncf %260 : vector<2x64xf32> to vector<2x64xbf16>
    %c192 = arith.constant 192 : index
    %c0_107 = arith.constant 0 : index
    %262 = vector.load %arg6[%c192, %c0_107] : memref<1024x512xbf16, #tpu.memory_space<vmem>>, vector<64x512xbf16>
    %cst_108 = arith.constant dense<0.000000e+00> : vector<2x512xf32>
    %263 = tpu.matmul %261, %262, %cst_108 {dimension_numbers = #tpu.dot_dimension_numbers<[1], [0], [0], [1], [0, 0, 1, 1], [], []>} : vector<2x64xbf16>, vector<64x512xbf16>, vector<2x512xf32> -> vector<2x512xf32>
    %264 = arith.addf %249, %263 : vector<2x512xf32>
    %265 = vector.extract_strided_slice %203 {offsets = [0, 2, 0, 0], sizes = [2, 1, 1, 64], strides = [1, 1, 1, 1]} : vector<2x8x8x64xf32> to vector<2x1x1x64xf32>
    %266 = vector.shape_cast %265 : vector<2x1x1x64xf32> to vector<2x64xf32>
    %267 = vector.extract_strided_slice %203 {offsets = [0, 2, 1, 0], sizes = [2, 1, 1, 64], strides = [1, 1, 1, 1]} : vector<2x8x8x64xf32> to vector<2x1x1x64xf32>
    %268 = vector.shape_cast %267 : vector<2x1x1x64xf32> to vector<2x64xf32>
    %269 = arith.maximumf %266, %268 : vector<2x64xf32>
    %270 = vector.extract_strided_slice %203 {offsets = [0, 3, 0, 0], sizes = [2, 1, 1, 64], strides = [1, 1, 1, 1]} : vector<2x8x8x64xf32> to vector<2x1x1x64xf32>
    %271 = vector.shape_cast %270 : vector<2x1x1x64xf32> to vector<2x64xf32>
    %272 = vector.extract_strided_slice %203 {offsets = [0, 3, 1, 0], sizes = [2, 1, 1, 64], strides = [1, 1, 1, 1]} : vector<2x8x8x64xf32> to vector<2x1x1x64xf32>
    %273 = vector.shape_cast %272 : vector<2x1x1x64xf32> to vector<2x64xf32>
    %274 = arith.maximumf %271, %273 : vector<2x64xf32>
    %275 = arith.maximumf %269, %274 : vector<2x64xf32>
    %276 = arith.truncf %275 : vector<2x64xf32> to vector<2x64xbf16>
    %c256 = arith.constant 256 : index
    %c0_109 = arith.constant 0 : index
    %277 = vector.load %arg6[%c256, %c0_109] : memref<1024x512xbf16, #tpu.memory_space<vmem>>, vector<64x512xbf16>
    %cst_110 = arith.constant dense<0.000000e+00> : vector<2x512xf32>
    %278 = tpu.matmul %276, %277, %cst_110 {dimension_numbers = #tpu.dot_dimension_numbers<[1], [0], [0], [1], [0, 0, 1, 1], [], []>} : vector<2x64xbf16>, vector<64x512xbf16>, vector<2x512xf32> -> vector<2x512xf32>
    %279 = arith.addf %264, %278 : vector<2x512xf32>
    %280 = vector.extract_strided_slice %203 {offsets = [0, 2, 2, 0], sizes = [2, 1, 1, 64], strides = [1, 1, 1, 1]} : vector<2x8x8x64xf32> to vector<2x1x1x64xf32>
    %281 = vector.shape_cast %280 : vector<2x1x1x64xf32> to vector<2x64xf32>
    %282 = vector.extract_strided_slice %203 {offsets = [0, 2, 3, 0], sizes = [2, 1, 1, 64], strides = [1, 1, 1, 1]} : vector<2x8x8x64xf32> to vector<2x1x1x64xf32>
    %283 = vector.shape_cast %282 : vector<2x1x1x64xf32> to vector<2x64xf32>
    %284 = arith.maximumf %281, %283 : vector<2x64xf32>
    %285 = vector.extract_strided_slice %203 {offsets = [0, 3, 2, 0], sizes = [2, 1, 1, 64], strides = [1, 1, 1, 1]} : vector<2x8x8x64xf32> to vector<2x1x1x64xf32>
    %286 = vector.shape_cast %285 : vector<2x1x1x64xf32> to vector<2x64xf32>
    %287 = vector.extract_strided_slice %203 {offsets = [0, 3, 3, 0], sizes = [2, 1, 1, 64], strides = [1, 1, 1, 1]} : vector<2x8x8x64xf32> to vector<2x1x1x64xf32>
    %288 = vector.shape_cast %287 : vector<2x1x1x64xf32> to vector<2x64xf32>
    %289 = arith.maximumf %286, %288 : vector<2x64xf32>
    %290 = arith.maximumf %284, %289 : vector<2x64xf32>
    %291 = arith.truncf %290 : vector<2x64xf32> to vector<2x64xbf16>
    %c320 = arith.constant 320 : index
    %c0_111 = arith.constant 0 : index
    %292 = vector.load %arg6[%c320, %c0_111] : memref<1024x512xbf16, #tpu.memory_space<vmem>>, vector<64x512xbf16>
    %cst_112 = arith.constant dense<0.000000e+00> : vector<2x512xf32>
    %293 = tpu.matmul %291, %292, %cst_112 {dimension_numbers = #tpu.dot_dimension_numbers<[1], [0], [0], [1], [0, 0, 1, 1], [], []>} : vector<2x64xbf16>, vector<64x512xbf16>, vector<2x512xf32> -> vector<2x512xf32>
    %294 = arith.addf %279, %293 : vector<2x512xf32>
    %295 = vector.extract_strided_slice %203 {offsets = [0, 2, 4, 0], sizes = [2, 1, 1, 64], strides = [1, 1, 1, 1]} : vector<2x8x8x64xf32> to vector<2x1x1x64xf32>
    %296 = vector.shape_cast %295 : vector<2x1x1x64xf32> to vector<2x64xf32>
    %297 = vector.extract_strided_slice %203 {offsets = [0, 2, 5, 0], sizes = [2, 1, 1, 64], strides = [1, 1, 1, 1]} : vector<2x8x8x64xf32> to vector<2x1x1x64xf32>
    %298 = vector.shape_cast %297 : vector<2x1x1x64xf32> to vector<2x64xf32>
    %299 = arith.maximumf %296, %298 : vector<2x64xf32>
    %300 = vector.extract_strided_slice %203 {offsets = [0, 3, 4, 0], sizes = [2, 1, 1, 64], strides = [1, 1, 1, 1]} : vector<2x8x8x64xf32> to vector<2x1x1x64xf32>
    %301 = vector.shape_cast %300 : vector<2x1x1x64xf32> to vector<2x64xf32>
    %302 = vector.extract_strided_slice %203 {offsets = [0, 3, 5, 0], sizes = [2, 1, 1, 64], strides = [1, 1, 1, 1]} : vector<2x8x8x64xf32> to vector<2x1x1x64xf32>
    %303 = vector.shape_cast %302 : vector<2x1x1x64xf32> to vector<2x64xf32>
    %304 = arith.maximumf %301, %303 : vector<2x64xf32>
    %305 = arith.maximumf %299, %304 : vector<2x64xf32>
    %306 = arith.truncf %305 : vector<2x64xf32> to vector<2x64xbf16>
    %c384 = arith.constant 384 : index
    %c0_113 = arith.constant 0 : index
    %307 = vector.load %arg6[%c384, %c0_113] : memref<1024x512xbf16, #tpu.memory_space<vmem>>, vector<64x512xbf16>
    %cst_114 = arith.constant dense<0.000000e+00> : vector<2x512xf32>
    %308 = tpu.matmul %306, %307, %cst_114 {dimension_numbers = #tpu.dot_dimension_numbers<[1], [0], [0], [1], [0, 0, 1, 1], [], []>} : vector<2x64xbf16>, vector<64x512xbf16>, vector<2x512xf32> -> vector<2x512xf32>
    %309 = arith.addf %294, %308 : vector<2x512xf32>
    %310 = vector.extract_strided_slice %203 {offsets = [0, 2, 6, 0], sizes = [2, 1, 1, 64], strides = [1, 1, 1, 1]} : vector<2x8x8x64xf32> to vector<2x1x1x64xf32>
    %311 = vector.shape_cast %310 : vector<2x1x1x64xf32> to vector<2x64xf32>
    %312 = vector.extract_strided_slice %203 {offsets = [0, 2, 7, 0], sizes = [2, 1, 1, 64], strides = [1, 1, 1, 1]} : vector<2x8x8x64xf32> to vector<2x1x1x64xf32>
    %313 = vector.shape_cast %312 : vector<2x1x1x64xf32> to vector<2x64xf32>
    %314 = arith.maximumf %311, %313 : vector<2x64xf32>
    %315 = vector.extract_strided_slice %203 {offsets = [0, 3, 6, 0], sizes = [2, 1, 1, 64], strides = [1, 1, 1, 1]} : vector<2x8x8x64xf32> to vector<2x1x1x64xf32>
    %316 = vector.shape_cast %315 : vector<2x1x1x64xf32> to vector<2x64xf32>
    %317 = vector.extract_strided_slice %203 {offsets = [0, 3, 7, 0], sizes = [2, 1, 1, 64], strides = [1, 1, 1, 1]} : vector<2x8x8x64xf32> to vector<2x1x1x64xf32>
    %318 = vector.shape_cast %317 : vector<2x1x1x64xf32> to vector<2x64xf32>
    %319 = arith.maximumf %316, %318 : vector<2x64xf32>
    %320 = arith.maximumf %314, %319 : vector<2x64xf32>
    %321 = arith.truncf %320 : vector<2x64xf32> to vector<2x64xbf16>
    %c448 = arith.constant 448 : index
    %c0_115 = arith.constant 0 : index
    %322 = vector.load %arg6[%c448, %c0_115] : memref<1024x512xbf16, #tpu.memory_space<vmem>>, vector<64x512xbf16>
    %cst_116 = arith.constant dense<0.000000e+00> : vector<2x512xf32>
    %323 = tpu.matmul %321, %322, %cst_116 {dimension_numbers = #tpu.dot_dimension_numbers<[1], [0], [0], [1], [0, 0, 1, 1], [], []>} : vector<2x64xbf16>, vector<64x512xbf16>, vector<2x512xf32> -> vector<2x512xf32>
    %324 = arith.addf %309, %323 : vector<2x512xf32>
    %325 = vector.extract_strided_slice %203 {offsets = [0, 4, 0, 0], sizes = [2, 1, 1, 64], strides = [1, 1, 1, 1]} : vector<2x8x8x64xf32> to vector<2x1x1x64xf32>
    %326 = vector.shape_cast %325 : vector<2x1x1x64xf32> to vector<2x64xf32>
    %327 = vector.extract_strided_slice %203 {offsets = [0, 4, 1, 0], sizes = [2, 1, 1, 64], strides = [1, 1, 1, 1]} : vector<2x8x8x64xf32> to vector<2x1x1x64xf32>
    %328 = vector.shape_cast %327 : vector<2x1x1x64xf32> to vector<2x64xf32>
    %329 = arith.maximumf %326, %328 : vector<2x64xf32>
    %330 = vector.extract_strided_slice %203 {offsets = [0, 5, 0, 0], sizes = [2, 1, 1, 64], strides = [1, 1, 1, 1]} : vector<2x8x8x64xf32> to vector<2x1x1x64xf32>
    %331 = vector.shape_cast %330 : vector<2x1x1x64xf32> to vector<2x64xf32>
    %332 = vector.extract_strided_slice %203 {offsets = [0, 5, 1, 0], sizes = [2, 1, 1, 64], strides = [1, 1, 1, 1]} : vector<2x8x8x64xf32> to vector<2x1x1x64xf32>
    %333 = vector.shape_cast %332 : vector<2x1x1x64xf32> to vector<2x64xf32>
    %334 = arith.maximumf %331, %333 : vector<2x64xf32>
    %335 = arith.maximumf %329, %334 : vector<2x64xf32>
    %336 = arith.truncf %335 : vector<2x64xf32> to vector<2x64xbf16>
    %c512 = arith.constant 512 : index
    %c0_117 = arith.constant 0 : index
    %337 = vector.load %arg6[%c512, %c0_117] : memref<1024x512xbf16, #tpu.memory_space<vmem>>, vector<64x512xbf16>
    %cst_118 = arith.constant dense<0.000000e+00> : vector<2x512xf32>
    %338 = tpu.matmul %336, %337, %cst_118 {dimension_numbers = #tpu.dot_dimension_numbers<[1], [0], [0], [1], [0, 0, 1, 1], [], []>} : vector<2x64xbf16>, vector<64x512xbf16>, vector<2x512xf32> -> vector<2x512xf32>
    %339 = arith.addf %324, %338 : vector<2x512xf32>
    %340 = vector.extract_strided_slice %203 {offsets = [0, 4, 2, 0], sizes = [2, 1, 1, 64], strides = [1, 1, 1, 1]} : vector<2x8x8x64xf32> to vector<2x1x1x64xf32>
    %341 = vector.shape_cast %340 : vector<2x1x1x64xf32> to vector<2x64xf32>
    %342 = vector.extract_strided_slice %203 {offsets = [0, 4, 3, 0], sizes = [2, 1, 1, 64], strides = [1, 1, 1, 1]} : vector<2x8x8x64xf32> to vector<2x1x1x64xf32>
    %343 = vector.shape_cast %342 : vector<2x1x1x64xf32> to vector<2x64xf32>
    %344 = arith.maximumf %341, %343 : vector<2x64xf32>
    %345 = vector.extract_strided_slice %203 {offsets = [0, 5, 2, 0], sizes = [2, 1, 1, 64], strides = [1, 1, 1, 1]} : vector<2x8x8x64xf32> to vector<2x1x1x64xf32>
    %346 = vector.shape_cast %345 : vector<2x1x1x64xf32> to vector<2x64xf32>
    %347 = vector.extract_strided_slice %203 {offsets = [0, 5, 3, 0], sizes = [2, 1, 1, 64], strides = [1, 1, 1, 1]} : vector<2x8x8x64xf32> to vector<2x1x1x64xf32>
    %348 = vector.shape_cast %347 : vector<2x1x1x64xf32> to vector<2x64xf32>
    %349 = arith.maximumf %346, %348 : vector<2x64xf32>
    %350 = arith.maximumf %344, %349 : vector<2x64xf32>
    %351 = arith.truncf %350 : vector<2x64xf32> to vector<2x64xbf16>
    %c576 = arith.constant 576 : index
    %c0_119 = arith.constant 0 : index
    %352 = vector.load %arg6[%c576, %c0_119] : memref<1024x512xbf16, #tpu.memory_space<vmem>>, vector<64x512xbf16>
    %cst_120 = arith.constant dense<0.000000e+00> : vector<2x512xf32>
    %353 = tpu.matmul %351, %352, %cst_120 {dimension_numbers = #tpu.dot_dimension_numbers<[1], [0], [0], [1], [0, 0, 1, 1], [], []>} : vector<2x64xbf16>, vector<64x512xbf16>, vector<2x512xf32> -> vector<2x512xf32>
    %354 = arith.addf %339, %353 : vector<2x512xf32>
    %355 = vector.extract_strided_slice %203 {offsets = [0, 4, 4, 0], sizes = [2, 1, 1, 64], strides = [1, 1, 1, 1]} : vector<2x8x8x64xf32> to vector<2x1x1x64xf32>
    %356 = vector.shape_cast %355 : vector<2x1x1x64xf32> to vector<2x64xf32>
    %357 = vector.extract_strided_slice %203 {offsets = [0, 4, 5, 0], sizes = [2, 1, 1, 64], strides = [1, 1, 1, 1]} : vector<2x8x8x64xf32> to vector<2x1x1x64xf32>
    %358 = vector.shape_cast %357 : vector<2x1x1x64xf32> to vector<2x64xf32>
    %359 = arith.maximumf %356, %358 : vector<2x64xf32>
    %360 = vector.extract_strided_slice %203 {offsets = [0, 5, 4, 0], sizes = [2, 1, 1, 64], strides = [1, 1, 1, 1]} : vector<2x8x8x64xf32> to vector<2x1x1x64xf32>
    %361 = vector.shape_cast %360 : vector<2x1x1x64xf32> to vector<2x64xf32>
    %362 = vector.extract_strided_slice %203 {offsets = [0, 5, 5, 0], sizes = [2, 1, 1, 64], strides = [1, 1, 1, 1]} : vector<2x8x8x64xf32> to vector<2x1x1x64xf32>
    %363 = vector.shape_cast %362 : vector<2x1x1x64xf32> to vector<2x64xf32>
    %364 = arith.maximumf %361, %363 : vector<2x64xf32>
    %365 = arith.maximumf %359, %364 : vector<2x64xf32>
    %366 = arith.truncf %365 : vector<2x64xf32> to vector<2x64xbf16>
    %c640 = arith.constant 640 : index
    %c0_121 = arith.constant 0 : index
    %367 = vector.load %arg6[%c640, %c0_121] : memref<1024x512xbf16, #tpu.memory_space<vmem>>, vector<64x512xbf16>
    %cst_122 = arith.constant dense<0.000000e+00> : vector<2x512xf32>
    %368 = tpu.matmul %366, %367, %cst_122 {dimension_numbers = #tpu.dot_dimension_numbers<[1], [0], [0], [1], [0, 0, 1, 1], [], []>} : vector<2x64xbf16>, vector<64x512xbf16>, vector<2x512xf32> -> vector<2x512xf32>
    %369 = arith.addf %354, %368 : vector<2x512xf32>
    %370 = vector.extract_strided_slice %203 {offsets = [0, 4, 6, 0], sizes = [2, 1, 1, 64], strides = [1, 1, 1, 1]} : vector<2x8x8x64xf32> to vector<2x1x1x64xf32>
    %371 = vector.shape_cast %370 : vector<2x1x1x64xf32> to vector<2x64xf32>
    %372 = vector.extract_strided_slice %203 {offsets = [0, 4, 7, 0], sizes = [2, 1, 1, 64], strides = [1, 1, 1, 1]} : vector<2x8x8x64xf32> to vector<2x1x1x64xf32>
    %373 = vector.shape_cast %372 : vector<2x1x1x64xf32> to vector<2x64xf32>
    %374 = arith.maximumf %371, %373 : vector<2x64xf32>
    %375 = vector.extract_strided_slice %203 {offsets = [0, 5, 6, 0], sizes = [2, 1, 1, 64], strides = [1, 1, 1, 1]} : vector<2x8x8x64xf32> to vector<2x1x1x64xf32>
    %376 = vector.shape_cast %375 : vector<2x1x1x64xf32> to vector<2x64xf32>
    %377 = vector.extract_strided_slice %203 {offsets = [0, 5, 7, 0], sizes = [2, 1, 1, 64], strides = [1, 1, 1, 1]} : vector<2x8x8x64xf32> to vector<2x1x1x64xf32>
    %378 = vector.shape_cast %377 : vector<2x1x1x64xf32> to vector<2x64xf32>
    %379 = arith.maximumf %376, %378 : vector<2x64xf32>
    %380 = arith.maximumf %374, %379 : vector<2x64xf32>
    %381 = arith.truncf %380 : vector<2x64xf32> to vector<2x64xbf16>
    %c704 = arith.constant 704 : index
    %c0_123 = arith.constant 0 : index
    %382 = vector.load %arg6[%c704, %c0_123] : memref<1024x512xbf16, #tpu.memory_space<vmem>>, vector<64x512xbf16>
    %cst_124 = arith.constant dense<0.000000e+00> : vector<2x512xf32>
    %383 = tpu.matmul %381, %382, %cst_124 {dimension_numbers = #tpu.dot_dimension_numbers<[1], [0], [0], [1], [0, 0, 1, 1], [], []>} : vector<2x64xbf16>, vector<64x512xbf16>, vector<2x512xf32> -> vector<2x512xf32>
    %384 = arith.addf %369, %383 : vector<2x512xf32>
    %385 = vector.extract_strided_slice %203 {offsets = [0, 6, 0, 0], sizes = [2, 1, 1, 64], strides = [1, 1, 1, 1]} : vector<2x8x8x64xf32> to vector<2x1x1x64xf32>
    %386 = vector.shape_cast %385 : vector<2x1x1x64xf32> to vector<2x64xf32>
    %387 = vector.extract_strided_slice %203 {offsets = [0, 6, 1, 0], sizes = [2, 1, 1, 64], strides = [1, 1, 1, 1]} : vector<2x8x8x64xf32> to vector<2x1x1x64xf32>
    %388 = vector.shape_cast %387 : vector<2x1x1x64xf32> to vector<2x64xf32>
    %389 = arith.maximumf %386, %388 : vector<2x64xf32>
    %390 = vector.extract_strided_slice %203 {offsets = [0, 7, 0, 0], sizes = [2, 1, 1, 64], strides = [1, 1, 1, 1]} : vector<2x8x8x64xf32> to vector<2x1x1x64xf32>
    %391 = vector.shape_cast %390 : vector<2x1x1x64xf32> to vector<2x64xf32>
    %392 = vector.extract_strided_slice %203 {offsets = [0, 7, 1, 0], sizes = [2, 1, 1, 64], strides = [1, 1, 1, 1]} : vector<2x8x8x64xf32> to vector<2x1x1x64xf32>
    %393 = vector.shape_cast %392 : vector<2x1x1x64xf32> to vector<2x64xf32>
    %394 = arith.maximumf %391, %393 : vector<2x64xf32>
    %395 = arith.maximumf %389, %394 : vector<2x64xf32>
    %396 = arith.truncf %395 : vector<2x64xf32> to vector<2x64xbf16>
    %c768 = arith.constant 768 : index
    %c0_125 = arith.constant 0 : index
    %397 = vector.load %arg6[%c768, %c0_125] : memref<1024x512xbf16, #tpu.memory_space<vmem>>, vector<64x512xbf16>
    %cst_126 = arith.constant dense<0.000000e+00> : vector<2x512xf32>
    %398 = tpu.matmul %396, %397, %cst_126 {dimension_numbers = #tpu.dot_dimension_numbers<[1], [0], [0], [1], [0, 0, 1, 1], [], []>} : vector<2x64xbf16>, vector<64x512xbf16>, vector<2x512xf32> -> vector<2x512xf32>
    %399 = arith.addf %384, %398 : vector<2x512xf32>
    %400 = vector.extract_strided_slice %203 {offsets = [0, 6, 2, 0], sizes = [2, 1, 1, 64], strides = [1, 1, 1, 1]} : vector<2x8x8x64xf32> to vector<2x1x1x64xf32>
    %401 = vector.shape_cast %400 : vector<2x1x1x64xf32> to vector<2x64xf32>
    %402 = vector.extract_strided_slice %203 {offsets = [0, 6, 3, 0], sizes = [2, 1, 1, 64], strides = [1, 1, 1, 1]} : vector<2x8x8x64xf32> to vector<2x1x1x64xf32>
    %403 = vector.shape_cast %402 : vector<2x1x1x64xf32> to vector<2x64xf32>
    %404 = arith.maximumf %401, %403 : vector<2x64xf32>
    %405 = vector.extract_strided_slice %203 {offsets = [0, 7, 2, 0], sizes = [2, 1, 1, 64], strides = [1, 1, 1, 1]} : vector<2x8x8x64xf32> to vector<2x1x1x64xf32>
    %406 = vector.shape_cast %405 : vector<2x1x1x64xf32> to vector<2x64xf32>
    %407 = vector.extract_strided_slice %203 {offsets = [0, 7, 3, 0], sizes = [2, 1, 1, 64], strides = [1, 1, 1, 1]} : vector<2x8x8x64xf32> to vector<2x1x1x64xf32>
    %408 = vector.shape_cast %407 : vector<2x1x1x64xf32> to vector<2x64xf32>
    %409 = arith.maximumf %406, %408 : vector<2x64xf32>
    %410 = arith.maximumf %404, %409 : vector<2x64xf32>
    %411 = arith.truncf %410 : vector<2x64xf32> to vector<2x64xbf16>
    %c832 = arith.constant 832 : index
    %c0_127 = arith.constant 0 : index
    %412 = vector.load %arg6[%c832, %c0_127] : memref<1024x512xbf16, #tpu.memory_space<vmem>>, vector<64x512xbf16>
    %cst_128 = arith.constant dense<0.000000e+00> : vector<2x512xf32>
    %413 = tpu.matmul %411, %412, %cst_128 {dimension_numbers = #tpu.dot_dimension_numbers<[1], [0], [0], [1], [0, 0, 1, 1], [], []>} : vector<2x64xbf16>, vector<64x512xbf16>, vector<2x512xf32> -> vector<2x512xf32>
    %414 = arith.addf %399, %413 : vector<2x512xf32>
    %415 = vector.extract_strided_slice %203 {offsets = [0, 6, 4, 0], sizes = [2, 1, 1, 64], strides = [1, 1, 1, 1]} : vector<2x8x8x64xf32> to vector<2x1x1x64xf32>
    %416 = vector.shape_cast %415 : vector<2x1x1x64xf32> to vector<2x64xf32>
    %417 = vector.extract_strided_slice %203 {offsets = [0, 6, 5, 0], sizes = [2, 1, 1, 64], strides = [1, 1, 1, 1]} : vector<2x8x8x64xf32> to vector<2x1x1x64xf32>
    %418 = vector.shape_cast %417 : vector<2x1x1x64xf32> to vector<2x64xf32>
    %419 = arith.maximumf %416, %418 : vector<2x64xf32>
    %420 = vector.extract_strided_slice %203 {offsets = [0, 7, 4, 0], sizes = [2, 1, 1, 64], strides = [1, 1, 1, 1]} : vector<2x8x8x64xf32> to vector<2x1x1x64xf32>
    %421 = vector.shape_cast %420 : vector<2x1x1x64xf32> to vector<2x64xf32>
    %422 = vector.extract_strided_slice %203 {offsets = [0, 7, 5, 0], sizes = [2, 1, 1, 64], strides = [1, 1, 1, 1]} : vector<2x8x8x64xf32> to vector<2x1x1x64xf32>
    %423 = vector.shape_cast %422 : vector<2x1x1x64xf32> to vector<2x64xf32>
    %424 = arith.maximumf %421, %423 : vector<2x64xf32>
    %425 = arith.maximumf %419, %424 : vector<2x64xf32>
    %426 = arith.truncf %425 : vector<2x64xf32> to vector<2x64xbf16>
    %c896 = arith.constant 896 : index
    %c0_129 = arith.constant 0 : index
    %427 = vector.load %arg6[%c896, %c0_129] : memref<1024x512xbf16, #tpu.memory_space<vmem>>, vector<64x512xbf16>
    %cst_130 = arith.constant dense<0.000000e+00> : vector<2x512xf32>
    %428 = tpu.matmul %426, %427, %cst_130 {dimension_numbers = #tpu.dot_dimension_numbers<[1], [0], [0], [1], [0, 0, 1, 1], [], []>} : vector<2x64xbf16>, vector<64x512xbf16>, vector<2x512xf32> -> vector<2x512xf32>
    %429 = arith.addf %414, %428 : vector<2x512xf32>
    %430 = vector.extract_strided_slice %203 {offsets = [0, 6, 6, 0], sizes = [2, 1, 1, 64], strides = [1, 1, 1, 1]} : vector<2x8x8x64xf32> to vector<2x1x1x64xf32>
    %431 = vector.shape_cast %430 : vector<2x1x1x64xf32> to vector<2x64xf32>
    %432 = vector.extract_strided_slice %203 {offsets = [0, 6, 7, 0], sizes = [2, 1, 1, 64], strides = [1, 1, 1, 1]} : vector<2x8x8x64xf32> to vector<2x1x1x64xf32>
    %433 = vector.shape_cast %432 : vector<2x1x1x64xf32> to vector<2x64xf32>
    %434 = arith.maximumf %431, %433 : vector<2x64xf32>
    %435 = vector.extract_strided_slice %203 {offsets = [0, 7, 6, 0], sizes = [2, 1, 1, 64], strides = [1, 1, 1, 1]} : vector<2x8x8x64xf32> to vector<2x1x1x64xf32>
    %436 = vector.shape_cast %435 : vector<2x1x1x64xf32> to vector<2x64xf32>
    %437 = vector.extract_strided_slice %203 {offsets = [0, 7, 7, 0], sizes = [2, 1, 1, 64], strides = [1, 1, 1, 1]} : vector<2x8x8x64xf32> to vector<2x1x1x64xf32>
    %438 = vector.shape_cast %437 : vector<2x1x1x64xf32> to vector<2x64xf32>
    %439 = arith.maximumf %436, %438 : vector<2x64xf32>
    %440 = arith.maximumf %434, %439 : vector<2x64xf32>
    %441 = arith.truncf %440 : vector<2x64xf32> to vector<2x64xbf16>
    %c960 = arith.constant 960 : index
    %c0_131 = arith.constant 0 : index
    %442 = vector.load %arg6[%c960, %c0_131] : memref<1024x512xbf16, #tpu.memory_space<vmem>>, vector<64x512xbf16>
    %cst_132 = arith.constant dense<0.000000e+00> : vector<2x512xf32>
    %443 = tpu.matmul %441, %442, %cst_132 {dimension_numbers = #tpu.dot_dimension_numbers<[1], [0], [0], [1], [0, 0, 1, 1], [], []>} : vector<2x64xbf16>, vector<64x512xbf16>, vector<2x512xf32> -> vector<2x512xf32>
    %444 = arith.addf %429, %443 : vector<2x512xf32>
    %c0_133 = arith.constant 0 : index
    %c0_134 = arith.constant 0 : index
    %445 = vector.load %arg7[%c0_133, %c0_134] : memref<1x512xf32, #tpu.memory_space<vmem>>, vector<1x512xf32>
    %446 = vector.broadcast %445 : vector<1x512xf32> to vector<2x512xf32>
    %447 = arith.addf %444, %446 : vector<2x512xf32>
    %cst_135 = arith.constant 0.000000e+00 : f32
    %448 = vector.broadcast %cst_135 : f32 to vector<2x512xf32>
    %449 = arith.maximumf %447, %448 : vector<2x512xf32>
    %450 = arith.truncf %449 : vector<2x512xf32> to vector<2x512xbf16>
    %c0_136 = arith.constant 0 : index
    %c0_137 = arith.constant 0 : index
    %451 = vector.load %arg8[%c0_136, %c0_137] : memref<512x128xbf16, #tpu.memory_space<vmem>>, vector<512x128xbf16>
    %cst_138 = arith.constant dense<0.000000e+00> : vector<2x128xf32>
    %452 = tpu.matmul %450, %451, %cst_138 {dimension_numbers = #tpu.dot_dimension_numbers<[1], [0], [0], [1], [0, 0, 1, 1], [], []>} : vector<2x512xbf16>, vector<512x128xbf16>, vector<2x128xf32> -> vector<2x128xf32>
    %c0_139 = arith.constant 0 : index
    %c0_140 = arith.constant 0 : index
    %453 = vector.load %arg9[%c0_139, %c0_140] : memref<1x128xf32, #tpu.memory_space<vmem>>, vector<1x128xf32>
    %454 = vector.broadcast %453 : vector<1x128xf32> to vector<2x128xf32>
    %455 = arith.addf %452, %454 : vector<2x128xf32>
    %c0_141 = arith.constant 0 : index
    %c0_142 = arith.constant 0 : index
    %456 = vector.load %arg10[%c0_141, %c0_142] : memref<2x128xf32, #tpu.memory_space<vmem>>, vector<2x128xf32>
    tpu.vector_store %arg10[%c0_141, %c0_142], %455 {strides = array<i32>} : memref<2x128xf32, #tpu.memory_space<vmem>>, vector<2x128xf32>,
    return
  }
  func.func @transform_0(%arg0: i32) -> (i32, i32, i32) {
    %c0_i32 = arith.constant 0 : i32
    %c0_i32_0 = arith.constant 0 : i32
    %c0_i32_1 = arith.constant 0 : i32
    return %c0_i32, %arg0, %c0_i32_0 : i32, i32, i32
  }
  func.func @transform_1(%arg0: i32) -> (i32, i32) {
    %c0_i32 = arith.constant 0 : i32
    %c0_i32_0 = arith.constant 0 : i32
    %c0_i32_1 = arith.constant 0 : i32
    return %c0_i32, %c0_i32_0 : i32, i32
  }
  func.func @transform_2(%arg0: i32) -> (i32, i32) {
    %c0_i32 = arith.constant 0 : i32
    %c0_i32_0 = arith.constant 0 : i32
    %c0_i32_1 = arith.constant 0 : i32
    return %c0_i32, %c0_i32_0 : i32, i32
  }
  func.func @transform_3(%arg0: i32) -> (i32, i32, i32) {
    %c0_i32 = arith.constant 0 : i32
    %c0_i32_0 = arith.constant 0 : i32
    %c0_i32_1 = arith.constant 0 : i32
    %c0_i32_2 = arith.constant 0 : i32
    return %c0_i32, %c0_i32_0, %c0_i32_1 : i32, i32, i32
  }
  func.func @transform_4(%arg0: i32) -> (i32, i32) {
    %c0_i32 = arith.constant 0 : i32
    %c0_i32_0 = arith.constant 0 : i32
    %c0_i32_1 = arith.constant 0 : i32
    return %c0_i32, %c0_i32_0 : i32, i32
  }
  func.func @transform_5(%arg0: i32) -> (i32, i32) {
    %c0_i32 = arith.constant 0 : i32
    %c0_i32_0 = arith.constant 0 : i32
    %c0_i32_1 = arith.constant 0 : i32
    return %c0_i32, %c0_i32_0 : i32, i32
  }
  func.func @transform_6(%arg0: i32) -> (i32, i32) {
    %c0_i32 = arith.constant 0 : i32
    %c0_i32_0 = arith.constant 0 : i32
    %c0_i32_1 = arith.constant 0 : i32
    return %c0_i32, %c0_i32_0 : i32, i32
  }
  func.func @transform_7(%arg0: i32) -> (i32, i32) {
    %c0_i32 = arith.constant 0 : i32
    %c0_i32_0 = arith.constant 0 : i32
    %c0_i32_1 = arith.constant 0 : i32
    return %c0_i32, %c0_i32_0 : i32, i32
  }
  func.func @transform_8(%arg0: i32) -> (i32, i32) {
    %c0_i32 = arith.constant 0 : i32
    %c0_i32_0 = arith.constant 0 : i32
    %c0_i32_1 = arith.constant 0 : i32
    return %c0_i32, %c0_i32_0 : i32, i32
  }
  func.func @transform_9(%arg0: i32) -> (i32, i32) {
    %c0_i32 = arith.constant 0 : i32
    %c0_i32_0 = arith.constant 0 : i32
    return %arg0, %c0_i32 : i32, i32
  }
}

</mosaic_0001>

<llo_original>
// kernel: cnn_forward.1
$region0: #{cnn_forward.1}
  #allocation0 [shape = 'u32[]', space=smem, size = 0x4, offset = 0x4, fixed_abs, tag = 'smem constant byte address 0x4 - core index']
  #allocation1 [shape = 'u32[72,128]{1,0:T(1,128)}', space=vmem, size = 0x9000, scoped, tag = 'internal scratch']
  %s0 = inlined_call_operand.vmem [shape: bf16[4,384,32], index: 0, kind: input, shape index: {}]
  %s1 = inlined_call_operand.vmem [shape: bf16[32,32], index: 1, kind: input, shape index: {}]
  %s2 = inlined_call_operand.vmem [shape: f32[1,32], index: 2, kind: input, shape index: {}]
  %s3 = inlined_call_operand.vmem [shape: bf16[25,32,64], index: 3, kind: input, shape index: {}]
  %s4 = inlined_call_operand.vmem [shape: f32[1,64], index: 4, kind: input, shape index: {}]
  %s5 = inlined_call_operand.vmem [shape: bf16[1024,512], index: 5, kind: input, shape index: {}]
  %s6 = inlined_call_operand.vmem [shape: f32[1,512], index: 6, kind: input, shape index: {}]
  %s7 = inlined_call_operand.vmem [shape: bf16[512,128], index: 7, kind: input, shape index: {}]
  %s8 = inlined_call_operand.vmem [shape: f32[1,128], index: 8, kind: input, shape index: {}]
  %s9 = inlined_call_operand.hbm [shape: f32[2,128], index: 9, kind: output, shape index: {}]
  %s10 = sld [smem:[#allocation0]]
  $region46: #{cnn_forward.1} parent=0
    _
  %s12 = ssub.s32 1, %s10
  %s13 = scalar_select 0, %s12, %s10
  $region1: #{cnn_forward.1} parent=0
    #allocation2 [shape = 'u8[1024]{0}', space=vmem, size = 0x400, scoped, tag = 'output window, operand 0, single buffered']
    #allocation3 [shape = 's32[1]{0}', space=sflag, size = 0x4, scoped, tag = 'scoped memory for cnn_forward.1']
    %14 = vsyncpa [#allocation3], 0
    // Predicated region
    $region2: #{cnn_forward.1} parent=1 // pred_check
      _
    $region3: #{cnn_forward.1} parent=1 // pred_check_branch
      %16 = sbr.rel (0) target = $region5
    $region4: #{cnn_forward.1} parent=1 // pred_region
      _
    $region5: #{cnn_forward.1} parent=1 // pred_fallthru
      _
    // Predicated region
    $region6: #{cnn_forward.1} parent=1 // pred_check
      _
    $region7: #{cnn_forward.1} parent=1 // pred_check_branch
      %18 = sbr.rel (0) target = $region9
    $region8: #{cnn_forward.1} parent=1 // pred_region
      _
    $region9: #{cnn_forward.1} parent=1 // pred_fallthru
      _
    // Predicated region
    $region10: #{cnn_forward.1} parent=1 // pred_check
      _
    $region11: #{cnn_forward.1} parent=1 // pred_check_branch
      %20 = sbr.rel (0) target = $region13
    $region12: #{cnn_forward.1} parent=1 // pred_region
      _
    $region13: #{cnn_forward.1} parent=1 // pred_fallthru
      _
    // Predicated region
    $region14: #{cnn_forward.1} parent=1 // pred_check
      _
    $region15: #{cnn_forward.1} parent=1 // pred_check_branch
      %22 = sbr.rel (0) target = $region17
    $region16: #{cnn_forward.1} parent=1 // pred_region
      _
    $region17: #{cnn_forward.1} parent=1 // pred_fallthru
      _
    // Predicated region
    $region18: #{cnn_forward.1} parent=1 // pred_check
      _
    $region19: #{cnn_forward.1} parent=1 // pred_check_branch
      %24 = sbr.rel (0) target = $region21
    $region20: #{cnn_forward.1} parent=1 // pred_region
      _
    $region21: #{cnn_forward.1} parent=1 // pred_fallthru
      _
    // Predicated region
    $region22: #{cnn_forward.1} parent=1 // pred_check
      _
    $region23: #{cnn_forward.1} parent=1 // pred_check_branch
      %26 = sbr.rel (0) target = $region25
    $region24: #{cnn_forward.1} parent=1 // pred_region
      _
    $region25: #{cnn_forward.1} parent=1 // pred_fallthru
      _
    // Predicated region
    $region26: #{cnn_forward.1} parent=1 // pred_check
      _
    $region27: #{cnn_forward.1} parent=1 // pred_check_branch
      %28 = sbr.rel (0) target = $region29
    $region28: #{cnn_forward.1} parent=1 // pred_region
      _
    $region29: #{cnn_forward.1} parent=1 // pred_fallthru
      _
    // Predicated region
    $region30: #{cnn_forward.1} parent=1 // pred_check
      _
    $region31: #{cnn_forward.1} parent=1 // pred_check_branch
      %30 = sbr.rel (0) target = $region33
    $region32: #{cnn_forward.1} parent=1 // pred_region
      _
    $region33: #{cnn_forward.1} parent=1 // pred_fallthru
      _
    // Predicated region
    $region34: #{cnn_forward.1} parent=1 // pred_check
      _
    $region35: #{cnn_forward.1} parent=1 // pred_check_branch
      %32 = sbr.rel (0) target = $region37
    $region36: #{cnn_forward.1} parent=1 // pred_region
      _
    $region37: #{cnn_forward.1} parent=1 // pred_fallthru
      _
    %v34 = vld [vmem:[%s1] sm:$0xf]
    %v35 = vld [vmem:[%s1 + $0x4] sm:$0xf]
    %v36 = vld [vmem:[%s1 + $0x8] sm:$0xf]
    %v37 = vld [vmem:[%s1 + $0xc] sm:$0xf]
    %v38 = vld [vmem:[%s0] sm:$0xf]
    %v39 = vld [vmem:[%s0 + $0x4] sm:$0xf]
    %v40 = vld [vmem:[%s0 + $0x8] sm:$0xf]
    %v41 = vld [vmem:[%s0 + $0xc] sm:$0xf]
    %v42 = vld [vmem:[%s0 + $0x10] sm:$0xf]
    %v43 = vld [vmem:[%s0 + $0x14] sm:$0xf]
    %v44 = vld [vmem:[%s0 + $0x18] sm:$0xf]
    %v45 = vld [vmem:[%s0 + $0x1c] sm:$0xf]
    %v46 = vld [vmem:[%s0 + $0x20] sm:$0xf]
    %v47 = vld [vmem:[%s0 + $0x24] sm:$0xf]
    %v48 = vld [vmem:[%s0 + $0x28] sm:$0xf]
    %v49 = vld [vmem:[%s0 + $0x2c] sm:$0xf]
    %v50 = vld [vmem:[%s0 + $0x30] sm:$0xf]
    %v51 = vld [vmem:[%s0 + $0x34] sm:$0xf]
    %v52 = vld [vmem:[%s0 + $0x38] sm:$0xf]
    %v53 = vld [vmem:[%s0 + $0x3c] sm:$0xf]
    %v54 = vld [vmem:[%s0 + $0x40] sm:$0xf]
    %v55 = vld [vmem:[%s0 + $0x44] sm:$0xf]
    %v56 = vld [vmem:[%s0 + $0x48] sm:$0xf]
    %v57 = vld [vmem:[%s0 + $0x4c] sm:$0xf]
    %v58 = vld [vmem:[%s0 + $0x50] sm:$0xf]
    %v59 = vld [vmem:[%s0 + $0x54] sm:$0xf]
    %v60 = vld [vmem:[%s0 + $0x58] sm:$0xf]
    %v61 = vld [vmem:[%s0 + $0x5c] sm:$0xf]
    %v62 = vld [vmem:[%s0 + $0x60] sm:$0xf]
    %v63 = vld [vmem:[%s0 + $0x64] sm:$0xf]
    %v64 = vld [vmem:[%s0 + $0x68] sm:$0xf]
    %v65 = vld [vmem:[%s0 + $0x6c] sm:$0xf]
    %v66 = vld [vmem:[%s0 + $0x70] sm:$0xf]
    %v67 = vld [vmem:[%s0 + $0x74] sm:$0xf]
    %v68 = vld [vmem:[%s0 + $0x78] sm:$0xf]
    %v69 = vld [vmem:[%s0 + $0x7c] sm:$0xf]
    %v70 = vld [vmem:[%s0 + $0x80] sm:$0xf]
    %v71 = vld [vmem:[%s0 + $0x84] sm:$0xf]
    %v72 = vld [vmem:[%s0 + $0x88] sm:$0xf]
    %v73 = vld [vmem:[%s0 + $0x8c] sm:$0xf]
    %v74 = vld [vmem:[%s0 + $0x90] sm:$0xf]
    %v75 = vld [vmem:[%s0 + $0x94] sm:$0xf]
    %v76 = vld [vmem:[%s0 + $0x98] sm:$0xf]
    %v77 = vld [vmem:[%s0 + $0x9c] sm:$0xf]
    %v78 = vld [vmem:[%s0 + $0xa0] sm:$0xf]
    %v79 = vld [vmem:[%s0 + $0xa4] sm:$0xf]
    %v80 = vld [vmem:[%s0 + $0xa8] sm:$0xf]
    %v81 = vld [vmem:[%s0 + $0xac] sm:$0xf]
    %v82 = vld [vmem:[%s0 + $0xb0] sm:$0xf]
    %v83 = vld [vmem:[%s0 + $0xb4] sm:$0xf]
    %v84 = vld [vmem:[%s0 + $0xb8] sm:$0xf]
    %v85 = vld [vmem:[%s0 + $0xbc] sm:$0xf]
    %v134 = vunpack.c.l.b16 %v38
    %v135 = vunpack.c.l.b16 %v39
    %v136 = vunpack.c.l.b16 %v40
    %v137 = vunpack.c.l.b16 %v41
    %v138 = vunpack.c.l.b16 %v42
    %v139 = vunpack.c.l.b16 %v43
    %v140 = vunpack.c.l.b16 %v44
    %v141 = vunpack.c.l.b16 %v45
    %v142 = vunpack.c.l.b16 %v46
    %v143 = vunpack.c.l.b16 %v47
    %v144 = vunpack.c.l.b16 %v48
    %v145 = vunpack.c.l.b16 %v49
    %v146 = vunpack.c.l.b16 %v50
    %v147 = vunpack.c.l.b16 %v51
    %v148 = vunpack.c.l.b16 %v52
    %v149 = vunpack.c.l.b16 %v53
    %v150 = vunpack.c.l.b16 %v54
    %v151 = vunpack.c.l.b16 %v55
    %v152 = vunpack.c.l.b16 %v56
    %v153 = vunpack.c.l.b16 %v57
    %v154 = vunpack.c.l.b16 %v58
    %v155 = vunpack.c.l.b16 %v59
    %v156 = vunpack.c.l.b16 %v60
    %v157 = vunpack.c.l.b16 %v61
    %v158 = vunpack.c.l.b16 %v62
    %v159 = vunpack.c.l.b16 %v63
    %v160 = vunpack.c.l.b16 %v64
    %v161 = vunpack.c.l.b16 %v65
    %v162 = vunpack.c.l.b16 %v66
    %v163 = vunpack.c.l.b16 %v67
    %v164 = vunpack.c.l.b16 %v68
    %v165 = vunpack.c.l.b16 %v69
    %v166 = vunpack.c.l.b16 %v70
    %v167 = vunpack.c.l.b16 %v71
    %v168 = vunpack.c.l.b16 %v72
    %v169 = vunpack.c.l.b16 %v73
    %v170 = vunpack.c.l.b16 %v74
    %v171 = vunpack.c.l.b16 %v75
    %v172 = vunpack.c.l.b16 %v76
    %v173 = vunpack.c.l.b16 %v77
    %v174 = vunpack.c.l.b16 %v78
    %v175 = vunpack.c.l.b16 %v79
    %v176 = vunpack.c.l.b16 %v80
    %v177 = vunpack.c.l.b16 %v81
    %v178 = vunpack.c.l.b16 %v82
    %v179 = vunpack.c.l.b16 %v83
    %v180 = vunpack.c.l.b16 %v84
    %v181 = vunpack.c.l.b16 %v85
    %v182 = vpack.c.b16 %v135, %v134
    %v183 = vpack.c.b16 %v137, %v136
    %v184 = vpack.c.b16 %v139, %v138
    %v185 = vpack.c.b16 %v141, %v140
    %v186 = vpack.c.b16 %v143, %v142
    %v187 = vpack.c.b16 %v145, %v144
    %v188 = vpack.c.b16 %v147, %v146
    %v189 = vpack.c.b16 %v149, %v148
    %v190 = vpack.c.b16 %v151, %v150
    %v191 = vpack.c.b16 %v153, %v152
    %v192 = vpack.c.b16 %v155, %v154
    %v193 = vpack.c.b16 %v157, %v156
    %v194 = vpack.c.b16 %v159, %v158
    %v195 = vpack.c.b16 %v161, %v160
    %v196 = vpack.c.b16 %v163, %v162
    %v197 = vpack.c.b16 %v165, %v164
    %v198 = vpack.c.b16 %v167, %v166
    %v199 = vpack.c.b16 %v169, %v168
    %v200 = vpack.c.b16 %v171, %v170
    %v201 = vpack.c.b16 %v173, %v172
    %v202 = vpack.c.b16 %v175, %v174
    %v203 = vpack.c.b16 %v177, %v176
    %v204 = vpack.c.b16 %v179, %v178
    %v205 = vpack.c.b16 %v181, %v180
    %v210 = vunpack.c.l.b16 %v34
    %v211 = vunpack.c.l.b16 %v35
    %v212 = vunpack.c.l.b16 %v36
    %v213 = vunpack.c.l.b16 %v37
    %v214 = vpack.c.b16 %v211, %v210
    %v215 = vpack.c.b16 %v213, %v212
    %vm218 = vcmask 261120
    %v220 = vsel %vm218, %v182, 0
    %v223 = vsel %vm218, %v183, 0
    %v226 = vsel %vm218, %v184, 0
    %v229 = vsel %vm218, %v185, 0
    %v232 = vsel %vm218, %v186, 0
    %v235 = vsel %vm218, %v187, 0
    %v238 = vsel %vm218, %v188, 0
    %v241 = vsel %vm218, %v189, 0
    %v244 = vsel %vm218, %v190, 0
    %v247 = vsel %vm218, %v191, 0
    %v250 = vsel %vm218, %v192, 0
    %v253 = vsel %vm218, %v193, 0
    %v256 = vsel %vm218, %v194, 0
    %v259 = vsel %vm218, %v195, 0
    %v262 = vsel %vm218, %v196, 0
    %v265 = vsel %vm218, %v197, 0
    %v268 = vsel %vm218, %v198, 0
    %v271 = vsel %vm218, %v199, 0
    %v274 = vsel %vm218, %v200, 0
    %v277 = vsel %vm218, %v201, 0
    %v280 = vsel %vm218, %v202, 0
    %v283 = vsel %vm218, %v203, 0
    %v286 = vsel %vm218, %v204, 0
    %v289 = vsel %vm218, %v205, 0
    %291 = vmatpush.bf16.msra.mxu0 0
    %292 = vmatpush.bf16.msra.mxu0 0
    %293 = vmatpush.bf16.msra.mxu0 0
    %294 = vmatpush.bf16.msra.mxu0 0
    %295 = vmatpush.bf16.msra.mxu0 0
    %296 = vmatpush.bf16.msra.mxu0 0
    %297 = vmatpush.bf16.msra.mxu0 %v215
    %298 = vmatpush.bf16.msra.mxu0 %v214
    %299 = vmatmul.bf16.gmra.mxu0 %v220
    %v300 = vpop.f32.mrf.mxu0
    %v301 = vadd.f32 0.0, %v300
    %v302 = vpop.f32.mrf.mxu0
    %v303 = vadd.f32 0.0, %v302
    %304 = vmatmul.bf16.gmra.mxu0 %v223
    %v305 = vpop.f32.mrf.mxu0
    %v306 = vadd.f32 0.0, %v305
    %v307 = vpop.f32.mrf.mxu0
    %v308 = vadd.f32 0.0, %v307
    %309 = vmatmul.bf16.gmra.mxu0 %v226
    %v310 = vpop.f32.mrf.mxu0
    %v311 = vadd.f32 0.0, %v310
    %v312 = vpop.f32.mrf.mxu0
    %v313 = vadd.f32 0.0, %v312
    %314 = vmatmul.bf16.gmra.mxu0 %v229
    %v315 = vpop.f32.mrf.mxu0
    %v316 = vadd.f32 0.0, %v315
    %v317 = vpop.f32.mrf.mxu0
    %v318 = vadd.f32 0.0, %v317
    %319 = vmatmul.bf16.gmra.mxu0 %v232
    %v320 = vpop.f32.mrf.mxu0
    %v321 = vadd.f32 0.0, %v320
    %v322 = vpop.f32.mrf.mxu0
    %v323 = vadd.f32 0.0, %v322
    %324 = vmatmul.bf16.gmra.mxu0 %v235
    %v325 = vpop.f32.mrf.mxu0
    %v326 = vadd.f32 0.0, %v325
    %v327 = vpop.f32.mrf.mxu0
    %v328 = vadd.f32 0.0, %v327
    %329 = vmatmul.bf16.gmra.mxu0 %v238
    %v330 = vpop.f32.mrf.mxu0
    %v331 = vadd.f32 0.0, %v330
    %v332 = vpop.f32.mrf.mxu0
    %v333 = vadd.f32 0.0, %v332
    %334 = vmatmul.bf16.gmra.mxu0 %v241
    %v335 = vpop.f32.mrf.mxu0
    %v336 = vadd.f32 0.0, %v335
    %v337 = vpop.f32.mrf.mxu0
    %v338 = vadd.f32 0.0, %v337
    %339 = vmatmul.bf16.gmra.mxu0 %v244
    %v340 = vpop.f32.mrf.mxu0
    %v341 = vadd.f32 0.0, %v340
    %v342 = vpop.f32.mrf.mxu0
    %v343 = vadd.f32 0.0, %v342
    %344 = vmatmul.bf16.gmra.mxu0 %v247
    %v345 = vpop.f32.mrf.mxu0
    %v346 = vadd.f32 0.0, %v345
    %v347 = vpop.f32.mrf.mxu0
    %v348 = vadd.f32 0.0, %v347
    %349 = vmatmul.bf16.gmra.mxu0 %v250
    %v350 = vpop.f32.mrf.mxu0
    %v351 = vadd.f32 0.0, %v350
    %v352 = vpop.f32.mrf.mxu0
    %v353 = vadd.f32 0.0, %v352
    %354 = vmatmul.bf16.gmra.mxu0 %v253
    %v355 = vpop.f32.mrf.mxu0
    %v356 = vadd.f32 0.0, %v355
    %v357 = vpop.f32.mrf.mxu0
    %v358 = vadd.f32 0.0, %v357
    %359 = vmatmul.bf16.gmra.mxu0 %v256
    %v360 = vpop.f32.mrf.mxu0
    %v361 = vadd.f32 0.0, %v360
    %v362 = vpop.f32.mrf.mxu0
    %v363 = vadd.f32 0.0, %v362
    %364 = vmatmul.bf16.gmra.mxu0 %v259
    %v365 = vpop.f32.mrf.mxu0
    %v366 = vadd.f32 0.0, %v365
    %v367 = vpop.f32.mrf.mxu0
    %v368 = vadd.f32 0.0, %v367
    %369 = vmatmul.bf16.gmra.mxu0 %v262
    %v370 = vpop.f32.mrf.mxu0
    %v371 = vadd.f32 0.0, %v370
    %v372 = vpop.f32.mrf.mxu0
    %v373 = vadd.f32 0.0, %v372
    %374 = vmatmul.bf16.gmra.mxu0 %v265
    %v375 = vpop.f32.mrf.mxu0
    %v376 = vadd.f32 0.0, %v375
    %v377 = vpop.f32.mrf.mxu0
    %v378 = vadd.f32 0.0, %v377
    %379 = vmatmul.bf16.gmra.mxu0 %v268
    %v380 = vpop.f32.mrf.mxu0
    %v381 = vadd.f32 0.0, %v380
    %v382 = vpop.f32.mrf.mxu0
    %v383 = vadd.f32 0.0, %v382
    %384 = vmatmul.bf16.gmra.mxu0 %v271
    %v385 = vpop.f32.mrf.mxu0
    %v386 = vadd.f32 0.0, %v385
    %v387 = vpop.f32.mrf.mxu0
    %v388 = vadd.f32 0.0, %v387
    %389 = vmatmul.bf16.gmra.mxu0 %v274
    %v390 = vpop.f32.mrf.mxu0
    %v391 = vadd.f32 0.0, %v390
    %v392 = vpop.f32.mrf.mxu0
    %v393 = vadd.f32 0.0, %v392
    %394 = vmatmul.bf16.gmra.mxu0 %v277
    %v395 = vpop.f32.mrf.mxu0
    %v396 = vadd.f32 0.0, %v395
    %v397 = vpop.f32.mrf.mxu0
    %v398 = vadd.f32 0.0, %v397
    %399 = vmatmul.bf16.gmra.mxu0 %v280
    %v400 = vpop.f32.mrf.mxu0
    %v401 = vadd.f32 0.0, %v400
    %v402 = vpop.f32.mrf.mxu0
    %v403 = vadd.f32 0.0, %v402
    %404 = vmatmul.bf16.gmra.mxu0 %v283
    %v405 = vpop.f32.mrf.mxu0
    %v406 = vadd.f32 0.0, %v405
    %v407 = vpop.f32.mrf.mxu0
    %v408 = vadd.f32 0.0, %v407
    %409 = vmatmul.bf16.gmra.mxu0 %v286
    %v410 = vpop.f32.mrf.mxu0
    %v411 = vadd.f32 0.0, %v410
    %v412 = vpop.f32.mrf.mxu0
    %v413 = vadd.f32 0.0, %v412
    %414 = vmatmul.bf16.gmra.mxu0 %v289
    %v415 = vpop.f32.mrf.mxu0
    %v416 = vadd.f32 0.0, %v415
    %v417 = vpop.f32.mrf.mxu0
    %v418 = vadd.f32 0.0, %v417
    %419 = vdwg.mxu0
    %s420 = scalar_lea.vmem %s0, 192
    %v421 = vld [vmem:[%s420] sm:$0xf]
    %v422 = vld [vmem:[%s420 + $0x4] sm:$0xf]
    %v423 = vld [vmem:[%s420 + $0x8] sm:$0xf]
    %v424 = vld [vmem:[%s420 + $0xc] sm:$0xf]
    %v425 = vld [vmem:[%s420 + $0x10] sm:$0xf]
    %v426 = vld [vmem:[%s420 + $0x14] sm:$0xf]
    %v427 = vld [vmem:[%s420 + $0x18] sm:$0xf]
    %v428 = vld [vmem:[%s420 + $0x1c] sm:$0xf]
    %v429 = vld [vmem:[%s420 + $0x20] sm:$0xf]
    %v430 = vld [vmem:[%s420 + $0x24] sm:$0xf]
    %v431 = vld [vmem:[%s420 + $0x28] sm:$0xf]
    %v432 = vld [vmem:[%s420 + $0x2c] sm:$0xf]
    %v433 = vld [vmem:[%s420 + $0x30] sm:$0xf]
    %v434 = vld [vmem:[%s420 + $0x34] sm:$0xf]
    %v435 = vld [vmem:[%s420 + $0x38] sm:$0xf]
    %v436 = vld [vmem:[%s420 + $0x3c] sm:$0xf]
    %v437 = vld [vmem:[%s420 + $0x40] sm:$0xf]
    %v438 = vld [vmem:[%s420 + $0x44] sm:$0xf]
    %v439 = vld [vmem:[%s420 + $0x48] sm:$0xf]
    %v440 = vld [vmem:[%s420 + $0x4c] sm:$0xf]
    %v441 = vld [vmem:[%s420 + $0x50] sm:$0xf]
    %v442 = vld [vmem:[%s420 + $0x54] sm:$0xf]
    %v443 = vld [vmem:[%s420 + $0x58] sm:$0xf]
    %v444 = vld [vmem:[%s420 + $0x5c] sm:$0xf]
    %v445 = vld [vmem:[%s420 + $0x60] sm:$0xf]
    %v446 = vld [vmem:[%s420 + $0x64] sm:$0xf]
    %v447 = vld [vmem:[%s420 + $0x68] sm:$0xf]
    %v448 = vld [vmem:[%s420 + $0x6c] sm:$0xf]
    %v449 = vld [vmem:[%s420 + $0x70] sm:$0xf]
    %v450 = vld [vmem:[%s420 + $0x74] sm:$0xf]
    %v451 = vld [vmem:[%s420 + $0x78] sm:$0xf]
    %v452 = vld [vmem:[%s420 + $0x7c] sm:$0xf]
    %v453 = vld [vmem:[%s420 + $0x80] sm:$0xf]
    %v454 = vld [vmem:[%s420 + $0x84] sm:$0xf]
    %v455 = vld [vmem:[%s420 + $0x88] sm:$0xf]
    %v456 = vld [vmem:[%s420 + $0x8c] sm:$0xf]
    %v457 = vld [vmem:[%s420 + $0x90] sm:$0xf]
    %v458 = vld [vmem:[%s420 + $0x94] sm:$0xf]
    %v459 = vld [vmem:[%s420 + $0x98] sm:$0xf]
    %v460 = vld [vmem:[%s420 + $0x9c] sm:$0xf]
    %v461 = vld [vmem:[%s420 + $0xa0] sm:$0xf]
    %v462 = vld [vmem:[%s420 + $0xa4] sm:$0xf]
    %v463 = vld [vmem:[%s420 + $0xa8] sm:$0xf]
    %v464 = vld [vmem:[%s420 + $0xac] sm:$0xf]
    %v465 = vld [vmem:[%s420 + $0xb0] sm:$0xf]
    %v466 = vld [vmem:[%s420 + $0xb4] sm:$0xf]
    %v467 = vld [vmem:[%s420 + $0xb8] sm:$0xf]
    %v468 = vld [vmem:[%s420 + $0xbc] sm:$0xf]
    %v517 = vunpack.c.l.b16 %v421
    %v518 = vunpack.c.l.b16 %v422
    %v519 = vunpack.c.l.b16 %v423
    %v520 = vunpack.c.l.b16 %v424
    %v521 = vunpack.c.l.b16 %v425
    %v522 = vunpack.c.l.b16 %v426
    %v523 = vunpack.c.l.b16 %v427
    %v524 = vunpack.c.l.b16 %v428
    %v525 = vunpack.c.l.b16 %v429
    %v526 = vunpack.c.l.b16 %v430
    %v527 = vunpack.c.l.b16 %v431
    %v528 = vunpack.c.l.b16 %v432
    %v529 = vunpack.c.l.b16 %v433
    %v530 = vunpack.c.l.b16 %v434
    %v531 = vunpack.c.l.b16 %v435
    %v532 = vunpack.c.l.b16 %v436
    %v533 = vunpack.c.l.b16 %v437
    %v534 = vunpack.c.l.b16 %v438
    %v535 = vunpack.c.l.b16 %v439
    %v536 = vunpack.c.l.b16 %v440
    %v537 = vunpack.c.l.b16 %v441
    %v538 = vunpack.c.l.b16 %v442
    %v539 = vunpack.c.l.b16 %v443
    %v540 = vunpack.c.l.b16 %v444
    %v541 = vunpack.c.l.b16 %v445
    %v542 = vunpack.c.l.b16 %v446
    %v543 = vunpack.c.l.b16 %v447
    %v544 = vunpack.c.l.b16 %v448
    %v545 = vunpack.c.l.b16 %v449
    %v546 = vunpack.c.l.b16 %v450
    %v547 = vunpack.c.l.b16 %v451
    %v548 = vunpack.c.l.b16 %v452
    %v549 = vunpack.c.l.b16 %v453
    %v550 = vunpack.c.l.b16 %v454
    %v551 = vunpack.c.l.b16 %v455
    %v552 = vunpack.c.l.b16 %v456
    %v553 = vunpack.c.l.b16 %v457
    %v554 = vunpack.c.l.b16 %v458
    %v555 = vunpack.c.l.b16 %v459
    %v556 = vunpack.c.l.b16 %v460
    %v557 = vunpack.c.l.b16 %v461
    %v558 = vunpack.c.l.b16 %v462
    %v559 = vunpack.c.l.b16 %v463
    %v560 = vunpack.c.l.b16 %v464
    %v561 = vunpack.c.l.b16 %v465
    %v562 = vunpack.c.l.b16 %v466
    %v563 = vunpack.c.l.b16 %v467
    %v564 = vunpack.c.l.b16 %v468
    %v565 = vpack.c.b16 %v518, %v517
    %v566 = vpack.c.b16 %v520, %v519
    %v567 = vpack.c.b16 %v522, %v521
    %v568 = vpack.c.b16 %v524, %v523
    %v569 = vpack.c.b16 %v526, %v525
    %v570 = vpack.c.b16 %v528, %v527
    %v571 = vpack.c.b16 %v530, %v529
    %v572 = vpack.c.b16 %v532, %v531
    %v573 = vpack.c.b16 %v534, %v533
    %v574 = vpack.c.b16 %v536, %v535
    %v575 = vpack.c.b16 %v538, %v537
    %v576 = vpack.c.b16 %v540, %v539
    %v577 = vpack.c.b16 %v542, %v541
    %v578 = vpack.c.b16 %v544, %v543
    %v579 = vpack.c.b16 %v546, %v545
    %v580 = vpack.c.b16 %v548, %v547
    %v581 = vpack.c.b16 %v550, %v549
    %v582 = vpack.c.b16 %v552, %v551
    %v583 = vpack.c.b16 %v554, %v553
    %v584 = vpack.c.b16 %v556, %v555
    %v585 = vpack.c.b16 %v558, %v557
    %v586 = vpack.c.b16 %v560, %v559
    %v587 = vpack.c.b16 %v562, %v561
    %v588 = vpack.c.b16 %v564, %v563
    %v590 = vsel %vm218, %v565, 0
    %v593 = vsel %vm218, %v566, 0
    %v596 = vsel %vm218, %v567, 0
    %v599 = vsel %vm218, %v568, 0
    %v602 = vsel %vm218, %v569, 0
    %v605 = vsel %vm218, %v570, 0
    %v608 = vsel %vm218, %v571, 0
    %v611 = vsel %vm218, %v572, 0
    %v614 = vsel %vm218, %v573, 0
    %v617 = vsel %vm218, %v574, 0
    %v620 = vsel %vm218, %v575, 0
    %v623 = vsel %vm218, %v576, 0
    %v626 = vsel %vm218, %v577, 0
    %v629 = vsel %vm218, %v578, 0
    %v632 = vsel %vm218, %v579, 0
    %v635 = vsel %vm218, %v580, 0
    %v638 = vsel %vm218, %v581, 0
    %v641 = vsel %vm218, %v582, 0
    %v644 = vsel %vm218, %v583, 0
    %v647 = vsel %vm218, %v584, 0
    %v650 = vsel %vm218, %v585, 0
    %v653 = vsel %vm218, %v586, 0
    %v656 = vsel %vm218, %v587, 0
    %v659 = vsel %vm218, %v588, 0
    %661 = vmatpush.bf16.msra.mxu0 0
    %662 = vmatpush.bf16.msra.mxu0 0
    %663 = vmatpush.bf16.msra.mxu0 0
    %664 = vmatpush.bf16.msra.mxu0 0
    %665 = vmatpush.bf16.msra.mxu0 0
    %666 = vmatpush.bf16.msra.mxu0 0
    %667 = vmatpush.bf16.msra.mxu0 %v215
    %668 = vmatpush.bf16.msra.mxu0 %v214
    %669 = vmatmul.bf16.gmra.mxu0 %v590
    %v670 = vpop.f32.mrf.mxu0
    %v671 = vadd.f32 0.0, %v670
    %v672 = vpop.f32.mrf.mxu0
    %v673 = vadd.f32 0.0, %v672
    %674 = vmatmul.bf16.gmra.mxu0 %v593
    %v675 = vpop.f32.mrf.mxu0
    %v676 = vadd.f32 0.0, %v675
    %v677 = vpop.f32.mrf.mxu0
    %v678 = vadd.f32 0.0, %v677
    %679 = vmatmul.bf16.gmra.mxu0 %v596
    %v680 = vpop.f32.mrf.mxu0
    %v681 = vadd.f32 0.0, %v680
    %v682 = vpop.f32.mrf.mxu0
    %v683 = vadd.f32 0.0, %v682
    %684 = vmatmul.bf16.gmra.mxu0 %v599
    %v685 = vpop.f32.mrf.mxu0
    %v686 = vadd.f32 0.0, %v685
    %v687 = vpop.f32.mrf.mxu0
    %v688 = vadd.f32 0.0, %v687
    %689 = vmatmul.bf16.gmra.mxu0 %v602
    %v690 = vpop.f32.mrf.mxu0
    %v691 = vadd.f32 0.0, %v690
    %v692 = vpop.f32.mrf.mxu0
    %v693 = vadd.f32 0.0, %v692
    %694 = vmatmul.bf16.gmra.mxu0 %v605
    %v695 = vpop.f32.mrf.mxu0
    %v696 = vadd.f32 0.0, %v695
    %v697 = vpop.f32.mrf.mxu0
    %v698 = vadd.f32 0.0, %v697
    %699 = vmatmul.bf16.gmra.mxu0 %v608
    %v700 = vpop.f32.mrf.mxu0
    %v701 = vadd.f32 0.0, %v700
    %v702 = vpop.f32.mrf.mxu0
    %v703 = vadd.f32 0.0, %v702
    %704 = vmatmul.bf16.gmra.mxu0 %v611
    %v705 = vpop.f32.mrf.mxu0
    %v706 = vadd.f32 0.0, %v705
    %v707 = vpop.f32.mrf.mxu0
    %v708 = vadd.f32 0.0, %v707
    %709 = vmatmul.bf16.gmra.mxu0 %v614
    %v710 = vpop.f32.mrf.mxu0
    %v711 = vadd.f32 0.0, %v710
    %v712 = vpop.f32.mrf.mxu0
    %v713 = vadd.f32 0.0, %v712
    %714 = vmatmul.bf16.gmra.mxu0 %v617
    %v715 = vpop.f32.mrf.mxu0
    %v716 = vadd.f32 0.0, %v715
    %v717 = vpop.f32.mrf.mxu0
    %v718 = vadd.f32 0.0, %v717
    %719 = vmatmul.bf16.gmra.mxu0 %v620
    %v720 = vpop.f32.mrf.mxu0
    %v721 = vadd.f32 0.0, %v720
    %v722 = vpop.f32.mrf.mxu0
    %v723 = vadd.f32 0.0, %v722
    %724 = vmatmul.bf16.gmra.mxu0 %v623
    %v725 = vpop.f32.mrf.mxu0
    %v726 = vadd.f32 0.0, %v725
    %v727 = vpop.f32.mrf.mxu0
    %v728 = vadd.f32 0.0, %v727
    %729 = vmatmul.bf16.gmra.mxu0 %v626
    %v730 = vpop.f32.mrf.mxu0
    %v731 = vadd.f32 0.0, %v730
    %v732 = vpop.f32.mrf.mxu0
    %v733 = vadd.f32 0.0, %v732
    %734 = vmatmul.bf16.gmra.mxu0 %v629
    %v735 = vpop.f32.mrf.mxu0
    %v736 = vadd.f32 0.0, %v735
    %v737 = vpop.f32.mrf.mxu0
    %v738 = vadd.f32 0.0, %v737
    %739 = vmatmul.bf16.gmra.mxu0 %v632
    %v740 = vpop.f32.mrf.mxu0
    %v741 = vadd.f32 0.0, %v740
    %v742 = vpop.f32.mrf.mxu0
    %v743 = vadd.f32 0.0, %v742
    %744 = vmatmul.bf16.gmra.mxu0 %v635
    %v745 = vpop.f32.mrf.mxu0
    %v746 = vadd.f32 0.0, %v745
    %v747 = vpop.f32.mrf.mxu0
    %v748 = vadd.f32 0.0, %v747
    %749 = vmatmul.bf16.gmra.mxu0 %v638
    %v750 = vpop.f32.mrf.mxu0
    %v751 = vadd.f32 0.0, %v750
    %v752 = vpop.f32.mrf.mxu0
    %v753 = vadd.f32 0.0, %v752
    %754 = vmatmul.bf16.gmra.mxu0 %v641
    %v755 = vpop.f32.mrf.mxu0
    %v756 = vadd.f32 0.0, %v755
    %v757 = vpop.f32.mrf.mxu0
    %v758 = vadd.f32 0.0, %v757
    %759 = vmatmul.bf16.gmra.mxu0 %v644
    %v760 = vpop.f32.mrf.mxu0
    %v761 = vadd.f32 0.0, %v760
    %v762 = vpop.f32.mrf.mxu0
    %v763 = vadd.f32 0.0, %v762
    %764 = vmatmul.bf16.gmra.mxu0 %v647
    %v765 = vpop.f32.mrf.mxu0
    %v766 = vadd.f32 0.0, %v765
    %v767 = vpop.f32.mrf.mxu0
    %v768 = vadd.f32 0.0, %v767
    %769 = vmatmul.bf16.gmra.mxu0 %v650
    %v770 = vpop.f32.mrf.mxu0
    %v771 = vadd.f32 0.0, %v770
    %v772 = vpop.f32.mrf.mxu0
    %v773 = vadd.f32 0.0, %v772
    %774 = vmatmul.bf16.gmra.mxu0 %v653
    %v775 = vpop.f32.mrf.mxu0
    %v776 = vadd.f32 0.0, %v775
    %v777 = vpop.f32.mrf.mxu0
    %v778 = vadd.f32 0.0, %v777
    %779 = vmatmul.bf16.gmra.mxu0 %v656
    %v780 = vpop.f32.mrf.mxu0
    %v781 = vadd.f32 0.0, %v780
    %v782 = vpop.f32.mrf.mxu0
    %v783 = vadd.f32 0.0, %v782
    %784 = vmatmul.bf16.gmra.mxu0 %v659
    %v785 = vpop.f32.mrf.mxu0
    %v786 = vadd.f32 0.0, %v785
    %v787 = vpop.f32.mrf.mxu0
    %v788 = vadd.f32 0.0, %v787
    %789 = vdwg.mxu0
    %v790 = vmax.f32 %v301, %v671
    %v791 = vmax.f32 %v303, %v673
    %v792 = vmax.f32 %v306, %v676
    %v793 = vmax.f32 %v308, %v678
    %v794 = vmax.f32 %v311, %v681
    %v795 = vmax.f32 %v313, %v683
    %v796 = vmax.f32 %v316, %v686
    %v797 = vmax.f32 %v318, %v688
    %v798 = vmax.f32 %v321, %v691
    %v799 = vmax.f32 %v323, %v693
    %v800 = vmax.f32 %v326, %v696
    %v801 = vmax.f32 %v328, %v698
    %v802 = vmax.f32 %v331, %v701
    %v803 = vmax.f32 %v333, %v703
    %v804 = vmax.f32 %v336, %v706
    %v805 = vmax.f32 %v338, %v708
    %v806 = vmax.f32 %v341, %v711
    %v807 = vmax.f32 %v343, %v713
    %v808 = vmax.f32 %v346, %v716
    %v809 = vmax.f32 %v348, %v718
    %v810 = vmax.f32 %v351, %v721
    %v811 = vmax.f32 %v353, %v723
    %v812 = vmax.f32 %v356, %v726
    %v813 = vmax.f32 %v358, %v728
    %v814 = vmax.f32 %v361, %v731
    %v815 = vmax.f32 %v363, %v733
    %v816 = vmax.f32 %v366, %v736
    %v817 = vmax.f32 %v368, %v738
    %v818 = vmax.f32 %v371, %v741
    %v819 = vmax.f32 %v373, %v743
    %v820 = vmax.f32 %v376, %v746
    %v821 = vmax.f32 %v378, %v748
    %v822 = vmax.f32 %v381, %v751
    %v823 = vmax.f32 %v383, %v753
    %v824 = vmax.f32 %v386, %v756
    %v825 = vmax.f32 %v388, %v758
    %v826 = vmax.f32 %v391, %v761
    %v827 = vmax.f32 %v393, %v763
    %v828 = vmax.f32 %v396, %v766
    %v829 = vmax.f32 %v398, %v768
    %v830 = vmax.f32 %v401, %v771
    %v831 = vmax.f32 %v403, %v773
    %v832 = vmax.f32 %v406, %v776
    %v833 = vmax.f32 %v408, %v778
    %v834 = vmax.f32 %v411, %v781
    %v835 = vmax.f32 %v413, %v783
    %v836 = vmax.f32 %v416, %v786
    %v837 = vmax.f32 %v418, %v788
    %s838 = scalar_lea.vmem %s0, 384
    %v839 = vld [vmem:[%s838] sm:$0xf]
    %v840 = vld [vmem:[%s838 + $0x4] sm:$0xf]
    %v841 = vld [vmem:[%s838 + $0x8] sm:$0xf]
    %v842 = vld [vmem:[%s838 + $0xc] sm:$0xf]
    %v843 = vld [vmem:[%s838 + $0x10] sm:$0xf]
    %v844 = vld [vmem:[%s838 + $0x14] sm:$0xf]
    %v845 = vld [vmem:[%s838 + $0x18] sm:$0xf]
    %v846 = vld [vmem:[%s838 + $0x1c] sm:$0xf]
    %v847 = vld [vmem:[%s838 + $0x20] sm:$0xf]
    %v848 = vld [vmem:[%s838 + $0x24] sm:$0xf]
    %v849 = vld [vmem:[%s838 + $0x28] sm:$0xf]
    %v850 = vld [vmem:[%s838 + $0x2c] sm:$0xf]
    %v851 = vld [vmem:[%s838 + $0x30] sm:$0xf]
    %v852 = vld [vmem:[%s838 + $0x34] sm:$0xf]
    %v853 = vld [vmem:[%s838 + $0x38] sm:$0xf]
    %v854 = vld [vmem:[%s838 + $0x3c] sm:$0xf]
    %v855 = vld [vmem:[%s838 + $0x40] sm:$0xf]
    %v856 = vld [vmem:[%s838 + $0x44] sm:$0xf]
    %v857 = vld [vmem:[%s838 + $0x48] sm:$0xf]
    %v858 = vld [vmem:[%s838 + $0x4c] sm:$0xf]
    %v859 = vld [vmem:[%s838 + $0x50] sm:$0xf]
    %v860 = vld [vmem:[%s838 + $0x54] sm:$0xf]
    %v861 = vld [vmem:[%s838 + $0x58] sm:$0xf]
    %v862 = vld [vmem:[%s838 + $0x5c] sm:$0xf]
    %v863 = vld [vmem:[%s838 + $0x60] sm:$0xf]
    %v864 = vld [vmem:[%s838 + $0x64] sm:$0xf]
    %v865 = vld [vmem:[%s838 + $0x68] sm:$0xf]
    %v866 = vld [vmem:[%s838 + $0x6c] sm:$0xf]
    %v867 = vld [vmem:[%s838 + $0x70] sm:$0xf]
    %v868 = vld [vmem:[%s838 + $0x74] sm:$0xf]
    %v869 = vld [vmem:[%s838 + $0x78] sm:$0xf]
    %v870 = vld [vmem:[%s838 + $0x7c] sm:$0xf]
    %v871 = vld [vmem:[%s838 + $0x80] sm:$0xf]
    %v872 = vld [vmem:[%s838 + $0x84] sm:$0xf]
    %v873 = vld [vmem:[%s838 + $0x88] sm:$0xf]
    %v874 = vld [vmem:[%s838 + $0x8c] sm:$0xf]
    %v875 = vld [vmem:[%s838 + $0x90] sm:$0xf]
    %v876 = vld [vmem:[%s838 + $0x94] sm:$0xf]
    %v877 = vld [vmem:[%s838 + $0x98] sm:$0xf]
    %v878 = vld [vmem:[%s838 + $0x9c] sm:$0xf]
    %v879 = vld [vmem:[%s838 + $0xa0] sm:$0xf]
    %v880 = vld [vmem:[%s838 + $0xa4] sm:$0xf]
    %v881 = vld [vmem:[%s838 + $0xa8] sm:$0xf]
    %v882 = vld [vmem:[%s838 + $0xac] sm:$0xf]
    %v883 = vld [vmem:[%s838 + $0xb0] sm:$0xf]
    %v884 = vld [vmem:[%s838 + $0xb4] sm:$0xf]
    %v885 = vld [vmem:[%s838 + $0xb8] sm:$0xf]
    %v886 = vld [vmem:[%s838 + $0xbc] sm:$0xf]
    %v935 = vunpack.c.l.b16 %v839
    %v936 = vunpack.c.l.b16 %v840
    %v937 = vunpack.c.l.b16 %v841
    %v938 = vunpack.c.l.b16 %v842
    %v939 = vunpack.c.l.b16 %v843
    %v940 = vunpack.c.l.b16 %v844
    %v941 = vunpack.c.l.b16 %v845
    %v942 = vunpack.c.l.b16 %v846
    %v943 = vunpack.c.l.b16 %v847
    %v944 = vunpack.c.l.b16 %v848
    %v945 = vunpack.c.l.b16 %v849
    %v946 = vunpack.c.l.b16 %v850
    %v947 = vunpack.c.l.b16 %v851
    %v948 = vunpack.c.l.b16 %v852
    %v949 = vunpack.c.l.b16 %v853
    %v950 = vunpack.c.l.b16 %v854
    %v951 = vunpack.c.l.b16 %v855
    %v952 = vunpack.c.l.b16 %v856
    %v953 = vunpack.c.l.b16 %v857
    %v954 = vunpack.c.l.b16 %v858
    %v955 = vunpack.c.l.b16 %v859
    %v956 = vunpack.c.l.b16 %v860
    %v957 = vunpack.c.l.b16 %v861
    %v958 = vunpack.c.l.b16 %v862
    %v959 = vunpack.c.l.b16 %v863
    %v960 = vunpack.c.l.b16 %v864
    %v961 = vunpack.c.l.b16 %v865
    %v962 = vunpack.c.l.b16 %v866
    %v963 = vunpack.c.l.b16 %v867
    %v964 = vunpack.c.l.b16 %v868
    %v965 = vunpack.c.l.b16 %v869
    %v966 = vunpack.c.l.b16 %v870
    %v967 = vunpack.c.l.b16 %v871
    %v968 = vunpack.c.l.b16 %v872
    %v969 = vunpack.c.l.b16 %v873
    %v970 = vunpack.c.l.b16 %v874
    %v971 = vunpack.c.l.b16 %v875
    %v972 = vunpack.c.l.b16 %v876
    %v973 = vunpack.c.l.b16 %v877
    %v974 = vunpack.c.l.b16 %v878
    %v975 = vunpack.c.l.b16 %v879
    %v976 = vunpack.c.l.b16 %v880
    %v977 = vunpack.c.l.b16 %v881
    %v978 = vunpack.c.l.b16 %v882
    %v979 = vunpack.c.l.b16 %v883
    %v980 = vunpack.c.l.b16 %v884
    %v981 = vunpack.c.l.b16 %v885
    %v982 = vunpack.c.l.b16 %v886
    %v983 = vpack.c.b16 %v936, %v935
    %v984 = vpack.c.b16 %v938, %v937
    %v985 = vpack.c.b16 %v940, %v939
    %v986 = vpack.c.b16 %v942, %v941
    %v987 = vpack.c.b16 %v944, %v943
    %v988 = vpack.c.b16 %v946, %v945
    %v989 = vpack.c.b16 %v948, %v947
    %v990 = vpack.c.b16 %v950, %v949
    %v991 = vpack.c.b16 %v952, %v951
    %v992 = vpack.c.b16 %v954, %v953
    %v993 = vpack.c.b16 %v956, %v955
    %v994 = vpack.c.b16 %v958, %v957
    %v995 = vpack.c.b16 %v960, %v959
    %v996 = vpack.c.b16 %v962, %v961
    %v997 = vpack.c.b16 %v964, %v963
    %v998 = vpack.c.b16 %v966, %v965
    %v999 = vpack.c.b16 %v968, %v967
    %v1000 = vpack.c.b16 %v970, %v969
    %v1001 = vpack.c.b16 %v972, %v971
    %v1002 = vpack.c.b16 %v974, %v973
    %v1003 = vpack.c.b16 %v976, %v975
    %v1004 = vpack.c.b16 %v978, %v977
    %v1005 = vpack.c.b16 %v980, %v979
    %v1006 = vpack.c.b16 %v982, %v981
    %v1008 = vsel %vm218, %v983, 0
    %v1011 = vsel %vm218, %v984, 0
    %v1014 = vsel %vm218, %v985, 0
    %v1017 = vsel %vm218, %v986, 0
    %v1020 = vsel %vm218, %v987, 0
    %v1023 = vsel %vm218, %v988, 0
    %v1026 = vsel %vm218, %v989, 0
    %v1029 = vsel %vm218, %v990, 0
    %v1032 = vsel %vm218, %v991, 0
    %v1035 = vsel %vm218, %v992, 0
    %v1038 = vsel %vm218, %v993, 0
    %v1041 = vsel %vm218, %v994, 0
    %v1044 = vsel %vm218, %v995, 0
    %v1047 = vsel %vm218, %v996, 0
    %v1050 = vsel %vm218, %v997, 0
    %v1053 = vsel %vm218, %v998, 0
    %v1056 = vsel %vm218, %v999, 0
    %v1059 = vsel %vm218, %v1000, 0
    %v1062 = vsel %vm218, %v1001, 0
    %v1065 = vsel %vm218, %v1002, 0
    %v1068 = vsel %vm218, %v1003, 0
    %v1071 = vsel %vm218, %v1004, 0
    %v1074 = vsel %vm218, %v1005, 0
    %v1077 = vsel %vm218, %v1006, 0
    %1079 = vmatpush.bf16.msra.mxu0 0
    %1080 = vmatpush.bf16.msra.mxu0 0
    %1081 = vmatpush.bf16.msra.mxu0 0
    %1082 = vmatpush.bf16.msra.mxu0 0
    %1083 = vmatpush.bf16.msra.mxu0 0
    %1084 = vmatpush.bf16.msra.mxu0 0
    %1085 = vmatpush.bf16.msra.mxu0 %v215
    %1086 = vmatpush.bf16.msra.mxu0 %v214
    %1087 = vmatmul.bf16.gmra.mxu0 %v1008
    %v1088 = vpop.f32.mrf.mxu0
    %v1089 = vadd.f32 0.0, %v1088
    %v1090 = vpop.f32.mrf.mxu0
    %v1091 = vadd.f32 0.0, %v1090
    %1092 = vmatmul.bf16.gmra.mxu0 %v1011
    %v1093 = vpop.f32.mrf.mxu0
    %v1094 = vadd.f32 0.0, %v1093
    %v1095 = vpop.f32.mrf.mxu0
    %v1096 = vadd.f32 0.0, %v1095
    %1097 = vmatmul.bf16.gmra.mxu0 %v1014
    %v1098 = vpop.f32.mrf.mxu0
    %v1099 = vadd.f32 0.0, %v1098
    %v1100 = vpop.f32.mrf.mxu0
    %v1101 = vadd.f32 0.0, %v1100
    %1102 = vmatmul.bf16.gmra.mxu0 %v1017
    %v1103 = vpop.f32.mrf.mxu0
    %v1104 = vadd.f32 0.0, %v1103
    %v1105 = vpop.f32.mrf.mxu0
    %v1106 = vadd.f32 0.0, %v1105
    %1107 = vmatmul.bf16.gmra.mxu0 %v1020
    %v1108 = vpop.f32.mrf.mxu0
    %v1109 = vadd.f32 0.0, %v1108
    %v1110 = vpop.f32.mrf.mxu0
    %v1111 = vadd.f32 0.0, %v1110
    %1112 = vmatmul.bf16.gmra.mxu0 %v1023
    %v1113 = vpop.f32.mrf.mxu0
    %v1114 = vadd.f32 0.0, %v1113
    %v1115 = vpop.f32.mrf.mxu0
    %v1116 = vadd.f32 0.0, %v1115
    %1117 = vmatmul.bf16.gmra.mxu0 %v1026
    %v1118 = vpop.f32.mrf.mxu0
    %v1119 = vadd.f32 0.0, %v1118
    %v1120 = vpop.f32.mrf.mxu0
    %v1121 = vadd.f32 0.0, %v1120
    %1122 = vmatmul.bf16.gmra.mxu0 %v1029
    %v1123 = vpop.f32.mrf.mxu0
    %v1124 = vadd.f32 0.0, %v1123
    %v1125 = vpop.f32.mrf.mxu0
    %v1126 = vadd.f32 0.0, %v1125
    %1127 = vmatmul.bf16.gmra.mxu0 %v1032
    %v1128 = vpop.f32.mrf.mxu0
    %v1129 = vadd.f32 0.0, %v1128
    %v1130 = vpop.f32.mrf.mxu0
    %v1131 = vadd.f32 0.0, %v1130
    %1132 = vmatmul.bf16.gmra.mxu0 %v1035
    %v1133 = vpop.f32.mrf.mxu0
    %v1134 = vadd.f32 0.0, %v1133
    %v1135 = vpop.f32.mrf.mxu0
    %v1136 = vadd.f32 0.0, %v1135
    %1137 = vmatmul.bf16.gmra.mxu0 %v1038
    %v1138 = vpop.f32.mrf.mxu0
    %v1139 = vadd.f32 0.0, %v1138
    %v1140 = vpop.f32.mrf.mxu0
    %v1141 = vadd.f32 0.0, %v1140
    %1142 = vmatmul.bf16.gmra.mxu0 %v1041
    %v1143 = vpop.f32.mrf.mxu0
    %v1144 = vadd.f32 0.0, %v1143
    %v1145 = vpop.f32.mrf.mxu0
    %v1146 = vadd.f32 0.0, %v1145
    %1147 = vmatmul.bf16.gmra.mxu0 %v1044
    %v1148 = vpop.f32.mrf.mxu0
    %v1149 = vadd.f32 0.0, %v1148
    %v1150 = vpop.f32.mrf.mxu0
    %v1151 = vadd.f32 0.0, %v1150
    %1152 = vmatmul.bf16.gmra.mxu0 %v1047
    %v1153 = vpop.f32.mrf.mxu0
    %v1154 = vadd.f32 0.0, %v1153
    %v1155 = vpop.f32.mrf.mxu0
    %v1156 = vadd.f32 0.0, %v1155
    %1157 = vmatmul.bf16.gmra.mxu0 %v1050
    %v1158 = vpop.f32.mrf.mxu0
    %v1159 = vadd.f32 0.0, %v1158
    %v1160 = vpop.f32.mrf.mxu0
    %v1161 = vadd.f32 0.0, %v1160
    %1162 = vmatmul.bf16.gmra.mxu0 %v1053
    %v1163 = vpop.f32.mrf.mxu0
    %v1164 = vadd.f32 0.0, %v1163
    %v1165 = vpop.f32.mrf.mxu0
    %v1166 = vadd.f32 0.0, %v1165
    %1167 = vmatmul.bf16.gmra.mxu0 %v1056
    %v1168 = vpop.f32.mrf.mxu0
    %v1169 = vadd.f32 0.0, %v1168
    %v1170 = vpop.f32.mrf.mxu0
    %v1171 = vadd.f32 0.0, %v1170
    %1172 = vmatmul.bf16.gmra.mxu0 %v1059
    %v1173 = vpop.f32.mrf.mxu0
    %v1174 = vadd.f32 0.0, %v1173
    %v1175 = vpop.f32.mrf.mxu0
    %v1176 = vadd.f32 0.0, %v1175
    %1177 = vmatmul.bf16.gmra.mxu0 %v1062
    %v1178 = vpop.f32.mrf.mxu0
    %v1179 = vadd.f32 0.0, %v1178
    %v1180 = vpop.f32.mrf.mxu0
    %v1181 = vadd.f32 0.0, %v1180
    %1182 = vmatmul.bf16.gmra.mxu0 %v1065
    %v1183 = vpop.f32.mrf.mxu0
    %v1184 = vadd.f32 0.0, %v1183
    %v1185 = vpop.f32.mrf.mxu0
    %v1186 = vadd.f32 0.0, %v1185
    %1187 = vmatmul.bf16.gmra.mxu0 %v1068
    %v1188 = vpop.f32.mrf.mxu0
    %v1189 = vadd.f32 0.0, %v1188
    %v1190 = vpop.f32.mrf.mxu0
    %v1191 = vadd.f32 0.0, %v1190
    %1192 = vmatmul.bf16.gmra.mxu0 %v1071
    %v1193 = vpop.f32.mrf.mxu0
    %v1194 = vadd.f32 0.0, %v1193
    %v1195 = vpop.f32.mrf.mxu0
    %v1196 = vadd.f32 0.0, %v1195
    %1197 = vmatmul.bf16.gmra.mxu0 %v1074
    %v1198 = vpop.f32.mrf.mxu0
    %v1199 = vadd.f32 0.0, %v1198
    %v1200 = vpop.f32.mrf.mxu0
    %v1201 = vadd.f32 0.0, %v1200
    %1202 = vmatmul.bf16.gmra.mxu0 %v1077
    %v1203 = vpop.f32.mrf.mxu0
    %v1204 = vadd.f32 0.0, %v1203
    %v1205 = vpop.f32.mrf.mxu0
    %v1206 = vadd.f32 0.0, %v1205
    %1207 = vdwg.mxu0
    %v1208 = vmax.f32 %v790, %v1089
    %v1209 = vmax.f32 %v791, %v1091
    %v1210 = vmax.f32 %v792, %v1094
    %v1211 = vmax.f32 %v793, %v1096
    %v1212 = vmax.f32 %v794, %v1099
    %v1213 = vmax.f32 %v795, %v1101
    %v1214 = vmax.f32 %v796, %v1104
    %v1215 = vmax.f32 %v797, %v1106
    %v1216 = vmax.f32 %v798, %v1109
    %v1217 = vmax.f32 %v799, %v1111
    %v1218 = vmax.f32 %v800, %v1114
    %v1219 = vmax.f32 %v801, %v1116
    %v1220 = vmax.f32 %v802, %v1119
    %v1221 = vmax.f32 %v803, %v1121
    %v1222 = vmax.f32 %v804, %v1124
    %v1223 = vmax.f32 %v805, %v1126
    %v1224 = vmax.f32 %v806, %v1129
    %v1225 = vmax.f32 %v807, %v1131
    %v1226 = vmax.f32 %v808, %v1134
    %v1227 = vmax.f32 %v809, %v1136
    %v1228 = vmax.f32 %v810, %v1139
    %v1229 = vmax.f32 %v811, %v1141
    %v1230 = vmax.f32 %v812, %v1144
    %v1231 = vmax.f32 %v813, %v1146
    %v1232 = vmax.f32 %v814, %v1149
    %v1233 = vmax.f32 %v815, %v1151
    %v1234 = vmax.f32 %v816, %v1154
    %v1235 = vmax.f32 %v817, %v1156
    %v1236 = vmax.f32 %v818, %v1159
    %v1237 = vmax.f32 %v819, %v1161
    %v1238 = vmax.f32 %v820, %v1164
    %v1239 = vmax.f32 %v821, %v1166
    %v1240 = vmax.f32 %v822, %v1169
    %v1241 = vmax.f32 %v823, %v1171
    %v1242 = vmax.f32 %v824, %v1174
    %v1243 = vmax.f32 %v825, %v1176
    %v1244 = vmax.f32 %v826, %v1179
    %v1245 = vmax.f32 %v827, %v1181
    %v1246 = vmax.f32 %v828, %v1184
    %v1247 = vmax.f32 %v829, %v1186
    %v1248 = vmax.f32 %v830, %v1189
    %v1249 = vmax.f32 %v831, %v1191
    %v1250 = vmax.f32 %v832, %v1194
    %v1251 = vmax.f32 %v833, %v1196
    %v1252 = vmax.f32 %v834, %v1199
    %v1253 = vmax.f32 %v835, %v1201
    %v1254 = vmax.f32 %v836, %v1204
    %v1255 = vmax.f32 %v837, %v1206
    %s1256 = scalar_lea.vmem %s0, 576
    %v1257 = vld [vmem:[%s1256] sm:$0xf]
    %v1258 = vld [vmem:[%s1256 + $0x4] sm:$0xf]
    %v1259 = vld [vmem:[%s1256 + $0x8] sm:$0xf]
    %v1260 = vld [vmem:[%s1256 + $0xc] sm:$0xf]
    %v1261 = vld [vmem:[%s1256 + $0x10] sm:$0xf]
    %v1262 = vld [vmem:[%s1256 + $0x14] sm:$0xf]
    %v1263 = vld [vmem:[%s1256 + $0x18] sm:$0xf]
    %v1264 = vld [vmem:[%s1256 + $0x1c] sm:$0xf]
    %v1265 = vld [vmem:[%s1256 + $0x20] sm:$0xf]
    %v1266 = vld [vmem:[%s1256 + $0x24] sm:$0xf]
    %v1267 = vld [vmem:[%s1256 + $0x28] sm:$0xf]
    %v1268 = vld [vmem:[%s1256 + $0x2c] sm:$0xf]
    %v1269 = vld [vmem:[%s1256 + $0x30] sm:$0xf]
    %v1270 = vld [vmem:[%s1256 + $0x34] sm:$0xf]
    %v1271 = vld [vmem:[%s1256 + $0x38] sm:$0xf]
    %v1272 = vld [vmem:[%s1256 + $0x3c] sm:$0xf]
    %v1273 = vld [vmem:[%s1256 + $0x40] sm:$0xf]
    %v1274 = vld [vmem:[%s1256 + $0x44] sm:$0xf]
    %v1275 = vld [vmem:[%s1256 + $0x48] sm:$0xf]
    %v1276 = vld [vmem:[%s1256 + $0x4c] sm:$0xf]
    %v1277 = vld [vmem:[%s1256 + $0x50] sm:$0xf]
    %v1278 = vld [vmem:[%s1256 + $0x54] sm:$0xf]
    %v1279 = vld [vmem:[%s1256 + $0x58] sm:$0xf]
    %v1280 = vld [vmem:[%s1256 + $0x5c] sm:$0xf]
    %v1281 = vld [vmem:[%s1256 + $0x60] sm:$0xf]
    %v1282 = vld [vmem:[%s1256 + $0x64] sm:$0xf]
    %v1283 = vld [vmem:[%s1256 + $0x68] sm:$0xf]
    %v1284 = vld [vmem:[%s1256 + $0x6c] sm:$0xf]
    %v1285 = vld [vmem:[%s1256 + $0x70] sm:$0xf]
    %v1286 = vld [vmem:[%s1256 + $0x74] sm:$0xf]
    %v1287 = vld [vmem:[%s1256 + $0x78] sm:$0xf]
    %v1288 = vld [vmem:[%s1256 + $0x7c] sm:$0xf]
    %v1289 = vld [vmem:[%s1256 + $0x80] sm:$0xf]
    %v1290 = vld [vmem:[%s1256 + $0x84] sm:$0xf]
    %v1291 = vld [vmem:[%s1256 + $0x88] sm:$0xf]
    %v1292 = vld [vmem:[%s1256 + $0x8c] sm:$0xf]
    %v1293 = vld [vmem:[%s1256 + $0x90] sm:$0xf]
    %v1294 = vld [vmem:[%s1256 + $0x94] sm:$0xf]
    %v1295 = vld [vmem:[%s1256 + $0x98] sm:$0xf]
    %v1296 = vld [vmem:[%s1256 + $0x9c] sm:$0xf]
    %v1297 = vld [vmem:[%s1256 + $0xa0] sm:$0xf]
    %v1298 = vld [vmem:[%s1256 + $0xa4] sm:$0xf]
    %v1299 = vld [vmem:[%s1256 + $0xa8] sm:$0xf]
    %v1300 = vld [vmem:[%s1256 + $0xac] sm:$0xf]
    %v1301 = vld [vmem:[%s1256 + $0xb0] sm:$0xf]
    %v1302 = vld [vmem:[%s1256 + $0xb4] sm:$0xf]
    %v1303 = vld [vmem:[%s1256 + $0xb8] sm:$0xf]
    %v1304 = vld [vmem:[%s1256 + $0xbc] sm:$0xf]
    %v1353 = vunpack.c.l.b16 %v1257
    %v1354 = vunpack.c.l.b16 %v1258
    %v1355 = vunpack.c.l.b16 %v1259
    %v1356 = vunpack.c.l.b16 %v1260
    %v1357 = vunpack.c.l.b16 %v1261
    %v1358 = vunpack.c.l.b16 %v1262
    %v1359 = vunpack.c.l.b16 %v1263
    %v1360 = vunpack.c.l.b16 %v1264
    %v1361 = vunpack.c.l.b16 %v1265
    %v1362 = vunpack.c.l.b16 %v1266
    %v1363 = vunpack.c.l.b16 %v1267
    %v1364 = vunpack.c.l.b16 %v1268
    %v1365 = vunpack.c.l.b16 %v1269
    %v1366 = vunpack.c.l.b16 %v1270
    %v1367 = vunpack.c.l.b16 %v1271
    %v1368 = vunpack.c.l.b16 %v1272
    %v1369 = vunpack.c.l.b16 %v1273
    %v1370 = vunpack.c.l.b16 %v1274
    %v1371 = vunpack.c.l.b16 %v1275
    %v1372 = vunpack.c.l.b16 %v1276
    %v1373 = vunpack.c.l.b16 %v1277
    %v1374 = vunpack.c.l.b16 %v1278
    %v1375 = vunpack.c.l.b16 %v1279
    %v1376 = vunpack.c.l.b16 %v1280
    %v1377 = vunpack.c.l.b16 %v1281
    %v1378 = vunpack.c.l.b16 %v1282
    %v1379 = vunpack.c.l.b16 %v1283
    %v1380 = vunpack.c.l.b16 %v1284
    %v1381 = vunpack.c.l.b16 %v1285
    %v1382 = vunpack.c.l.b16 %v1286
    %v1383 = vunpack.c.l.b16 %v1287
    %v1384 = vunpack.c.l.b16 %v1288
    %v1385 = vunpack.c.l.b16 %v1289
    %v1386 = vunpack.c.l.b16 %v1290
    %v1387 = vunpack.c.l.b16 %v1291
    %v1388 = vunpack.c.l.b16 %v1292
    %v1389 = vunpack.c.l.b16 %v1293
    %v1390 = vunpack.c.l.b16 %v1294
    %v1391 = vunpack.c.l.b16 %v1295
    %v1392 = vunpack.c.l.b16 %v1296
    %v1393 = vunpack.c.l.b16 %v1297
    %v1394 = vunpack.c.l.b16 %v1298
    %v1395 = vunpack.c.l.b16 %v1299
    %v1396 = vunpack.c.l.b16 %v1300
    %v1397 = vunpack.c.l.b16 %v1301
    %v1398 = vunpack.c.l.b16 %v1302
    %v1399 = vunpack.c.l.b16 %v1303
    %v1400 = vunpack.c.l.b16 %v1304
    %v1401 = vpack.c.b16 %v1354, %v1353
    %v1402 = vpack.c.b16 %v1356, %v1355
    %v1403 = vpack.c.b16 %v1358, %v1357
    %v1404 = vpack.c.b16 %v1360, %v1359
    %v1405 = vpack.c.b16 %v1362, %v1361
    %v1406 = vpack.c.b16 %v1364, %v1363
    %v1407 = vpack.c.b16 %v1366, %v1365
    %v1408 = vpack.c.b16 %v1368, %v1367
    %v1409 = vpack.c.b16 %v1370, %v1369
    %v1410 = vpack.c.b16 %v1372, %v1371
    %v1411 = vpack.c.b16 %v1374, %v1373
    %v1412 = vpack.c.b16 %v1376, %v1375
    %v1413 = vpack.c.b16 %v1378, %v1377
    %v1414 = vpack.c.b16 %v1380, %v1379
    %v1415 = vpack.c.b16 %v1382, %v1381
    %v1416 = vpack.c.b16 %v1384, %v1383
    %v1417 = vpack.c.b16 %v1386, %v1385
    %v1418 = vpack.c.b16 %v1388, %v1387
    %v1419 = vpack.c.b16 %v1390, %v1389
    %v1420 = vpack.c.b16 %v1392, %v1391
    %v1421 = vpack.c.b16 %v1394, %v1393
    %v1422 = vpack.c.b16 %v1396, %v1395
    %v1423 = vpack.c.b16 %v1398, %v1397
    %v1424 = vpack.c.b16 %v1400, %v1399
    %v1426 = vsel %vm218, %v1401, 0
    %v1429 = vsel %vm218, %v1402, 0
    %v1432 = vsel %vm218, %v1403, 0
    %v1435 = vsel %vm218, %v1404, 0
    %v1438 = vsel %vm218, %v1405, 0
    %v1441 = vsel %vm218, %v1406, 0
    %v1444 = vsel %vm218, %v1407, 0
    %v1447 = vsel %vm218, %v1408, 0
    %v1450 = vsel %vm218, %v1409, 0
    %v1453 = vsel %vm218, %v1410, 0
    %v1456 = vsel %vm218, %v1411, 0
    %v1459 = vsel %vm218, %v1412, 0
    %v1462 = vsel %vm218, %v1413, 0
    %v1465 = vsel %vm218, %v1414, 0
    %v1468 = vsel %vm218, %v1415, 0
    %v1471 = vsel %vm218, %v1416, 0
    %v1474 = vsel %vm218, %v1417, 0
    %v1477 = vsel %vm218, %v1418, 0
    %v1480 = vsel %vm218, %v1419, 0
    %v1483 = vsel %vm218, %v1420, 0
    %v1486 = vsel %vm218, %v1421, 0
    %v1489 = vsel %vm218, %v1422, 0
    %v1492 = vsel %vm218, %v1423, 0
    %v1495 = vsel %vm218, %v1424, 0
    %1497 = vmatpush.bf16.msra.mxu0 0
    %1498 = vmatpush.bf16.msra.mxu0 0
    %1499 = vmatpush.bf16.msra.mxu0 0
    %1500 = vmatpush.bf16.msra.mxu0 0
    %1501 = vmatpush.bf16.msra.mxu0 0
    %1502 = vmatpush.bf16.msra.mxu0 0
    %1503 = vmatpush.bf16.msra.mxu0 %v215
    %1504 = vmatpush.bf16.msra.mxu0 %v214
    %1505 = vmatmul.bf16.gmra.mxu0 %v1426
    %v1506 = vpop.f32.mrf.mxu0
    %v1507 = vadd.f32 0.0, %v1506
    %v1508 = vpop.f32.mrf.mxu0
    %v1509 = vadd.f32 0.0, %v1508
    %1510 = vmatmul.bf16.gmra.mxu0 %v1429
    %v1511 = vpop.f32.mrf.mxu0
    %v1512 = vadd.f32 0.0, %v1511
    %v1513 = vpop.f32.mrf.mxu0
    %v1514 = vadd.f32 0.0, %v1513
    %1515 = vmatmul.bf16.gmra.mxu0 %v1432
    %v1516 = vpop.f32.mrf.mxu0
    %v1517 = vadd.f32 0.0, %v1516
    %v1518 = vpop.f32.mrf.mxu0
    %v1519 = vadd.f32 0.0, %v1518
    %1520 = vmatmul.bf16.gmra.mxu0 %v1435
    %v1521 = vpop.f32.mrf.mxu0
    %v1522 = vadd.f32 0.0, %v1521
    %v1523 = vpop.f32.mrf.mxu0
    %v1524 = vadd.f32 0.0, %v1523
    %1525 = vmatmul.bf16.gmra.mxu0 %v1438
    %v1526 = vpop.f32.mrf.mxu0
    %v1527 = vadd.f32 0.0, %v1526
    %v1528 = vpop.f32.mrf.mxu0
    %v1529 = vadd.f32 0.0, %v1528
    %1530 = vmatmul.bf16.gmra.mxu0 %v1441
    %v1531 = vpop.f32.mrf.mxu0
    %v1532 = vadd.f32 0.0, %v1531
    %v1533 = vpop.f32.mrf.mxu0
    %v1534 = vadd.f32 0.0, %v1533
    %1535 = vmatmul.bf16.gmra.mxu0 %v1444
    %v1536 = vpop.f32.mrf.mxu0
    %v1537 = vadd.f32 0.0, %v1536
    %v1538 = vpop.f32.mrf.mxu0
    %v1539 = vadd.f32 0.0, %v1538
    %1540 = vmatmul.bf16.gmra.mxu0 %v1447
    %v1541 = vpop.f32.mrf.mxu0
    %v1542 = vadd.f32 0.0, %v1541
    %v1543 = vpop.f32.mrf.mxu0
    %v1544 = vadd.f32 0.0, %v1543
    %1545 = vmatmul.bf16.gmra.mxu0 %v1450
    %v1546 = vpop.f32.mrf.mxu0
    %v1547 = vadd.f32 0.0, %v1546
    %v1548 = vpop.f32.mrf.mxu0
    %v1549 = vadd.f32 0.0, %v1548
    %1550 = vmatmul.bf16.gmra.mxu0 %v1453
    %v1551 = vpop.f32.mrf.mxu0
    %v1552 = vadd.f32 0.0, %v1551
    %v1553 = vpop.f32.mrf.mxu0
    %v1554 = vadd.f32 0.0, %v1553
    %1555 = vmatmul.bf16.gmra.mxu0 %v1456
    %v1556 = vpop.f32.mrf.mxu0
    %v1557 = vadd.f32 0.0, %v1556
    %v1558 = vpop.f32.mrf.mxu0
    %v1559 = vadd.f32 0.0, %v1558
    %1560 = vmatmul.bf16.gmra.mxu0 %v1459
    %v1561 = vpop.f32.mrf.mxu0
    %v1562 = vadd.f32 0.0, %v1561
    %v1563 = vpop.f32.mrf.mxu0
    %v1564 = vadd.f32 0.0, %v1563
    %1565 = vmatmul.bf16.gmra.mxu0 %v1462
    %v1566 = vpop.f32.mrf.mxu0
    %v1567 = vadd.f32 0.0, %v1566
    %v1568 = vpop.f32.mrf.mxu0
    %v1569 = vadd.f32 0.0, %v1568
    %1570 = vmatmul.bf16.gmra.mxu0 %v1465
    %v1571 = vpop.f32.mrf.mxu0
    %v1572 = vadd.f32 0.0, %v1571
    %v1573 = vpop.f32.mrf.mxu0
    %v1574 = vadd.f32 0.0, %v1573
    %1575 = vmatmul.bf16.gmra.mxu0 %v1468
    %v1576 = vpop.f32.mrf.mxu0
    %v1577 = vadd.f32 0.0, %v1576
    %v1578 = vpop.f32.mrf.mxu0
    %v1579 = vadd.f32 0.0, %v1578
    %1580 = vmatmul.bf16.gmra.mxu0 %v1471
    %v1581 = vpop.f32.mrf.mxu0
    %v1582 = vadd.f32 0.0, %v1581
    %v1583 = vpop.f32.mrf.mxu0
    %v1584 = vadd.f32 0.0, %v1583
    %1585 = vmatmul.bf16.gmra.mxu0 %v1474
    %v1586 = vpop.f32.mrf.mxu0
    %v1587 = vadd.f32 0.0, %v1586
    %v1588 = vpop.f32.mrf.mxu0
    %v1589 = vadd.f32 0.0, %v1588
    %1590 = vmatmul.bf16.gmra.mxu0 %v1477
    %v1591 = vpop.f32.mrf.mxu0
    %v1592 = vadd.f32 0.0, %v1591
    %v1593 = vpop.f32.mrf.mxu0
    %v1594 = vadd.f32 0.0, %v1593
    %1595 = vmatmul.bf16.gmra.mxu0 %v1480
    %v1596 = vpop.f32.mrf.mxu0
    %v1597 = vadd.f32 0.0, %v1596
    %v1598 = vpop.f32.mrf.mxu0
    %v1599 = vadd.f32 0.0, %v1598
    %1600 = vmatmul.bf16.gmra.mxu0 %v1483
    %v1601 = vpop.f32.mrf.mxu0
    %v1602 = vadd.f32 0.0, %v1601
    %v1603 = vpop.f32.mrf.mxu0
    %v1604 = vadd.f32 0.0, %v1603
    %1605 = vmatmul.bf16.gmra.mxu0 %v1486
    %v1606 = vpop.f32.mrf.mxu0
    %v1607 = vadd.f32 0.0, %v1606
    %v1608 = vpop.f32.mrf.mxu0
    %v1609 = vadd.f32 0.0, %v1608
    %1610 = vmatmul.bf16.gmra.mxu0 %v1489
    %v1611 = vpop.f32.mrf.mxu0
    %v1612 = vadd.f32 0.0, %v1611
    %v1613 = vpop.f32.mrf.mxu0
    %v1614 = vadd.f32 0.0, %v1613
    %1615 = vmatmul.bf16.gmra.mxu0 %v1492
    %v1616 = vpop.f32.mrf.mxu0
    %v1617 = vadd.f32 0.0, %v1616
    %v1618 = vpop.f32.mrf.mxu0
    %v1619 = vadd.f32 0.0, %v1618
    %1620 = vmatmul.bf16.gmra.mxu0 %v1495
    %v1621 = vpop.f32.mrf.mxu0
    %v1622 = vadd.f32 0.0, %v1621
    %v1623 = vpop.f32.mrf.mxu0
    %v1624 = vadd.f32 0.0, %v1623
    %1625 = vdwg.mxu0
    %v1626 = vmax.f32 %v1208, %v1507
    %v1627 = vmax.f32 %v1209, %v1509
    %v1628 = vmax.f32 %v1210, %v1512
    %v1629 = vmax.f32 %v1211, %v1514
    %v1630 = vmax.f32 %v1212, %v1517
    %v1631 = vmax.f32 %v1213, %v1519
    %v1632 = vmax.f32 %v1214, %v1522
    %v1633 = vmax.f32 %v1215, %v1524
    %v1634 = vmax.f32 %v1216, %v1527
    %v1635 = vmax.f32 %v1217, %v1529
    %v1636 = vmax.f32 %v1218, %v1532
    %v1637 = vmax.f32 %v1219, %v1534
    %v1638 = vmax.f32 %v1220, %v1537
    %v1639 = vmax.f32 %v1221, %v1539
    %v1640 = vmax.f32 %v1222, %v1542
    %v1641 = vmax.f32 %v1223, %v1544
    %v1642 = vmax.f32 %v1224, %v1547
    %v1643 = vmax.f32 %v1225, %v1549
    %v1644 = vmax.f32 %v1226, %v1552
    %v1645 = vmax.f32 %v1227, %v1554
    %v1646 = vmax.f32 %v1228, %v1557
    %v1647 = vmax.f32 %v1229, %v1559
    %v1648 = vmax.f32 %v1230, %v1562
    %v1649 = vmax.f32 %v1231, %v1564
    %v1650 = vmax.f32 %v1232, %v1567
    %v1651 = vmax.f32 %v1233, %v1569
    %v1652 = vmax.f32 %v1234, %v1572
    %v1653 = vmax.f32 %v1235, %v1574
    %v1654 = vmax.f32 %v1236, %v1577
    %v1655 = vmax.f32 %v1237, %v1579
    %v1656 = vmax.f32 %v1238, %v1582
    %v1657 = vmax.f32 %v1239, %v1584
    %v1658 = vmax.f32 %v1240, %v1587
    %v1659 = vmax.f32 %v1241, %v1589
    %v1660 = vmax.f32 %v1242, %v1592
    %v1661 = vmax.f32 %v1243, %v1594
    %v1662 = vmax.f32 %v1244, %v1597
    %v1663 = vmax.f32 %v1245, %v1599
    %v1664 = vmax.f32 %v1246, %v1602
    %v1665 = vmax.f32 %v1247, %v1604
    %v1666 = vmax.f32 %v1248, %v1607
    %v1667 = vmax.f32 %v1249, %v1609
    %v1668 = vmax.f32 %v1250, %v1612
    %v1669 = vmax.f32 %v1251, %v1614
    %v1670 = vmax.f32 %v1252, %v1617
    %v1671 = vmax.f32 %v1253, %v1619
    %v1672 = vmax.f32 %v1254, %v1622
    %v1673 = vmax.f32 %v1255, %v1624
    %v1674 = vld [vmem:[%s2] sm:$0x1]
    %v1676 = vperm.slane %v1674, 0
    %v1678 = vadd.f32 %v1626, %v1676
    %v1679 = vadd.f32 %v1627, %v1676
    %v1680 = vadd.f32 %v1628, %v1676
    %v1681 = vadd.f32 %v1629, %v1676
    %v1682 = vadd.f32 %v1630, %v1676
    %v1683 = vadd.f32 %v1631, %v1676
    %v1684 = vadd.f32 %v1632, %v1676
    %v1685 = vadd.f32 %v1633, %v1676
    %v1686 = vadd.f32 %v1634, %v1676
    %v1687 = vadd.f32 %v1635, %v1676
    %v1688 = vadd.f32 %v1636, %v1676
    %v1689 = vadd.f32 %v1637, %v1676
    %v1690 = vadd.f32 %v1638, %v1676
    %v1691 = vadd.f32 %v1639, %v1676
    %v1692 = vadd.f32 %v1640, %v1676
    %v1693 = vadd.f32 %v1641, %v1676
    %v1694 = vadd.f32 %v1642, %v1676
    %v1695 = vadd.f32 %v1643, %v1676
    %v1696 = vadd.f32 %v1644, %v1676
    %v1697 = vadd.f32 %v1645, %v1676
    %v1698 = vadd.f32 %v1646, %v1676
    %v1699 = vadd.f32 %v1647, %v1676
    %v1700 = vadd.f32 %v1648, %v1676
    %v1701 = vadd.f32 %v1649, %v1676
    %v1702 = vadd.f32 %v1650, %v1676
    %v1703 = vadd.f32 %v1651, %v1676
    %v1704 = vadd.f32 %v1652, %v1676
    %v1705 = vadd.f32 %v1653, %v1676
    %v1706 = vadd.f32 %v1654, %v1676
    %v1707 = vadd.f32 %v1655, %v1676
    %v1708 = vadd.f32 %v1656, %v1676
    %v1709 = vadd.f32 %v1657, %v1676
    %v1710 = vadd.f32 %v1658, %v1676
    %v1711 = vadd.f32 %v1659, %v1676
    %v1712 = vadd.f32 %v1660, %v1676
    %v1713 = vadd.f32 %v1661, %v1676
    %v1714 = vadd.f32 %v1662, %v1676
    %v1715 = vadd.f32 %v1663, %v1676
    %v1716 = vadd.f32 %v1664, %v1676
    %v1717 = vadd.f32 %v1665, %v1676
    %v1718 = vadd.f32 %v1666, %v1676
    %v1719 = vadd.f32 %v1667, %v1676
    %v1720 = vadd.f32 %v1668, %v1676
    %v1721 = vadd.f32 %v1669, %v1676
    %v1722 = vadd.f32 %v1670, %v1676
    %v1723 = vadd.f32 %v1671, %v1676
    %v1724 = vadd.f32 %v1672, %v1676
    %v1725 = vadd.f32 %v1673, %v1676
    %v1726 = vmax.f32 %v1678, 0.0
    %v1727 = vmax.f32 %v1679, 0.0
    %v1728 = vmax.f32 %v1680, 0.0
    %v1729 = vmax.f32 %v1681, 0.0
    %v1730 = vmax.f32 %v1682, 0.0
    %v1731 = vmax.f32 %v1683, 0.0
    %v1732 = vmax.f32 %v1684, 0.0
    %v1733 = vmax.f32 %v1685, 0.0
    %v1734 = vmax.f32 %v1686, 0.0
    %v1735 = vmax.f32 %v1687, 0.0
    %v1736 = vmax.f32 %v1688, 0.0
    %v1737 = vmax.f32 %v1689, 0.0
    %v1738 = vmax.f32 %v1690, 0.0
    %v1739 = vmax.f32 %v1691, 0.0
    %v1740 = vmax.f32 %v1692, 0.0
    %v1741 = vmax.f32 %v1693, 0.0
    %v1742 = vmax.f32 %v1694, 0.0
    %v1743 = vmax.f32 %v1695, 0.0
    %v1744 = vmax.f32 %v1696, 0.0
    %v1745 = vmax.f32 %v1697, 0.0
    %v1746 = vmax.f32 %v1698, 0.0
    %v1747 = vmax.f32 %v1699, 0.0
    %v1748 = vmax.f32 %v1700, 0.0
    %v1749 = vmax.f32 %v1701, 0.0
    %v1750 = vmax.f32 %v1702, 0.0
    %v1751 = vmax.f32 %v1703, 0.0
    %v1752 = vmax.f32 %v1704, 0.0
    %v1753 = vmax.f32 %v1705, 0.0
    %v1754 = vmax.f32 %v1706, 0.0
    %v1755 = vmax.f32 %v1707, 0.0
    %v1756 = vmax.f32 %v1708, 0.0
    %v1757 = vmax.f32 %v1709, 0.0
    %v1758 = vmax.f32 %v1710, 0.0
    %v1759 = vmax.f32 %v1711, 0.0
    %v1760 = vmax.f32 %v1712, 0.0
    %v1761 = vmax.f32 %v1713, 0.0
    %v1762 = vmax.f32 %v1714, 0.0
    %v1763 = vmax.f32 %v1715, 0.0
    %v1764 = vmax.f32 %v1716, 0.0
    %v1765 = vmax.f32 %v1717, 0.0
    %v1766 = vmax.f32 %v1718, 0.0
    %v1767 = vmax.f32 %v1719, 0.0
    %v1768 = vmax.f32 %v1720, 0.0
    %v1769 = vmax.f32 %v1721, 0.0
    %v1770 = vmax.f32 %v1722, 0.0
    %v1771 = vmax.f32 %v1723, 0.0
    %v1772 = vmax.f32 %v1724, 0.0
    %v1773 = vmax.f32 %v1725, 0.0
    %v1774 = vpack.c.bf16 %v1728, %v1726
    %v1775 = vpack.c.bf16 %v1732, %v1730
    %v1776 = vpack.c.bf16 %v1736, %v1734
    %v1777 = vpack.c.bf16 %v1740, %v1738
    %v1778 = vpack.c.bf16 %v1752, %v1750
    %v1779 = vpack.c.bf16 %v1756, %v1754
    %v1780 = vpack.c.bf16 %v1760, %v1758
    %v1781 = vpack.c.bf16 %v1764, %v1762
    %v1782 = vld [vmem:[%s3] sm:$0xf]
    %v1783 = vld [vmem:[%s3 + $0x4] sm:$0xf]
    %v1784 = vld [vmem:[%s3 + $0x8] sm:$0xf]
    %v1785 = vld [vmem:[%s3 + $0xc] sm:$0xf]
    %vm1818 = vcmask 1046528
    %v1819 = vrot.slane %v1726, 1
    %v1820 = vrot.slane %v1727, 1
    %v1821 = vsel %vm1818, %v1819, %v1820
    %v1822 = vrot.slane %v1728, 1
    %v1823 = vrot.slane %v1729, 1
    %v1824 = vsel %vm1818, %v1822, %v1823
    %v1825 = vrot.slane %v1730, 1
    %v1826 = vrot.slane %v1731, 1
    %v1827 = vsel %vm1818, %v1825, %v1826
    %v1828 = vrot.slane %v1732, 1
    %v1829 = vrot.slane %v1733, 1
    %v1830 = vsel %vm1818, %v1828, %v1829
    %v1831 = vrot.slane %v1734, 1
    %v1832 = vrot.slane %v1735, 1
    %v1833 = vsel %vm1818, %v1831, %v1832
    %v1834 = vrot.slane %v1736, 1
    %v1835 = vrot.slane %v1737, 1
    %v1836 = vsel %vm1818, %v1834, %v1835
    %v1837 = vrot.slane %v1738, 1
    %v1838 = vrot.slane %v1739, 1
    %v1839 = vsel %vm1818, %v1837, %v1838
    %v1840 = vrot.slane %v1740, 1
    %v1841 = vrot.slane %v1741, 1
    %v1842 = vsel %vm1818, %v1840, %v1841
    %v1843 = vrot.slane %v1750, 1
    %v1844 = vrot.slane %v1751, 1
    %v1845 = vsel %vm1818, %v1843, %v1844
    %v1846 = vrot.slane %v1752, 1
    %v1847 = vrot.slane %v1753, 1
    %v1848 = vsel %vm1818, %v1846, %v1847
    %v1849 = vrot.slane %v1754, 1
    %v1850 = vrot.slane %v1755, 1
    %v1851 = vsel %vm1818, %v1849, %v1850
    %v1852 = vrot.slane %v1756, 1
    %v1853 = vrot.slane %v1757, 1
    %v1854 = vsel %vm1818, %v1852, %v1853
    %v1855 = vrot.slane %v1758, 1
    %v1856 = vrot.slane %v1759, 1
    %v1857 = vsel %vm1818, %v1855, %v1856
    %v1858 = vrot.slane %v1760, 1
    %v1859 = vrot.slane %v1761, 1
    %v1860 = vsel %vm1818, %v1858, %v1859
    %v1861 = vrot.slane %v1762, 1
    %v1862 = vrot.slane %v1763, 1
    %v1863 = vsel %vm1818, %v1861, %v1862
    %v1864 = vrot.slane %v1764, 1
    %v1865 = vrot.slane %v1765, 1
    %v1866 = vsel %vm1818, %v1864, %v1865
    %v1883 = vpack.c.bf16 %v1824, %v1821
    %v1884 = vpack.c.bf16 %v1830, %v1827
    %v1885 = vpack.c.bf16 %v1836, %v1833
    %v1886 = vpack.c.bf16 %v1842, %v1839
    %v1887 = vpack.c.bf16 %v1848, %v1845
    %v1888 = vpack.c.bf16 %v1854, %v1851
    %v1889 = vpack.c.bf16 %v1860, %v1857
    %v1890 = vpack.c.bf16 %v1866, %v1863
    %s1891 = scalar_lea.vmem %s3, 16
    %v1892 = vld [vmem:[%s1891] sm:$0xf]
    %v1893 = vld [vmem:[%s1891 + $0x4] sm:$0xf]
    %v1894 = vld [vmem:[%s1891 + $0x8] sm:$0xf]
    %v1895 = vld [vmem:[%s1891 + $0xc] sm:$0xf]
    %v1900 = vunpack.c.l.b16 %v1892
    %v1901 = vunpack.c.l.b16 %v1893
    %v1902 = vunpack.c.l.b16 %v1894
    %v1903 = vunpack.c.l.b16 %v1895
    %v1904 = vpack.c.b16 %v1901, %v1900
    %v1905 = vpack.c.b16 %v1903, %v1902
    %v1909 = vsel %vm218, %v1883, 0
    %v1912 = vsel %vm218, %v1884, 0
    %v1915 = vsel %vm218, %v1885, 0
    %v1918 = vsel %vm218, %v1886, 0
    %v1921 = vsel %vm218, %v1887, 0
    %v1924 = vsel %vm218, %v1888, 0
    %v1927 = vsel %vm218, %v1889, 0
    %v1930 = vsel %vm218, %v1890, 0
    %1932 = vmatpush.bf16.msra.mxu0 0
    %1933 = vmatpush.bf16.msra.mxu0 0
    %1934 = vmatpush.bf16.msra.mxu0 0
    %1935 = vmatpush.bf16.msra.mxu0 0
    %1936 = vmatpush.bf16.msra.mxu0 0
    %1937 = vmatpush.bf16.msra.mxu0 0
    %1938 = vmatpush.bf16.msra.mxu0 %v1905
    %1939 = vmatpush.bf16.msra.mxu0 %v1904
    %1940 = vmatmul.bf16.gmra.mxu0 %v1909
    %v1941 = vpop.f32.mrf.mxu0
    %v1942 = vadd.f32 0.0, %v1941
    %v1943 = vpop.f32.mrf.mxu0
    %v1944 = vadd.f32 0.0, %v1943
    %1945 = vmatmul.bf16.gmra.mxu0 %v1912
    %v1946 = vpop.f32.mrf.mxu0
    %v1947 = vadd.f32 0.0, %v1946
    %v1948 = vpop.f32.mrf.mxu0
    %v1949 = vadd.f32 0.0, %v1948
    %1950 = vmatmul.bf16.gmra.mxu0 %v1915
    %v1951 = vpop.f32.mrf.mxu0
    %v1952 = vadd.f32 0.0, %v1951
    %v1953 = vpop.f32.mrf.mxu0
    %v1954 = vadd.f32 0.0, %v1953
    %1955 = vmatmul.bf16.gmra.mxu0 %v1918
    %v1956 = vpop.f32.mrf.mxu0
    %v1957 = vadd.f32 0.0, %v1956
    %v1958 = vpop.f32.mrf.mxu0
    %v1959 = vadd.f32 0.0, %v1958
    %1960 = vmatmul.bf16.gmra.mxu0 %v1921
    %v1961 = vpop.f32.mrf.mxu0
    %v1962 = vadd.f32 0.0, %v1961
    %v1963 = vpop.f32.mrf.mxu0
    %v1964 = vadd.f32 0.0, %v1963
    %1965 = vmatmul.bf16.gmra.mxu0 %v1924
    %v1966 = vpop.f32.mrf.mxu0
    %v1967 = vadd.f32 0.0, %v1966
    %v1968 = vpop.f32.mrf.mxu0
    %v1969 = vadd.f32 0.0, %v1968
    %1970 = vmatmul.bf16.gmra.mxu0 %v1927
    %v1971 = vpop.f32.mrf.mxu0
    %v1972 = vadd.f32 0.0, %v1971
    %v1973 = vpop.f32.mrf.mxu0
    %v1974 = vadd.f32 0.0, %v1973
    %1975 = vmatmul.bf16.gmra.mxu0 %v1930
    %v1976 = vpop.f32.mrf.mxu0
    %v1977 = vadd.f32 0.0, %v1976
    %v1978 = vpop.f32.mrf.mxu0
    %v1979 = vadd.f32 0.0, %v1978
    %1980 = vdwg.mxu0
    %v1985 = vunpack.c.l.b16 %v1782
    %v1986 = vunpack.c.l.b16 %v1783
    %v1987 = vunpack.c.l.b16 %v1784
    %v1988 = vunpack.c.l.b16 %v1785
    %v1989 = vpack.c.b16 %v1986, %v1985
    %v1990 = vpack.c.b16 %v1988, %v1987
    %v1994 = vsel %vm218, %v1774, 0
    %v1997 = vsel %vm218, %v1775, 0
    %v2000 = vsel %vm218, %v1776, 0
    %v2003 = vsel %vm218, %v1777, 0
    %v2006 = vsel %vm218, %v1778, 0
    %v2009 = vsel %vm218, %v1779, 0
    %v2012 = vsel %vm218, %v1780, 0
    %v2015 = vsel %vm218, %v1781, 0
    %2017 = vmatpush.bf16.msra.mxu0 0
    %2018 = vmatpush.bf16.msra.mxu0 0
    %2019 = vmatpush.bf16.msra.mxu0 0
    %2020 = vmatpush.bf16.msra.mxu0 0
    %2021 = vmatpush.bf16.msra.mxu0 0
    %2022 = vmatpush.bf16.msra.mxu0 0
    %2023 = vmatpush.bf16.msra.mxu0 %v1990
    %2024 = vmatpush.bf16.msra.mxu0 %v1989
    %2025 = vmatmul.bf16.gmra.mxu0 %v1994
    %v2026 = vpop.f32.mrf.mxu0
    %v2027 = vadd.f32 %v1942, %v2026
    %v2028 = vpop.f32.mrf.mxu0
    %v2029 = vadd.f32 %v1944, %v2028
    %2030 = vmatmul.bf16.gmra.mxu0 %v1997
    %v2031 = vpop.f32.mrf.mxu0
    %v2032 = vadd.f32 %v1947, %v2031
    %v2033 = vpop.f32.mrf.mxu0
    %v2034 = vadd.f32 %v1949, %v2033
    %2035 = vmatmul.bf16.gmra.mxu0 %v2000
    %v2036 = vpop.f32.mrf.mxu0
    %v2037 = vadd.f32 %v1952, %v2036
    %v2038 = vpop.f32.mrf.mxu0
    %v2039 = vadd.f32 %v1954, %v2038
    %2040 = vmatmul.bf16.gmra.mxu0 %v2003
    %v2041 = vpop.f32.mrf.mxu0
    %v2042 = vadd.f32 %v1957, %v2041
    %v2043 = vpop.f32.mrf.mxu0
    %v2044 = vadd.f32 %v1959, %v2043
    %2045 = vmatmul.bf16.gmra.mxu0 %v2006
    %v2046 = vpop.f32.mrf.mxu0
    %v2047 = vadd.f32 %v1962, %v2046
    %v2048 = vpop.f32.mrf.mxu0
    %v2049 = vadd.f32 %v1964, %v2048
    %2050 = vmatmul.bf16.gmra.mxu0 %v2009
    %v2051 = vpop.f32.mrf.mxu0
    %v2052 = vadd.f32 %v1967, %v2051
    %v2053 = vpop.f32.mrf.mxu0
    %v2054 = vadd.f32 %v1969, %v2053
    %2055 = vmatmul.bf16.gmra.mxu0 %v2012
    %v2056 = vpop.f32.mrf.mxu0
    %v2057 = vadd.f32 %v1972, %v2056
    %v2058 = vpop.f32.mrf.mxu0
    %v2059 = vadd.f32 %v1974, %v2058
    %2060 = vmatmul.bf16.gmra.mxu0 %v2015
    %v2061 = vpop.f32.mrf.mxu0
    %v2062 = vadd.f32 %v1977, %v2061
    %v2063 = vpop.f32.mrf.mxu0
    %v2064 = vadd.f32 %v1979, %v2063
    %2065 = vdwg.mxu0
    %vm2066 = vcmask 1045504
    %v2067 = vrot.slane %v1726, 2
    %v2068 = vrot.slane %v1727, 2
    %v2069 = vsel %vm2066, %v2067, %v2068
    %v2070 = vrot.slane %v1728, 2
    %v2071 = vrot.slane %v1729, 2
    %v2072 = vsel %vm2066, %v2070, %v2071
    %v2073 = vrot.slane %v1730, 2
    %v2074 = vrot.slane %v1731, 2
    %v2075 = vsel %vm2066, %v2073, %v2074
    %v2076 = vrot.slane %v1732, 2
    %v2077 = vrot.slane %v1733, 2
    %v2078 = vsel %vm2066, %v2076, %v2077
    %v2079 = vrot.slane %v1734, 2
    %v2080 = vrot.slane %v1735, 2
    %v2081 = vsel %vm2066, %v2079, %v2080
    %v2082 = vrot.slane %v1736, 2
    %v2083 = vrot.slane %v1737, 2
    %v2084 = vsel %vm2066, %v2082, %v2083
    %v2085 = vrot.slane %v1738, 2
    %v2086 = vrot.slane %v1739, 2
    %v2087 = vsel %vm2066, %v2085, %v2086
    %v2088 = vrot.slane %v1740, 2
    %v2089 = vrot.slane %v1741, 2
    %v2090 = vsel %vm2066, %v2088, %v2089
    %v2091 = vrot.slane %v1750, 2
    %v2092 = vrot.slane %v1751, 2
    %v2093 = vsel %vm2066, %v2091, %v2092
    %v2094 = vrot.slane %v1752, 2
    %v2095 = vrot.slane %v1753, 2
    %v2096 = vsel %vm2066, %v2094, %v2095
    %v2097 = vrot.slane %v1754, 2
    %v2098 = vrot.slane %v1755, 2
    %v2099 = vsel %vm2066, %v2097, %v2098
    %v2100 = vrot.slane %v1756, 2
    %v2101 = vrot.slane %v1757, 2
    %v2102 = vsel %vm2066, %v2100, %v2101
    %v2103 = vrot.slane %v1758, 2
    %v2104 = vrot.slane %v1759, 2
    %v2105 = vsel %vm2066, %v2103, %v2104
    %v2106 = vrot.slane %v1760, 2
    %v2107 = vrot.slane %v1761, 2
    %v2108 = vsel %vm2066, %v2106, %v2107
    %v2109 = vrot.slane %v1762, 2
    %v2110 = vrot.slane %v1763, 2
    %v2111 = vsel %vm2066, %v2109, %v2110
    %v2112 = vrot.slane %v1764, 2
    %v2113 = vrot.slane %v1765, 2
    %v2114 = vsel %vm2066, %v2112, %v2113
    %v2131 = vpack.c.bf16 %v2072, %v2069
    %v2132 = vpack.c.bf16 %v2078, %v2075
    %v2133 = vpack.c.bf16 %v2084, %v2081
    %v2134 = vpack.c.bf16 %v2090, %v2087
    %v2135 = vpack.c.bf16 %v2096, %v2093
    %v2136 = vpack.c.bf16 %v2102, %v2099
    %v2137 = vpack.c.bf16 %v2108, %v2105
    %v2138 = vpack.c.bf16 %v2114, %v2111
    %s2139 = scalar_lea.vmem %s3, 32
    %v2140 = vld [vmem:[%s2139] sm:$0xf]
    %v2141 = vld [vmem:[%s2139 + $0x4] sm:$0xf]
    %v2142 = vld [vmem:[%s2139 + $0x8] sm:$0xf]
    %v2143 = vld [vmem:[%s2139 + $0xc] sm:$0xf]
    %v2148 = vunpack.c.l.b16 %v2140
    %v2149 = vunpack.c.l.b16 %v2141
    %v2150 = vunpack.c.l.b16 %v2142
    %v2151 = vunpack.c.l.b16 %v2143
    %v2152 = vpack.c.b16 %v2149, %v2148
    %v2153 = vpack.c.b16 %v2151, %v2150
    %v2157 = vsel %vm218, %v2131, 0
    %v2160 = vsel %vm218, %v2132, 0
    %v2163 = vsel %vm218, %v2133, 0
    %v2166 = vsel %vm218, %v2134, 0
    %v2169 = vsel %vm218, %v2135, 0
    %v2172 = vsel %vm218, %v2136, 0
    %v2175 = vsel %vm218, %v2137, 0
    %v2178 = vsel %vm218, %v2138, 0
    %2180 = vmatpush.bf16.msra.mxu0 0
    %2181 = vmatpush.bf16.msra.mxu0 0
    %2182 = vmatpush.bf16.msra.mxu0 0
    %2183 = vmatpush.bf16.msra.mxu0 0
    %2184 = vmatpush.bf16.msra.mxu0 0
    %2185 = vmatpush.bf16.msra.mxu0 0
    %2186 = vmatpush.bf16.msra.mxu0 %v2153
    %2187 = vmatpush.bf16.msra.mxu0 %v2152
    %2188 = vmatmul.bf16.gmra.mxu0 %v2157
    %v2189 = vpop.f32.mrf.mxu0
    %v2190 = vadd.f32 0.0, %v2189
    %v2191 = vpop.f32.mrf.mxu0
    %v2192 = vadd.f32 0.0, %v2191
    %2193 = vmatmul.bf16.gmra.mxu0 %v2160
    %v2194 = vpop.f32.mrf.mxu0
    %v2195 = vadd.f32 0.0, %v2194
    %v2196 = vpop.f32.mrf.mxu0
    %v2197 = vadd.f32 0.0, %v2196
    %2198 = vmatmul.bf16.gmra.mxu0 %v2163
    %v2199 = vpop.f32.mrf.mxu0
    %v2200 = vadd.f32 0.0, %v2199
    %v2201 = vpop.f32.mrf.mxu0
    %v2202 = vadd.f32 0.0, %v2201
    %2203 = vmatmul.bf16.gmra.mxu0 %v2166
    %v2204 = vpop.f32.mrf.mxu0
    %v2205 = vadd.f32 0.0, %v2204
    %v2206 = vpop.f32.mrf.mxu0
    %v2207 = vadd.f32 0.0, %v2206
    %2208 = vmatmul.bf16.gmra.mxu0 %v2169
    %v2209 = vpop.f32.mrf.mxu0
    %v2210 = vadd.f32 0.0, %v2209
    %v2211 = vpop.f32.mrf.mxu0
    %v2212 = vadd.f32 0.0, %v2211
    %2213 = vmatmul.bf16.gmra.mxu0 %v2172
    %v2214 = vpop.f32.mrf.mxu0
    %v2215 = vadd.f32 0.0, %v2214
    %v2216 = vpop.f32.mrf.mxu0
    %v2217 = vadd.f32 0.0, %v2216
    %2218 = vmatmul.bf16.gmra.mxu0 %v2175
    %v2219 = vpop.f32.mrf.mxu0
    %v2220 = vadd.f32 0.0, %v2219
    %v2221 = vpop.f32.mrf.mxu0
    %v2222 = vadd.f32 0.0, %v2221
    %2223 = vmatmul.bf16.gmra.mxu0 %v2178
    %v2224 = vpop.f32.mrf.mxu0
    %v2225 = vadd.f32 0.0, %v2224
    %v2226 = vpop.f32.mrf.mxu0
    %v2227 = vadd.f32 0.0, %v2226
    %2228 = vdwg.mxu0
    %v2229 = vadd.f32 %v2027, %v2190
    %v2230 = vadd.f32 %v2029, %v2192
    %v2231 = vadd.f32 %v2032, %v2195
    %v2232 = vadd.f32 %v2034, %v2197
    %v2233 = vadd.f32 %v2037, %v2200
    %v2234 = vadd.f32 %v2039, %v2202
    %v2235 = vadd.f32 %v2042, %v2205
    %v2236 = vadd.f32 %v2044, %v2207
    %v2237 = vadd.f32 %v2047, %v2210
    %v2238 = vadd.f32 %v2049, %v2212
    %v2239 = vadd.f32 %v2052, %v2215
    %v2240 = vadd.f32 %v2054, %v2217
    %v2241 = vadd.f32 %v2057, %v2220
    %v2242 = vadd.f32 %v2059, %v2222
    %v2243 = vadd.f32 %v2062, %v2225
    %v2244 = vadd.f32 %v2064, %v2227
    %vm2245 = vcmask 1044480
    %v2246 = vrot.slane %v1726, 3
    %v2247 = vrot.slane %v1727, 3
    %v2248 = vsel %vm2245, %v2246, %v2247
    %v2249 = vrot.slane %v1728, 3
    %v2250 = vrot.slane %v1729, 3
    %v2251 = vsel %vm2245, %v2249, %v2250
    %v2252 = vrot.slane %v1730, 3
    %v2253 = vrot.slane %v1731, 3
    %v2254 = vsel %vm2245, %v2252, %v2253
    %v2255 = vrot.slane %v1732, 3
    %v2256 = vrot.slane %v1733, 3
    %v2257 = vsel %vm2245, %v2255, %v2256
    %v2258 = vrot.slane %v1734, 3
    %v2259 = vrot.slane %v1735, 3
    %v2260 = vsel %vm2245, %v2258, %v2259
    %v2261 = vrot.slane %v1736, 3
    %v2262 = vrot.slane %v1737, 3
    %v2263 = vsel %vm2245, %v2261, %v2262
    %v2264 = vrot.slane %v1738, 3
    %v2265 = vrot.slane %v1739, 3
    %v2266 = vsel %vm2245, %v2264, %v2265
    %v2267 = vrot.slane %v1740, 3
    %v2268 = vrot.slane %v1741, 3
    %v2269 = vsel %vm2245, %v2267, %v2268
    %v2270 = vrot.slane %v1750, 3
    %v2271 = vrot.slane %v1751, 3
    %v2272 = vsel %vm2245, %v2270, %v2271
    %v2273 = vrot.slane %v1752, 3
    %v2274 = vrot.slane %v1753, 3
    %v2275 = vsel %vm2245, %v2273, %v2274
    %v2276 = vrot.slane %v1754, 3
    %v2277 = vrot.slane %v1755, 3
    %v2278 = vsel %vm2245, %v2276, %v2277
    %v2279 = vrot.slane %v1756, 3
    %v2280 = vrot.slane %v1757, 3
    %v2281 = vsel %vm2245, %v2279, %v2280
    %v2282 = vrot.slane %v1758, 3
    %v2283 = vrot.slane %v1759, 3
    %v2284 = vsel %vm2245, %v2282, %v2283
    %v2285 = vrot.slane %v1760, 3
    %v2286 = vrot.slane %v1761, 3
    %v2287 = vsel %vm2245, %v2285, %v2286
    %v2288 = vrot.slane %v1762, 3
    %v2289 = vrot.slane %v1763, 3
    %v2290 = vsel %vm2245, %v2288, %v2289
    %v2291 = vrot.slane %v1764, 3
    %v2292 = vrot.slane %v1765, 3
    %v2293 = vsel %vm2245, %v2291, %v2292
    %v2310 = vpack.c.bf16 %v2251, %v2248
    %v2311 = vpack.c.bf16 %v2257, %v2254
    %v2312 = vpack.c.bf16 %v2263, %v2260
    %v2313 = vpack.c.bf16 %v2269, %v2266
    %v2314 = vpack.c.bf16 %v2275, %v2272
    %v2315 = vpack.c.bf16 %v2281, %v2278
    %v2316 = vpack.c.bf16 %v2287, %v2284
    %v2317 = vpack.c.bf16 %v2293, %v2290
    %s2318 = scalar_lea.vmem %s3, 48
    %v2319 = vld [vmem:[%s2318] sm:$0xf]
    %v2320 = vld [vmem:[%s2318 + $0x4] sm:$0xf]
    %v2321 = vld [vmem:[%s2318 + $0x8] sm:$0xf]
    %v2322 = vld [vmem:[%s2318 + $0xc] sm:$0xf]
    %v2327 = vunpack.c.l.b16 %v2319
    %v2328 = vunpack.c.l.b16 %v2320
    %v2329 = vunpack.c.l.b16 %v2321
    %v2330 = vunpack.c.l.b16 %v2322
    %v2331 = vpack.c.b16 %v2328, %v2327
    %v2332 = vpack.c.b16 %v2330, %v2329
    %v2336 = vsel %vm218, %v2310, 0
    %v2339 = vsel %vm218, %v2311, 0
    %v2342 = vsel %vm218, %v2312, 0
    %v2345 = vsel %vm218, %v2313, 0
    %v2348 = vsel %vm218, %v2314, 0
    %v2351 = vsel %vm218, %v2315, 0
    %v2354 = vsel %vm218, %v2316, 0
    %v2357 = vsel %vm218, %v2317, 0
    %2359 = vmatpush.bf16.msra.mxu0 0
    %2360 = vmatpush.bf16.msra.mxu0 0
    %2361 = vmatpush.bf16.msra.mxu0 0
    %2362 = vmatpush.bf16.msra.mxu0 0
    %2363 = vmatpush.bf16.msra.mxu0 0
    %2364 = vmatpush.bf16.msra.mxu0 0
    %2365 = vmatpush.bf16.msra.mxu0 %v2332
    %2366 = vmatpush.bf16.msra.mxu0 %v2331
    %2367 = vmatmul.bf16.gmra.mxu0 %v2336
    %v2368 = vpop.f32.mrf.mxu0
    %v2369 = vadd.f32 0.0, %v2368
    %v2370 = vpop.f32.mrf.mxu0
    %v2371 = vadd.f32 0.0, %v2370
    %2372 = vmatmul.bf16.gmra.mxu0 %v2339
    %v2373 = vpop.f32.mrf.mxu0
    %v2374 = vadd.f32 0.0, %v2373
    %v2375 = vpop.f32.mrf.mxu0
    %v2376 = vadd.f32 0.0, %v2375
    %2377 = vmatmul.bf16.gmra.mxu0 %v2342
    %v2378 = vpop.f32.mrf.mxu0
    %v2379 = vadd.f32 0.0, %v2378
    %v2380 = vpop.f32.mrf.mxu0
    %v2381 = vadd.f32 0.0, %v2380
    %2382 = vmatmul.bf16.gmra.mxu0 %v2345
    %v2383 = vpop.f32.mrf.mxu0
    %v2384 = vadd.f32 0.0, %v2383
    %v2385 = vpop.f32.mrf.mxu0
    %v2386 = vadd.f32 0.0, %v2385
    %2387 = vmatmul.bf16.gmra.mxu0 %v2348
    %v2388 = vpop.f32.mrf.mxu0
    %v2389 = vadd.f32 0.0, %v2388
    %v2390 = vpop.f32.mrf.mxu0
    %v2391 = vadd.f32 0.0, %v2390
    %2392 = vmatmul.bf16.gmra.mxu0 %v2351
    %v2393 = vpop.f32.mrf.mxu0
    %v2394 = vadd.f32 0.0, %v2393
    %v2395 = vpop.f32.mrf.mxu0
    %v2396 = vadd.f32 0.0, %v2395
    %2397 = vmatmul.bf16.gmra.mxu0 %v2354
    %v2398 = vpop.f32.mrf.mxu0
    %v2399 = vadd.f32 0.0, %v2398
    %v2400 = vpop.f32.mrf.mxu0
    %v2401 = vadd.f32 0.0, %v2400
    %2402 = vmatmul.bf16.gmra.mxu0 %v2357
    %v2403 = vpop.f32.mrf.mxu0
    %v2404 = vadd.f32 0.0, %v2403
    %v2405 = vpop.f32.mrf.mxu0
    %v2406 = vadd.f32 0.0, %v2405
    %2407 = vdwg.mxu0
    %v2408 = vadd.f32 %v2229, %v2369
    %v2409 = vadd.f32 %v2230, %v2371
    %v2410 = vadd.f32 %v2231, %v2374
    %v2411 = vadd.f32 %v2232, %v2376
    %v2412 = vadd.f32 %v2233, %v2379
    %v2413 = vadd.f32 %v2234, %v2381
    %v2414 = vadd.f32 %v2235, %v2384
    %v2415 = vadd.f32 %v2236, %v2386
    %v2416 = vadd.f32 %v2237, %v2389
    %v2417 = vadd.f32 %v2238, %v2391
    %v2418 = vadd.f32 %v2239, %v2394
    %v2419 = vadd.f32 %v2240, %v2396
    %v2420 = vadd.f32 %v2241, %v2399
    %v2421 = vadd.f32 %v2242, %v2401
    %v2422 = vadd.f32 %v2243, %v2404
    %v2423 = vadd.f32 %v2244, %v2406
    %vm2424 = vcmask 1043456
    %v2425 = vrot.slane %v1726, 4
    %v2426 = vrot.slane %v1727, 4
    %v2427 = vsel %vm2424, %v2425, %v2426
    %v2428 = vrot.slane %v1728, 4
    %v2429 = vrot.slane %v1729, 4
    %v2430 = vsel %vm2424, %v2428, %v2429
    %v2431 = vrot.slane %v1730, 4
    %v2432 = vrot.slane %v1731, 4
    %v2433 = vsel %vm2424, %v2431, %v2432
    %v2434 = vrot.slane %v1732, 4
    %v2435 = vrot.slane %v1733, 4
    %v2436 = vsel %vm2424, %v2434, %v2435
    %v2437 = vrot.slane %v1734, 4
    %v2438 = vrot.slane %v1735, 4
    %v2439 = vsel %vm2424, %v2437, %v2438
    %v2440 = vrot.slane %v1736, 4
    %v2441 = vrot.slane %v1737, 4
    %v2442 = vsel %vm2424, %v2440, %v2441
    %v2443 = vrot.slane %v1738, 4
    %v2444 = vrot.slane %v1739, 4
    %v2445 = vsel %vm2424, %v2443, %v2444
    %v2446 = vrot.slane %v1740, 4
    %v2447 = vrot.slane %v1741, 4
    %v2448 = vsel %vm2424, %v2446, %v2447
    %v2449 = vrot.slane %v1750, 4
    %v2450 = vrot.slane %v1751, 4
    %v2451 = vsel %vm2424, %v2449, %v2450
    %v2452 = vrot.slane %v1752, 4
    %v2453 = vrot.slane %v1753, 4
    %v2454 = vsel %vm2424, %v2452, %v2453
    %v2455 = vrot.slane %v1754, 4
    %v2456 = vrot.slane %v1755, 4
    %v2457 = vsel %vm2424, %v2455, %v2456
    %v2458 = vrot.slane %v1756, 4
    %v2459 = vrot.slane %v1757, 4
    %v2460 = vsel %vm2424, %v2458, %v2459
    %v2461 = vrot.slane %v1758, 4
    %v2462 = vrot.slane %v1759, 4
    %v2463 = vsel %vm2424, %v2461, %v2462
    %v2464 = vrot.slane %v1760, 4
    %v2465 = vrot.slane %v1761, 4
    %v2466 = vsel %vm2424, %v2464, %v2465
    %v2467 = vrot.slane %v1762, 4
    %v2468 = vrot.slane %v1763, 4
    %v2469 = vsel %vm2424, %v2467, %v2468
    %v2470 = vrot.slane %v1764, 4
    %v2471 = vrot.slane %v1765, 4
    %v2472 = vsel %vm2424, %v2470, %v2471
    %v2489 = vpack.c.bf16 %v2430, %v2427
    %v2490 = vpack.c.bf16 %v2436, %v2433
    %v2491 = vpack.c.bf16 %v2442, %v2439
    %v2492 = vpack.c.bf16 %v2448, %v2445
    %v2493 = vpack.c.bf16 %v2454, %v2451
    %v2494 = vpack.c.bf16 %v2460, %v2457
    %v2495 = vpack.c.bf16 %v2466, %v2463
    %v2496 = vpack.c.bf16 %v2472, %v2469
    %s2497 = scalar_lea.vmem %s3, 64
    %v2498 = vld [vmem:[%s2497] sm:$0xf]
    %v2499 = vld [vmem:[%s2497 + $0x4] sm:$0xf]
    %v2500 = vld [vmem:[%s2497 + $0x8] sm:$0xf]
    %v2501 = vld [vmem:[%s2497 + $0xc] sm:$0xf]
    %v2506 = vunpack.c.l.b16 %v2498
    %v2507 = vunpack.c.l.b16 %v2499
    %v2508 = vunpack.c.l.b16 %v2500
    %v2509 = vunpack.c.l.b16 %v2501
    %v2510 = vpack.c.b16 %v2507, %v2506
    %v2511 = vpack.c.b16 %v2509, %v2508
    %v2515 = vsel %vm218, %v2489, 0
    %v2518 = vsel %vm218, %v2490, 0
    %v2521 = vsel %vm218, %v2491, 0
    %v2524 = vsel %vm218, %v2492, 0
    %v2527 = vsel %vm218, %v2493, 0
    %v2530 = vsel %vm218, %v2494, 0
    %v2533 = vsel %vm218, %v2495, 0
    %v2536 = vsel %vm218, %v2496, 0
    %2538 = vmatpush.bf16.msra.mxu0 0
    %2539 = vmatpush.bf16.msra.mxu0 0
    %2540 = vmatpush.bf16.msra.mxu0 0
    %2541 = vmatpush.bf16.msra.mxu0 0
    %2542 = vmatpush.bf16.msra.mxu0 0
    %2543 = vmatpush.bf16.msra.mxu0 0
    %2544 = vmatpush.bf16.msra.mxu0 %v2511
    %2545 = vmatpush.bf16.msra.mxu0 %v2510
    %2546 = vmatmul.bf16.gmra.mxu0 %v2515
    %v2547 = vpop.f32.mrf.mxu0
    %v2548 = vadd.f32 0.0, %v2547
    %v2549 = vpop.f32.mrf.mxu0
    %v2550 = vadd.f32 0.0, %v2549
    %2551 = vmatmul.bf16.gmra.mxu0 %v2518
    %v2552 = vpop.f32.mrf.mxu0
    %v2553 = vadd.f32 0.0, %v2552
    %v2554 = vpop.f32.mrf.mxu0
    %v2555 = vadd.f32 0.0, %v2554
    %2556 = vmatmul.bf16.gmra.mxu0 %v2521
    %v2557 = vpop.f32.mrf.mxu0
    %v2558 = vadd.f32 0.0, %v2557
    %v2559 = vpop.f32.mrf.mxu0
    %v2560 = vadd.f32 0.0, %v2559
    %2561 = vmatmul.bf16.gmra.mxu0 %v2524
    %v2562 = vpop.f32.mrf.mxu0
    %v2563 = vadd.f32 0.0, %v2562
    %v2564 = vpop.f32.mrf.mxu0
    %v2565 = vadd.f32 0.0, %v2564
    %2566 = vmatmul.bf16.gmra.mxu0 %v2527
    %v2567 = vpop.f32.mrf.mxu0
    %v2568 = vadd.f32 0.0, %v2567
    %v2569 = vpop.f32.mrf.mxu0
    %v2570 = vadd.f32 0.0, %v2569
    %2571 = vmatmul.bf16.gmra.mxu0 %v2530
    %v2572 = vpop.f32.mrf.mxu0
    %v2573 = vadd.f32 0.0, %v2572
    %v2574 = vpop.f32.mrf.mxu0
    %v2575 = vadd.f32 0.0, %v2574
    %2576 = vmatmul.bf16.gmra.mxu0 %v2533
    %v2577 = vpop.f32.mrf.mxu0
    %v2578 = vadd.f32 0.0, %v2577
    %v2579 = vpop.f32.mrf.mxu0
    %v2580 = vadd.f32 0.0, %v2579
    %2581 = vmatmul.bf16.gmra.mxu0 %v2536
    %v2582 = vpop.f32.mrf.mxu0
    %v2583 = vadd.f32 0.0, %v2582
    %v2584 = vpop.f32.mrf.mxu0
    %v2585 = vadd.f32 0.0, %v2584
    %2586 = vdwg.mxu0
    %v2587 = vadd.f32 %v2408, %v2548
    %v2588 = vadd.f32 %v2409, %v2550
    %v2589 = vadd.f32 %v2410, %v2553
    %v2590 = vadd.f32 %v2411, %v2555
    %v2591 = vadd.f32 %v2412, %v2558
    %v2592 = vadd.f32 %v2413, %v2560
    %v2593 = vadd.f32 %v2414, %v2563
    %v2594 = vadd.f32 %v2415, %v2565
    %v2595 = vadd.f32 %v2416, %v2568
    %v2596 = vadd.f32 %v2417, %v2570
    %v2597 = vadd.f32 %v2418, %v2573
    %v2598 = vadd.f32 %v2419, %v2575
    %v2599 = vadd.f32 %v2420, %v2578
    %v2600 = vadd.f32 %v2421, %v2580
    %v2601 = vadd.f32 %v2422, %v2583
    %v2602 = vadd.f32 %v2423, %v2585
    %v2603 = vpack.c.bf16 %v1730, %v1728
    %v2604 = vpack.c.bf16 %v1734, %v1732
    %v2605 = vpack.c.bf16 %v1738, %v1736
    %v2606 = vpack.c.bf16 %v1742, %v1740
    %v2607 = vpack.c.bf16 %v1754, %v1752
    %v2608 = vpack.c.bf16 %v1758, %v1756
    %v2609 = vpack.c.bf16 %v1762, %v1760
    %v2610 = vpack.c.bf16 %v1766, %v1764
    %s2611 = scalar_lea.vmem %s3, 80
    %v2612 = vld [vmem:[%s2611] sm:$0xf]
    %v2613 = vld [vmem:[%s2611 + $0x4] sm:$0xf]
    %v2614 = vld [vmem:[%s2611 + $0x8] sm:$0xf]
    %v2615 = vld [vmem:[%s2611 + $0xc] sm:$0xf]
    %v2620 = vunpack.c.l.b16 %v2612
    %v2621 = vunpack.c.l.b16 %v2613
    %v2622 = vunpack.c.l.b16 %v2614
    %v2623 = vunpack.c.l.b16 %v2615
    %v2624 = vpack.c.b16 %v2621, %v2620
    %v2625 = vpack.c.b16 %v2623, %v2622
    %v2629 = vsel %vm218, %v2603, 0
    %v2632 = vsel %vm218, %v2604, 0
    %v2635 = vsel %vm218, %v2605, 0
    %v2638 = vsel %vm218, %v2606, 0
    %v2641 = vsel %vm218, %v2607, 0
    %v2644 = vsel %vm218, %v2608, 0
    %v2647 = vsel %vm218, %v2609, 0
    %v2650 = vsel %vm218, %v2610, 0
    %2652 = vmatpush.bf16.msra.mxu0 0
    %2653 = vmatpush.bf16.msra.mxu0 0
    %2654 = vmatpush.bf16.msra.mxu0 0
    %2655 = vmatpush.bf16.msra.mxu0 0
    %2656 = vmatpush.bf16.msra.mxu0 0
    %2657 = vmatpush.bf16.msra.mxu0 0
    %2658 = vmatpush.bf16.msra.mxu0 %v2625
    %2659 = vmatpush.bf16.msra.mxu0 %v2624
    %2660 = vmatmul.bf16.gmra.mxu0 %v2629
    %v2661 = vpop.f32.mrf.mxu0
    %v2662 = vadd.f32 0.0, %v2661
    %v2663 = vpop.f32.mrf.mxu0
    %v2664 = vadd.f32 0.0, %v2663
    %2665 = vmatmul.bf16.gmra.mxu0 %v2632
    %v2666 = vpop.f32.mrf.mxu0
    %v2667 = vadd.f32 0.0, %v2666
    %v2668 = vpop.f32.mrf.mxu0
    %v2669 = vadd.f32 0.0, %v2668
    %2670 = vmatmul.bf16.gmra.mxu0 %v2635
    %v2671 = vpop.f32.mrf.mxu0
    %v2672 = vadd.f32 0.0, %v2671
    %v2673 = vpop.f32.mrf.mxu0
    %v2674 = vadd.f32 0.0, %v2673
    %2675 = vmatmul.bf16.gmra.mxu0 %v2638
    %v2676 = vpop.f32.mrf.mxu0
    %v2677 = vadd.f32 0.0, %v2676
    %v2678 = vpop.f32.mrf.mxu0
    %v2679 = vadd.f32 0.0, %v2678
    %2680 = vmatmul.bf16.gmra.mxu0 %v2641
    %v2681 = vpop.f32.mrf.mxu0
    %v2682 = vadd.f32 0.0, %v2681
    %v2683 = vpop.f32.mrf.mxu0
    %v2684 = vadd.f32 0.0, %v2683
    %2685 = vmatmul.bf16.gmra.mxu0 %v2644
    %v2686 = vpop.f32.mrf.mxu0
    %v2687 = vadd.f32 0.0, %v2686
    %v2688 = vpop.f32.mrf.mxu0
    %v2689 = vadd.f32 0.0, %v2688
    %2690 = vmatmul.bf16.gmra.mxu0 %v2647
    %v2691 = vpop.f32.mrf.mxu0
    %v2692 = vadd.f32 0.0, %v2691
    %v2693 = vpop.f32.mrf.mxu0
    %v2694 = vadd.f32 0.0, %v2693
    %2695 = vmatmul.bf16.gmra.mxu0 %v2650
    %v2696 = vpop.f32.mrf.mxu0
    %v2697 = vadd.f32 0.0, %v2696
    %v2698 = vpop.f32.mrf.mxu0
    %v2699 = vadd.f32 0.0, %v2698
    %2700 = vdwg.mxu0
    %v2701 = vadd.f32 %v2587, %v2662
    %v2702 = vadd.f32 %v2588, %v2664
    %v2703 = vadd.f32 %v2589, %v2667
    %v2704 = vadd.f32 %v2590, %v2669
    %v2705 = vadd.f32 %v2591, %v2672
    %v2706 = vadd.f32 %v2592, %v2674
    %v2707 = vadd.f32 %v2593, %v2677
    %v2708 = vadd.f32 %v2594, %v2679
    %v2709 = vadd.f32 %v2595, %v2682
    %v2710 = vadd.f32 %v2596, %v2684
    %v2711 = vadd.f32 %v2597, %v2687
    %v2712 = vadd.f32 %v2598, %v2689
    %v2713 = vadd.f32 %v2599, %v2692
    %v2714 = vadd.f32 %v2600, %v2694
    %v2715 = vadd.f32 %v2601, %v2697
    %v2716 = vadd.f32 %v2602, %v2699
    %v2721 = vrot.slane %v1742, 1
    %v2722 = vrot.slane %v1743, 1
    %v2723 = vsel %vm1818, %v2721, %v2722
    %v2724 = vrot.slane %v1766, 1
    %v2725 = vrot.slane %v1767, 1
    %v2726 = vsel %vm1818, %v2724, %v2725
    %v2729 = vpack.c.bf16 %v1827, %v1824
    %v2730 = vpack.c.bf16 %v1833, %v1830
    %v2731 = vpack.c.bf16 %v1839, %v1836
    %v2732 = vpack.c.bf16 %v2723, %v1842
    %v2733 = vpack.c.bf16 %v1851, %v1848
    %v2734 = vpack.c.bf16 %v1857, %v1854
    %v2735 = vpack.c.bf16 %v1863, %v1860
    %v2736 = vpack.c.bf16 %v2726, %v1866
    %s2737 = scalar_lea.vmem %s3, 96
    %v2738 = vld [vmem:[%s2737] sm:$0xf]
    %v2739 = vld [vmem:[%s2737 + $0x4] sm:$0xf]
    %v2740 = vld [vmem:[%s2737 + $0x8] sm:$0xf]
    %v2741 = vld [vmem:[%s2737 + $0xc] sm:$0xf]
    %v2746 = vunpack.c.l.b16 %v2738
    %v2747 = vunpack.c.l.b16 %v2739
    %v2748 = vunpack.c.l.b16 %v2740
    %v2749 = vunpack.c.l.b16 %v2741
    %v2750 = vpack.c.b16 %v2747, %v2746
    %v2751 = vpack.c.b16 %v2749, %v2748
    %v2755 = vsel %vm218, %v2729, 0
    %v2758 = vsel %vm218, %v2730, 0
    %v2761 = vsel %vm218, %v2731, 0
    %v2764 = vsel %vm218, %v2732, 0
    %v2767 = vsel %vm218, %v2733, 0
    %v2770 = vsel %vm218, %v2734, 0
    %v2773 = vsel %vm218, %v2735, 0
    %v2776 = vsel %vm218, %v2736, 0
    %2778 = vmatpush.bf16.msra.mxu0 0
    %2779 = vmatpush.bf16.msra.mxu0 0
    %2780 = vmatpush.bf16.msra.mxu0 0
    %2781 = vmatpush.bf16.msra.mxu0 0
    %2782 = vmatpush.bf16.msra.mxu0 0
    %2783 = vmatpush.bf16.msra.mxu0 0
    %2784 = vmatpush.bf16.msra.mxu0 %v2751
    %2785 = vmatpush.bf16.msra.mxu0 %v2750
    %2786 = vmatmul.bf16.gmra.mxu0 %v2755
    %v2787 = vpop.f32.mrf.mxu0
    %v2788 = vadd.f32 0.0, %v2787
    %v2789 = vpop.f32.mrf.mxu0
    %v2790 = vadd.f32 0.0, %v2789
    %2791 = vmatmul.bf16.gmra.mxu0 %v2758
    %v2792 = vpop.f32.mrf.mxu0
    %v2793 = vadd.f32 0.0, %v2792
    %v2794 = vpop.f32.mrf.mxu0
    %v2795 = vadd.f32 0.0, %v2794
    %2796 = vmatmul.bf16.gmra.mxu0 %v2761
    %v2797 = vpop.f32.mrf.mxu0
    %v2798 = vadd.f32 0.0, %v2797
    %v2799 = vpop.f32.mrf.mxu0
    %v2800 = vadd.f32 0.0, %v2799
    %2801 = vmatmul.bf16.gmra.mxu0 %v2764
    %v2802 = vpop.f32.mrf.mxu0
    %v2803 = vadd.f32 0.0, %v2802
    %v2804 = vpop.f32.mrf.mxu0
    %v2805 = vadd.f32 0.0, %v2804
    %2806 = vmatmul.bf16.gmra.mxu0 %v2767
    %v2807 = vpop.f32.mrf.mxu0
    %v2808 = vadd.f32 0.0, %v2807
    %v2809 = vpop.f32.mrf.mxu0
    %v2810 = vadd.f32 0.0, %v2809
    %2811 = vmatmul.bf16.gmra.mxu0 %v2770
    %v2812 = vpop.f32.mrf.mxu0
    %v2813 = vadd.f32 0.0, %v2812
    %v2814 = vpop.f32.mrf.mxu0
    %v2815 = vadd.f32 0.0, %v2814
    %2816 = vmatmul.bf16.gmra.mxu0 %v2773
    %v2817 = vpop.f32.mrf.mxu0
    %v2818 = vadd.f32 0.0, %v2817
    %v2819 = vpop.f32.mrf.mxu0
    %v2820 = vadd.f32 0.0, %v2819
    %2821 = vmatmul.bf16.gmra.mxu0 %v2776
    %v2822 = vpop.f32.mrf.mxu0
    %v2823 = vadd.f32 0.0, %v2822
    %v2824 = vpop.f32.mrf.mxu0
    %v2825 = vadd.f32 0.0, %v2824
    %2826 = vdwg.mxu0
    %v2827 = vadd.f32 %v2701, %v2788
    %v2828 = vadd.f32 %v2702, %v2790
    %v2829 = vadd.f32 %v2703, %v2793
    %v2830 = vadd.f32 %v2704, %v2795
    %v2831 = vadd.f32 %v2705, %v2798
    %v2832 = vadd.f32 %v2706, %v2800
    %v2833 = vadd.f32 %v2707, %v2803
    %v2834 = vadd.f32 %v2708, %v2805
    %v2835 = vadd.f32 %v2709, %v2808
    %v2836 = vadd.f32 %v2710, %v2810
    %v2837 = vadd.f32 %v2711, %v2813
    %v2838 = vadd.f32 %v2712, %v2815
    %v2839 = vadd.f32 %v2713, %v2818
    %v2840 = vadd.f32 %v2714, %v2820
    %v2841 = vadd.f32 %v2715, %v2823
    %v2842 = vadd.f32 %v2716, %v2825
    %v2843 = vrot.slane %v1742, 2
    %v2844 = vrot.slane %v1743, 2
    %v2845 = vsel %vm2066, %v2843, %v2844
    %v2846 = vrot.slane %v1766, 2
    %v2847 = vrot.slane %v1767, 2
    %v2848 = vsel %vm2066, %v2846, %v2847
    %v2851 = vpack.c.bf16 %v2075, %v2072
    %v2852 = vpack.c.bf16 %v2081, %v2078
    %v2853 = vpack.c.bf16 %v2087, %v2084
    %v2854 = vpack.c.bf16 %v2845, %v2090
    %v2855 = vpack.c.bf16 %v2099, %v2096
    %v2856 = vpack.c.bf16 %v2105, %v2102
    %v2857 = vpack.c.bf16 %v2111, %v2108
    %v2858 = vpack.c.bf16 %v2848, %v2114
    %s2859 = scalar_lea.vmem %s3, 112
    %v2860 = vld [vmem:[%s2859] sm:$0xf]
    %v2861 = vld [vmem:[%s2859 + $0x4] sm:$0xf]
    %v2862 = vld [vmem:[%s2859 + $0x8] sm:$0xf]
    %v2863 = vld [vmem:[%s2859 + $0xc] sm:$0xf]
    %v2868 = vunpack.c.l.b16 %v2860
    %v2869 = vunpack.c.l.b16 %v2861
    %v2870 = vunpack.c.l.b16 %v2862
    %v2871 = vunpack.c.l.b16 %v2863
    %v2872 = vpack.c.b16 %v2869, %v2868
    %v2873 = vpack.c.b16 %v2871, %v2870
    %v2877 = vsel %vm218, %v2851, 0
    %v2880 = vsel %vm218, %v2852, 0
    %v2883 = vsel %vm218, %v2853, 0
    %v2886 = vsel %vm218, %v2854, 0
    %v2889 = vsel %vm218, %v2855, 0
    %v2892 = vsel %vm218, %v2856, 0
    %v2895 = vsel %vm218, %v2857, 0
    %v2898 = vsel %vm218, %v2858, 0
    %2900 = vmatpush.bf16.msra.mxu0 0
    %2901 = vmatpush.bf16.msra.mxu0 0
    %2902 = vmatpush.bf16.msra.mxu0 0
    %2903 = vmatpush.bf16.msra.mxu0 0
    %2904 = vmatpush.bf16.msra.mxu0 0
    %2905 = vmatpush.bf16.msra.mxu0 0
    %2906 = vmatpush.bf16.msra.mxu0 %v2873
    %2907 = vmatpush.bf16.msra.mxu0 %v2872
    %2908 = vmatmul.bf16.gmra.mxu0 %v2877
    %v2909 = vpop.f32.mrf.mxu0
    %v2910 = vadd.f32 0.0, %v2909
    %v2911 = vpop.f32.mrf.mxu0
    %v2912 = vadd.f32 0.0, %v2911
    %2913 = vmatmul.bf16.gmra.mxu0 %v2880
    %v2914 = vpop.f32.mrf.mxu0
    %v2915 = vadd.f32 0.0, %v2914
    %v2916 = vpop.f32.mrf.mxu0
    %v2917 = vadd.f32 0.0, %v2916
    %2918 = vmatmul.bf16.gmra.mxu0 %v2883
    %v2919 = vpop.f32.mrf.mxu0
    %v2920 = vadd.f32 0.0, %v2919
    %v2921 = vpop.f32.mrf.mxu0
    %v2922 = vadd.f32 0.0, %v2921
    %2923 = vmatmul.bf16.gmra.mxu0 %v2886
    %v2924 = vpop.f32.mrf.mxu0
    %v2925 = vadd.f32 0.0, %v2924
    %v2926 = vpop.f32.mrf.mxu0
    %v2927 = vadd.f32 0.0, %v2926
    %2928 = vmatmul.bf16.gmra.mxu0 %v2889
    %v2929 = vpop.f32.mrf.mxu0
    %v2930 = vadd.f32 0.0, %v2929
    %v2931 = vpop.f32.mrf.mxu0
    %v2932 = vadd.f32 0.0, %v2931
    %2933 = vmatmul.bf16.gmra.mxu0 %v2892
    %v2934 = vpop.f32.mrf.mxu0
    %v2935 = vadd.f32 0.0, %v2934
    %v2936 = vpop.f32.mrf.mxu0
    %v2937 = vadd.f32 0.0, %v2936
    %2938 = vmatmul.bf16.gmra.mxu0 %v2895
    %v2939 = vpop.f32.mrf.mxu0
    %v2940 = vadd.f32 0.0, %v2939
    %v2941 = vpop.f32.mrf.mxu0
    %v2942 = vadd.f32 0.0, %v2941
    %2943 = vmatmul.bf16.gmra.mxu0 %v2898
    %v2944 = vpop.f32.mrf.mxu0
    %v2945 = vadd.f32 0.0, %v2944
    %v2946 = vpop.f32.mrf.mxu0
    %v2947 = vadd.f32 0.0, %v2946
    %2948 = vdwg.mxu0
    %v2949 = vadd.f32 %v2827, %v2910
    %v2950 = vadd.f32 %v2828, %v2912
    %v2951 = vadd.f32 %v2829, %v2915
    %v2952 = vadd.f32 %v2830, %v2917
    %v2953 = vadd.f32 %v2831, %v2920
    %v2954 = vadd.f32 %v2832, %v2922
    %v2955 = vadd.f32 %v2833, %v2925
    %v2956 = vadd.f32 %v2834, %v2927
    %v2957 = vadd.f32 %v2835, %v2930
    %v2958 = vadd.f32 %v2836, %v2932
    %v2959 = vadd.f32 %v2837, %v2935
    %v2960 = vadd.f32 %v2838, %v2937
    %v2961 = vadd.f32 %v2839, %v2940
    %v2962 = vadd.f32 %v2840, %v2942
    %v2963 = vadd.f32 %v2841, %v2945
    %v2964 = vadd.f32 %v2842, %v2947
    %v2965 = vrot.slane %v1742, 3
    %v2966 = vrot.slane %v1743, 3
    %v2967 = vsel %vm2245, %v2965, %v2966
    %v2968 = vrot.slane %v1766, 3
    %v2969 = vrot.slane %v1767, 3
    %v2970 = vsel %vm2245, %v2968, %v2969
    %v2973 = vpack.c.bf16 %v2254, %v2251
    %v2974 = vpack.c.bf16 %v2260, %v2257
    %v2975 = vpack.c.bf16 %v2266, %v2263
    %v2976 = vpack.c.bf16 %v2967, %v2269
    %v2977 = vpack.c.bf16 %v2278, %v2275
    %v2978 = vpack.c.bf16 %v2284, %v2281
    %v2979 = vpack.c.bf16 %v2290, %v2287
    %v2980 = vpack.c.bf16 %v2970, %v2293
    %s2981 = scalar_lea.vmem %s3, 128
    %v2982 = vld [vmem:[%s2981] sm:$0xf]
    %v2983 = vld [vmem:[%s2981 + $0x4] sm:$0xf]
    %v2984 = vld [vmem:[%s2981 + $0x8] sm:$0xf]
    %v2985 = vld [vmem:[%s2981 + $0xc] sm:$0xf]
    %v2990 = vunpack.c.l.b16 %v2982
    %v2991 = vunpack.c.l.b16 %v2983
    %v2992 = vunpack.c.l.b16 %v2984
    %v2993 = vunpack.c.l.b16 %v2985
    %v2994 = vpack.c.b16 %v2991, %v2990
    %v2995 = vpack.c.b16 %v2993, %v2992
    %v2999 = vsel %vm218, %v2973, 0
    %v3002 = vsel %vm218, %v2974, 0
    %v3005 = vsel %vm218, %v2975, 0
    %v3008 = vsel %vm218, %v2976, 0
    %v3011 = vsel %vm218, %v2977, 0
    %v3014 = vsel %vm218, %v2978, 0
    %v3017 = vsel %vm218, %v2979, 0
    %v3020 = vsel %vm218, %v2980, 0
    %3022 = vmatpush.bf16.msra.mxu0 0
    %3023 = vmatpush.bf16.msra.mxu0 0
    %3024 = vmatpush.bf16.msra.mxu0 0
    %3025 = vmatpush.bf16.msra.mxu0 0
    %3026 = vmatpush.bf16.msra.mxu0 0
    %3027 = vmatpush.bf16.msra.mxu0 0
    %3028 = vmatpush.bf16.msra.mxu0 %v2995
    %3029 = vmatpush.bf16.msra.mxu0 %v2994
    %3030 = vmatmul.bf16.gmra.mxu0 %v2999
    %v3031 = vpop.f32.mrf.mxu0
    %v3032 = vadd.f32 0.0, %v3031
    %v3033 = vpop.f32.mrf.mxu0
    %v3034 = vadd.f32 0.0, %v3033
    %3035 = vmatmul.bf16.gmra.mxu0 %v3002
    %v3036 = vpop.f32.mrf.mxu0
    %v3037 = vadd.f32 0.0, %v3036
    %v3038 = vpop.f32.mrf.mxu0
    %v3039 = vadd.f32 0.0, %v3038
    %3040 = vmatmul.bf16.gmra.mxu0 %v3005
    %v3041 = vpop.f32.mrf.mxu0
    %v3042 = vadd.f32 0.0, %v3041
    %v3043 = vpop.f32.mrf.mxu0
    %v3044 = vadd.f32 0.0, %v3043
    %3045 = vmatmul.bf16.gmra.mxu0 %v3008
    %v3046 = vpop.f32.mrf.mxu0
    %v3047 = vadd.f32 0.0, %v3046
    %v3048 = vpop.f32.mrf.mxu0
    %v3049 = vadd.f32 0.0, %v3048
    %3050 = vmatmul.bf16.gmra.mxu0 %v3011
    %v3051 = vpop.f32.mrf.mxu0
    %v3052 = vadd.f32 0.0, %v3051
    %v3053 = vpop.f32.mrf.mxu0
    %v3054 = vadd.f32 0.0, %v3053
    %3055 = vmatmul.bf16.gmra.mxu0 %v3014
    %v3056 = vpop.f32.mrf.mxu0
    %v3057 = vadd.f32 0.0, %v3056
    %v3058 = vpop.f32.mrf.mxu0
    %v3059 = vadd.f32 0.0, %v3058
    %3060 = vmatmul.bf16.gmra.mxu0 %v3017
    %v3061 = vpop.f32.mrf.mxu0
    %v3062 = vadd.f32 0.0, %v3061
    %v3063 = vpop.f32.mrf.mxu0
    %v3064 = vadd.f32 0.0, %v3063
    %3065 = vmatmul.bf16.gmra.mxu0 %v3020
    %v3066 = vpop.f32.mrf.mxu0
    %v3067 = vadd.f32 0.0, %v3066
    %v3068 = vpop.f32.mrf.mxu0
    %v3069 = vadd.f32 0.0, %v3068
    %3070 = vdwg.mxu0
    %v3071 = vadd.f32 %v2949, %v3032
    %v3072 = vadd.f32 %v2950, %v3034
    %v3073 = vadd.f32 %v2951, %v3037
    %v3074 = vadd.f32 %v2952, %v3039
    %v3075 = vadd.f32 %v2953, %v3042
    %v3076 = vadd.f32 %v2954, %v3044
    %v3077 = vadd.f32 %v2955, %v3047
    %v3078 = vadd.f32 %v2956, %v3049
    %v3079 = vadd.f32 %v2957, %v3052
    %v3080 = vadd.f32 %v2958, %v3054
    %v3081 = vadd.f32 %v2959, %v3057
    %v3082 = vadd.f32 %v2960, %v3059
    %v3083 = vadd.f32 %v2961, %v3062
    %v3084 = vadd.f32 %v2962, %v3064
    %v3085 = vadd.f32 %v2963, %v3067
    %v3086 = vadd.f32 %v2964, %v3069
    %v3087 = vrot.slane %v1742, 4
    %v3088 = vrot.slane %v1743, 4
    %v3089 = vsel %vm2424, %v3087, %v3088
    %v3090 = vrot.slane %v1766, 4
    %v3091 = vrot.slane %v1767, 4
    %v3092 = vsel %vm2424, %v3090, %v3091
    %v3095 = vpack.c.bf16 %v2433, %v2430
    %v3096 = vpack.c.bf16 %v2439, %v2436
    %v3097 = vpack.c.bf16 %v2445, %v2442
    %v3098 = vpack.c.bf16 %v3089, %v2448
    %v3099 = vpack.c.bf16 %v2457, %v2454
    %v3100 = vpack.c.bf16 %v2463, %v2460
    %v3101 = vpack.c.bf16 %v2469, %v2466
    %v3102 = vpack.c.bf16 %v3092, %v2472
    %s3103 = scalar_lea.vmem %s3, 144
    %v3104 = vld [vmem:[%s3103] sm:$0xf]
    %v3105 = vld [vmem:[%s3103 + $0x4] sm:$0xf]
    %v3106 = vld [vmem:[%s3103 + $0x8] sm:$0xf]
    %v3107 = vld [vmem:[%s3103 + $0xc] sm:$0xf]
    %v3112 = vunpack.c.l.b16 %v3104
    %v3113 = vunpack.c.l.b16 %v3105
    %v3114 = vunpack.c.l.b16 %v3106
    %v3115 = vunpack.c.l.b16 %v3107
    %v3116 = vpack.c.b16 %v3113, %v3112
    %v3117 = vpack.c.b16 %v3115, %v3114
    %v3121 = vsel %vm218, %v3095, 0
    %v3124 = vsel %vm218, %v3096, 0
    %v3127 = vsel %vm218, %v3097, 0
    %v3130 = vsel %vm218, %v3098, 0
    %v3133 = vsel %vm218, %v3099, 0
    %v3136 = vsel %vm218, %v3100, 0
    %v3139 = vsel %vm218, %v3101, 0
    %v3142 = vsel %vm218, %v3102, 0
    %3144 = vmatpush.bf16.msra.mxu0 0
    %3145 = vmatpush.bf16.msra.mxu0 0
    %3146 = vmatpush.bf16.msra.mxu0 0
    %3147 = vmatpush.bf16.msra.mxu0 0
    %3148 = vmatpush.bf16.msra.mxu0 0
    %3149 = vmatpush.bf16.msra.mxu0 0
    %3150 = vmatpush.bf16.msra.mxu0 %v3117
    %3151 = vmatpush.bf16.msra.mxu0 %v3116
    %3152 = vmatmul.bf16.gmra.mxu0 %v3121
    %v3153 = vpop.f32.mrf.mxu0
    %v3154 = vadd.f32 0.0, %v3153
    %v3155 = vpop.f32.mrf.mxu0
    %v3156 = vadd.f32 0.0, %v3155
    %3157 = vmatmul.bf16.gmra.mxu0 %v3124
    %v3158 = vpop.f32.mrf.mxu0
    %v3159 = vadd.f32 0.0, %v3158
    %v3160 = vpop.f32.mrf.mxu0
    %v3161 = vadd.f32 0.0, %v3160
    %3162 = vmatmul.bf16.gmra.mxu0 %v3127
    %v3163 = vpop.f32.mrf.mxu0
    %v3164 = vadd.f32 0.0, %v3163
    %v3165 = vpop.f32.mrf.mxu0
    %v3166 = vadd.f32 0.0, %v3165
    %3167 = vmatmul.bf16.gmra.mxu0 %v3130
    %v3168 = vpop.f32.mrf.mxu0
    %v3169 = vadd.f32 0.0, %v3168
    %v3170 = vpop.f32.mrf.mxu0
    %v3171 = vadd.f32 0.0, %v3170
    %3172 = vmatmul.bf16.gmra.mxu0 %v3133
    %v3173 = vpop.f32.mrf.mxu0
    %v3174 = vadd.f32 0.0, %v3173
    %v3175 = vpop.f32.mrf.mxu0
    %v3176 = vadd.f32 0.0, %v3175
    %3177 = vmatmul.bf16.gmra.mxu0 %v3136
    %v3178 = vpop.f32.mrf.mxu0
    %v3179 = vadd.f32 0.0, %v3178
    %v3180 = vpop.f32.mrf.mxu0
    %v3181 = vadd.f32 0.0, %v3180
    %3182 = vmatmul.bf16.gmra.mxu0 %v3139
    %v3183 = vpop.f32.mrf.mxu0
    %v3184 = vadd.f32 0.0, %v3183
    %v3185 = vpop.f32.mrf.mxu0
    %v3186 = vadd.f32 0.0, %v3185
    %3187 = vmatmul.bf16.gmra.mxu0 %v3142
    %v3188 = vpop.f32.mrf.mxu0
    %v3189 = vadd.f32 0.0, %v3188
    %v3190 = vpop.f32.mrf.mxu0
    %v3191 = vadd.f32 0.0, %v3190
    %3192 = vdwg.mxu0
    %v3193 = vadd.f32 %v3071, %v3154
    %v3194 = vadd.f32 %v3072, %v3156
    %v3195 = vadd.f32 %v3073, %v3159
    %v3196 = vadd.f32 %v3074, %v3161
    %v3197 = vadd.f32 %v3075, %v3164
    %v3198 = vadd.f32 %v3076, %v3166
    %v3199 = vadd.f32 %v3077, %v3169
    %v3200 = vadd.f32 %v3078, %v3171
    %v3201 = vadd.f32 %v3079, %v3174
    %v3202 = vadd.f32 %v3080, %v3176
    %v3203 = vadd.f32 %v3081, %v3179
    %v3204 = vadd.f32 %v3082, %v3181
    %v3205 = vadd.f32 %v3083, %v3184
    %v3206 = vadd.f32 %v3084, %v3186
    %v3207 = vadd.f32 %v3085, %v3189
    %v3208 = vadd.f32 %v3086, %v3191
    %v3209 = vpack.c.bf16 %v1744, %v1742
    %v3210 = vpack.c.bf16 %v1768, %v1766
    %s3211 = scalar_lea.vmem %s3, 160
    %v3212 = vld [vmem:[%s3211] sm:$0xf]
    %v3213 = vld [vmem:[%s3211 + $0x4] sm:$0xf]
    %v3214 = vld [vmem:[%s3211 + $0x8] sm:$0xf]
    %v3215 = vld [vmem:[%s3211 + $0xc] sm:$0xf]
    %v3220 = vunpack.c.l.b16 %v3212
    %v3221 = vunpack.c.l.b16 %v3213
    %v3222 = vunpack.c.l.b16 %v3214
    %v3223 = vunpack.c.l.b16 %v3215
    %v3224 = vpack.c.b16 %v3221, %v3220
    %v3225 = vpack.c.b16 %v3223, %v3222
    %v3229 = vsel %vm218, %v3209, 0
    %v3232 = vsel %vm218, %v3210, 0
    %3234 = vmatpush.bf16.msra.mxu0 0
    %3235 = vmatpush.bf16.msra.mxu0 0
    %3236 = vmatpush.bf16.msra.mxu0 0
    %3237 = vmatpush.bf16.msra.mxu0 0
    %3238 = vmatpush.bf16.msra.mxu0 0
    %3239 = vmatpush.bf16.msra.mxu0 0
    %3240 = vmatpush.bf16.msra.mxu0 %v3225
    %3241 = vmatpush.bf16.msra.mxu0 %v3224
    %3242 = vmatmul.bf16.gmra.mxu0 %v1997
    %v3243 = vpop.f32.mrf.mxu0
    %v3244 = vadd.f32 0.0, %v3243
    %v3245 = vpop.f32.mrf.mxu0
    %v3246 = vadd.f32 0.0, %v3245
    %3247 = vmatmul.bf16.gmra.mxu0 %v2000
    %v3248 = vpop.f32.mrf.mxu0
    %v3249 = vadd.f32 0.0, %v3248
    %v3250 = vpop.f32.mrf.mxu0
    %v3251 = vadd.f32 0.0, %v3250
    %3252 = vmatmul.bf16.gmra.mxu0 %v2003
    %v3253 = vpop.f32.mrf.mxu0
    %v3254 = vadd.f32 0.0, %v3253
    %v3255 = vpop.f32.mrf.mxu0
    %v3256 = vadd.f32 0.0, %v3255
    %3257 = vmatmul.bf16.gmra.mxu0 %v3229
    %v3258 = vpop.f32.mrf.mxu0
    %v3259 = vadd.f32 0.0, %v3258
    %v3260 = vpop.f32.mrf.mxu0
    %v3261 = vadd.f32 0.0, %v3260
    %3262 = vmatmul.bf16.gmra.mxu0 %v2009
    %v3263 = vpop.f32.mrf.mxu0
    %v3264 = vadd.f32 0.0, %v3263
    %v3265 = vpop.f32.mrf.mxu0
    %v3266 = vadd.f32 0.0, %v3265
    %3267 = vmatmul.bf16.gmra.mxu0 %v2012
    %v3268 = vpop.f32.mrf.mxu0
    %v3269 = vadd.f32 0.0, %v3268
    %v3270 = vpop.f32.mrf.mxu0
    %v3271 = vadd.f32 0.0, %v3270
    %3272 = vmatmul.bf16.gmra.mxu0 %v2015
    %v3273 = vpop.f32.mrf.mxu0
    %v3274 = vadd.f32 0.0, %v3273
    %v3275 = vpop.f32.mrf.mxu0
    %v3276 = vadd.f32 0.0, %v3275
    %3277 = vmatmul.bf16.gmra.mxu0 %v3232
    %v3278 = vpop.f32.mrf.mxu0
    %v3279 = vadd.f32 0.0, %v3278
    %v3280 = vpop.f32.mrf.mxu0
    %v3281 = vadd.f32 0.0, %v3280
    %3282 = vdwg.mxu0
    %v3283 = vadd.f32 %v3193, %v3244
    %v3284 = vadd.f32 %v3194, %v3246
    %v3285 = vadd.f32 %v3195, %v3249
    %v3286 = vadd.f32 %v3196, %v3251
    %v3287 = vadd.f32 %v3197, %v3254
    %v3288 = vadd.f32 %v3198, %v3256
    %v3289 = vadd.f32 %v3199, %v3259
    %v3290 = vadd.f32 %v3200, %v3261
    %v3291 = vadd.f32 %v3201, %v3264
    %v3292 = vadd.f32 %v3202, %v3266
    %v3293 = vadd.f32 %v3203, %v3269
    %v3294 = vadd.f32 %v3204, %v3271
    %v3295 = vadd.f32 %v3205, %v3274
    %v3296 = vadd.f32 %v3206, %v3276
    %v3297 = vadd.f32 %v3207, %v3279
    %v3298 = vadd.f32 %v3208, %v3281
    %v3303 = vrot.slane %v1744, 1
    %v3304 = vrot.slane %v1745, 1
    %v3305 = vsel %vm1818, %v3303, %v3304
    %v3306 = vrot.slane %v1768, 1
    %v3307 = vrot.slane %v1769, 1
    %v3308 = vsel %vm1818, %v3306, %v3307
    %v3311 = vpack.c.bf16 %v3305, %v2723
    %v3312 = vpack.c.bf16 %v3308, %v2726
    %s3313 = scalar_lea.vmem %s3, 176
    %v3314 = vld [vmem:[%s3313] sm:$0xf]
    %v3315 = vld [vmem:[%s3313 + $0x4] sm:$0xf]
    %v3316 = vld [vmem:[%s3313 + $0x8] sm:$0xf]
    %v3317 = vld [vmem:[%s3313 + $0xc] sm:$0xf]
    %v3322 = vunpack.c.l.b16 %v3314
    %v3323 = vunpack.c.l.b16 %v3315
    %v3324 = vunpack.c.l.b16 %v3316
    %v3325 = vunpack.c.l.b16 %v3317
    %v3326 = vpack.c.b16 %v3323, %v3322
    %v3327 = vpack.c.b16 %v3325, %v3324
    %v3331 = vsel %vm218, %v3311, 0
    %v3334 = vsel %vm218, %v3312, 0
    %3336 = vmatpush.bf16.msra.mxu0 0
    %3337 = vmatpush.bf16.msra.mxu0 0
    %3338 = vmatpush.bf16.msra.mxu0 0
    %3339 = vmatpush.bf16.msra.mxu0 0
    %3340 = vmatpush.bf16.msra.mxu0 0
    %3341 = vmatpush.bf16.msra.mxu0 0
    %3342 = vmatpush.bf16.msra.mxu0 %v3327
    %3343 = vmatpush.bf16.msra.mxu0 %v3326
    %3344 = vmatmul.bf16.gmra.mxu0 %v1912
    %v3345 = vpop.f32.mrf.mxu0
    %v3346 = vadd.f32 0.0, %v3345
    %v3347 = vpop.f32.mrf.mxu0
    %v3348 = vadd.f32 0.0, %v3347
    %3349 = vmatmul.bf16.gmra.mxu0 %v1915
    %v3350 = vpop.f32.mrf.mxu0
    %v3351 = vadd.f32 0.0, %v3350
    %v3352 = vpop.f32.mrf.mxu0
    %v3353 = vadd.f32 0.0, %v3352
    %3354 = vmatmul.bf16.gmra.mxu0 %v1918
    %v3355 = vpop.f32.mrf.mxu0
    %v3356 = vadd.f32 0.0, %v3355
    %v3357 = vpop.f32.mrf.mxu0
    %v3358 = vadd.f32 0.0, %v3357
    %3359 = vmatmul.bf16.gmra.mxu0 %v3331
    %v3360 = vpop.f32.mrf.mxu0
    %v3361 = vadd.f32 0.0, %v3360
    %v3362 = vpop.f32.mrf.mxu0
    %v3363 = vadd.f32 0.0, %v3362
    %3364 = vmatmul.bf16.gmra.mxu0 %v1924
    %v3365 = vpop.f32.mrf.mxu0
    %v3366 = vadd.f32 0.0, %v3365
    %v3367 = vpop.f32.mrf.mxu0
    %v3368 = vadd.f32 0.0, %v3367
    %3369 = vmatmul.bf16.gmra.mxu0 %v1927
    %v3370 = vpop.f32.mrf.mxu0
    %v3371 = vadd.f32 0.0, %v3370
    %v3372 = vpop.f32.mrf.mxu0
    %v3373 = vadd.f32 0.0, %v3372
    %3374 = vmatmul.bf16.gmra.mxu0 %v1930
    %v3375 = vpop.f32.mrf.mxu0
    %v3376 = vadd.f32 0.0, %v3375
    %v3377 = vpop.f32.mrf.mxu0
    %v3378 = vadd.f32 0.0, %v3377
    %3379 = vmatmul.bf16.gmra.mxu0 %v3334
    %v3380 = vpop.f32.mrf.mxu0
    %v3381 = vadd.f32 0.0, %v3380
    %v3382 = vpop.f32.mrf.mxu0
    %v3383 = vadd.f32 0.0, %v3382
    %3384 = vdwg.mxu0
    %v3385 = vadd.f32 %v3283, %v3346
    %v3386 = vadd.f32 %v3284, %v3348
    %v3387 = vadd.f32 %v3285, %v3351
    %v3388 = vadd.f32 %v3286, %v3353
    %v3389 = vadd.f32 %v3287, %v3356
    %v3390 = vadd.f32 %v3288, %v3358
    %v3391 = vadd.f32 %v3289, %v3361
    %v3392 = vadd.f32 %v3290, %v3363
    %v3393 = vadd.f32 %v3291, %v3366
    %v3394 = vadd.f32 %v3292, %v3368
    %v3395 = vadd.f32 %v3293, %v3371
    %v3396 = vadd.f32 %v3294, %v3373
    %v3397 = vadd.f32 %v3295, %v3376
    %v3398 = vadd.f32 %v3296, %v3378
    %v3399 = vadd.f32 %v3297, %v3381
    %v3400 = vadd.f32 %v3298, %v3383
    %v3401 = vrot.slane %v1744, 2
    %v3402 = vrot.slane %v1745, 2
    %v3403 = vsel %vm2066, %v3401, %v3402
    %v3404 = vrot.slane %v1768, 2
    %v3405 = vrot.slane %v1769, 2
    %v3406 = vsel %vm2066, %v3404, %v3405
    %v3409 = vpack.c.bf16 %v3403, %v2845
    %v3410 = vpack.c.bf16 %v3406, %v2848
    %s3411 = scalar_lea.vmem %s3, 192
    %v3412 = vld [vmem:[%s3411] sm:$0xf]
    %v3413 = vld [vmem:[%s3411 + $0x4] sm:$0xf]
    %v3414 = vld [vmem:[%s3411 + $0x8] sm:$0xf]
    %v3415 = vld [vmem:[%s3411 + $0xc] sm:$0xf]
    %v3420 = vunpack.c.l.b16 %v3412
    %v3421 = vunpack.c.l.b16 %v3413
    %v3422 = vunpack.c.l.b16 %v3414
    %v3423 = vunpack.c.l.b16 %v3415
    %v3424 = vpack.c.b16 %v3421, %v3420
    %v3425 = vpack.c.b16 %v3423, %v3422
    %v3429 = vsel %vm218, %v3409, 0
    %v3432 = vsel %vm218, %v3410, 0
    %3434 = vmatpush.bf16.msra.mxu0 0
    %3435 = vmatpush.bf16.msra.mxu0 0
    %3436 = vmatpush.bf16.msra.mxu0 0
    %3437 = vmatpush.bf16.msra.mxu0 0
    %3438 = vmatpush.bf16.msra.mxu0 0
    %3439 = vmatpush.bf16.msra.mxu0 0
    %3440 = vmatpush.bf16.msra.mxu0 %v3425
    %3441 = vmatpush.bf16.msra.mxu0 %v3424
    %3442 = vmatmul.bf16.gmra.mxu0 %v2160
    %v3443 = vpop.f32.mrf.mxu0
    %v3444 = vadd.f32 0.0, %v3443
    %v3445 = vpop.f32.mrf.mxu0
    %v3446 = vadd.f32 0.0, %v3445
    %3447 = vmatmul.bf16.gmra.mxu0 %v2163
    %v3448 = vpop.f32.mrf.mxu0
    %v3449 = vadd.f32 0.0, %v3448
    %v3450 = vpop.f32.mrf.mxu0
    %v3451 = vadd.f32 0.0, %v3450
    %3452 = vmatmul.bf16.gmra.mxu0 %v2166
    %v3453 = vpop.f32.mrf.mxu0
    %v3454 = vadd.f32 0.0, %v3453
    %v3455 = vpop.f32.mrf.mxu0
    %v3456 = vadd.f32 0.0, %v3455
    %3457 = vmatmul.bf16.gmra.mxu0 %v3429
    %v3458 = vpop.f32.mrf.mxu0
    %v3459 = vadd.f32 0.0, %v3458
    %v3460 = vpop.f32.mrf.mxu0
    %v3461 = vadd.f32 0.0, %v3460
    %3462 = vmatmul.bf16.gmra.mxu0 %v2172
    %v3463 = vpop.f32.mrf.mxu0
    %v3464 = vadd.f32 0.0, %v3463
    %v3465 = vpop.f32.mrf.mxu0
    %v3466 = vadd.f32 0.0, %v3465
    %3467 = vmatmul.bf16.gmra.mxu0 %v2175
    %v3468 = vpop.f32.mrf.mxu0
    %v3469 = vadd.f32 0.0, %v3468
    %v3470 = vpop.f32.mrf.mxu0
    %v3471 = vadd.f32 0.0, %v3470
    %3472 = vmatmul.bf16.gmra.mxu0 %v2178
    %v3473 = vpop.f32.mrf.mxu0
    %v3474 = vadd.f32 0.0, %v3473
    %v3475 = vpop.f32.mrf.mxu0
    %v3476 = vadd.f32 0.0, %v3475
    %3477 = vmatmul.bf16.gmra.mxu0 %v3432
    %v3478 = vpop.f32.mrf.mxu0
    %v3479 = vadd.f32 0.0, %v3478
    %v3480 = vpop.f32.mrf.mxu0
    %v3481 = vadd.f32 0.0, %v3480
    %3482 = vdwg.mxu0
    %v3483 = vadd.f32 %v3385, %v3444
    %v3484 = vadd.f32 %v3386, %v3446
    %v3485 = vadd.f32 %v3387, %v3449
    %v3486 = vadd.f32 %v3388, %v3451
    %v3487 = vadd.f32 %v3389, %v3454
    %v3488 = vadd.f32 %v3390, %v3456
    %v3489 = vadd.f32 %v3391, %v3459
    %v3490 = vadd.f32 %v3392, %v3461
    %v3491 = vadd.f32 %v3393, %v3464
    %v3492 = vadd.f32 %v3394, %v3466
    %v3493 = vadd.f32 %v3395, %v3469
    %v3494 = vadd.f32 %v3396, %v3471
    %v3495 = vadd.f32 %v3397, %v3474
    %v3496 = vadd.f32 %v3398, %v3476
    %v3497 = vadd.f32 %v3399, %v3479
    %v3498 = vadd.f32 %v3400, %v3481
    %v3499 = vrot.slane %v1744, 3
    %v3500 = vrot.slane %v1745, 3
    %v3501 = vsel %vm2245, %v3499, %v3500
    %v3502 = vrot.slane %v1768, 3
    %v3503 = vrot.slane %v1769, 3
    %v3504 = vsel %vm2245, %v3502, %v3503
    %v3507 = vpack.c.bf16 %v3501, %v2967
    %v3508 = vpack.c.bf16 %v3504, %v2970
    %s3509 = scalar_lea.vmem %s3, 208
    %v3510 = vld [vmem:[%s3509] sm:$0xf]
    %v3511 = vld [vmem:[%s3509 + $0x4] sm:$0xf]
    %v3512 = vld [vmem:[%s3509 + $0x8] sm:$0xf]
    %v3513 = vld [vmem:[%s3509 + $0xc] sm:$0xf]
    %v3518 = vunpack.c.l.b16 %v3510
    %v3519 = vunpack.c.l.b16 %v3511
    %v3520 = vunpack.c.l.b16 %v3512
    %v3521 = vunpack.c.l.b16 %v3513
    %v3522 = vpack.c.b16 %v3519, %v3518
    %v3523 = vpack.c.b16 %v3521, %v3520
    %v3527 = vsel %vm218, %v3507, 0
    %v3530 = vsel %vm218, %v3508, 0
    %3532 = vmatpush.bf16.msra.mxu0 0
    %3533 = vmatpush.bf16.msra.mxu0 0
    %3534 = vmatpush.bf16.msra.mxu0 0
    %3535 = vmatpush.bf16.msra.mxu0 0
    %3536 = vmatpush.bf16.msra.mxu0 0
    %3537 = vmatpush.bf16.msra.mxu0 0
    %3538 = vmatpush.bf16.msra.mxu0 %v3523
    %3539 = vmatpush.bf16.msra.mxu0 %v3522
    %3540 = vmatmul.bf16.gmra.mxu0 %v2339
    %v3541 = vpop.f32.mrf.mxu0
    %v3542 = vadd.f32 0.0, %v3541
    %v3543 = vpop.f32.mrf.mxu0
    %v3544 = vadd.f32 0.0, %v3543
    %3545 = vmatmul.bf16.gmra.mxu0 %v2342
    %v3546 = vpop.f32.mrf.mxu0
    %v3547 = vadd.f32 0.0, %v3546
    %v3548 = vpop.f32.mrf.mxu0
    %v3549 = vadd.f32 0.0, %v3548
    %3550 = vmatmul.bf16.gmra.mxu0 %v2345
    %v3551 = vpop.f32.mrf.mxu0
    %v3552 = vadd.f32 0.0, %v3551
    %v3553 = vpop.f32.mrf.mxu0
    %v3554 = vadd.f32 0.0, %v3553
    %3555 = vmatmul.bf16.gmra.mxu0 %v3527
    %v3556 = vpop.f32.mrf.mxu0
    %v3557 = vadd.f32 0.0, %v3556
    %v3558 = vpop.f32.mrf.mxu0
    %v3559 = vadd.f32 0.0, %v3558
    %3560 = vmatmul.bf16.gmra.mxu0 %v2351
    %v3561 = vpop.f32.mrf.mxu0
    %v3562 = vadd.f32 0.0, %v3561
    %v3563 = vpop.f32.mrf.mxu0
    %v3564 = vadd.f32 0.0, %v3563
    %3565 = vmatmul.bf16.gmra.mxu0 %v2354
    %v3566 = vpop.f32.mrf.mxu0
    %v3567 = vadd.f32 0.0, %v3566
    %v3568 = vpop.f32.mrf.mxu0
    %v3569 = vadd.f32 0.0, %v3568
    %3570 = vmatmul.bf16.gmra.mxu0 %v2357
    %v3571 = vpop.f32.mrf.mxu0
    %v3572 = vadd.f32 0.0, %v3571
    %v3573 = vpop.f32.mrf.mxu0
    %v3574 = vadd.f32 0.0, %v3573
    %3575 = vmatmul.bf16.gmra.mxu0 %v3530
    %v3576 = vpop.f32.mrf.mxu0
    %v3577 = vadd.f32 0.0, %v3576
    %v3578 = vpop.f32.mrf.mxu0
    %v3579 = vadd.f32 0.0, %v3578
    %3580 = vdwg.mxu0
    %v3581 = vadd.f32 %v3483, %v3542
    %v3582 = vadd.f32 %v3484, %v3544
    %v3583 = vadd.f32 %v3485, %v3547
    %v3584 = vadd.f32 %v3486, %v3549
    %v3585 = vadd.f32 %v3487, %v3552
    %v3586 = vadd.f32 %v3488, %v3554
    %v3587 = vadd.f32 %v3489, %v3557
    %v3588 = vadd.f32 %v3490, %v3559
    %v3589 = vadd.f32 %v3491, %v3562
    %v3590 = vadd.f32 %v3492, %v3564
    %v3591 = vadd.f32 %v3493, %v3567
    %v3592 = vadd.f32 %v3494, %v3569
    %v3593 = vadd.f32 %v3495, %v3572
    %v3594 = vadd.f32 %v3496, %v3574
    %v3595 = vadd.f32 %v3497, %v3577
    %v3596 = vadd.f32 %v3498, %v3579
    %v3597 = vrot.slane %v1744, 4
    %v3598 = vrot.slane %v1745, 4
    %v3599 = vsel %vm2424, %v3597, %v3598
    %v3600 = vrot.slane %v1768, 4
    %v3601 = vrot.slane %v1769, 4
    %v3602 = vsel %vm2424, %v3600, %v3601
    %v3605 = vpack.c.bf16 %v3599, %v3089
    %v3606 = vpack.c.bf16 %v3602, %v3092
    %s3607 = scalar_lea.vmem %s3, 224
    %v3608 = vld [vmem:[%s3607] sm:$0xf]
    %v3609 = vld [vmem:[%s3607 + $0x4] sm:$0xf]
    %v3610 = vld [vmem:[%s3607 + $0x8] sm:$0xf]
    %v3611 = vld [vmem:[%s3607 + $0xc] sm:$0xf]
    %v3616 = vunpack.c.l.b16 %v3608
    %v3617 = vunpack.c.l.b16 %v3609
    %v3618 = vunpack.c.l.b16 %v3610
    %v3619 = vunpack.c.l.b16 %v3611
    %v3620 = vpack.c.b16 %v3617, %v3616
    %v3621 = vpack.c.b16 %v3619, %v3618
    %v3625 = vsel %vm218, %v3605, 0
    %v3628 = vsel %vm218, %v3606, 0
    %3630 = vmatpush.bf16.msra.mxu0 0
    %3631 = vmatpush.bf16.msra.mxu0 0
    %3632 = vmatpush.bf16.msra.mxu0 0
    %3633 = vmatpush.bf16.msra.mxu0 0
    %3634 = vmatpush.bf16.msra.mxu0 0
    %3635 = vmatpush.bf16.msra.mxu0 0
    %3636 = vmatpush.bf16.msra.mxu0 %v3621
    %3637 = vmatpush.bf16.msra.mxu0 %v3620
    %3638 = vmatmul.bf16.gmra.mxu0 %v2518
    %v3639 = vpop.f32.mrf.mxu0
    %v3640 = vadd.f32 0.0, %v3639
    %v3641 = vpop.f32.mrf.mxu0
    %v3642 = vadd.f32 0.0, %v3641
    %3643 = vmatmul.bf16.gmra.mxu0 %v2521
    %v3644 = vpop.f32.mrf.mxu0
    %v3645 = vadd.f32 0.0, %v3644
    %v3646 = vpop.f32.mrf.mxu0
    %v3647 = vadd.f32 0.0, %v3646
    %3648 = vmatmul.bf16.gmra.mxu0 %v2524
    %v3649 = vpop.f32.mrf.mxu0
    %v3650 = vadd.f32 0.0, %v3649
    %v3651 = vpop.f32.mrf.mxu0
    %v3652 = vadd.f32 0.0, %v3651
    %3653 = vmatmul.bf16.gmra.mxu0 %v3625
    %v3654 = vpop.f32.mrf.mxu0
    %v3655 = vadd.f32 0.0, %v3654
    %v3656 = vpop.f32.mrf.mxu0
    %v3657 = vadd.f32 0.0, %v3656
    %3658 = vmatmul.bf16.gmra.mxu0 %v2530
    %v3659 = vpop.f32.mrf.mxu0
    %v3660 = vadd.f32 0.0, %v3659
    %v3661 = vpop.f32.mrf.mxu0
    %v3662 = vadd.f32 0.0, %v3661
    %3663 = vmatmul.bf16.gmra.mxu0 %v2533
    %v3664 = vpop.f32.mrf.mxu0
    %v3665 = vadd.f32 0.0, %v3664
    %v3666 = vpop.f32.mrf.mxu0
    %v3667 = vadd.f32 0.0, %v3666
    %3668 = vmatmul.bf16.gmra.mxu0 %v2536
    %v3669 = vpop.f32.mrf.mxu0
    %v3670 = vadd.f32 0.0, %v3669
    %v3671 = vpop.f32.mrf.mxu0
    %v3672 = vadd.f32 0.0, %v3671
    %3673 = vmatmul.bf16.gmra.mxu0 %v3628
    %v3674 = vpop.f32.mrf.mxu0
    %v3675 = vadd.f32 0.0, %v3674
    %v3676 = vpop.f32.mrf.mxu0
    %v3677 = vadd.f32 0.0, %v3676
    %3678 = vdwg.mxu0
    %v3679 = vadd.f32 %v3581, %v3640
    %v3680 = vadd.f32 %v3582, %v3642
    %v3681 = vadd.f32 %v3583, %v3645
    %v3682 = vadd.f32 %v3584, %v3647
    %v3683 = vadd.f32 %v3585, %v3650
    %v3684 = vadd.f32 %v3586, %v3652
    %v3685 = vadd.f32 %v3587, %v3655
    %v3686 = vadd.f32 %v3588, %v3657
    %v3687 = vadd.f32 %v3589, %v3660
    %v3688 = vadd.f32 %v3590, %v3662
    %v3689 = vadd.f32 %v3591, %v3665
    %v3690 = vadd.f32 %v3592, %v3667
    %v3691 = vadd.f32 %v3593, %v3670
    %v3692 = vadd.f32 %v3594, %v3672
    %v3693 = vadd.f32 %v3595, %v3675
    %v3694 = vadd.f32 %v3596, %v3677
    %v3695 = vpack.c.bf16 %v1746, %v1744
    %v3696 = vpack.c.bf16 %v1770, %v1768
    %s3697 = scalar_lea.vmem %s3, 240
    %v3698 = vld [vmem:[%s3697] sm:$0xf]
    %v3699 = vld [vmem:[%s3697 + $0x4] sm:$0xf]
    %v3700 = vld [vmem:[%s3697 + $0x8] sm:$0xf]
    %v3701 = vld [vmem:[%s3697 + $0xc] sm:$0xf]
    %v3706 = vunpack.c.l.b16 %v3698
    %v3707 = vunpack.c.l.b16 %v3699
    %v3708 = vunpack.c.l.b16 %v3700
    %v3709 = vunpack.c.l.b16 %v3701
    %v3710 = vpack.c.b16 %v3707, %v3706
    %v3711 = vpack.c.b16 %v3709, %v3708
    %v3715 = vsel %vm218, %v3695, 0
    %v3718 = vsel %vm218, %v3696, 0
    %3720 = vmatpush.bf16.msra.mxu0 0
    %3721 = vmatpush.bf16.msra.mxu0 0
    %3722 = vmatpush.bf16.msra.mxu0 0
    %3723 = vmatpush.bf16.msra.mxu0 0
    %3724 = vmatpush.bf16.msra.mxu0 0
    %3725 = vmatpush.bf16.msra.mxu0 0
    %3726 = vmatpush.bf16.msra.mxu0 %v3711
    %3727 = vmatpush.bf16.msra.mxu0 %v3710
    %3728 = vmatmul.bf16.gmra.mxu0 %v2632
    %v3729 = vpop.f32.mrf.mxu0
    %v3730 = vadd.f32 0.0, %v3729
    %v3731 = vpop.f32.mrf.mxu0
    %v3732 = vadd.f32 0.0, %v3731
    %3733 = vmatmul.bf16.gmra.mxu0 %v2635
    %v3734 = vpop.f32.mrf.mxu0
    %v3735 = vadd.f32 0.0, %v3734
    %v3736 = vpop.f32.mrf.mxu0
    %v3737 = vadd.f32 0.0, %v3736
    %3738 = vmatmul.bf16.gmra.mxu0 %v2638
    %v3739 = vpop.f32.mrf.mxu0
    %v3740 = vadd.f32 0.0, %v3739
    %v3741 = vpop.f32.mrf.mxu0
    %v3742 = vadd.f32 0.0, %v3741
    %3743 = vmatmul.bf16.gmra.mxu0 %v3715
    %v3744 = vpop.f32.mrf.mxu0
    %v3745 = vadd.f32 0.0, %v3744
    %v3746 = vpop.f32.mrf.mxu0
    %v3747 = vadd.f32 0.0, %v3746
    %3748 = vmatmul.bf16.gmra.mxu0 %v2644
    %v3749 = vpop.f32.mrf.mxu0
    %v3750 = vadd.f32 0.0, %v3749
    %v3751 = vpop.f32.mrf.mxu0
    %v3752 = vadd.f32 0.0, %v3751
    %3753 = vmatmul.bf16.gmra.mxu0 %v2647
    %v3754 = vpop.f32.mrf.mxu0
    %v3755 = vadd.f32 0.0, %v3754
    %v3756 = vpop.f32.mrf.mxu0
    %v3757 = vadd.f32 0.0, %v3756
    %3758 = vmatmul.bf16.gmra.mxu0 %v2650
    %v3759 = vpop.f32.mrf.mxu0
    %v3760 = vadd.f32 0.0, %v3759
    %v3761 = vpop.f32.mrf.mxu0
    %v3762 = vadd.f32 0.0, %v3761
    %3763 = vmatmul.bf16.gmra.mxu0 %v3718
    %v3764 = vpop.f32.mrf.mxu0
    %v3765 = vadd.f32 0.0, %v3764
    %v3766 = vpop.f32.mrf.mxu0
    %v3767 = vadd.f32 0.0, %v3766
    %3768 = vdwg.mxu0
    %v3769 = vadd.f32 %v3679, %v3730
    %v3770 = vadd.f32 %v3680, %v3732
    %v3771 = vadd.f32 %v3681, %v3735
    %v3772 = vadd.f32 %v3682, %v3737
    %v3773 = vadd.f32 %v3683, %v3740
    %v3774 = vadd.f32 %v3684, %v3742
    %v3775 = vadd.f32 %v3685, %v3745
    %v3776 = vadd.f32 %v3686, %v3747
    %v3777 = vadd.f32 %v3687, %v3750
    %v3778 = vadd.f32 %v3688, %v3752
    %v3779 = vadd.f32 %v3689, %v3755
    %v3780 = vadd.f32 %v3690, %v3757
    %v3781 = vadd.f32 %v3691, %v3760
    %v3782 = vadd.f32 %v3692, %v3762
    %v3783 = vadd.f32 %v3693, %v3765
    %v3784 = vadd.f32 %v3694, %v3767
    %v3789 = vrot.slane %v1746, 1
    %v3790 = vrot.slane %v1747, 1
    %v3791 = vsel %vm1818, %v3789, %v3790
    %v3792 = vrot.slane %v1770, 1
    %v3793 = vrot.slane %v1771, 1
    %v3794 = vsel %vm1818, %v3792, %v3793
    %v3797 = vpack.c.bf16 %v3791, %v3305
    %v3798 = vpack.c.bf16 %v3794, %v3308
    %s3799 = scalar_lea.vmem %s3, 256
    %v3800 = vld [vmem:[%s3799] sm:$0xf]
    %v3801 = vld [vmem:[%s3799 + $0x4] sm:$0xf]
    %v3802 = vld [vmem:[%s3799 + $0x8] sm:$0xf]
    %v3803 = vld [vmem:[%s3799 + $0xc] sm:$0xf]
    %v3808 = vunpack.c.l.b16 %v3800
    %v3809 = vunpack.c.l.b16 %v3801
    %v3810 = vunpack.c.l.b16 %v3802
    %v3811 = vunpack.c.l.b16 %v3803
    %v3812 = vpack.c.b16 %v3809, %v3808
    %v3813 = vpack.c.b16 %v3811, %v3810
    %v3817 = vsel %vm218, %v3797, 0
    %v3820 = vsel %vm218, %v3798, 0
    %3822 = vmatpush.bf16.msra.mxu0 0
    %3823 = vmatpush.bf16.msra.mxu0 0
    %3824 = vmatpush.bf16.msra.mxu0 0
    %3825 = vmatpush.bf16.msra.mxu0 0
    %3826 = vmatpush.bf16.msra.mxu0 0
    %3827 = vmatpush.bf16.msra.mxu0 0
    %3828 = vmatpush.bf16.msra.mxu0 %v3813
    %3829 = vmatpush.bf16.msra.mxu0 %v3812
    %3830 = vmatmul.bf16.gmra.mxu0 %v2758
    %v3831 = vpop.f32.mrf.mxu0
    %v3832 = vadd.f32 0.0, %v3831
    %v3833 = vpop.f32.mrf.mxu0
    %v3834 = vadd.f32 0.0, %v3833
    %3835 = vmatmul.bf16.gmra.mxu0 %v2761
    %v3836 = vpop.f32.mrf.mxu0
    %v3837 = vadd.f32 0.0, %v3836
    %v3838 = vpop.f32.mrf.mxu0
    %v3839 = vadd.f32 0.0, %v3838
    %3840 = vmatmul.bf16.gmra.mxu0 %v2764
    %v3841 = vpop.f32.mrf.mxu0
    %v3842 = vadd.f32 0.0, %v3841
    %v3843 = vpop.f32.mrf.mxu0
    %v3844 = vadd.f32 0.0, %v3843
    %3845 = vmatmul.bf16.gmra.mxu0 %v3817
    %v3846 = vpop.f32.mrf.mxu0
    %v3847 = vadd.f32 0.0, %v3846
    %v3848 = vpop.f32.mrf.mxu0
    %v3849 = vadd.f32 0.0, %v3848
    %3850 = vmatmul.bf16.gmra.mxu0 %v2770
    %v3851 = vpop.f32.mrf.mxu0
    %v3852 = vadd.f32 0.0, %v3851
    %v3853 = vpop.f32.mrf.mxu0
    %v3854 = vadd.f32 0.0, %v3853
    %3855 = vmatmul.bf16.gmra.mxu0 %v2773
    %v3856 = vpop.f32.mrf.mxu0
    %v3857 = vadd.f32 0.0, %v3856
    %v3858 = vpop.f32.mrf.mxu0
    %v3859 = vadd.f32 0.0, %v3858
    %3860 = vmatmul.bf16.gmra.mxu0 %v2776
    %v3861 = vpop.f32.mrf.mxu0
    %v3862 = vadd.f32 0.0, %v3861
    %v3863 = vpop.f32.mrf.mxu0
    %v3864 = vadd.f32 0.0, %v3863
    %3865 = vmatmul.bf16.gmra.mxu0 %v3820
    %v3866 = vpop.f32.mrf.mxu0
    %v3867 = vadd.f32 0.0, %v3866
    %v3868 = vpop.f32.mrf.mxu0
    %v3869 = vadd.f32 0.0, %v3868
    %3870 = vdwg.mxu0
    %v3871 = vadd.f32 %v3769, %v3832
    %v3872 = vadd.f32 %v3770, %v3834
    %v3873 = vadd.f32 %v3771, %v3837
    %v3874 = vadd.f32 %v3772, %v3839
    %v3875 = vadd.f32 %v3773, %v3842
    %v3876 = vadd.f32 %v3774, %v3844
    %v3877 = vadd.f32 %v3775, %v3847
    %v3878 = vadd.f32 %v3776, %v3849
    %v3879 = vadd.f32 %v3777, %v3852
    %v3880 = vadd.f32 %v3778, %v3854
    %v3881 = vadd.f32 %v3779, %v3857
    %v3882 = vadd.f32 %v3780, %v3859
    %v3883 = vadd.f32 %v3781, %v3862
    %v3884 = vadd.f32 %v3782, %v3864
    %v3885 = vadd.f32 %v3783, %v3867
    %v3886 = vadd.f32 %v3784, %v3869
    %v3887 = vrot.slane %v1746, 2
    %v3888 = vrot.slane %v1747, 2
    %v3889 = vsel %vm2066, %v3887, %v3888
    %v3890 = vrot.slane %v1770, 2
    %v3891 = vrot.slane %v1771, 2
    %v3892 = vsel %vm2066, %v3890, %v3891
    %v3895 = vpack.c.bf16 %v3889, %v3403
    %v3896 = vpack.c.bf16 %v3892, %v3406
    %s3897 = scalar_lea.vmem %s3, 272
    %v3898 = vld [vmem:[%s3897] sm:$0xf]
    %v3899 = vld [vmem:[%s3897 + $0x4] sm:$0xf]
    %v3900 = vld [vmem:[%s3897 + $0x8] sm:$0xf]
    %v3901 = vld [vmem:[%s3897 + $0xc] sm:$0xf]
    %v3906 = vunpack.c.l.b16 %v3898
    %v3907 = vunpack.c.l.b16 %v3899
    %v3908 = vunpack.c.l.b16 %v3900
    %v3909 = vunpack.c.l.b16 %v3901
    %v3910 = vpack.c.b16 %v3907, %v3906
    %v3911 = vpack.c.b16 %v3909, %v3908
    %v3915 = vsel %vm218, %v3895, 0
    %v3918 = vsel %vm218, %v3896, 0
    %3920 = vmatpush.bf16.msra.mxu0 0
    %3921 = vmatpush.bf16.msra.mxu0 0
    %3922 = vmatpush.bf16.msra.mxu0 0
    %3923 = vmatpush.bf16.msra.mxu0 0
    %3924 = vmatpush.bf16.msra.mxu0 0
    %3925 = vmatpush.bf16.msra.mxu0 0
    %3926 = vmatpush.bf16.msra.mxu0 %v3911
    %3927 = vmatpush.bf16.msra.mxu0 %v3910
    %3928 = vmatmul.bf16.gmra.mxu0 %v2880
    %v3929 = vpop.f32.mrf.mxu0
    %v3930 = vadd.f32 0.0, %v3929
    %v3931 = vpop.f32.mrf.mxu0
    %v3932 = vadd.f32 0.0, %v3931
    %3933 = vmatmul.bf16.gmra.mxu0 %v2883
    %v3934 = vpop.f32.mrf.mxu0
    %v3935 = vadd.f32 0.0, %v3934
    %v3936 = vpop.f32.mrf.mxu0
    %v3937 = vadd.f32 0.0, %v3936
    %3938 = vmatmul.bf16.gmra.mxu0 %v2886
    %v3939 = vpop.f32.mrf.mxu0
    %v3940 = vadd.f32 0.0, %v3939
    %v3941 = vpop.f32.mrf.mxu0
    %v3942 = vadd.f32 0.0, %v3941
    %3943 = vmatmul.bf16.gmra.mxu0 %v3915
    %v3944 = vpop.f32.mrf.mxu0
    %v3945 = vadd.f32 0.0, %v3944
    %v3946 = vpop.f32.mrf.mxu0
    %v3947 = vadd.f32 0.0, %v3946
    %3948 = vmatmul.bf16.gmra.mxu0 %v2892
    %v3949 = vpop.f32.mrf.mxu0
    %v3950 = vadd.f32 0.0, %v3949
    %v3951 = vpop.f32.mrf.mxu0
    %v3952 = vadd.f32 0.0, %v3951
    %3953 = vmatmul.bf16.gmra.mxu0 %v2895
    %v3954 = vpop.f32.mrf.mxu0
    %v3955 = vadd.f32 0.0, %v3954
    %v3956 = vpop.f32.mrf.mxu0
    %v3957 = vadd.f32 0.0, %v3956
    %3958 = vmatmul.bf16.gmra.mxu0 %v2898
    %v3959 = vpop.f32.mrf.mxu0
    %v3960 = vadd.f32 0.0, %v3959
    %v3961 = vpop.f32.mrf.mxu0
    %v3962 = vadd.f32 0.0, %v3961
    %3963 = vmatmul.bf16.gmra.mxu0 %v3918
    %v3964 = vpop.f32.mrf.mxu0
    %v3965 = vadd.f32 0.0, %v3964
    %v3966 = vpop.f32.mrf.mxu0
    %v3967 = vadd.f32 0.0, %v3966
    %3968 = vdwg.mxu0
    %v3969 = vadd.f32 %v3871, %v3930
    %v3970 = vadd.f32 %v3872, %v3932
    %v3971 = vadd.f32 %v3873, %v3935
    %v3972 = vadd.f32 %v3874, %v3937
    %v3973 = vadd.f32 %v3875, %v3940
    %v3974 = vadd.f32 %v3876, %v3942
    %v3975 = vadd.f32 %v3877, %v3945
    %v3976 = vadd.f32 %v3878, %v3947
    %v3977 = vadd.f32 %v3879, %v3950
    %v3978 = vadd.f32 %v3880, %v3952
    %v3979 = vadd.f32 %v3881, %v3955
    %v3980 = vadd.f32 %v3882, %v3957
    %v3981 = vadd.f32 %v3883, %v3960
    %v3982 = vadd.f32 %v3884, %v3962
    %v3983 = vadd.f32 %v3885, %v3965
    %v3984 = vadd.f32 %v3886, %v3967
    %v3985 = vrot.slane %v1746, 3
    %v3986 = vrot.slane %v1747, 3
    %v3987 = vsel %vm2245, %v3985, %v3986
    %v3988 = vrot.slane %v1770, 3
    %v3989 = vrot.slane %v1771, 3
    %v3990 = vsel %vm2245, %v3988, %v3989
    %v3993 = vpack.c.bf16 %v3987, %v3501
    %v3994 = vpack.c.bf16 %v3990, %v3504
    %s3995 = scalar_lea.vmem %s3, 288
    %v3996 = vld [vmem:[%s3995] sm:$0xf]
    %v3997 = vld [vmem:[%s3995 + $0x4] sm:$0xf]
    %v3998 = vld [vmem:[%s3995 + $0x8] sm:$0xf]
    %v3999 = vld [vmem:[%s3995 + $0xc] sm:$0xf]
    %v4004 = vunpack.c.l.b16 %v3996
    %v4005 = vunpack.c.l.b16 %v3997
    %v4006 = vunpack.c.l.b16 %v3998
    %v4007 = vunpack.c.l.b16 %v3999
    %v4008 = vpack.c.b16 %v4005, %v4004
    %v4009 = vpack.c.b16 %v4007, %v4006
    %v4013 = vsel %vm218, %v3993, 0
    %v4016 = vsel %vm218, %v3994, 0
    %4018 = vmatpush.bf16.msra.mxu0 0
    %4019 = vmatpush.bf16.msra.mxu0 0
    %4020 = vmatpush.bf16.msra.mxu0 0
    %4021 = vmatpush.bf16.msra.mxu0 0
    %4022 = vmatpush.bf16.msra.mxu0 0
    %4023 = vmatpush.bf16.msra.mxu0 0
    %4024 = vmatpush.bf16.msra.mxu0 %v4009
    %4025 = vmatpush.bf16.msra.mxu0 %v4008
    %4026 = vmatmul.bf16.gmra.mxu0 %v3002
    %v4027 = vpop.f32.mrf.mxu0
    %v4028 = vadd.f32 0.0, %v4027
    %v4029 = vpop.f32.mrf.mxu0
    %v4030 = vadd.f32 0.0, %v4029
    %4031 = vmatmul.bf16.gmra.mxu0 %v3005
    %v4032 = vpop.f32.mrf.mxu0
    %v4033 = vadd.f32 0.0, %v4032
    %v4034 = vpop.f32.mrf.mxu0
    %v4035 = vadd.f32 0.0, %v4034
    %4036 = vmatmul.bf16.gmra.mxu0 %v3008
    %v4037 = vpop.f32.mrf.mxu0
    %v4038 = vadd.f32 0.0, %v4037
    %v4039 = vpop.f32.mrf.mxu0
    %v4040 = vadd.f32 0.0, %v4039
    %4041 = vmatmul.bf16.gmra.mxu0 %v4013
    %v4042 = vpop.f32.mrf.mxu0
    %v4043 = vadd.f32 0.0, %v4042
    %v4044 = vpop.f32.mrf.mxu0
    %v4045 = vadd.f32 0.0, %v4044
    %4046 = vmatmul.bf16.gmra.mxu0 %v3014
    %v4047 = vpop.f32.mrf.mxu0
    %v4048 = vadd.f32 0.0, %v4047
    %v4049 = vpop.f32.mrf.mxu0
    %v4050 = vadd.f32 0.0, %v4049
    %4051 = vmatmul.bf16.gmra.mxu0 %v3017
    %v4052 = vpop.f32.mrf.mxu0
    %v4053 = vadd.f32 0.0, %v4052
    %v4054 = vpop.f32.mrf.mxu0
    %v4055 = vadd.f32 0.0, %v4054
    %4056 = vmatmul.bf16.gmra.mxu0 %v3020
    %v4057 = vpop.f32.mrf.mxu0
    %v4058 = vadd.f32 0.0, %v4057
    %v4059 = vpop.f32.mrf.mxu0
    %v4060 = vadd.f32 0.0, %v4059
    %4061 = vmatmul.bf16.gmra.mxu0 %v4016
    %v4062 = vpop.f32.mrf.mxu0
    %v4063 = vadd.f32 0.0, %v4062
    %v4064 = vpop.f32.mrf.mxu0
    %v4065 = vadd.f32 0.0, %v4064
    %4066 = vdwg.mxu0
    %v4067 = vadd.f32 %v3969, %v4028
    %v4068 = vadd.f32 %v3970, %v4030
    %v4069 = vadd.f32 %v3971, %v4033
    %v4070 = vadd.f32 %v3972, %v4035
    %v4071 = vadd.f32 %v3973, %v4038
    %v4072 = vadd.f32 %v3974, %v4040
    %v4073 = vadd.f32 %v3975, %v4043
    %v4074 = vadd.f32 %v3976, %v4045
    %v4075 = vadd.f32 %v3977, %v4048
    %v4076 = vadd.f32 %v3978, %v4050
    %v4077 = vadd.f32 %v3979, %v4053
    %v4078 = vadd.f32 %v3980, %v4055
    %v4079 = vadd.f32 %v3981, %v4058
    %v4080 = vadd.f32 %v3982, %v4060
    %v4081 = vadd.f32 %v3983, %v4063
    %v4082 = vadd.f32 %v3984, %v4065
    %v4083 = vrot.slane %v1746, 4
    %v4084 = vrot.slane %v1747, 4
    %v4085 = vsel %vm2424, %v4083, %v4084
    %v4086 = vrot.slane %v1770, 4
    %v4087 = vrot.slane %v1771, 4
    %v4088 = vsel %vm2424, %v4086, %v4087
    %v4091 = vpack.c.bf16 %v4085, %v3599
    %v4092 = vpack.c.bf16 %v4088, %v3602
    %s4093 = scalar_lea.vmem %s3, 304
    %v4094 = vld [vmem:[%s4093] sm:$0xf]
    %v4095 = vld [vmem:[%s4093 + $0x4] sm:$0xf]
    %v4096 = vld [vmem:[%s4093 + $0x8] sm:$0xf]
    %v4097 = vld [vmem:[%s4093 + $0xc] sm:$0xf]
    %v4102 = vunpack.c.l.b16 %v4094
    %v4103 = vunpack.c.l.b16 %v4095
    %v4104 = vunpack.c.l.b16 %v4096
    %v4105 = vunpack.c.l.b16 %v4097
    %v4106 = vpack.c.b16 %v4103, %v4102
    %v4107 = vpack.c.b16 %v4105, %v4104
    %v4111 = vsel %vm218, %v4091, 0
    %v4114 = vsel %vm218, %v4092, 0
    %4116 = vmatpush.bf16.msra.mxu0 0
    %4117 = vmatpush.bf16.msra.mxu0 0
    %4118 = vmatpush.bf16.msra.mxu0 0
    %4119 = vmatpush.bf16.msra.mxu0 0
    %4120 = vmatpush.bf16.msra.mxu0 0
    %4121 = vmatpush.bf16.msra.mxu0 0
    %4122 = vmatpush.bf16.msra.mxu0 %v4107
    %4123 = vmatpush.bf16.msra.mxu0 %v4106
    %4124 = vmatmul.bf16.gmra.mxu0 %v3124
    %v4125 = vpop.f32.mrf.mxu0
    %v4126 = vadd.f32 0.0, %v4125
    %v4127 = vpop.f32.mrf.mxu0
    %v4128 = vadd.f32 0.0, %v4127
    %4129 = vmatmul.bf16.gmra.mxu0 %v3127
    %v4130 = vpop.f32.mrf.mxu0
    %v4131 = vadd.f32 0.0, %v4130
    %v4132 = vpop.f32.mrf.mxu0
    %v4133 = vadd.f32 0.0, %v4132
    %4134 = vmatmul.bf16.gmra.mxu0 %v3130
    %v4135 = vpop.f32.mrf.mxu0
    %v4136 = vadd.f32 0.0, %v4135
    %v4137 = vpop.f32.mrf.mxu0
    %v4138 = vadd.f32 0.0, %v4137
    %4139 = vmatmul.bf16.gmra.mxu0 %v4111
    %v4140 = vpop.f32.mrf.mxu0
    %v4141 = vadd.f32 0.0, %v4140
    %v4142 = vpop.f32.mrf.mxu0
    %v4143 = vadd.f32 0.0, %v4142
    %4144 = vmatmul.bf16.gmra.mxu0 %v3136
    %v4145 = vpop.f32.mrf.mxu0
    %v4146 = vadd.f32 0.0, %v4145
    %v4147 = vpop.f32.mrf.mxu0
    %v4148 = vadd.f32 0.0, %v4147
    %4149 = vmatmul.bf16.gmra.mxu0 %v3139
    %v4150 = vpop.f32.mrf.mxu0
    %v4151 = vadd.f32 0.0, %v4150
    %v4152 = vpop.f32.mrf.mxu0
    %v4153 = vadd.f32 0.0, %v4152
    %4154 = vmatmul.bf16.gmra.mxu0 %v3142
    %v4155 = vpop.f32.mrf.mxu0
    %v4156 = vadd.f32 0.0, %v4155
    %v4157 = vpop.f32.mrf.mxu0
    %v4158 = vadd.f32 0.0, %v4157
    %4159 = vmatmul.bf16.gmra.mxu0 %v4114
    %v4160 = vpop.f32.mrf.mxu0
    %v4161 = vadd.f32 0.0, %v4160
    %v4162 = vpop.f32.mrf.mxu0
    %v4163 = vadd.f32 0.0, %v4162
    %4164 = vdwg.mxu0
    %v4165 = vadd.f32 %v4067, %v4126
    %v4166 = vadd.f32 %v4068, %v4128
    %v4167 = vadd.f32 %v4069, %v4131
    %v4168 = vadd.f32 %v4070, %v4133
    %v4169 = vadd.f32 %v4071, %v4136
    %v4170 = vadd.f32 %v4072, %v4138
    %v4171 = vadd.f32 %v4073, %v4141
    %v4172 = vadd.f32 %v4074, %v4143
    %v4173 = vadd.f32 %v4075, %v4146
    %v4174 = vadd.f32 %v4076, %v4148
    %v4175 = vadd.f32 %v4077, %v4151
    %v4176 = vadd.f32 %v4078, %v4153
    %v4177 = vadd.f32 %v4079, %v4156
    %v4178 = vadd.f32 %v4080, %v4158
    %v4179 = vadd.f32 %v4081, %v4161
    %v4180 = vadd.f32 %v4082, %v4163
    %v4181 = vpack.c.bf16 %v1748, %v1746
    %v4182 = vpack.c.bf16 %v1772, %v1770
    %s4183 = scalar_lea.vmem %s3, 320
    %v4184 = vld [vmem:[%s4183] sm:$0xf]
    %v4185 = vld [vmem:[%s4183 + $0x4] sm:$0xf]
    %v4186 = vld [vmem:[%s4183 + $0x8] sm:$0xf]
    %v4187 = vld [vmem:[%s4183 + $0xc] sm:$0xf]
    %v4192 = vunpack.c.l.b16 %v4184
    %v4193 = vunpack.c.l.b16 %v4185
    %v4194 = vunpack.c.l.b16 %v4186
    %v4195 = vunpack.c.l.b16 %v4187
    %v4196 = vpack.c.b16 %v4193, %v4192
    %v4197 = vpack.c.b16 %v4195, %v4194
    %v4201 = vsel %vm218, %v4181, 0
    %v4204 = vsel %vm218, %v4182, 0
    %4206 = vmatpush.bf16.msra.mxu0 0
    %4207 = vmatpush.bf16.msra.mxu0 0
    %4208 = vmatpush.bf16.msra.mxu0 0
    %4209 = vmatpush.bf16.msra.mxu0 0
    %4210 = vmatpush.bf16.msra.mxu0 0
    %4211 = vmatpush.bf16.msra.mxu0 0
    %4212 = vmatpush.bf16.msra.mxu0 %v4197
    %4213 = vmatpush.bf16.msra.mxu0 %v4196
    %4214 = vmatmul.bf16.gmra.mxu0 %v2000
    %v4215 = vpop.f32.mrf.mxu0
    %v4216 = vadd.f32 0.0, %v4215
    %v4217 = vpop.f32.mrf.mxu0
    %v4218 = vadd.f32 0.0, %v4217
    %4219 = vmatmul.bf16.gmra.mxu0 %v2003
    %v4220 = vpop.f32.mrf.mxu0
    %v4221 = vadd.f32 0.0, %v4220
    %v4222 = vpop.f32.mrf.mxu0
    %v4223 = vadd.f32 0.0, %v4222
    %4224 = vmatmul.bf16.gmra.mxu0 %v3229
    %v4225 = vpop.f32.mrf.mxu0
    %v4226 = vadd.f32 0.0, %v4225
    %v4227 = vpop.f32.mrf.mxu0
    %v4228 = vadd.f32 0.0, %v4227
    %4229 = vmatmul.bf16.gmra.mxu0 %v4201
    %v4230 = vpop.f32.mrf.mxu0
    %v4231 = vadd.f32 0.0, %v4230
    %v4232 = vpop.f32.mrf.mxu0
    %v4233 = vadd.f32 0.0, %v4232
    %4234 = vmatmul.bf16.gmra.mxu0 %v2012
    %v4235 = vpop.f32.mrf.mxu0
    %v4236 = vadd.f32 0.0, %v4235
    %v4237 = vpop.f32.mrf.mxu0
    %v4238 = vadd.f32 0.0, %v4237
    %4239 = vmatmul.bf16.gmra.mxu0 %v2015
    %v4240 = vpop.f32.mrf.mxu0
    %v4241 = vadd.f32 0.0, %v4240
    %v4242 = vpop.f32.mrf.mxu0
    %v4243 = vadd.f32 0.0, %v4242
    %4244 = vmatmul.bf16.gmra.mxu0 %v3232
    %v4245 = vpop.f32.mrf.mxu0
    %v4246 = vadd.f32 0.0, %v4245
    %v4247 = vpop.f32.mrf.mxu0
    %v4248 = vadd.f32 0.0, %v4247
    %4249 = vmatmul.bf16.gmra.mxu0 %v4204
    %v4250 = vpop.f32.mrf.mxu0
    %v4251 = vadd.f32 0.0, %v4250
    %v4252 = vpop.f32.mrf.mxu0
    %v4253 = vadd.f32 0.0, %v4252
    %4254 = vdwg.mxu0
    %v4255 = vadd.f32 %v4165, %v4216
    %v4256 = vadd.f32 %v4166, %v4218
    %v4257 = vadd.f32 %v4167, %v4221
    %v4258 = vadd.f32 %v4168, %v4223
    %v4259 = vadd.f32 %v4169, %v4226
    %v4260 = vadd.f32 %v4170, %v4228
    %v4261 = vadd.f32 %v4171, %v4231
    %v4262 = vadd.f32 %v4172, %v4233
    %v4263 = vadd.f32 %v4173, %v4236
    %v4264 = vadd.f32 %v4174, %v4238
    %v4265 = vadd.f32 %v4175, %v4241
    %v4266 = vadd.f32 %v4176, %v4243
    %v4267 = vadd.f32 %v4177, %v4246
    %v4268 = vadd.f32 %v4178, %v4248
    %v4269 = vadd.f32 %v4179, %v4251
    %v4270 = vadd.f32 %v4180, %v4253
    %v4275 = vrot.slane %v1748, 1
    %v4276 = vrot.slane %v1749, 1
    %v4277 = vsel %vm1818, %v4275, %v4276
    %v4278 = vrot.slane %v1772, 1
    %v4279 = vrot.slane %v1773, 1
    %v4280 = vsel %vm1818, %v4278, %v4279
    %v4283 = vpack.c.bf16 %v4277, %v3791
    %v4284 = vpack.c.bf16 %v4280, %v3794
    %s4285 = scalar_lea.vmem %s3, 336
    %v4286 = vld [vmem:[%s4285] sm:$0xf]
    %v4287 = vld [vmem:[%s4285 + $0x4] sm:$0xf]
    %v4288 = vld [vmem:[%s4285 + $0x8] sm:$0xf]
    %v4289 = vld [vmem:[%s4285 + $0xc] sm:$0xf]
    %v4294 = vunpack.c.l.b16 %v4286
    %v4295 = vunpack.c.l.b16 %v4287
    %v4296 = vunpack.c.l.b16 %v4288
    %v4297 = vunpack.c.l.b16 %v4289
    %v4298 = vpack.c.b16 %v4295, %v4294
    %v4299 = vpack.c.b16 %v4297, %v4296
    %v4303 = vsel %vm218, %v4283, 0
    %v4306 = vsel %vm218, %v4284, 0
    %4308 = vmatpush.bf16.msra.mxu0 0
    %4309 = vmatpush.bf16.msra.mxu0 0
    %4310 = vmatpush.bf16.msra.mxu0 0
    %4311 = vmatpush.bf16.msra.mxu0 0
    %4312 = vmatpush.bf16.msra.mxu0 0
    %4313 = vmatpush.bf16.msra.mxu0 0
    %4314 = vmatpush.bf16.msra.mxu0 %v4299
    %4315 = vmatpush.bf16.msra.mxu0 %v4298
    %4316 = vmatmul.bf16.gmra.mxu0 %v1915
    %v4317 = vpop.f32.mrf.mxu0
    %v4318 = vadd.f32 0.0, %v4317
    %v4319 = vpop.f32.mrf.mxu0
    %v4320 = vadd.f32 0.0, %v4319
    %4321 = vmatmul.bf16.gmra.mxu0 %v1918
    %v4322 = vpop.f32.mrf.mxu0
    %v4323 = vadd.f32 0.0, %v4322
    %v4324 = vpop.f32.mrf.mxu0
    %v4325 = vadd.f32 0.0, %v4324
    %4326 = vmatmul.bf16.gmra.mxu0 %v3331
    %v4327 = vpop.f32.mrf.mxu0
    %v4328 = vadd.f32 0.0, %v4327
    %v4329 = vpop.f32.mrf.mxu0
    %v4330 = vadd.f32 0.0, %v4329
    %4331 = vmatmul.bf16.gmra.mxu0 %v4303
    %v4332 = vpop.f32.mrf.mxu0
    %v4333 = vadd.f32 0.0, %v4332
    %v4334 = vpop.f32.mrf.mxu0
    %v4335 = vadd.f32 0.0, %v4334
    %4336 = vmatmul.bf16.gmra.mxu0 %v1927
    %v4337 = vpop.f32.mrf.mxu0
    %v4338 = vadd.f32 0.0, %v4337
    %v4339 = vpop.f32.mrf.mxu0
    %v4340 = vadd.f32 0.0, %v4339
    %4341 = vmatmul.bf16.gmra.mxu0 %v1930
    %v4342 = vpop.f32.mrf.mxu0
    %v4343 = vadd.f32 0.0, %v4342
    %v4344 = vpop.f32.mrf.mxu0
    %v4345 = vadd.f32 0.0, %v4344
    %4346 = vmatmul.bf16.gmra.mxu0 %v3334
    %v4347 = vpop.f32.mrf.mxu0
    %v4348 = vadd.f32 0.0, %v4347
    %v4349 = vpop.f32.mrf.mxu0
    %v4350 = vadd.f32 0.0, %v4349
    %4351 = vmatmul.bf16.gmra.mxu0 %v4306
    %v4352 = vpop.f32.mrf.mxu0
    %v4353 = vadd.f32 0.0, %v4352
    %v4354 = vpop.f32.mrf.mxu0
    %v4355 = vadd.f32 0.0, %v4354
    %4356 = vdwg.mxu0
    %v4357 = vadd.f32 %v4255, %v4318
    %v4358 = vadd.f32 %v4256, %v4320
    %v4359 = vadd.f32 %v4257, %v4323
    %v4360 = vadd.f32 %v4258, %v4325
    %v4361 = vadd.f32 %v4259, %v4328
    %v4362 = vadd.f32 %v4260, %v4330
    %v4363 = vadd.f32 %v4261, %v4333
    %v4364 = vadd.f32 %v4262, %v4335
    %v4365 = vadd.f32 %v4263, %v4338
    %v4366 = vadd.f32 %v4264, %v4340
    %v4367 = vadd.f32 %v4265, %v4343
    %v4368 = vadd.f32 %v4266, %v4345
    %v4369 = vadd.f32 %v4267, %v4348
    %v4370 = vadd.f32 %v4268, %v4350
    %v4371 = vadd.f32 %v4269, %v4353
    %v4372 = vadd.f32 %v4270, %v4355
    %v4373 = vrot.slane %v1748, 2
    %v4374 = vrot.slane %v1749, 2
    %v4375 = vsel %vm2066, %v4373, %v4374
    %v4376 = vrot.slane %v1772, 2
    %v4377 = vrot.slane %v1773, 2
    %v4378 = vsel %vm2066, %v4376, %v4377
    %v4381 = vpack.c.bf16 %v4375, %v3889
    %v4382 = vpack.c.bf16 %v4378, %v3892
    %s4383 = scalar_lea.vmem %s3, 352
    %v4384 = vld [vmem:[%s4383] sm:$0xf]
    %v4385 = vld [vmem:[%s4383 + $0x4] sm:$0xf]
    %v4386 = vld [vmem:[%s4383 + $0x8] sm:$0xf]
    %v4387 = vld [vmem:[%s4383 + $0xc] sm:$0xf]
    %v4392 = vunpack.c.l.b16 %v4384
    %v4393 = vunpack.c.l.b16 %v4385
    %v4394 = vunpack.c.l.b16 %v4386
    %v4395 = vunpack.c.l.b16 %v4387
    %v4396 = vpack.c.b16 %v4393, %v4392
    %v4397 = vpack.c.b16 %v4395, %v4394
    %v4401 = vsel %vm218, %v4381, 0
    %v4404 = vsel %vm218, %v4382, 0
    %4406 = vmatpush.bf16.msra.mxu0 0
    %4407 = vmatpush.bf16.msra.mxu0 0
    %4408 = vmatpush.bf16.msra.mxu0 0
    %4409 = vmatpush.bf16.msra.mxu0 0
    %4410 = vmatpush.bf16.msra.mxu0 0
    %4411 = vmatpush.bf16.msra.mxu0 0
    %4412 = vmatpush.bf16.msra.mxu0 %v4397
    %4413 = vmatpush.bf16.msra.mxu0 %v4396
    %4414 = vmatmul.bf16.gmra.mxu0 %v2163
    %v4415 = vpop.f32.mrf.mxu0
    %v4416 = vadd.f32 0.0, %v4415
    %v4417 = vpop.f32.mrf.mxu0
    %v4418 = vadd.f32 0.0, %v4417
    %4419 = vmatmul.bf16.gmra.mxu0 %v2166
    %v4420 = vpop.f32.mrf.mxu0
    %v4421 = vadd.f32 0.0, %v4420
    %v4422 = vpop.f32.mrf.mxu0
    %v4423 = vadd.f32 0.0, %v4422
    %4424 = vmatmul.bf16.gmra.mxu0 %v3429
    %v4425 = vpop.f32.mrf.mxu0
    %v4426 = vadd.f32 0.0, %v4425
    %v4427 = vpop.f32.mrf.mxu0
    %v4428 = vadd.f32 0.0, %v4427
    %4429 = vmatmul.bf16.gmra.mxu0 %v4401
    %v4430 = vpop.f32.mrf.mxu0
    %v4431 = vadd.f32 0.0, %v4430
    %v4432 = vpop.f32.mrf.mxu0
    %v4433 = vadd.f32 0.0, %v4432
    %4434 = vmatmul.bf16.gmra.mxu0 %v2175
    %v4435 = vpop.f32.mrf.mxu0
    %v4436 = vadd.f32 0.0, %v4435
    %v4437 = vpop.f32.mrf.mxu0
    %v4438 = vadd.f32 0.0, %v4437
    %4439 = vmatmul.bf16.gmra.mxu0 %v2178
    %v4440 = vpop.f32.mrf.mxu0
    %v4441 = vadd.f32 0.0, %v4440
    %v4442 = vpop.f32.mrf.mxu0
    %v4443 = vadd.f32 0.0, %v4442
    %4444 = vmatmul.bf16.gmra.mxu0 %v3432
    %v4445 = vpop.f32.mrf.mxu0
    %v4446 = vadd.f32 0.0, %v4445
    %v4447 = vpop.f32.mrf.mxu0
    %v4448 = vadd.f32 0.0, %v4447
    %4449 = vmatmul.bf16.gmra.mxu0 %v4404
    %v4450 = vpop.f32.mrf.mxu0
    %v4451 = vadd.f32 0.0, %v4450
    %v4452 = vpop.f32.mrf.mxu0
    %v4453 = vadd.f32 0.0, %v4452
    %4454 = vdwg.mxu0
    %v4455 = vadd.f32 %v4357, %v4416
    %v4456 = vadd.f32 %v4358, %v4418
    %v4457 = vadd.f32 %v4359, %v4421
    %v4458 = vadd.f32 %v4360, %v4423
    %v4459 = vadd.f32 %v4361, %v4426
    %v4460 = vadd.f32 %v4362, %v4428
    %v4461 = vadd.f32 %v4363, %v4431
    %v4462 = vadd.f32 %v4364, %v4433
    %v4463 = vadd.f32 %v4365, %v4436
    %v4464 = vadd.f32 %v4366, %v4438
    %v4465 = vadd.f32 %v4367, %v4441
    %v4466 = vadd.f32 %v4368, %v4443
    %v4467 = vadd.f32 %v4369, %v4446
    %v4468 = vadd.f32 %v4370, %v4448
    %v4469 = vadd.f32 %v4371, %v4451
    %v4470 = vadd.f32 %v4372, %v4453
    %v4471 = vrot.slane %v1748, 3
    %v4472 = vrot.slane %v1749, 3
    %v4473 = vsel %vm2245, %v4471, %v4472
    %v4474 = vrot.slane %v1772, 3
    %v4475 = vrot.slane %v1773, 3
    %v4476 = vsel %vm2245, %v4474, %v4475
    %v4479 = vpack.c.bf16 %v4473, %v3987
    %v4480 = vpack.c.bf16 %v4476, %v3990
    %s4481 = scalar_lea.vmem %s3, 368
    %v4482 = vld [vmem:[%s4481] sm:$0xf]
    %v4483 = vld [vmem:[%s4481 + $0x4] sm:$0xf]
    %v4484 = vld [vmem:[%s4481 + $0x8] sm:$0xf]
    %v4485 = vld [vmem:[%s4481 + $0xc] sm:$0xf]
    %v4490 = vunpack.c.l.b16 %v4482
    %v4491 = vunpack.c.l.b16 %v4483
    %v4492 = vunpack.c.l.b16 %v4484
    %v4493 = vunpack.c.l.b16 %v4485
    %v4494 = vpack.c.b16 %v4491, %v4490
    %v4495 = vpack.c.b16 %v4493, %v4492
    %v4499 = vsel %vm218, %v4479, 0
    %v4502 = vsel %vm218, %v4480, 0
    %4504 = vmatpush.bf16.msra.mxu0 0
    %4505 = vmatpush.bf16.msra.mxu0 0
    %4506 = vmatpush.bf16.msra.mxu0 0
    %4507 = vmatpush.bf16.msra.mxu0 0
    %4508 = vmatpush.bf16.msra.mxu0 0
    %4509 = vmatpush.bf16.msra.mxu0 0
    %4510 = vmatpush.bf16.msra.mxu0 %v4495
    %4511 = vmatpush.bf16.msra.mxu0 %v4494
    %4512 = vmatmul.bf16.gmra.mxu0 %v2342
    %v4513 = vpop.f32.mrf.mxu0
    %v4514 = vadd.f32 0.0, %v4513
    %v4515 = vpop.f32.mrf.mxu0
    %v4516 = vadd.f32 0.0, %v4515
    %4517 = vmatmul.bf16.gmra.mxu0 %v2345
    %v4518 = vpop.f32.mrf.mxu0
    %v4519 = vadd.f32 0.0, %v4518
    %v4520 = vpop.f32.mrf.mxu0
    %v4521 = vadd.f32 0.0, %v4520
    %4522 = vmatmul.bf16.gmra.mxu0 %v3527
    %v4523 = vpop.f32.mrf.mxu0
    %v4524 = vadd.f32 0.0, %v4523
    %v4525 = vpop.f32.mrf.mxu0
    %v4526 = vadd.f32 0.0, %v4525
    %4527 = vmatmul.bf16.gmra.mxu0 %v4499
    %v4528 = vpop.f32.mrf.mxu0
    %v4529 = vadd.f32 0.0, %v4528
    %v4530 = vpop.f32.mrf.mxu0
    %v4531 = vadd.f32 0.0, %v4530
    %4532 = vmatmul.bf16.gmra.mxu0 %v2354
    %v4533 = vpop.f32.mrf.mxu0
    %v4534 = vadd.f32 0.0, %v4533
    %v4535 = vpop.f32.mrf.mxu0
    %v4536 = vadd.f32 0.0, %v4535
    %4537 = vmatmul.bf16.gmra.mxu0 %v2357
    %v4538 = vpop.f32.mrf.mxu0
    %v4539 = vadd.f32 0.0, %v4538
    %v4540 = vpop.f32.mrf.mxu0
    %v4541 = vadd.f32 0.0, %v4540
    %4542 = vmatmul.bf16.gmra.mxu0 %v3530
    %v4543 = vpop.f32.mrf.mxu0
    %v4544 = vadd.f32 0.0, %v4543
    %v4545 = vpop.f32.mrf.mxu0
    %v4546 = vadd.f32 0.0, %v4545
    %4547 = vmatmul.bf16.gmra.mxu0 %v4502
    %v4548 = vpop.f32.mrf.mxu0
    %v4549 = vadd.f32 0.0, %v4548
    %v4550 = vpop.f32.mrf.mxu0
    %v4551 = vadd.f32 0.0, %v4550
    %4552 = vdwg.mxu0
    %v4553 = vadd.f32 %v4455, %v4514
    %v4554 = vadd.f32 %v4456, %v4516
    %v4555 = vadd.f32 %v4457, %v4519
    %v4556 = vadd.f32 %v4458, %v4521
    %v4557 = vadd.f32 %v4459, %v4524
    %v4558 = vadd.f32 %v4460, %v4526
    %v4559 = vadd.f32 %v4461, %v4529
    %v4560 = vadd.f32 %v4462, %v4531
    %v4561 = vadd.f32 %v4463, %v4534
    %v4562 = vadd.f32 %v4464, %v4536
    %v4563 = vadd.f32 %v4465, %v4539
    %v4564 = vadd.f32 %v4466, %v4541
    %v4565 = vadd.f32 %v4467, %v4544
    %v4566 = vadd.f32 %v4468, %v4546
    %v4567 = vadd.f32 %v4469, %v4549
    %v4568 = vadd.f32 %v4470, %v4551
    %v4569 = vrot.slane %v1748, 4
    %v4570 = vrot.slane %v1749, 4
    %v4571 = vsel %vm2424, %v4569, %v4570
    %v4572 = vrot.slane %v1772, 4
    %v4573 = vrot.slane %v1773, 4
    %v4574 = vsel %vm2424, %v4572, %v4573
    %v4577 = vpack.c.bf16 %v4571, %v4085
    %v4578 = vpack.c.bf16 %v4574, %v4088
    %s4579 = scalar_lea.vmem %s3, 384
    %v4580 = vld [vmem:[%s4579] sm:$0xf]
    %v4581 = vld [vmem:[%s4579 + $0x4] sm:$0xf]
    %v4582 = vld [vmem:[%s4579 + $0x8] sm:$0xf]
    %v4583 = vld [vmem:[%s4579 + $0xc] sm:$0xf]
    %v4588 = vunpack.c.l.b16 %v4580
    %v4589 = vunpack.c.l.b16 %v4581
    %v4590 = vunpack.c.l.b16 %v4582
    %v4591 = vunpack.c.l.b16 %v4583
    %v4592 = vpack.c.b16 %v4589, %v4588
    %v4593 = vpack.c.b16 %v4591, %v4590
    %v4597 = vsel %vm218, %v4577, 0
    %v4600 = vsel %vm218, %v4578, 0
    %4602 = vmatpush.bf16.msra.mxu0 0
    %4603 = vmatpush.bf16.msra.mxu0 0
    %4604 = vmatpush.bf16.msra.mxu0 0
    %4605 = vmatpush.bf16.msra.mxu0 0
    %4606 = vmatpush.bf16.msra.mxu0 0
    %4607 = vmatpush.bf16.msra.mxu0 0
    %4608 = vmatpush.bf16.msra.mxu0 %v4593
    %4609 = vmatpush.bf16.msra.mxu0 %v4592
    %4610 = vmatmul.bf16.gmra.mxu0 %v2521
    %v4611 = vpop.f32.mrf.mxu0
    %v4612 = vadd.f32 0.0, %v4611
    %v4613 = vpop.f32.mrf.mxu0
    %v4614 = vadd.f32 0.0, %v4613
    %4615 = vmatmul.bf16.gmra.mxu0 %v2524
    %v4616 = vpop.f32.mrf.mxu0
    %v4617 = vadd.f32 0.0, %v4616
    %v4618 = vpop.f32.mrf.mxu0
    %v4619 = vadd.f32 0.0, %v4618
    %4620 = vmatmul.bf16.gmra.mxu0 %v3625
    %v4621 = vpop.f32.mrf.mxu0
    %v4622 = vadd.f32 0.0, %v4621
    %v4623 = vpop.f32.mrf.mxu0
    %v4624 = vadd.f32 0.0, %v4623
    %4625 = vmatmul.bf16.gmra.mxu0 %v4597
    %v4626 = vpop.f32.mrf.mxu0
    %v4627 = vadd.f32 0.0, %v4626
    %v4628 = vpop.f32.mrf.mxu0
    %v4629 = vadd.f32 0.0, %v4628
    %4630 = vmatmul.bf16.gmra.mxu0 %v2533
    %v4631 = vpop.f32.mrf.mxu0
    %v4632 = vadd.f32 0.0, %v4631
    %v4633 = vpop.f32.mrf.mxu0
    %v4634 = vadd.f32 0.0, %v4633
    %4635 = vmatmul.bf16.gmra.mxu0 %v2536
    %v4636 = vpop.f32.mrf.mxu0
    %v4637 = vadd.f32 0.0, %v4636
    %v4638 = vpop.f32.mrf.mxu0
    %v4639 = vadd.f32 0.0, %v4638
    %4640 = vmatmul.bf16.gmra.mxu0 %v3628
    %v4641 = vpop.f32.mrf.mxu0
    %v4642 = vadd.f32 0.0, %v4641
    %v4643 = vpop.f32.mrf.mxu0
    %v4644 = vadd.f32 0.0, %v4643
    %4645 = vmatmul.bf16.gmra.mxu0 %v4600
    %v4646 = vpop.f32.mrf.mxu0
    %v4647 = vadd.f32 0.0, %v4646
    %v4648 = vpop.f32.mrf.mxu0
    %v4649 = vadd.f32 0.0, %v4648
    %4650 = vdwg.mxu0
    %v4651 = vadd.f32 %v4553, %v4612
    %v4652 = vadd.f32 %v4554, %v4614
    %v4653 = vadd.f32 %v4555, %v4617
    %v4654 = vadd.f32 %v4556, %v4619
    %v4655 = vadd.f32 %v4557, %v4622
    %v4656 = vadd.f32 %v4558, %v4624
    %v4657 = vadd.f32 %v4559, %v4627
    %v4658 = vadd.f32 %v4560, %v4629
    %v4659 = vadd.f32 %v4561, %v4632
    %v4660 = vadd.f32 %v4562, %v4634
    %v4661 = vadd.f32 %v4563, %v4637
    %v4662 = vadd.f32 %v4564, %v4639
    %v4663 = vadd.f32 %v4565, %v4642
    %v4664 = vadd.f32 %v4566, %v4644
    %v4665 = vadd.f32 %v4567, %v4647
    %v4666 = vadd.f32 %v4568, %v4649
    %v4667 = vld [vmem:[%s4] sm:$0x1]
    %v4669 = vperm.slane %v4667, 0
    %v4671 = vadd.f32 %v4651, %v4669
    %v4672 = vadd.f32 %v4652, %v4669
    %v4673 = vadd.f32 %v4653, %v4669
    %v4674 = vadd.f32 %v4654, %v4669
    %v4675 = vadd.f32 %v4655, %v4669
    %v4676 = vadd.f32 %v4656, %v4669
    %v4677 = vadd.f32 %v4657, %v4669
    %v4678 = vadd.f32 %v4658, %v4669
    %v4679 = vadd.f32 %v4659, %v4669
    %v4680 = vadd.f32 %v4660, %v4669
    %v4681 = vadd.f32 %v4661, %v4669
    %v4682 = vadd.f32 %v4662, %v4669
    %v4683 = vadd.f32 %v4663, %v4669
    %v4684 = vadd.f32 %v4664, %v4669
    %v4685 = vadd.f32 %v4665, %v4669
    %v4686 = vadd.f32 %v4666, %v4669
    %v4687 = vmax.f32 %v4671, 0.0
    %v4688 = vmax.f32 %v4672, 0.0
    %v4689 = vmax.f32 %v4673, 0.0
    %v4690 = vmax.f32 %v4674, 0.0
    %v4691 = vmax.f32 %v4675, 0.0
    %v4692 = vmax.f32 %v4676, 0.0
    %v4693 = vmax.f32 %v4677, 0.0
    %v4694 = vmax.f32 %v4678, 0.0
    %v4695 = vmax.f32 %v4679, 0.0
    %v4696 = vmax.f32 %v4680, 0.0
    %v4697 = vmax.f32 %v4681, 0.0
    %v4698 = vmax.f32 %v4682, 0.0
    %v4699 = vmax.f32 %v4683, 0.0
    %v4700 = vmax.f32 %v4684, 0.0
    %v4701 = vmax.f32 %v4685, 0.0
    %v4702 = vmax.f32 %v4686, 0.0
    %v4705 = vrot.slane %v4687, 1
    %v4706 = vrot.slane %v4695, 1
    %v4709 = vmax.f32 %v4687, %v4705
    %v4710 = vmax.f32 %v4695, %v4706
    %v4713 = vrot.slane %v4688, 1
    %v4714 = vrot.slane %v4696, 1
    %v4717 = vmax.f32 %v4688, %v4713
    %v4718 = vmax.f32 %v4696, %v4714
    %v4719 = vmax.f32 %v4709, %v4717
    %v4720 = vmax.f32 %v4710, %v4718
    %v4721 = vpack.c.bf16 %v4719, %v4719
    %v4722 = vpack.c.bf16 %v4720, %v4720
    %v4723 = vld [vmem:[%s5] sm:$0xff]
    %v4724 = vld [vmem:[%s5 + $0x8] sm:$0xff]
    %v4725 = vld [vmem:[%s5 + $0x10] sm:$0xff]
    %v4726 = vld [vmem:[%s5 + $0x18] sm:$0xff]
    %v4727 = vld [vmem:[%s5 + $0x20] sm:$0xff]
    %v4728 = vld [vmem:[%s5 + $0x28] sm:$0xff]
    %v4729 = vld [vmem:[%s5 + $0x30] sm:$0xff]
    %v4730 = vld [vmem:[%s5 + $0x38] sm:$0xff]
    %v4731 = vld [vmem:[%s5 + $0x40] sm:$0xff]
    %v4732 = vld [vmem:[%s5 + $0x48] sm:$0xff]
    %v4733 = vld [vmem:[%s5 + $0x50] sm:$0xff]
    %v4734 = vld [vmem:[%s5 + $0x58] sm:$0xff]
    %v4735 = vld [vmem:[%s5 + $0x60] sm:$0xff]
    %v4736 = vld [vmem:[%s5 + $0x68] sm:$0xff]
    %v4737 = vld [vmem:[%s5 + $0x70] sm:$0xff]
    %v4738 = vld [vmem:[%s5 + $0x78] sm:$0xff]
    %v4739 = vld [vmem:[%s5 + $0x80] sm:$0xff]
    %v4740 = vld [vmem:[%s5 + $0x88] sm:$0xff]
    %v4741 = vld [vmem:[%s5 + $0x90] sm:$0xff]
    %v4742 = vld [vmem:[%s5 + $0x98] sm:$0xff]
    %v4743 = vld [vmem:[%s5 + $0xa0] sm:$0xff]
    %v4744 = vld [vmem:[%s5 + $0xa8] sm:$0xff]
    %v4745 = vld [vmem:[%s5 + $0xb0] sm:$0xff]
    %v4746 = vld [vmem:[%s5 + $0xb8] sm:$0xff]
    %v4747 = vld [vmem:[%s5 + $0xc0] sm:$0xff]
    %v4748 = vld [vmem:[%s5 + $0xc8] sm:$0xff]
    %v4749 = vld [vmem:[%s5 + $0xd0] sm:$0xff]
    %v4750 = vld [vmem:[%s5 + $0xd8] sm:$0xff]
    %v4751 = vld [vmem:[%s5 + $0xe0] sm:$0xff]
    %v4752 = vld [vmem:[%s5 + $0xe8] sm:$0xff]
    %v4753 = vld [vmem:[%s5 + $0xf0] sm:$0xff]
    %v4754 = vld [vmem:[%s5 + $0xf8] sm:$0xff]
    %v4757 = vunpack.c.l.b16 %v4721
    %v4758 = vunpack.c.l.b16 %v4722
    %v4759 = vrot.slane %v4757, 2
    %v4760 = vrot.slane %v4758, 1
    %vm4761 = vcmask 1041409
    %v4762 = vsel %vm4761, %v4760, %v4759
    %v4763 = vpack.c.b16 %v4762, %v4762
    %v4780 = vunpack.c.l.b16 %v4739
    %v4781 = vunpack.c.h.b16 %v4739
    %v4782 = vunpack.c.l.b16 %v4740
    %v4783 = vunpack.c.h.b16 %v4740
    %v4784 = vunpack.c.l.b16 %v4741
    %v4785 = vunpack.c.h.b16 %v4741
    %v4786 = vunpack.c.l.b16 %v4742
    %v4787 = vunpack.c.h.b16 %v4742
    %v4788 = vunpack.c.l.b16 %v4743
    %v4789 = vunpack.c.h.b16 %v4743
    %v4790 = vunpack.c.l.b16 %v4744
    %v4791 = vunpack.c.h.b16 %v4744
    %v4792 = vunpack.c.l.b16 %v4745
    %v4793 = vunpack.c.h.b16 %v4745
    %v4794 = vunpack.c.l.b16 %v4746
    %v4795 = vunpack.c.h.b16 %v4746
    %v4796 = vunpack.c.l.b16 %v4747
    %v4797 = vunpack.c.h.b16 %v4747
    %v4798 = vunpack.c.l.b16 %v4748
    %v4799 = vunpack.c.h.b16 %v4748
    %v4800 = vunpack.c.l.b16 %v4749
    %v4801 = vunpack.c.h.b16 %v4749
    %v4802 = vunpack.c.l.b16 %v4750
    %v4803 = vunpack.c.h.b16 %v4750
    %v4804 = vunpack.c.l.b16 %v4751
    %v4805 = vunpack.c.h.b16 %v4751
    %v4806 = vunpack.c.l.b16 %v4752
    %v4807 = vunpack.c.h.b16 %v4752
    %v4808 = vunpack.c.l.b16 %v4753
    %v4809 = vunpack.c.h.b16 %v4753
    %v4810 = vunpack.c.l.b16 %v4754
    %v4811 = vunpack.c.h.b16 %v4754
    %v4812 = vpack.c.b16 %v4784, %v4780
    %v4813 = vpack.c.b16 %v4785, %v4781
    %v4814 = vpack.c.b16 %v4786, %v4782
    %v4815 = vpack.c.b16 %v4787, %v4783
    %v4816 = vpack.c.b16 %v4792, %v4788
    %v4817 = vpack.c.b16 %v4793, %v4789
    %v4818 = vpack.c.b16 %v4794, %v4790
    %v4819 = vpack.c.b16 %v4795, %v4791
    %v4820 = vpack.c.b16 %v4800, %v4796
    %v4821 = vpack.c.b16 %v4801, %v4797
    %v4822 = vpack.c.b16 %v4802, %v4798
    %v4823 = vpack.c.b16 %v4803, %v4799
    %v4824 = vpack.c.b16 %v4808, %v4804
    %v4825 = vpack.c.b16 %v4809, %v4805
    %v4826 = vpack.c.b16 %v4810, %v4806
    %v4827 = vpack.c.b16 %v4811, %v4807
    %vm4844 = vcmask 523264
    %v4846 = vsel %vm4844, %v4763, 0
    %4848 = vmatpush.bf16.msra.mxu0 0
    %4849 = vmatpush.bf16.msra.mxu0 0
    %4850 = vmatpush.bf16.msra.mxu0 0
    %4851 = vmatpush.bf16.msra.mxu0 0
    %4852 = vmatpush.bf16.msra.mxu0 %v4824
    %4853 = vmatpush.bf16.msra.mxu0 %v4820
    %4854 = vmatpush.bf16.msra.mxu0 %v4816
    %4855 = vmatpush.bf16.msra.mxu0 %v4812
    %4856 = vmatmul.bf16.gmra.mxu0 %v4846
    %v4857 = vpop.f32.mrf.mxu0
    %v4858 = vadd.f32 0.0, %v4857
    %v4859 = vpop.f32.mrf.mxu0
    %4860 = vdwg.mxu0
    %4861 = vmatpush.bf16.msra.mxu0 0
    %4862 = vmatpush.bf16.msra.mxu0 0
    %4863 = vmatpush.bf16.msra.mxu0 0
    %4864 = vmatpush.bf16.msra.mxu0 0
    %4865 = vmatpush.bf16.msra.mxu0 %v4825
    %4866 = vmatpush.bf16.msra.mxu0 %v4821
    %4867 = vmatpush.bf16.msra.mxu0 %v4817
    %4868 = vmatpush.bf16.msra.mxu0 %v4813
    %4869 = vmatmul.bf16.gmra.mxu0 %v4846
    %v4870 = vpop.f32.mrf.mxu0
    %v4871 = vadd.f32 0.0, %v4870
    %v4872 = vpop.f32.mrf.mxu0
    %4873 = vdwg.mxu0
    %4874 = vmatpush.bf16.msra.mxu0 0
    %4875 = vmatpush.bf16.msra.mxu0 0
    %4876 = vmatpush.bf16.msra.mxu0 0
    %4877 = vmatpush.bf16.msra.mxu0 0
    %4878 = vmatpush.bf16.msra.mxu0 %v4826
    %4879 = vmatpush.bf16.msra.mxu0 %v4822
    %4880 = vmatpush.bf16.msra.mxu0 %v4818
    %4881 = vmatpush.bf16.msra.mxu0 %v4814
    %4882 = vmatmul.bf16.gmra.mxu0 %v4846
    %v4883 = vpop.f32.mrf.mxu0
    %v4884 = vadd.f32 0.0, %v4883
    %v4885 = vpop.f32.mrf.mxu0
    %4886 = vdwg.mxu0
    %4887 = vmatpush.bf16.msra.mxu0 0
    %4888 = vmatpush.bf16.msra.mxu0 0
    %4889 = vmatpush.bf16.msra.mxu0 0
    %4890 = vmatpush.bf16.msra.mxu0 0
    %4891 = vmatpush.bf16.msra.mxu0 %v4827
    %4892 = vmatpush.bf16.msra.mxu0 %v4823
    %4893 = vmatpush.bf16.msra.mxu0 %v4819
    %4894 = vmatpush.bf16.msra.mxu0 %v4815
    %4895 = vmatmul.bf16.gmra.mxu0 %v4846
    %v4896 = vpop.f32.mrf.mxu0
    %v4897 = vadd.f32 0.0, %v4896
    %v4898 = vpop.f32.mrf.mxu0
    %4899 = vdwg.mxu0
    %v4900 = vrot.slane %v4758, 7
    %v4901 = vsel %vm4761, %v4900, %v4757
    %v4902 = vpack.c.b16 %v4901, %v4901
    %v4919 = vunpack.c.l.b16 %v4723
    %v4920 = vunpack.c.h.b16 %v4723
    %v4921 = vunpack.c.l.b16 %v4724
    %v4922 = vunpack.c.h.b16 %v4724
    %v4923 = vunpack.c.l.b16 %v4725
    %v4924 = vunpack.c.h.b16 %v4725
    %v4925 = vunpack.c.l.b16 %v4726
    %v4926 = vunpack.c.h.b16 %v4726
    %v4927 = vunpack.c.l.b16 %v4727
    %v4928 = vunpack.c.h.b16 %v4727
    %v4929 = vunpack.c.l.b16 %v4728
    %v4930 = vunpack.c.h.b16 %v4728
    %v4931 = vunpack.c.l.b16 %v4729
    %v4932 = vunpack.c.h.b16 %v4729
    %v4933 = vunpack.c.l.b16 %v4730
    %v4934 = vunpack.c.h.b16 %v4730
    %v4935 = vunpack.c.l.b16 %v4731
    %v4936 = vunpack.c.h.b16 %v4731
    %v4937 = vunpack.c.l.b16 %v4732
    %v4938 = vunpack.c.h.b16 %v4732
    %v4939 = vunpack.c.l.b16 %v4733
    %v4940 = vunpack.c.h.b16 %v4733
    %v4941 = vunpack.c.l.b16 %v4734
    %v4942 = vunpack.c.h.b16 %v4734
    %v4943 = vunpack.c.l.b16 %v4735
    %v4944 = vunpack.c.h.b16 %v4735
    %v4945 = vunpack.c.l.b16 %v4736
    %v4946 = vunpack.c.h.b16 %v4736
    %v4947 = vunpack.c.l.b16 %v4737
    %v4948 = vunpack.c.h.b16 %v4737
    %v4949 = vunpack.c.l.b16 %v4738
    %v4950 = vunpack.c.h.b16 %v4738
    %v4951 = vpack.c.b16 %v4923, %v4919
    %v4952 = vpack.c.b16 %v4924, %v4920
    %v4953 = vpack.c.b16 %v4925, %v4921
    %v4954 = vpack.c.b16 %v4926, %v4922
    %v4955 = vpack.c.b16 %v4931, %v4927
    %v4956 = vpack.c.b16 %v4932, %v4928
    %v4957 = vpack.c.b16 %v4933, %v4929
    %v4958 = vpack.c.b16 %v4934, %v4930
    %v4959 = vpack.c.b16 %v4939, %v4935
    %v4960 = vpack.c.b16 %v4940, %v4936
    %v4961 = vpack.c.b16 %v4941, %v4937
    %v4962 = vpack.c.b16 %v4942, %v4938
    %v4963 = vpack.c.b16 %v4947, %v4943
    %v4964 = vpack.c.b16 %v4948, %v4944
    %v4965 = vpack.c.b16 %v4949, %v4945
    %v4966 = vpack.c.b16 %v4950, %v4946
    %v4984 = vsel %vm4844, %v4902, 0
    %4986 = vmatpush.bf16.msra.mxu0 0
    %4987 = vmatpush.bf16.msra.mxu0 0
    %4988 = vmatpush.bf16.msra.mxu0 0
    %4989 = vmatpush.bf16.msra.mxu0 0
    %4990 = vmatpush.bf16.msra.mxu0 %v4963
    %4991 = vmatpush.bf16.msra.mxu0 %v4959
    %4992 = vmatpush.bf16.msra.mxu0 %v4955
    %4993 = vmatpush.bf16.msra.mxu0 %v4951
    %4994 = vmatmul.bf16.gmra.mxu0 %v4984
    %v4995 = vpop.f32.mrf.mxu0
    %v4996 = vadd.f32 %v4858, %v4995
    %v4997 = vpop.f32.mrf.mxu0
    %4998 = vdwg.mxu0
    %4999 = vmatpush.bf16.msra.mxu0 0
    %5000 = vmatpush.bf16.msra.mxu0 0
    %5001 = vmatpush.bf16.msra.mxu0 0
    %5002 = vmatpush.bf16.msra.mxu0 0
    %5003 = vmatpush.bf16.msra.mxu0 %v4964
    %5004 = vmatpush.bf16.msra.mxu0 %v4960
    %5005 = vmatpush.bf16.msra.mxu0 %v4956
    %5006 = vmatpush.bf16.msra.mxu0 %v4952
    %5007 = vmatmul.bf16.gmra.mxu0 %v4984
    %v5008 = vpop.f32.mrf.mxu0
    %v5009 = vadd.f32 %v4871, %v5008
    %v5010 = vpop.f32.mrf.mxu0
    %5011 = vdwg.mxu0
    %5012 = vmatpush.bf16.msra.mxu0 0
    %5013 = vmatpush.bf16.msra.mxu0 0
    %5014 = vmatpush.bf16.msra.mxu0 0
    %5015 = vmatpush.bf16.msra.mxu0 0
    %5016 = vmatpush.bf16.msra.mxu0 %v4965
    %5017 = vmatpush.bf16.msra.mxu0 %v4961
    %5018 = vmatpush.bf16.msra.mxu0 %v4957
    %5019 = vmatpush.bf16.msra.mxu0 %v4953
    %5020 = vmatmul.bf16.gmra.mxu0 %v4984
    %v5021 = vpop.f32.mrf.mxu0
    %v5022 = vadd.f32 %v4884, %v5021
    %v5023 = vpop.f32.mrf.mxu0
    %5024 = vdwg.mxu0
    %5025 = vmatpush.bf16.msra.mxu0 0
    %5026 = vmatpush.bf16.msra.mxu0 0
    %5027 = vmatpush.bf16.msra.mxu0 0
    %5028 = vmatpush.bf16.msra.mxu0 0
    %5029 = vmatpush.bf16.msra.mxu0 %v4966
    %5030 = vmatpush.bf16.msra.mxu0 %v4962
    %5031 = vmatpush.bf16.msra.mxu0 %v4958
    %5032 = vmatpush.bf16.msra.mxu0 %v4954
    %5033 = vmatmul.bf16.gmra.mxu0 %v4984
    %v5034 = vpop.f32.mrf.mxu0
    %v5035 = vadd.f32 %v4897, %v5034
    %v5036 = vpop.f32.mrf.mxu0
    %5037 = vdwg.mxu0
    %v5038 = vld [vmem:[%s5 + $0x100] sm:$0xff]
    %v5039 = vld [vmem:[%s5 + $0x108] sm:$0xff]
    %v5040 = vld [vmem:[%s5 + $0x110] sm:$0xff]
    %v5041 = vld [vmem:[%s5 + $0x118] sm:$0xff]
    %v5042 = vld [vmem:[%s5 + $0x120] sm:$0xff]
    %v5043 = vld [vmem:[%s5 + $0x128] sm:$0xff]
    %v5044 = vld [vmem:[%s5 + $0x130] sm:$0xff]
    %v5045 = vld [vmem:[%s5 + $0x138] sm:$0xff]
    %v5046 = vld [vmem:[%s5 + $0x140] sm:$0xff]
    %v5047 = vld [vmem:[%s5 + $0x148] sm:$0xff]
    %v5048 = vld [vmem:[%s5 + $0x150] sm:$0xff]
    %v5049 = vld [vmem:[%s5 + $0x158] sm:$0xff]
    %v5050 = vld [vmem:[%s5 + $0x160] sm:$0xff]
    %v5051 = vld [vmem:[%s5 + $0x168] sm:$0xff]
    %v5052 = vld [vmem:[%s5 + $0x170] sm:$0xff]
    %v5053 = vld [vmem:[%s5 + $0x178] sm:$0xff]
    %v5054 = vrot.slane %v4757, 4
    %v5055 = vrot.slane %v4758, 3
    %v5056 = vsel %vm4761, %v5055, %v5054
    %v5057 = vpack.c.b16 %v5056, %v5056
    %v5074 = vunpack.c.l.b16 %v5038
    %v5075 = vunpack.c.h.b16 %v5038
    %v5076 = vunpack.c.l.b16 %v5039
    %v5077 = vunpack.c.h.b16 %v5039
    %v5078 = vunpack.c.l.b16 %v5040
    %v5079 = vunpack.c.h.b16 %v5040
    %v5080 = vunpack.c.l.b16 %v5041
    %v5081 = vunpack.c.h.b16 %v5041
    %v5082 = vunpack.c.l.b16 %v5042
    %v5083 = vunpack.c.h.b16 %v5042
    %v5084 = vunpack.c.l.b16 %v5043
    %v5085 = vunpack.c.h.b16 %v5043
    %v5086 = vunpack.c.l.b16 %v5044
    %v5087 = vunpack.c.h.b16 %v5044
    %v5088 = vunpack.c.l.b16 %v5045
    %v5089 = vunpack.c.h.b16 %v5045
    %v5090 = vunpack.c.l.b16 %v5046
    %v5091 = vunpack.c.h.b16 %v5046
    %v5092 = vunpack.c.l.b16 %v5047
    %v5093 = vunpack.c.h.b16 %v5047
    %v5094 = vunpack.c.l.b16 %v5048
    %v5095 = vunpack.c.h.b16 %v5048
    %v5096 = vunpack.c.l.b16 %v5049
    %v5097 = vunpack.c.h.b16 %v5049
    %v5098 = vunpack.c.l.b16 %v5050
    %v5099 = vunpack.c.h.b16 %v5050
    %v5100 = vunpack.c.l.b16 %v5051
    %v5101 = vunpack.c.h.b16 %v5051
    %v5102 = vunpack.c.l.b16 %v5052
    %v5103 = vunpack.c.h.b16 %v5052
    %v5104 = vunpack.c.l.b16 %v5053
    %v5105 = vunpack.c.h.b16 %v5053
    %v5106 = vpack.c.b16 %v5078, %v5074
    %v5107 = vpack.c.b16 %v5079, %v5075
    %v5108 = vpack.c.b16 %v5080, %v5076
    %v5109 = vpack.c.b16 %v5081, %v5077
    %v5110 = vpack.c.b16 %v5086, %v5082
    %v5111 = vpack.c.b16 %v5087, %v5083
    %v5112 = vpack.c.b16 %v5088, %v5084
    %v5113 = vpack.c.b16 %v5089, %v5085
    %v5114 = vpack.c.b16 %v5094, %v5090
    %v5115 = vpack.c.b16 %v5095, %v5091
    %v5116 = vpack.c.b16 %v5096, %v5092
    %v5117 = vpack.c.b16 %v5097, %v5093
    %v5118 = vpack.c.b16 %v5102, %v5098
    %v5119 = vpack.c.b16 %v5103, %v5099
    %v5120 = vpack.c.b16 %v5104, %v5100
    %v5121 = vpack.c.b16 %v5105, %v5101
    %v5139 = vsel %vm4844, %v5057, 0
    %5141 = vmatpush.bf16.msra.mxu0 0
    %5142 = vmatpush.bf16.msra.mxu0 0
    %5143 = vmatpush.bf16.msra.mxu0 0
    %5144 = vmatpush.bf16.msra.mxu0 0
    %5145 = vmatpush.bf16.msra.mxu0 %v5118
    %5146 = vmatpush.bf16.msra.mxu0 %v5114
    %5147 = vmatpush.bf16.msra.mxu0 %v5110
    %5148 = vmatpush.bf16.msra.mxu0 %v5106
    %5149 = vmatmul.bf16.gmra.mxu0 %v5139
    %v5150 = vpop.f32.mrf.mxu0
    %v5151 = vadd.f32 0.0, %v5150
    %v5152 = vpop.f32.mrf.mxu0
    %5153 = vdwg.mxu0
    %5154 = vmatpush.bf16.msra.mxu0 0
    %5155 = vmatpush.bf16.msra.mxu0 0
    %5156 = vmatpush.bf16.msra.mxu0 0
    %5157 = vmatpush.bf16.msra.mxu0 0
    %5158 = vmatpush.bf16.msra.mxu0 %v5119
    %5159 = vmatpush.bf16.msra.mxu0 %v5115
    %5160 = vmatpush.bf16.msra.mxu0 %v5111
    %5161 = vmatpush.bf16.msra.mxu0 %v5107
    %5162 = vmatmul.bf16.gmra.mxu0 %v5139
    %v5163 = vpop.f32.mrf.mxu0
    %v5164 = vadd.f32 0.0, %v5163
    %v5165 = vpop.f32.mrf.mxu0
    %5166 = vdwg.mxu0
    %5167 = vmatpush.bf16.msra.mxu0 0
    %5168 = vmatpush.bf16.msra.mxu0 0
    %5169 = vmatpush.bf16.msra.mxu0 0
    %5170 = vmatpush.bf16.msra.mxu0 0
    %5171 = vmatpush.bf16.msra.mxu0 %v5120
    %5172 = vmatpush.bf16.msra.mxu0 %v5116
    %5173 = vmatpush.bf16.msra.mxu0 %v5112
    %5174 = vmatpush.bf16.msra.mxu0 %v5108
    %5175 = vmatmul.bf16.gmra.mxu0 %v5139
    %v5176 = vpop.f32.mrf.mxu0
    %v5177 = vadd.f32 0.0, %v5176
    %v5178 = vpop.f32.mrf.mxu0
    %5179 = vdwg.mxu0
    %5180 = vmatpush.bf16.msra.mxu0 0
    %5181 = vmatpush.bf16.msra.mxu0 0
    %5182 = vmatpush.bf16.msra.mxu0 0
    %5183 = vmatpush.bf16.msra.mxu0 0
    %5184 = vmatpush.bf16.msra.mxu0 %v5121
    %5185 = vmatpush.bf16.msra.mxu0 %v5117
    %5186 = vmatpush.bf16.msra.mxu0 %v5113
    %5187 = vmatpush.bf16.msra.mxu0 %v5109
    %5188 = vmatmul.bf16.gmra.mxu0 %v5139
    %v5189 = vpop.f32.mrf.mxu0
    %v5190 = vadd.f32 0.0, %v5189
    %v5191 = vpop.f32.mrf.mxu0
    %5192 = vdwg.mxu0
    %v5193 = vadd.f32 %v4996, %v5151
    %v5194 = vadd.f32 %v5009, %v5164
    %v5195 = vadd.f32 %v5022, %v5177
    %v5196 = vadd.f32 %v5035, %v5190
    %v5197 = vld [vmem:[%s5 + $0x180] sm:$0xff]
    %v5198 = vld [vmem:[%s5 + $0x188] sm:$0xff]
    %v5199 = vld [vmem:[%s5 + $0x190] sm:$0xff]
    %v5200 = vld [vmem:[%s5 + $0x198] sm:$0xff]
    %v5201 = vld [vmem:[%s5 + $0x1a0] sm:$0xff]
    %v5202 = vld [vmem:[%s5 + $0x1a8] sm:$0xff]
    %v5203 = vld [vmem:[%s5 + $0x1b0] sm:$0xff]
    %v5204 = vld [vmem:[%s5 + $0x1b8] sm:$0xff]
    %v5205 = vld [vmem:[%s5 + $0x1c0] sm:$0xff]
    %v5206 = vld [vmem:[%s5 + $0x1c8] sm:$0xff]
    %v5207 = vld [vmem:[%s5 + $0x1d0] sm:$0xff]
    %v5208 = vld [vmem:[%s5 + $0x1d8] sm:$0xff]
    %v5209 = vld [vmem:[%s5 + $0x1e0] sm:$0xff]
    %v5210 = vld [vmem:[%s5 + $0x1e8] sm:$0xff]
    %v5211 = vld [vmem:[%s5 + $0x1f0] sm:$0xff]
    %v5212 = vld [vmem:[%s5 + $0x1f8] sm:$0xff]
    %v5213 = vrot.slane %v4757, 6
    %v5214 = vrot.slane %v4758, 5
    %v5215 = vsel %vm4761, %v5214, %v5213
    %v5216 = vpack.c.b16 %v5215, %v5215
    %v5233 = vunpack.c.l.b16 %v5197
    %v5234 = vunpack.c.h.b16 %v5197
    %v5235 = vunpack.c.l.b16 %v5198
    %v5236 = vunpack.c.h.b16 %v5198
    %v5237 = vunpack.c.l.b16 %v5199
    %v5238 = vunpack.c.h.b16 %v5199
    %v5239 = vunpack.c.l.b16 %v5200
    %v5240 = vunpack.c.h.b16 %v5200
    %v5241 = vunpack.c.l.b16 %v5201
    %v5242 = vunpack.c.h.b16 %v5201
    %v5243 = vunpack.c.l.b16 %v5202
    %v5244 = vunpack.c.h.b16 %v5202
    %v5245 = vunpack.c.l.b16 %v5203
    %v5246 = vunpack.c.h.b16 %v5203
    %v5247 = vunpack.c.l.b16 %v5204
    %v5248 = vunpack.c.h.b16 %v5204
    %v5249 = vunpack.c.l.b16 %v5205
    %v5250 = vunpack.c.h.b16 %v5205
    %v5251 = vunpack.c.l.b16 %v5206
    %v5252 = vunpack.c.h.b16 %v5206
    %v5253 = vunpack.c.l.b16 %v5207
    %v5254 = vunpack.c.h.b16 %v5207
    %v5255 = vunpack.c.l.b16 %v5208
    %v5256 = vunpack.c.h.b16 %v5208
    %v5257 = vunpack.c.l.b16 %v5209
    %v5258 = vunpack.c.h.b16 %v5209
    %v5259 = vunpack.c.l.b16 %v5210
    %v5260 = vunpack.c.h.b16 %v5210
    %v5261 = vunpack.c.l.b16 %v5211
    %v5262 = vunpack.c.h.b16 %v5211
    %v5263 = vunpack.c.l.b16 %v5212
    %v5264 = vunpack.c.h.b16 %v5212
    %v5265 = vpack.c.b16 %v5237, %v5233
    %v5266 = vpack.c.b16 %v5238, %v5234
    %v5267 = vpack.c.b16 %v5239, %v5235
    %v5268 = vpack.c.b16 %v5240, %v5236
    %v5269 = vpack.c.b16 %v5245, %v5241
    %v5270 = vpack.c.b16 %v5246, %v5242
    %v5271 = vpack.c.b16 %v5247, %v5243
    %v5272 = vpack.c.b16 %v5248, %v5244
    %v5273 = vpack.c.b16 %v5253, %v5249
    %v5274 = vpack.c.b16 %v5254, %v5250
    %v5275 = vpack.c.b16 %v5255, %v5251
    %v5276 = vpack.c.b16 %v5256, %v5252
    %v5277 = vpack.c.b16 %v5261, %v5257
    %v5278 = vpack.c.b16 %v5262, %v5258
    %v5279 = vpack.c.b16 %v5263, %v5259
    %v5280 = vpack.c.b16 %v5264, %v5260
    %v5298 = vsel %vm4844, %v5216, 0
    %5300 = vmatpush.bf16.msra.mxu0 0
    %5301 = vmatpush.bf16.msra.mxu0 0
    %5302 = vmatpush.bf16.msra.mxu0 0
    %5303 = vmatpush.bf16.msra.mxu0 0
    %5304 = vmatpush.bf16.msra.mxu0 %v5277
    %5305 = vmatpush.bf16.msra.mxu0 %v5273
    %5306 = vmatpush.bf16.msra.mxu0 %v5269
    %5307 = vmatpush.bf16.msra.mxu0 %v5265
    %5308 = vmatmul.bf16.gmra.mxu0 %v5298
    %v5309 = vpop.f32.mrf.mxu0
    %v5310 = vadd.f32 0.0, %v5309
    %v5311 = vpop.f32.mrf.mxu0
    %5312 = vdwg.mxu0
    %5313 = vmatpush.bf16.msra.mxu0 0
    %5314 = vmatpush.bf16.msra.mxu0 0
    %5315 = vmatpush.bf16.msra.mxu0 0
    %5316 = vmatpush.bf16.msra.mxu0 0
    %5317 = vmatpush.bf16.msra.mxu0 %v5278
    %5318 = vmatpush.bf16.msra.mxu0 %v5274
    %5319 = vmatpush.bf16.msra.mxu0 %v5270
    %5320 = vmatpush.bf16.msra.mxu0 %v5266
    %5321 = vmatmul.bf16.gmra.mxu0 %v5298
    %v5322 = vpop.f32.mrf.mxu0
    %v5323 = vadd.f32 0.0, %v5322
    %v5324 = vpop.f32.mrf.mxu0
    %5325 = vdwg.mxu0
    %5326 = vmatpush.bf16.msra.mxu0 0
    %5327 = vmatpush.bf16.msra.mxu0 0
    %5328 = vmatpush.bf16.msra.mxu0 0
    %5329 = vmatpush.bf16.msra.mxu0 0
    %5330 = vmatpush.bf16.msra.mxu0 %v5279
    %5331 = vmatpush.bf16.msra.mxu0 %v5275
    %5332 = vmatpush.bf16.msra.mxu0 %v5271
    %5333 = vmatpush.bf16.msra.mxu0 %v5267
    %5334 = vmatmul.bf16.gmra.mxu0 %v5298
    %v5335 = vpop.f32.mrf.mxu0
    %v5336 = vadd.f32 0.0, %v5335
    %v5337 = vpop.f32.mrf.mxu0
    %5338 = vdwg.mxu0
    %5339 = vmatpush.bf16.msra.mxu0 0
    %5340 = vmatpush.bf16.msra.mxu0 0
    %5341 = vmatpush.bf16.msra.mxu0 0
    %5342 = vmatpush.bf16.msra.mxu0 0
    %5343 = vmatpush.bf16.msra.mxu0 %v5280
    %5344 = vmatpush.bf16.msra.mxu0 %v5276
    %5345 = vmatpush.bf16.msra.mxu0 %v5272
    %5346 = vmatpush.bf16.msra.mxu0 %v5268
    %5347 = vmatmul.bf16.gmra.mxu0 %v5298
    %v5348 = vpop.f32.mrf.mxu0
    %v5349 = vadd.f32 0.0, %v5348
    %v5350 = vpop.f32.mrf.mxu0
    %5351 = vdwg.mxu0
    %v5352 = vadd.f32 %v5193, %v5310
    %v5353 = vadd.f32 %v5194, %v5323
    %v5354 = vadd.f32 %v5195, %v5336
    %v5355 = vadd.f32 %v5196, %v5349
    %v5358 = vrot.slane %v4689, 1
    %v5359 = vrot.slane %v4697, 1
    %v5362 = vmax.f32 %v4689, %v5358
    %v5363 = vmax.f32 %v4697, %v5359
    %v5366 = vrot.slane %v4690, 1
    %v5367 = vrot.slane %v4698, 1
    %v5370 = vmax.f32 %v4690, %v5366
    %v5371 = vmax.f32 %v4698, %v5367
    %v5372 = vmax.f32 %v5362, %v5370
    %v5373 = vmax.f32 %v5363, %v5371
    %v5374 = vpack.c.bf16 %v5372, %v5372
    %v5375 = vpack.c.bf16 %v5373, %v5373
    %v5376 = vld [vmem:[%s5 + $0x200] sm:$0xff]
    %v5377 = vld [vmem:[%s5 + $0x208] sm:$0xff]
    %v5378 = vld [vmem:[%s5 + $0x210] sm:$0xff]
    %v5379 = vld [vmem:[%s5 + $0x218] sm:$0xff]
    %v5380 = vld [vmem:[%s5 + $0x220] sm:$0xff]
    %v5381 = vld [vmem:[%s5 + $0x228] sm:$0xff]
    %v5382 = vld [vmem:[%s5 + $0x230] sm:$0xff]
    %v5383 = vld [vmem:[%s5 + $0x238] sm:$0xff]
    %v5384 = vld [vmem:[%s5 + $0x240] sm:$0xff]
    %v5385 = vld [vmem:[%s5 + $0x248] sm:$0xff]
    %v5386 = vld [vmem:[%s5 + $0x250] sm:$0xff]
    %v5387 = vld [vmem:[%s5 + $0x258] sm:$0xff]
    %v5388 = vld [vmem:[%s5 + $0x260] sm:$0xff]
    %v5389 = vld [vmem:[%s5 + $0x268] sm:$0xff]
    %v5390 = vld [vmem:[%s5 + $0x270] sm:$0xff]
    %v5391 = vld [vmem:[%s5 + $0x278] sm:$0xff]
    %v5394 = vunpack.c.l.b16 %v5374
    %v5395 = vunpack.c.l.b16 %v5375
    %v5396 = vrot.slane %v5395, 7
    %v5397 = vsel %vm4761, %v5396, %v5394
    %v5398 = vpack.c.b16 %v5397, %v5397
    %v5415 = vunpack.c.l.b16 %v5376
    %v5416 = vunpack.c.h.b16 %v5376
    %v5417 = vunpack.c.l.b16 %v5377
    %v5418 = vunpack.c.h.b16 %v5377
    %v5419 = vunpack.c.l.b16 %v5378
    %v5420 = vunpack.c.h.b16 %v5378
    %v5421 = vunpack.c.l.b16 %v5379
    %v5422 = vunpack.c.h.b16 %v5379
    %v5423 = vunpack.c.l.b16 %v5380
    %v5424 = vunpack.c.h.b16 %v5380
    %v5425 = vunpack.c.l.b16 %v5381
    %v5426 = vunpack.c.h.b16 %v5381
    %v5427 = vunpack.c.l.b16 %v5382
    %v5428 = vunpack.c.h.b16 %v5382
    %v5429 = vunpack.c.l.b16 %v5383
    %v5430 = vunpack.c.h.b16 %v5383
    %v5431 = vunpack.c.l.b16 %v5384
    %v5432 = vunpack.c.h.b16 %v5384
    %v5433 = vunpack.c.l.b16 %v5385
    %v5434 = vunpack.c.h.b16 %v5385
    %v5435 = vunpack.c.l.b16 %v5386
    %v5436 = vunpack.c.h.b16 %v5386
    %v5437 = vunpack.c.l.b16 %v5387
    %v5438 = vunpack.c.h.b16 %v5387
    %v5439 = vunpack.c.l.b16 %v5388
    %v5440 = vunpack.c.h.b16 %v5388
    %v5441 = vunpack.c.l.b16 %v5389
    %v5442 = vunpack.c.h.b16 %v5389
    %v5443 = vunpack.c.l.b16 %v5390
    %v5444 = vunpack.c.h.b16 %v5390
    %v5445 = vunpack.c.l.b16 %v5391
    %v5446 = vunpack.c.h.b16 %v5391
    %v5447 = vpack.c.b16 %v5419, %v5415
    %v5448 = vpack.c.b16 %v5420, %v5416
    %v5449 = vpack.c.b16 %v5421, %v5417
    %v5450 = vpack.c.b16 %v5422, %v5418
    %v5451 = vpack.c.b16 %v5427, %v5423
    %v5452 = vpack.c.b16 %v5428, %v5424
    %v5453 = vpack.c.b16 %v5429, %v5425
    %v5454 = vpack.c.b16 %v5430, %v5426
    %v5455 = vpack.c.b16 %v5435, %v5431
    %v5456 = vpack.c.b16 %v5436, %v5432
    %v5457 = vpack.c.b16 %v5437, %v5433
    %v5458 = vpack.c.b16 %v5438, %v5434
    %v5459 = vpack.c.b16 %v5443, %v5439
    %v5460 = vpack.c.b16 %v5444, %v5440
    %v5461 = vpack.c.b16 %v5445, %v5441
    %v5462 = vpack.c.b16 %v5446, %v5442
    %v5480 = vsel %vm4844, %v5398, 0
    %5482 = vmatpush.bf16.msra.mxu0 0
    %5483 = vmatpush.bf16.msra.mxu0 0
    %5484 = vmatpush.bf16.msra.mxu0 0
    %5485 = vmatpush.bf16.msra.mxu0 0
    %5486 = vmatpush.bf16.msra.mxu0 %v5459
    %5487 = vmatpush.bf16.msra.mxu0 %v5455
    %5488 = vmatpush.bf16.msra.mxu0 %v5451
    %5489 = vmatpush.bf16.msra.mxu0 %v5447
    %5490 = vmatmul.bf16.gmra.mxu0 %v5480
    %v5491 = vpop.f32.mrf.mxu0
    %v5492 = vadd.f32 0.0, %v5491
    %v5493 = vpop.f32.mrf.mxu0
    %5494 = vdwg.mxu0
    %5495 = vmatpush.bf16.msra.mxu0 0
    %5496 = vmatpush.bf16.msra.mxu0 0
    %5497 = vmatpush.bf16.msra.mxu0 0
    %5498 = vmatpush.bf16.msra.mxu0 0
    %5499 = vmatpush.bf16.msra.mxu0 %v5460
    %5500 = vmatpush.bf16.msra.mxu0 %v5456
    %5501 = vmatpush.bf16.msra.mxu0 %v5452
    %5502 = vmatpush.bf16.msra.mxu0 %v5448
    %5503 = vmatmul.bf16.gmra.mxu0 %v5480
    %v5504 = vpop.f32.mrf.mxu0
    %v5505 = vadd.f32 0.0, %v5504
    %v5506 = vpop.f32.mrf.mxu0
    %5507 = vdwg.mxu0
    %5508 = vmatpush.bf16.msra.mxu0 0
    %5509 = vmatpush.bf16.msra.mxu0 0
    %5510 = vmatpush.bf16.msra.mxu0 0
    %5511 = vmatpush.bf16.msra.mxu0 0
    %5512 = vmatpush.bf16.msra.mxu0 %v5461
    %5513 = vmatpush.bf16.msra.mxu0 %v5457
    %5514 = vmatpush.bf16.msra.mxu0 %v5453
    %5515 = vmatpush.bf16.msra.mxu0 %v5449
    %5516 = vmatmul.bf16.gmra.mxu0 %v5480
    %v5517 = vpop.f32.mrf.mxu0
    %v5518 = vadd.f32 0.0, %v5517
    %v5519 = vpop.f32.mrf.mxu0
    %5520 = vdwg.mxu0
    %5521 = vmatpush.bf16.msra.mxu0 0
    %5522 = vmatpush.bf16.msra.mxu0 0
    %5523 = vmatpush.bf16.msra.mxu0 0
    %5524 = vmatpush.bf16.msra.mxu0 0
    %5525 = vmatpush.bf16.msra.mxu0 %v5462
    %5526 = vmatpush.bf16.msra.mxu0 %v5458
    %5527 = vmatpush.bf16.msra.mxu0 %v5454
    %5528 = vmatpush.bf16.msra.mxu0 %v5450
    %5529 = vmatmul.bf16.gmra.mxu0 %v5480
    %v5530 = vpop.f32.mrf.mxu0
    %v5531 = vadd.f32 0.0, %v5530
    %v5532 = vpop.f32.mrf.mxu0
    %5533 = vdwg.mxu0
    %v5534 = vadd.f32 %v5352, %v5492
    %v5535 = vadd.f32 %v5353, %v5505
    %v5536 = vadd.f32 %v5354, %v5518
    %v5537 = vadd.f32 %v5355, %v5531
    %v5538 = vld [vmem:[%s5 + $0x280] sm:$0xff]
    %v5539 = vld [vmem:[%s5 + $0x288] sm:$0xff]
    %v5540 = vld [vmem:[%s5 + $0x290] sm:$0xff]
    %v5541 = vld [vmem:[%s5 + $0x298] sm:$0xff]
    %v5542 = vld [vmem:[%s5 + $0x2a0] sm:$0xff]
    %v5543 = vld [vmem:[%s5 + $0x2a8] sm:$0xff]
    %v5544 = vld [vmem:[%s5 + $0x2b0] sm:$0xff]
    %v5545 = vld [vmem:[%s5 + $0x2b8] sm:$0xff]
    %v5546 = vld [vmem:[%s5 + $0x2c0] sm:$0xff]
    %v5547 = vld [vmem:[%s5 + $0x2c8] sm:$0xff]
    %v5548 = vld [vmem:[%s5 + $0x2d0] sm:$0xff]
    %v5549 = vld [vmem:[%s5 + $0x2d8] sm:$0xff]
    %v5550 = vld [vmem:[%s5 + $0x2e0] sm:$0xff]
    %v5551 = vld [vmem:[%s5 + $0x2e8] sm:$0xff]
    %v5552 = vld [vmem:[%s5 + $0x2f0] sm:$0xff]
    %v5553 = vld [vmem:[%s5 + $0x2f8] sm:$0xff]
    %v5554 = vrot.slane %v5394, 2
    %v5555 = vrot.slane %v5395, 1
    %v5556 = vsel %vm4761, %v5555, %v5554
    %v5557 = vpack.c.b16 %v5556, %v5556
    %v5574 = vunpack.c.l.b16 %v5538
    %v5575 = vunpack.c.h.b16 %v5538
    %v5576 = vunpack.c.l.b16 %v5539
    %v5577 = vunpack.c.h.b16 %v5539
    %v5578 = vunpack.c.l.b16 %v5540
    %v5579 = vunpack.c.h.b16 %v5540
    %v5580 = vunpack.c.l.b16 %v5541
    %v5581 = vunpack.c.h.b16 %v5541
    %v5582 = vunpack.c.l.b16 %v5542
    %v5583 = vunpack.c.h.b16 %v5542
    %v5584 = vunpack.c.l.b16 %v5543
    %v5585 = vunpack.c.h.b16 %v5543
    %v5586 = vunpack.c.l.b16 %v5544
    %v5587 = vunpack.c.h.b16 %v5544
    %v5588 = vunpack.c.l.b16 %v5545
    %v5589 = vunpack.c.h.b16 %v5545
    %v5590 = vunpack.c.l.b16 %v5546
    %v5591 = vunpack.c.h.b16 %v5546
    %v5592 = vunpack.c.l.b16 %v5547
    %v5593 = vunpack.c.h.b16 %v5547
    %v5594 = vunpack.c.l.b16 %v5548
    %v5595 = vunpack.c.h.b16 %v5548
    %v5596 = vunpack.c.l.b16 %v5549
    %v5597 = vunpack.c.h.b16 %v5549
    %v5598 = vunpack.c.l.b16 %v5550
    %v5599 = vunpack.c.h.b16 %v5550
    %v5600 = vunpack.c.l.b16 %v5551
    %v5601 = vunpack.c.h.b16 %v5551
    %v5602 = vunpack.c.l.b16 %v5552
    %v5603 = vunpack.c.h.b16 %v5552
    %v5604 = vunpack.c.l.b16 %v5553
    %v5605 = vunpack.c.h.b16 %v5553
    %v5606 = vpack.c.b16 %v5578, %v5574
    %v5607 = vpack.c.b16 %v5579, %v5575
    %v5608 = vpack.c.b16 %v5580, %v5576
    %v5609 = vpack.c.b16 %v5581, %v5577
    %v5610 = vpack.c.b16 %v5586, %v5582
    %v5611 = vpack.c.b16 %v5587, %v5583
    %v5612 = vpack.c.b16 %v5588, %v5584
    %v5613 = vpack.c.b16 %v5589, %v5585
    %v5614 = vpack.c.b16 %v5594, %v5590
    %v5615 = vpack.c.b16 %v5595, %v5591
    %v5616 = vpack.c.b16 %v5596, %v5592
    %v5617 = vpack.c.b16 %v5597, %v5593
    %v5618 = vpack.c.b16 %v5602, %v5598
    %v5619 = vpack.c.b16 %v5603, %v5599
    %v5620 = vpack.c.b16 %v5604, %v5600
    %v5621 = vpack.c.b16 %v5605, %v5601
    %v5639 = vsel %vm4844, %v5557, 0
    %5641 = vmatpush.bf16.msra.mxu0 0
    %5642 = vmatpush.bf16.msra.mxu0 0
    %5643 = vmatpush.bf16.msra.mxu0 0
    %5644 = vmatpush.bf16.msra.mxu0 0
    %5645 = vmatpush.bf16.msra.mxu0 %v5618
    %5646 = vmatpush.bf16.msra.mxu0 %v5614
    %5647 = vmatpush.bf16.msra.mxu0 %v5610
    %5648 = vmatpush.bf16.msra.mxu0 %v5606
    %5649 = vmatmul.bf16.gmra.mxu0 %v5639
    %v5650 = vpop.f32.mrf.mxu0
    %v5651 = vadd.f32 0.0, %v5650
    %v5652 = vpop.f32.mrf.mxu0
    %5653 = vdwg.mxu0
    %5654 = vmatpush.bf16.msra.mxu0 0
    %5655 = vmatpush.bf16.msra.mxu0 0
    %5656 = vmatpush.bf16.msra.mxu0 0
    %5657 = vmatpush.bf16.msra.mxu0 0
    %5658 = vmatpush.bf16.msra.mxu0 %v5619
    %5659 = vmatpush.bf16.msra.mxu0 %v5615
    %5660 = vmatpush.bf16.msra.mxu0 %v5611
    %5661 = vmatpush.bf16.msra.mxu0 %v5607
    %5662 = vmatmul.bf16.gmra.mxu0 %v5639
    %v5663 = vpop.f32.mrf.mxu0
    %v5664 = vadd.f32 0.0, %v5663
    %v5665 = vpop.f32.mrf.mxu0
    %5666 = vdwg.mxu0
    %5667 = vmatpush.bf16.msra.mxu0 0
    %5668 = vmatpush.bf16.msra.mxu0 0
    %5669 = vmatpush.bf16.msra.mxu0 0
    %5670 = vmatpush.bf16.msra.mxu0 0
    %5671 = vmatpush.bf16.msra.mxu0 %v5620
    %5672 = vmatpush.bf16.msra.mxu0 %v5616
    %5673 = vmatpush.bf16.msra.mxu0 %v5612
    %5674 = vmatpush.bf16.msra.mxu0 %v5608
    %5675 = vmatmul.bf16.gmra.mxu0 %v5639
    %v5676 = vpop.f32.mrf.mxu0
    %v5677 = vadd.f32 0.0, %v5676
    %v5678 = vpop.f32.mrf.mxu0
    %5679 = vdwg.mxu0
    %5680 = vmatpush.bf16.msra.mxu0 0
    %5681 = vmatpush.bf16.msra.mxu0 0
    %5682 = vmatpush.bf16.msra.mxu0 0
    %5683 = vmatpush.bf16.msra.mxu0 0
    %5684 = vmatpush.bf16.msra.mxu0 %v5621
    %5685 = vmatpush.bf16.msra.mxu0 %v5617
    %5686 = vmatpush.bf16.msra.mxu0 %v5613
    %5687 = vmatpush.bf16.msra.mxu0 %v5609
    %5688 = vmatmul.bf16.gmra.mxu0 %v5639
    %v5689 = vpop.f32.mrf.mxu0
    %v5690 = vadd.f32 0.0, %v5689
    %v5691 = vpop.f32.mrf.mxu0
    %5692 = vdwg.mxu0
    %v5693 = vadd.f32 %v5534, %v5651
    %v5694 = vadd.f32 %v5535, %v5664
    %v5695 = vadd.f32 %v5536, %v5677
    %v5696 = vadd.f32 %v5537, %v5690
    %v5697 = vld [vmem:[%s5 + $0x300] sm:$0xff]
    %v5698 = vld [vmem:[%s5 + $0x308] sm:$0xff]
    %v5699 = vld [vmem:[%s5 + $0x310] sm:$0xff]
    %v5700 = vld [vmem:[%s5 + $0x318] sm:$0xff]
    %v5701 = vld [vmem:[%s5 + $0x320] sm:$0xff]
    %v5702 = vld [vmem:[%s5 + $0x328] sm:$0xff]
    %v5703 = vld [vmem:[%s5 + $0x330] sm:$0xff]
    %v5704 = vld [vmem:[%s5 + $0x338] sm:$0xff]
    %v5705 = vld [vmem:[%s5 + $0x340] sm:$0xff]
    %v5706 = vld [vmem:[%s5 + $0x348] sm:$0xff]
    %v5707 = vld [vmem:[%s5 + $0x350] sm:$0xff]
    %v5708 = vld [vmem:[%s5 + $0x358] sm:$0xff]
    %v5709 = vld [vmem:[%s5 + $0x360] sm:$0xff]
    %v5710 = vld [vmem:[%s5 + $0x368] sm:$0xff]
    %v5711 = vld [vmem:[%s5 + $0x370] sm:$0xff]
    %v5712 = vld [vmem:[%s5 + $0x378] sm:$0xff]
    %v5713 = vrot.slane %v5394, 4
    %v5714 = vrot.slane %v5395, 3
    %v5715 = vsel %vm4761, %v5714, %v5713
    %v5716 = vpack.c.b16 %v5715, %v5715
    %v5733 = vunpack.c.l.b16 %v5697
    %v5734 = vunpack.c.h.b16 %v5697
    %v5735 = vunpack.c.l.b16 %v5698
    %v5736 = vunpack.c.h.b16 %v5698
    %v5737 = vunpack.c.l.b16 %v5699
    %v5738 = vunpack.c.h.b16 %v5699
    %v5739 = vunpack.c.l.b16 %v5700
    %v5740 = vunpack.c.h.b16 %v5700
    %v5741 = vunpack.c.l.b16 %v5701
    %v5742 = vunpack.c.h.b16 %v5701
    %v5743 = vunpack.c.l.b16 %v5702
    %v5744 = vunpack.c.h.b16 %v5702
    %v5745 = vunpack.c.l.b16 %v5703
    %v5746 = vunpack.c.h.b16 %v5703
    %v5747 = vunpack.c.l.b16 %v5704
    %v5748 = vunpack.c.h.b16 %v5704
    %v5749 = vunpack.c.l.b16 %v5705
    %v5750 = vunpack.c.h.b16 %v5705
    %v5751 = vunpack.c.l.b16 %v5706
    %v5752 = vunpack.c.h.b16 %v5706
    %v5753 = vunpack.c.l.b16 %v5707
    %v5754 = vunpack.c.h.b16 %v5707
    %v5755 = vunpack.c.l.b16 %v5708
    %v5756 = vunpack.c.h.b16 %v5708
    %v5757 = vunpack.c.l.b16 %v5709
    %v5758 = vunpack.c.h.b16 %v5709
    %v5759 = vunpack.c.l.b16 %v5710
    %v5760 = vunpack.c.h.b16 %v5710
    %v5761 = vunpack.c.l.b16 %v5711
    %v5762 = vunpack.c.h.b16 %v5711
    %v5763 = vunpack.c.l.b16 %v5712
    %v5764 = vunpack.c.h.b16 %v5712
    %v5765 = vpack.c.b16 %v5737, %v5733
    %v5766 = vpack.c.b16 %v5738, %v5734
    %v5767 = vpack.c.b16 %v5739, %v5735
    %v5768 = vpack.c.b16 %v5740, %v5736
    %v5769 = vpack.c.b16 %v5745, %v5741
    %v5770 = vpack.c.b16 %v5746, %v5742
    %v5771 = vpack.c.b16 %v5747, %v5743
    %v5772 = vpack.c.b16 %v5748, %v5744
    %v5773 = vpack.c.b16 %v5753, %v5749
    %v5774 = vpack.c.b16 %v5754, %v5750
    %v5775 = vpack.c.b16 %v5755, %v5751
    %v5776 = vpack.c.b16 %v5756, %v5752
    %v5777 = vpack.c.b16 %v5761, %v5757
    %v5778 = vpack.c.b16 %v5762, %v5758
    %v5779 = vpack.c.b16 %v5763, %v5759
    %v5780 = vpack.c.b16 %v5764, %v5760
    %v5798 = vsel %vm4844, %v5716, 0
    %5800 = vmatpush.bf16.msra.mxu0 0
    %5801 = vmatpush.bf16.msra.mxu0 0
    %5802 = vmatpush.bf16.msra.mxu0 0
    %5803 = vmatpush.bf16.msra.mxu0 0
    %5804 = vmatpush.bf16.msra.mxu0 %v5777
    %5805 = vmatpush.bf16.msra.mxu0 %v5773
    %5806 = vmatpush.bf16.msra.mxu0 %v5769
    %5807 = vmatpush.bf16.msra.mxu0 %v5765
    %5808 = vmatmul.bf16.gmra.mxu0 %v5798
    %v5809 = vpop.f32.mrf.mxu0
    %v5810 = vadd.f32 0.0, %v5809
    %v5811 = vpop.f32.mrf.mxu0
    %5812 = vdwg.mxu0
    %5813 = vmatpush.bf16.msra.mxu0 0
    %5814 = vmatpush.bf16.msra.mxu0 0
    %5815 = vmatpush.bf16.msra.mxu0 0
    %5816 = vmatpush.bf16.msra.mxu0 0
    %5817 = vmatpush.bf16.msra.mxu0 %v5778
    %5818 = vmatpush.bf16.msra.mxu0 %v5774
    %5819 = vmatpush.bf16.msra.mxu0 %v5770
    %5820 = vmatpush.bf16.msra.mxu0 %v5766
    %5821 = vmatmul.bf16.gmra.mxu0 %v5798
    %v5822 = vpop.f32.mrf.mxu0
    %v5823 = vadd.f32 0.0, %v5822
    %v5824 = vpop.f32.mrf.mxu0
    %5825 = vdwg.mxu0
    %5826 = vmatpush.bf16.msra.mxu0 0
    %5827 = vmatpush.bf16.msra.mxu0 0
    %5828 = vmatpush.bf16.msra.mxu0 0
    %5829 = vmatpush.bf16.msra.mxu0 0
    %5830 = vmatpush.bf16.msra.mxu0 %v5779
    %5831 = vmatpush.bf16.msra.mxu0 %v5775
    %5832 = vmatpush.bf16.msra.mxu0 %v5771
    %5833 = vmatpush.bf16.msra.mxu0 %v5767
    %5834 = vmatmul.bf16.gmra.mxu0 %v5798
    %v5835 = vpop.f32.mrf.mxu0
    %v5836 = vadd.f32 0.0, %v5835
    %v5837 = vpop.f32.mrf.mxu0
    %5838 = vdwg.mxu0
    %5839 = vmatpush.bf16.msra.mxu0 0
    %5840 = vmatpush.bf16.msra.mxu0 0
    %5841 = vmatpush.bf16.msra.mxu0 0
    %5842 = vmatpush.bf16.msra.mxu0 0
    %5843 = vmatpush.bf16.msra.mxu0 %v5780
    %5844 = vmatpush.bf16.msra.mxu0 %v5776
    %5845 = vmatpush.bf16.msra.mxu0 %v5772
    %5846 = vmatpush.bf16.msra.mxu0 %v5768
    %5847 = vmatmul.bf16.gmra.mxu0 %v5798
    %v5848 = vpop.f32.mrf.mxu0
    %v5849 = vadd.f32 0.0, %v5848
    %v5850 = vpop.f32.mrf.mxu0
    %5851 = vdwg.mxu0
    %v5852 = vadd.f32 %v5693, %v5810
    %v5853 = vadd.f32 %v5694, %v5823
    %v5854 = vadd.f32 %v5695, %v5836
    %v5855 = vadd.f32 %v5696, %v5849
    %v5856 = vld [vmem:[%s5 + $0x380] sm:$0xff]
    %v5857 = vld [vmem:[%s5 + $0x388] sm:$0xff]
    %v5858 = vld [vmem:[%s5 + $0x390] sm:$0xff]
    %v5859 = vld [vmem:[%s5 + $0x398] sm:$0xff]
    %v5860 = vld [vmem:[%s5 + $0x3a0] sm:$0xff]
    %v5861 = vld [vmem:[%s5 + $0x3a8] sm:$0xff]
    %v5862 = vld [vmem:[%s5 + $0x3b0] sm:$0xff]
    %v5863 = vld [vmem:[%s5 + $0x3b8] sm:$0xff]
    %v5864 = vld [vmem:[%s5 + $0x3c0] sm:$0xff]
    %v5865 = vld [vmem:[%s5 + $0x3c8] sm:$0xff]
    %v5866 = vld [vmem:[%s5 + $0x3d0] sm:$0xff]
    %v5867 = vld [vmem:[%s5 + $0x3d8] sm:$0xff]
    %v5868 = vld [vmem:[%s5 + $0x3e0] sm:$0xff]
    %v5869 = vld [vmem:[%s5 + $0x3e8] sm:$0xff]
    %v5870 = vld [vmem:[%s5 + $0x3f0] sm:$0xff]
    %v5871 = vld [vmem:[%s5 + $0x3f8] sm:$0xff]
    %v5872 = vrot.slane %v5394, 6
    %v5873 = vrot.slane %v5395, 5
    %v5874 = vsel %vm4761, %v5873, %v5872
    %v5875 = vpack.c.b16 %v5874, %v5874
    %v5892 = vunpack.c.l.b16 %v5856
    %v5893 = vunpack.c.h.b16 %v5856
    %v5894 = vunpack.c.l.b16 %v5857
    %v5895 = vunpack.c.h.b16 %v5857
    %v5896 = vunpack.c.l.b16 %v5858
    %v5897 = vunpack.c.h.b16 %v5858
    %v5898 = vunpack.c.l.b16 %v5859
    %v5899 = vunpack.c.h.b16 %v5859
    %v5900 = vunpack.c.l.b16 %v5860
    %v5901 = vunpack.c.h.b16 %v5860
    %v5902 = vunpack.c.l.b16 %v5861
    %v5903 = vunpack.c.h.b16 %v5861
    %v5904 = vunpack.c.l.b16 %v5862
    %v5905 = vunpack.c.h.b16 %v5862
    %v5906 = vunpack.c.l.b16 %v5863
    %v5907 = vunpack.c.h.b16 %v5863
    %v5908 = vunpack.c.l.b16 %v5864
    %v5909 = vunpack.c.h.b16 %v5864
    %v5910 = vunpack.c.l.b16 %v5865
    %v5911 = vunpack.c.h.b16 %v5865
    %v5912 = vunpack.c.l.b16 %v5866
    %v5913 = vunpack.c.h.b16 %v5866
    %v5914 = vunpack.c.l.b16 %v5867
    %v5915 = vunpack.c.h.b16 %v5867
    %v5916 = vunpack.c.l.b16 %v5868
    %v5917 = vunpack.c.h.b16 %v5868
    %v5918 = vunpack.c.l.b16 %v5869
    %v5919 = vunpack.c.h.b16 %v5869
    %v5920 = vunpack.c.l.b16 %v5870
    %v5921 = vunpack.c.h.b16 %v5870
    %v5922 = vunpack.c.l.b16 %v5871
    %v5923 = vunpack.c.h.b16 %v5871
    %v5924 = vpack.c.b16 %v5896, %v5892
    %v5925 = vpack.c.b16 %v5897, %v5893
    %v5926 = vpack.c.b16 %v5898, %v5894
    %v5927 = vpack.c.b16 %v5899, %v5895
    %v5928 = vpack.c.b16 %v5904, %v5900
    %v5929 = vpack.c.b16 %v5905, %v5901
    %v5930 = vpack.c.b16 %v5906, %v5902
    %v5931 = vpack.c.b16 %v5907, %v5903
    %v5932 = vpack.c.b16 %v5912, %v5908
    %v5933 = vpack.c.b16 %v5913, %v5909
    %v5934 = vpack.c.b16 %v5914, %v5910
    %v5935 = vpack.c.b16 %v5915, %v5911
    %v5936 = vpack.c.b16 %v5920, %v5916
    %v5937 = vpack.c.b16 %v5921, %v5917
    %v5938 = vpack.c.b16 %v5922, %v5918
    %v5939 = vpack.c.b16 %v5923, %v5919
    %v5957 = vsel %vm4844, %v5875, 0
    %5959 = vmatpush.bf16.msra.mxu0 0
    %5960 = vmatpush.bf16.msra.mxu0 0
    %5961 = vmatpush.bf16.msra.mxu0 0
    %5962 = vmatpush.bf16.msra.mxu0 0
    %5963 = vmatpush.bf16.msra.mxu0 %v5936
    %5964 = vmatpush.bf16.msra.mxu0 %v5932
    %5965 = vmatpush.bf16.msra.mxu0 %v5928
    %5966 = vmatpush.bf16.msra.mxu0 %v5924
    %5967 = vmatmul.bf16.gmra.mxu0 %v5957
    %v5968 = vpop.f32.mrf.mxu0
    %v5969 = vadd.f32 0.0, %v5968
    %v5970 = vpop.f32.mrf.mxu0
    %5971 = vdwg.mxu0
    %5972 = vmatpush.bf16.msra.mxu0 0
    %5973 = vmatpush.bf16.msra.mxu0 0
    %5974 = vmatpush.bf16.msra.mxu0 0
    %5975 = vmatpush.bf16.msra.mxu0 0
    %5976 = vmatpush.bf16.msra.mxu0 %v5937
    %5977 = vmatpush.bf16.msra.mxu0 %v5933
    %5978 = vmatpush.bf16.msra.mxu0 %v5929
    %5979 = vmatpush.bf16.msra.mxu0 %v5925
    %5980 = vmatmul.bf16.gmra.mxu0 %v5957
    %v5981 = vpop.f32.mrf.mxu0
    %v5982 = vadd.f32 0.0, %v5981
    %v5983 = vpop.f32.mrf.mxu0
    %5984 = vdwg.mxu0
    %5985 = vmatpush.bf16.msra.mxu0 0
    %5986 = vmatpush.bf16.msra.mxu0 0
    %5987 = vmatpush.bf16.msra.mxu0 0
    %5988 = vmatpush.bf16.msra.mxu0 0
    %5989 = vmatpush.bf16.msra.mxu0 %v5938
    %5990 = vmatpush.bf16.msra.mxu0 %v5934
    %5991 = vmatpush.bf16.msra.mxu0 %v5930
    %5992 = vmatpush.bf16.msra.mxu0 %v5926
    %5993 = vmatmul.bf16.gmra.mxu0 %v5957
    %v5994 = vpop.f32.mrf.mxu0
    %v5995 = vadd.f32 0.0, %v5994
    %v5996 = vpop.f32.mrf.mxu0
    %5997 = vdwg.mxu0
    %5998 = vmatpush.bf16.msra.mxu0 0
    %5999 = vmatpush.bf16.msra.mxu0 0
    %6000 = vmatpush.bf16.msra.mxu0 0
    %6001 = vmatpush.bf16.msra.mxu0 0
    %6002 = vmatpush.bf16.msra.mxu0 %v5939
    %6003 = vmatpush.bf16.msra.mxu0 %v5935
    %6004 = vmatpush.bf16.msra.mxu0 %v5931
    %6005 = vmatpush.bf16.msra.mxu0 %v5927
    %6006 = vmatmul.bf16.gmra.mxu0 %v5957
    %v6007 = vpop.f32.mrf.mxu0
    %v6008 = vadd.f32 0.0, %v6007
    %v6009 = vpop.f32.mrf.mxu0
    %6010 = vdwg.mxu0
    %v6011 = vadd.f32 %v5852, %v5969
    %v6012 = vadd.f32 %v5853, %v5982
    %v6013 = vadd.f32 %v5854, %v5995
    %v6014 = vadd.f32 %v5855, %v6008
    %v6017 = vrot.slane %v4691, 1
    %v6018 = vrot.slane %v4699, 1
    %v6021 = vmax.f32 %v4691, %v6017
    %v6022 = vmax.f32 %v4699, %v6018
    %v6025 = vrot.slane %v4692, 1
    %v6026 = vrot.slane %v4700, 1
    %v6029 = vmax.f32 %v4692, %v6025
    %v6030 = vmax.f32 %v4700, %v6026
    %v6031 = vmax.f32 %v6021, %v6029
    %v6032 = vmax.f32 %v6022, %v6030
    %v6033 = vpack.c.bf16 %v6031, %v6031
    %v6034 = vpack.c.bf16 %v6032, %v6032
    %v6035 = vld [vmem:[%s5 + $0x400] sm:$0xff]
    %v6036 = vld [vmem:[%s5 + $0x408] sm:$0xff]
    %v6037 = vld [vmem:[%s5 + $0x410] sm:$0xff]
    %v6038 = vld [vmem:[%s5 + $0x418] sm:$0xff]
    %v6039 = vld [vmem:[%s5 + $0x420] sm:$0xff]
    %v6040 = vld [vmem:[%s5 + $0x428] sm:$0xff]
    %v6041 = vld [vmem:[%s5 + $0x430] sm:$0xff]
    %v6042 = vld [vmem:[%s5 + $0x438] sm:$0xff]
    %v6043 = vld [vmem:[%s5 + $0x440] sm:$0xff]
    %v6044 = vld [vmem:[%s5 + $0x448] sm:$0xff]
    %v6045 = vld [vmem:[%s5 + $0x450] sm:$0xff]
    %v6046 = vld [vmem:[%s5 + $0x458] sm:$0xff]
    %v6047 = vld [vmem:[%s5 + $0x460] sm:$0xff]
    %v6048 = vld [vmem:[%s5 + $0x468] sm:$0xff]
    %v6049 = vld [vmem:[%s5 + $0x470] sm:$0xff]
    %v6050 = vld [vmem:[%s5 + $0x478] sm:$0xff]
    %v6053 = vunpack.c.l.b16 %v6033
    %v6054 = vunpack.c.l.b16 %v6034
    %v6055 = vrot.slane %v6054, 7
    %v6056 = vsel %vm4761, %v6055, %v6053
    %v6057 = vpack.c.b16 %v6056, %v6056
    %v6074 = vunpack.c.l.b16 %v6035
    %v6075 = vunpack.c.h.b16 %v6035
    %v6076 = vunpack.c.l.b16 %v6036
    %v6077 = vunpack.c.h.b16 %v6036
    %v6078 = vunpack.c.l.b16 %v6037
    %v6079 = vunpack.c.h.b16 %v6037
    %v6080 = vunpack.c.l.b16 %v6038
    %v6081 = vunpack.c.h.b16 %v6038
    %v6082 = vunpack.c.l.b16 %v6039
    %v6083 = vunpack.c.h.b16 %v6039
    %v6084 = vunpack.c.l.b16 %v6040
    %v6085 = vunpack.c.h.b16 %v6040
    %v6086 = vunpack.c.l.b16 %v6041
    %v6087 = vunpack.c.h.b16 %v6041
    %v6088 = vunpack.c.l.b16 %v6042
    %v6089 = vunpack.c.h.b16 %v6042
    %v6090 = vunpack.c.l.b16 %v6043
    %v6091 = vunpack.c.h.b16 %v6043
    %v6092 = vunpack.c.l.b16 %v6044
    %v6093 = vunpack.c.h.b16 %v6044
    %v6094 = vunpack.c.l.b16 %v6045
    %v6095 = vunpack.c.h.b16 %v6045
    %v6096 = vunpack.c.l.b16 %v6046
    %v6097 = vunpack.c.h.b16 %v6046
    %v6098 = vunpack.c.l.b16 %v6047
    %v6099 = vunpack.c.h.b16 %v6047
    %v6100 = vunpack.c.l.b16 %v6048
    %v6101 = vunpack.c.h.b16 %v6048
    %v6102 = vunpack.c.l.b16 %v6049
    %v6103 = vunpack.c.h.b16 %v6049
    %v6104 = vunpack.c.l.b16 %v6050
    %v6105 = vunpack.c.h.b16 %v6050
    %v6106 = vpack.c.b16 %v6078, %v6074
    %v6107 = vpack.c.b16 %v6079, %v6075
    %v6108 = vpack.c.b16 %v6080, %v6076
    %v6109 = vpack.c.b16 %v6081, %v6077
    %v6110 = vpack.c.b16 %v6086, %v6082
    %v6111 = vpack.c.b16 %v6087, %v6083
    %v6112 = vpack.c.b16 %v6088, %v6084
    %v6113 = vpack.c.b16 %v6089, %v6085
    %v6114 = vpack.c.b16 %v6094, %v6090
    %v6115 = vpack.c.b16 %v6095, %v6091
    %v6116 = vpack.c.b16 %v6096, %v6092
    %v6117 = vpack.c.b16 %v6097, %v6093
    %v6118 = vpack.c.b16 %v6102, %v6098
    %v6119 = vpack.c.b16 %v6103, %v6099
    %v6120 = vpack.c.b16 %v6104, %v6100
    %v6121 = vpack.c.b16 %v6105, %v6101
    %v6139 = vsel %vm4844, %v6057, 0
    %6141 = vmatpush.bf16.msra.mxu0 0
    %6142 = vmatpush.bf16.msra.mxu0 0
    %6143 = vmatpush.bf16.msra.mxu0 0
    %6144 = vmatpush.bf16.msra.mxu0 0
    %6145 = vmatpush.bf16.msra.mxu0 %v6118
    %6146 = vmatpush.bf16.msra.mxu0 %v6114
    %6147 = vmatpush.bf16.msra.mxu0 %v6110
    %6148 = vmatpush.bf16.msra.mxu0 %v6106
    %6149 = vmatmul.bf16.gmra.mxu0 %v6139
    %v6150 = vpop.f32.mrf.mxu0
    %v6151 = vadd.f32 0.0, %v6150
    %v6152 = vpop.f32.mrf.mxu0
    %6153 = vdwg.mxu0
    %6154 = vmatpush.bf16.msra.mxu0 0
    %6155 = vmatpush.bf16.msra.mxu0 0
    %6156 = vmatpush.bf16.msra.mxu0 0
    %6157 = vmatpush.bf16.msra.mxu0 0
    %6158 = vmatpush.bf16.msra.mxu0 %v6119
    %6159 = vmatpush.bf16.msra.mxu0 %v6115
    %6160 = vmatpush.bf16.msra.mxu0 %v6111
    %6161 = vmatpush.bf16.msra.mxu0 %v6107
    %6162 = vmatmul.bf16.gmra.mxu0 %v6139
    %v6163 = vpop.f32.mrf.mxu0
    %v6164 = vadd.f32 0.0, %v6163
    %v6165 = vpop.f32.mrf.mxu0
    %6166 = vdwg.mxu0
    %6167 = vmatpush.bf16.msra.mxu0 0
    %6168 = vmatpush.bf16.msra.mxu0 0
    %6169 = vmatpush.bf16.msra.mxu0 0
    %6170 = vmatpush.bf16.msra.mxu0 0
    %6171 = vmatpush.bf16.msra.mxu0 %v6120
    %6172 = vmatpush.bf16.msra.mxu0 %v6116
    %6173 = vmatpush.bf16.msra.mxu0 %v6112
    %6174 = vmatpush.bf16.msra.mxu0 %v6108
    %6175 = vmatmul.bf16.gmra.mxu0 %v6139
    %v6176 = vpop.f32.mrf.mxu0
    %v6177 = vadd.f32 0.0, %v6176
    %v6178 = vpop.f32.mrf.mxu0
    %6179 = vdwg.mxu0
    %6180 = vmatpush.bf16.msra.mxu0 0
    %6181 = vmatpush.bf16.msra.mxu0 0
    %6182 = vmatpush.bf16.msra.mxu0 0
    %6183 = vmatpush.bf16.msra.mxu0 0
    %6184 = vmatpush.bf16.msra.mxu0 %v6121
    %6185 = vmatpush.bf16.msra.mxu0 %v6117
    %6186 = vmatpush.bf16.msra.mxu0 %v6113
    %6187 = vmatpush.bf16.msra.mxu0 %v6109
    %6188 = vmatmul.bf16.gmra.mxu0 %v6139
    %v6189 = vpop.f32.mrf.mxu0
    %v6190 = vadd.f32 0.0, %v6189
    %v6191 = vpop.f32.mrf.mxu0
    %6192 = vdwg.mxu0
    %v6193 = vadd.f32 %v6011, %v6151
    %v6194 = vadd.f32 %v6012, %v6164
    %v6195 = vadd.f32 %v6013, %v6177
    %v6196 = vadd.f32 %v6014, %v6190
    %v6197 = vld [vmem:[%s5 + $0x480] sm:$0xff]
    %v6198 = vld [vmem:[%s5 + $0x488] sm:$0xff]
    %v6199 = vld [vmem:[%s5 + $0x490] sm:$0xff]
    %v6200 = vld [vmem:[%s5 + $0x498] sm:$0xff]
    %v6201 = vld [vmem:[%s5 + $0x4a0] sm:$0xff]
    %v6202 = vld [vmem:[%s5 + $0x4a8] sm:$0xff]
    %v6203 = vld [vmem:[%s5 + $0x4b0] sm:$0xff]
    %v6204 = vld [vmem:[%s5 + $0x4b8] sm:$0xff]
    %v6205 = vld [vmem:[%s5 + $0x4c0] sm:$0xff]
    %v6206 = vld [vmem:[%s5 + $0x4c8] sm:$0xff]
    %v6207 = vld [vmem:[%s5 + $0x4d0] sm:$0xff]
    %v6208 = vld [vmem:[%s5 + $0x4d8] sm:$0xff]
    %v6209 = vld [vmem:[%s5 + $0x4e0] sm:$0xff]
    %v6210 = vld [vmem:[%s5 + $0x4e8] sm:$0xff]
    %v6211 = vld [vmem:[%s5 + $0x4f0] sm:$0xff]
    %v6212 = vld [vmem:[%s5 + $0x4f8] sm:$0xff]
    %v6213 = vrot.slane %v6053, 2
    %v6214 = vrot.slane %v6054, 1
    %v6215 = vsel %vm4761, %v6214, %v6213
    %v6216 = vpack.c.b16 %v6215, %v6215
    %v6233 = vunpack.c.l.b16 %v6197
    %v6234 = vunpack.c.h.b16 %v6197
    %v6235 = vunpack.c.l.b16 %v6198
    %v6236 = vunpack.c.h.b16 %v6198
    %v6237 = vunpack.c.l.b16 %v6199
    %v6238 = vunpack.c.h.b16 %v6199
    %v6239 = vunpack.c.l.b16 %v6200
    %v6240 = vunpack.c.h.b16 %v6200
    %v6241 = vunpack.c.l.b16 %v6201
    %v6242 = vunpack.c.h.b16 %v6201
    %v6243 = vunpack.c.l.b16 %v6202
    %v6244 = vunpack.c.h.b16 %v6202
    %v6245 = vunpack.c.l.b16 %v6203
    %v6246 = vunpack.c.h.b16 %v6203
    %v6247 = vunpack.c.l.b16 %v6204
    %v6248 = vunpack.c.h.b16 %v6204
    %v6249 = vunpack.c.l.b16 %v6205
    %v6250 = vunpack.c.h.b16 %v6205
    %v6251 = vunpack.c.l.b16 %v6206
    %v6252 = vunpack.c.h.b16 %v6206
    %v6253 = vunpack.c.l.b16 %v6207
    %v6254 = vunpack.c.h.b16 %v6207
    %v6255 = vunpack.c.l.b16 %v6208
    %v6256 = vunpack.c.h.b16 %v6208
    %v6257 = vunpack.c.l.b16 %v6209
    %v6258 = vunpack.c.h.b16 %v6209
    %v6259 = vunpack.c.l.b16 %v6210
    %v6260 = vunpack.c.h.b16 %v6210
    %v6261 = vunpack.c.l.b16 %v6211
    %v6262 = vunpack.c.h.b16 %v6211
    %v6263 = vunpack.c.l.b16 %v6212
    %v6264 = vunpack.c.h.b16 %v6212
    %v6265 = vpack.c.b16 %v6237, %v6233
    %v6266 = vpack.c.b16 %v6238, %v6234
    %v6267 = vpack.c.b16 %v6239, %v6235
    %v6268 = vpack.c.b16 %v6240, %v6236
    %v6269 = vpack.c.b16 %v6245, %v6241
    %v6270 = vpack.c.b16 %v6246, %v6242
    %v6271 = vpack.c.b16 %v6247, %v6243
    %v6272 = vpack.c.b16 %v6248, %v6244
    %v6273 = vpack.c.b16 %v6253, %v6249
    %v6274 = vpack.c.b16 %v6254, %v6250
    %v6275 = vpack.c.b16 %v6255, %v6251
    %v6276 = vpack.c.b16 %v6256, %v6252
    %v6277 = vpack.c.b16 %v6261, %v6257
    %v6278 = vpack.c.b16 %v6262, %v6258
    %v6279 = vpack.c.b16 %v6263, %v6259
    %v6280 = vpack.c.b16 %v6264, %v6260
    %v6298 = vsel %vm4844, %v6216, 0
    %6300 = vmatpush.bf16.msra.mxu0 0
    %6301 = vmatpush.bf16.msra.mxu0 0
    %6302 = vmatpush.bf16.msra.mxu0 0
    %6303 = vmatpush.bf16.msra.mxu0 0
    %6304 = vmatpush.bf16.msra.mxu0 %v6277
    %6305 = vmatpush.bf16.msra.mxu0 %v6273
    %6306 = vmatpush.bf16.msra.mxu0 %v6269
    %6307 = vmatpush.bf16.msra.mxu0 %v6265
    %6308 = vmatmul.bf16.gmra.mxu0 %v6298
    %v6309 = vpop.f32.mrf.mxu0
    %v6310 = vadd.f32 0.0, %v6309
    %v6311 = vpop.f32.mrf.mxu0
    %6312 = vdwg.mxu0
    %6313 = vmatpush.bf16.msra.mxu0 0
    %6314 = vmatpush.bf16.msra.mxu0 0
    %6315 = vmatpush.bf16.msra.mxu0 0
    %6316 = vmatpush.bf16.msra.mxu0 0
    %6317 = vmatpush.bf16.msra.mxu0 %v6278
    %6318 = vmatpush.bf16.msra.mxu0 %v6274
    %6319 = vmatpush.bf16.msra.mxu0 %v6270
    %6320 = vmatpush.bf16.msra.mxu0 %v6266
    %6321 = vmatmul.bf16.gmra.mxu0 %v6298
    %v6322 = vpop.f32.mrf.mxu0
    %v6323 = vadd.f32 0.0, %v6322
    %v6324 = vpop.f32.mrf.mxu0
    %6325 = vdwg.mxu0
    %6326 = vmatpush.bf16.msra.mxu0 0
    %6327 = vmatpush.bf16.msra.mxu0 0
    %6328 = vmatpush.bf16.msra.mxu0 0
    %6329 = vmatpush.bf16.msra.mxu0 0
    %6330 = vmatpush.bf16.msra.mxu0 %v6279
    %6331 = vmatpush.bf16.msra.mxu0 %v6275
    %6332 = vmatpush.bf16.msra.mxu0 %v6271
    %6333 = vmatpush.bf16.msra.mxu0 %v6267
    %6334 = vmatmul.bf16.gmra.mxu0 %v6298
    %v6335 = vpop.f32.mrf.mxu0
    %v6336 = vadd.f32 0.0, %v6335
    %v6337 = vpop.f32.mrf.mxu0
    %6338 = vdwg.mxu0
    %6339 = vmatpush.bf16.msra.mxu0 0
    %6340 = vmatpush.bf16.msra.mxu0 0
    %6341 = vmatpush.bf16.msra.mxu0 0
    %6342 = vmatpush.bf16.msra.mxu0 0
    %6343 = vmatpush.bf16.msra.mxu0 %v6280
    %6344 = vmatpush.bf16.msra.mxu0 %v6276
    %6345 = vmatpush.bf16.msra.mxu0 %v6272
    %6346 = vmatpush.bf16.msra.mxu0 %v6268
    %6347 = vmatmul.bf16.gmra.mxu0 %v6298
    %v6348 = vpop.f32.mrf.mxu0
    %v6349 = vadd.f32 0.0, %v6348
    %v6350 = vpop.f32.mrf.mxu0
    %6351 = vdwg.mxu0
    %v6352 = vadd.f32 %v6193, %v6310
    %v6353 = vadd.f32 %v6194, %v6323
    %v6354 = vadd.f32 %v6195, %v6336
    %v6355 = vadd.f32 %v6196, %v6349
    %v6356 = vld [vmem:[%s5 + $0x500] sm:$0xff]
    %v6357 = vld [vmem:[%s5 + $0x508] sm:$0xff]
    %v6358 = vld [vmem:[%s5 + $0x510] sm:$0xff]
    %v6359 = vld [vmem:[%s5 + $0x518] sm:$0xff]
    %v6360 = vld [vmem:[%s5 + $0x520] sm:$0xff]
    %v6361 = vld [vmem:[%s5 + $0x528] sm:$0xff]
    %v6362 = vld [vmem:[%s5 + $0x530] sm:$0xff]
    %v6363 = vld [vmem:[%s5 + $0x538] sm:$0xff]
    %v6364 = vld [vmem:[%s5 + $0x540] sm:$0xff]
    %v6365 = vld [vmem:[%s5 + $0x548] sm:$0xff]
    %v6366 = vld [vmem:[%s5 + $0x550] sm:$0xff]
    %v6367 = vld [vmem:[%s5 + $0x558] sm:$0xff]
    %v6368 = vld [vmem:[%s5 + $0x560] sm:$0xff]
    %v6369 = vld [vmem:[%s5 + $0x568] sm:$0xff]
    %v6370 = vld [vmem:[%s5 + $0x570] sm:$0xff]
    %v6371 = vld [vmem:[%s5 + $0x578] sm:$0xff]
    %v6372 = vrot.slane %v6053, 4
    %v6373 = vrot.slane %v6054, 3
    %v6374 = vsel %vm4761, %v6373, %v6372
    %v6375 = vpack.c.b16 %v6374, %v6374
    %v6392 = vunpack.c.l.b16 %v6356
    %v6393 = vunpack.c.h.b16 %v6356
    %v6394 = vunpack.c.l.b16 %v6357
    %v6395 = vunpack.c.h.b16 %v6357
    %v6396 = vunpack.c.l.b16 %v6358
    %v6397 = vunpack.c.h.b16 %v6358
    %v6398 = vunpack.c.l.b16 %v6359
    %v6399 = vunpack.c.h.b16 %v6359
    %v6400 = vunpack.c.l.b16 %v6360
    %v6401 = vunpack.c.h.b16 %v6360
    %v6402 = vunpack.c.l.b16 %v6361
    %v6403 = vunpack.c.h.b16 %v6361
    %v6404 = vunpack.c.l.b16 %v6362
    %v6405 = vunpack.c.h.b16 %v6362
    %v6406 = vunpack.c.l.b16 %v6363
    %v6407 = vunpack.c.h.b16 %v6363
    %v6408 = vunpack.c.l.b16 %v6364
    %v6409 = vunpack.c.h.b16 %v6364
    %v6410 = vunpack.c.l.b16 %v6365
    %v6411 = vunpack.c.h.b16 %v6365
    %v6412 = vunpack.c.l.b16 %v6366
    %v6413 = vunpack.c.h.b16 %v6366
    %v6414 = vunpack.c.l.b16 %v6367
    %v6415 = vunpack.c.h.b16 %v6367
    %v6416 = vunpack.c.l.b16 %v6368
    %v6417 = vunpack.c.h.b16 %v6368
    %v6418 = vunpack.c.l.b16 %v6369
    %v6419 = vunpack.c.h.b16 %v6369
    %v6420 = vunpack.c.l.b16 %v6370
    %v6421 = vunpack.c.h.b16 %v6370
    %v6422 = vunpack.c.l.b16 %v6371
    %v6423 = vunpack.c.h.b16 %v6371
    %v6424 = vpack.c.b16 %v6396, %v6392
    %v6425 = vpack.c.b16 %v6397, %v6393
    %v6426 = vpack.c.b16 %v6398, %v6394
    %v6427 = vpack.c.b16 %v6399, %v6395
    %v6428 = vpack.c.b16 %v6404, %v6400
    %v6429 = vpack.c.b16 %v6405, %v6401
    %v6430 = vpack.c.b16 %v6406, %v6402
    %v6431 = vpack.c.b16 %v6407, %v6403
    %v6432 = vpack.c.b16 %v6412, %v6408
    %v6433 = vpack.c.b16 %v6413, %v6409
    %v6434 = vpack.c.b16 %v6414, %v6410
    %v6435 = vpack.c.b16 %v6415, %v6411
    %v6436 = vpack.c.b16 %v6420, %v6416
    %v6437 = vpack.c.b16 %v6421, %v6417
    %v6438 = vpack.c.b16 %v6422, %v6418
    %v6439 = vpack.c.b16 %v6423, %v6419
    %v6457 = vsel %vm4844, %v6375, 0
    %6459 = vmatpush.bf16.msra.mxu0 0
    %6460 = vmatpush.bf16.msra.mxu0 0
    %6461 = vmatpush.bf16.msra.mxu0 0
    %6462 = vmatpush.bf16.msra.mxu0 0
    %6463 = vmatpush.bf16.msra.mxu0 %v6436
    %6464 = vmatpush.bf16.msra.mxu0 %v6432
    %6465 = vmatpush.bf16.msra.mxu0 %v6428
    %6466 = vmatpush.bf16.msra.mxu0 %v6424
    %6467 = vmatmul.bf16.gmra.mxu0 %v6457
    %v6468 = vpop.f32.mrf.mxu0
    %v6469 = vadd.f32 0.0, %v6468
    %v6470 = vpop.f32.mrf.mxu0
    %6471 = vdwg.mxu0
    %6472 = vmatpush.bf16.msra.mxu0 0
    %6473 = vmatpush.bf16.msra.mxu0 0
    %6474 = vmatpush.bf16.msra.mxu0 0
    %6475 = vmatpush.bf16.msra.mxu0 0
    %6476 = vmatpush.bf16.msra.mxu0 %v6437
    %6477 = vmatpush.bf16.msra.mxu0 %v6433
    %6478 = vmatpush.bf16.msra.mxu0 %v6429
    %6479 = vmatpush.bf16.msra.mxu0 %v6425
    %6480 = vmatmul.bf16.gmra.mxu0 %v6457
    %v6481 = vpop.f32.mrf.mxu0
    %v6482 = vadd.f32 0.0, %v6481
    %v6483 = vpop.f32.mrf.mxu0
    %6484 = vdwg.mxu0
    %6485 = vmatpush.bf16.msra.mxu0 0
    %6486 = vmatpush.bf16.msra.mxu0 0
    %6487 = vmatpush.bf16.msra.mxu0 0
    %6488 = vmatpush.bf16.msra.mxu0 0
    %6489 = vmatpush.bf16.msra.mxu0 %v6438
    %6490 = vmatpush.bf16.msra.mxu0 %v6434
    %6491 = vmatpush.bf16.msra.mxu0 %v6430
    %6492 = vmatpush.bf16.msra.mxu0 %v6426
    %6493 = vmatmul.bf16.gmra.mxu0 %v6457
    %v6494 = vpop.f32.mrf.mxu0
    %v6495 = vadd.f32 0.0, %v6494
    %v6496 = vpop.f32.mrf.mxu0
    %6497 = vdwg.mxu0
    %6498 = vmatpush.bf16.msra.mxu0 0
    %6499 = vmatpush.bf16.msra.mxu0 0
    %6500 = vmatpush.bf16.msra.mxu0 0
    %6501 = vmatpush.bf16.msra.mxu0 0
    %6502 = vmatpush.bf16.msra.mxu0 %v6439
    %6503 = vmatpush.bf16.msra.mxu0 %v6435
    %6504 = vmatpush.bf16.msra.mxu0 %v6431
    %6505 = vmatpush.bf16.msra.mxu0 %v6427
    %6506 = vmatmul.bf16.gmra.mxu0 %v6457
    %v6507 = vpop.f32.mrf.mxu0
    %v6508 = vadd.f32 0.0, %v6507
    %v6509 = vpop.f32.mrf.mxu0
    %6510 = vdwg.mxu0
    %v6511 = vadd.f32 %v6352, %v6469
    %v6512 = vadd.f32 %v6353, %v6482
    %v6513 = vadd.f32 %v6354, %v6495
    %v6514 = vadd.f32 %v6355, %v6508
    %v6515 = vld [vmem:[%s5 + $0x580] sm:$0xff]
    %v6516 = vld [vmem:[%s5 + $0x588] sm:$0xff]
    %v6517 = vld [vmem:[%s5 + $0x590] sm:$0xff]
    %v6518 = vld [vmem:[%s5 + $0x598] sm:$0xff]
    %v6519 = vld [vmem:[%s5 + $0x5a0] sm:$0xff]
    %v6520 = vld [vmem:[%s5 + $0x5a8] sm:$0xff]
    %v6521 = vld [vmem:[%s5 + $0x5b0] sm:$0xff]
    %v6522 = vld [vmem:[%s5 + $0x5b8] sm:$0xff]
    %v6523 = vld [vmem:[%s5 + $0x5c0] sm:$0xff]
    %v6524 = vld [vmem:[%s5 + $0x5c8] sm:$0xff]
    %v6525 = vld [vmem:[%s5 + $0x5d0] sm:$0xff]
    %v6526 = vld [vmem:[%s5 + $0x5d8] sm:$0xff]
    %v6527 = vld [vmem:[%s5 + $0x5e0] sm:$0xff]
    %v6528 = vld [vmem:[%s5 + $0x5e8] sm:$0xff]
    %v6529 = vld [vmem:[%s5 + $0x5f0] sm:$0xff]
    %v6530 = vld [vmem:[%s5 + $0x5f8] sm:$0xff]
    %v6531 = vrot.slane %v6053, 6
    %v6532 = vrot.slane %v6054, 5
    %v6533 = vsel %vm4761, %v6532, %v6531
    %v6534 = vpack.c.b16 %v6533, %v6533
    %v6551 = vunpack.c.l.b16 %v6515
    %v6552 = vunpack.c.h.b16 %v6515
    %v6553 = vunpack.c.l.b16 %v6516
    %v6554 = vunpack.c.h.b16 %v6516
    %v6555 = vunpack.c.l.b16 %v6517
    %v6556 = vunpack.c.h.b16 %v6517
    %v6557 = vunpack.c.l.b16 %v6518
    %v6558 = vunpack.c.h.b16 %v6518
    %v6559 = vunpack.c.l.b16 %v6519
    %v6560 = vunpack.c.h.b16 %v6519
    %v6561 = vunpack.c.l.b16 %v6520
    %v6562 = vunpack.c.h.b16 %v6520
    %v6563 = vunpack.c.l.b16 %v6521
    %v6564 = vunpack.c.h.b16 %v6521
    %v6565 = vunpack.c.l.b16 %v6522
    %v6566 = vunpack.c.h.b16 %v6522
    %v6567 = vunpack.c.l.b16 %v6523
    %v6568 = vunpack.c.h.b16 %v6523
    %v6569 = vunpack.c.l.b16 %v6524
    %v6570 = vunpack.c.h.b16 %v6524
    %v6571 = vunpack.c.l.b16 %v6525
    %v6572 = vunpack.c.h.b16 %v6525
    %v6573 = vunpack.c.l.b16 %v6526
    %v6574 = vunpack.c.h.b16 %v6526
    %v6575 = vunpack.c.l.b16 %v6527
    %v6576 = vunpack.c.h.b16 %v6527
    %v6577 = vunpack.c.l.b16 %v6528
    %v6578 = vunpack.c.h.b16 %v6528
    %v6579 = vunpack.c.l.b16 %v6529
    %v6580 = vunpack.c.h.b16 %v6529
    %v6581 = vunpack.c.l.b16 %v6530
    %v6582 = vunpack.c.h.b16 %v6530
    %v6583 = vpack.c.b16 %v6555, %v6551
    %v6584 = vpack.c.b16 %v6556, %v6552
    %v6585 = vpack.c.b16 %v6557, %v6553
    %v6586 = vpack.c.b16 %v6558, %v6554
    %v6587 = vpack.c.b16 %v6563, %v6559
    %v6588 = vpack.c.b16 %v6564, %v6560
    %v6589 = vpack.c.b16 %v6565, %v6561
    %v6590 = vpack.c.b16 %v6566, %v6562
    %v6591 = vpack.c.b16 %v6571, %v6567
    %v6592 = vpack.c.b16 %v6572, %v6568
    %v6593 = vpack.c.b16 %v6573, %v6569
    %v6594 = vpack.c.b16 %v6574, %v6570
    %v6595 = vpack.c.b16 %v6579, %v6575
    %v6596 = vpack.c.b16 %v6580, %v6576
    %v6597 = vpack.c.b16 %v6581, %v6577
    %v6598 = vpack.c.b16 %v6582, %v6578
    %v6616 = vsel %vm4844, %v6534, 0
    %6618 = vmatpush.bf16.msra.mxu0 0
    %6619 = vmatpush.bf16.msra.mxu0 0
    %6620 = vmatpush.bf16.msra.mxu0 0
    %6621 = vmatpush.bf16.msra.mxu0 0
    %6622 = vmatpush.bf16.msra.mxu0 %v6595
    %6623 = vmatpush.bf16.msra.mxu0 %v6591
    %6624 = vmatpush.bf16.msra.mxu0 %v6587
    %6625 = vmatpush.bf16.msra.mxu0 %v6583
    %6626 = vmatmul.bf16.gmra.mxu0 %v6616
    %v6627 = vpop.f32.mrf.mxu0
    %v6628 = vadd.f32 0.0, %v6627
    %v6629 = vpop.f32.mrf.mxu0
    %6630 = vdwg.mxu0
    %6631 = vmatpush.bf16.msra.mxu0 0
    %6632 = vmatpush.bf16.msra.mxu0 0
    %6633 = vmatpush.bf16.msra.mxu0 0
    %6634 = vmatpush.bf16.msra.mxu0 0
    %6635 = vmatpush.bf16.msra.mxu0 %v6596
    %6636 = vmatpush.bf16.msra.mxu0 %v6592
    %6637 = vmatpush.bf16.msra.mxu0 %v6588
    %6638 = vmatpush.bf16.msra.mxu0 %v6584
    %6639 = vmatmul.bf16.gmra.mxu0 %v6616
    %v6640 = vpop.f32.mrf.mxu0
    %v6641 = vadd.f32 0.0, %v6640
    %v6642 = vpop.f32.mrf.mxu0
    %6643 = vdwg.mxu0
    %6644 = vmatpush.bf16.msra.mxu0 0
    %6645 = vmatpush.bf16.msra.mxu0 0
    %6646 = vmatpush.bf16.msra.mxu0 0
    %6647 = vmatpush.bf16.msra.mxu0 0
    %6648 = vmatpush.bf16.msra.mxu0 %v6597
    %6649 = vmatpush.bf16.msra.mxu0 %v6593
    %6650 = vmatpush.bf16.msra.mxu0 %v6589
    %6651 = vmatpush.bf16.msra.mxu0 %v6585
    %6652 = vmatmul.bf16.gmra.mxu0 %v6616
    %v6653 = vpop.f32.mrf.mxu0
    %v6654 = vadd.f32 0.0, %v6653
    %v6655 = vpop.f32.mrf.mxu0
    %6656 = vdwg.mxu0
    %6657 = vmatpush.bf16.msra.mxu0 0
    %6658 = vmatpush.bf16.msra.mxu0 0
    %6659 = vmatpush.bf16.msra.mxu0 0
    %6660 = vmatpush.bf16.msra.mxu0 0
    %6661 = vmatpush.bf16.msra.mxu0 %v6598
    %6662 = vmatpush.bf16.msra.mxu0 %v6594
    %6663 = vmatpush.bf16.msra.mxu0 %v6590
    %6664 = vmatpush.bf16.msra.mxu0 %v6586
    %6665 = vmatmul.bf16.gmra.mxu0 %v6616
    %v6666 = vpop.f32.mrf.mxu0
    %v6667 = vadd.f32 0.0, %v6666
    %v6668 = vpop.f32.mrf.mxu0
    %6669 = vdwg.mxu0
    %v6670 = vadd.f32 %v6511, %v6628
    %v6671 = vadd.f32 %v6512, %v6641
    %v6672 = vadd.f32 %v6513, %v6654
    %v6673 = vadd.f32 %v6514, %v6667
    %v6676 = vrot.slane %v4693, 1
    %v6677 = vrot.slane %v4701, 1
    %v6680 = vmax.f32 %v4693, %v6676
    %v6681 = vmax.f32 %v4701, %v6677
    %v6684 = vrot.slane %v4694, 1
    %v6685 = vrot.slane %v4702, 1
    %v6688 = vmax.f32 %v4694, %v6684
    %v6689 = vmax.f32 %v4702, %v6685
    %v6690 = vmax.f32 %v6680, %v6688
    %v6691 = vmax.f32 %v6681, %v6689
    %v6692 = vpack.c.bf16 %v6690, %v6690
    %v6693 = vpack.c.bf16 %v6691, %v6691
    %v6694 = vld [vmem:[%s5 + $0x600] sm:$0xff]
    %v6695 = vld [vmem:[%s5 + $0x608] sm:$0xff]
    %v6696 = vld [vmem:[%s5 + $0x610] sm:$0xff]
    %v6697 = vld [vmem:[%s5 + $0x618] sm:$0xff]
    %v6698 = vld [vmem:[%s5 + $0x620] sm:$0xff]
    %v6699 = vld [vmem:[%s5 + $0x628] sm:$0xff]
    %v6700 = vld [vmem:[%s5 + $0x630] sm:$0xff]
    %v6701 = vld [vmem:[%s5 + $0x638] sm:$0xff]
    %v6702 = vld [vmem:[%s5 + $0x640] sm:$0xff]
    %v6703 = vld [vmem:[%s5 + $0x648] sm:$0xff]
    %v6704 = vld [vmem:[%s5 + $0x650] sm:$0xff]
    %v6705 = vld [vmem:[%s5 + $0x658] sm:$0xff]
    %v6706 = vld [vmem:[%s5 + $0x660] sm:$0xff]
    %v6707 = vld [vmem:[%s5 + $0x668] sm:$0xff]
    %v6708 = vld [vmem:[%s5 + $0x670] sm:$0xff]
    %v6709 = vld [vmem:[%s5 + $0x678] sm:$0xff]
    %v6712 = vunpack.c.l.b16 %v6692
    %v6713 = vunpack.c.l.b16 %v6693
    %v6714 = vrot.slane %v6713, 7
    %v6715 = vsel %vm4761, %v6714, %v6712
    %v6716 = vpack.c.b16 %v6715, %v6715
    %v6733 = vunpack.c.l.b16 %v6694
    %v6734 = vunpack.c.h.b16 %v6694
    %v6735 = vunpack.c.l.b16 %v6695
    %v6736 = vunpack.c.h.b16 %v6695
    %v6737 = vunpack.c.l.b16 %v6696
    %v6738 = vunpack.c.h.b16 %v6696
    %v6739 = vunpack.c.l.b16 %v6697
    %v6740 = vunpack.c.h.b16 %v6697
    %v6741 = vunpack.c.l.b16 %v6698
    %v6742 = vunpack.c.h.b16 %v6698
    %v6743 = vunpack.c.l.b16 %v6699
    %v6744 = vunpack.c.h.b16 %v6699
    %v6745 = vunpack.c.l.b16 %v6700
    %v6746 = vunpack.c.h.b16 %v6700
    %v6747 = vunpack.c.l.b16 %v6701
    %v6748 = vunpack.c.h.b16 %v6701
    %v6749 = vunpack.c.l.b16 %v6702
    %v6750 = vunpack.c.h.b16 %v6702
    %v6751 = vunpack.c.l.b16 %v6703
    %v6752 = vunpack.c.h.b16 %v6703
    %v6753 = vunpack.c.l.b16 %v6704
    %v6754 = vunpack.c.h.b16 %v6704
    %v6755 = vunpack.c.l.b16 %v6705
    %v6756 = vunpack.c.h.b16 %v6705
    %v6757 = vunpack.c.l.b16 %v6706
    %v6758 = vunpack.c.h.b16 %v6706
    %v6759 = vunpack.c.l.b16 %v6707
    %v6760 = vunpack.c.h.b16 %v6707
    %v6761 = vunpack.c.l.b16 %v6708
    %v6762 = vunpack.c.h.b16 %v6708
    %v6763 = vunpack.c.l.b16 %v6709
    %v6764 = vunpack.c.h.b16 %v6709
    %v6765 = vpack.c.b16 %v6737, %v6733
    %v6766 = vpack.c.b16 %v6738, %v6734
    %v6767 = vpack.c.b16 %v6739, %v6735
    %v6768 = vpack.c.b16 %v6740, %v6736
    %v6769 = vpack.c.b16 %v6745, %v6741
    %v6770 = vpack.c.b16 %v6746, %v6742
    %v6771 = vpack.c.b16 %v6747, %v6743
    %v6772 = vpack.c.b16 %v6748, %v6744
    %v6773 = vpack.c.b16 %v6753, %v6749
    %v6774 = vpack.c.b16 %v6754, %v6750
    %v6775 = vpack.c.b16 %v6755, %v6751
    %v6776 = vpack.c.b16 %v6756, %v6752
    %v6777 = vpack.c.b16 %v6761, %v6757
    %v6778 = vpack.c.b16 %v6762, %v6758
    %v6779 = vpack.c.b16 %v6763, %v6759
    %v6780 = vpack.c.b16 %v6764, %v6760
    %v6798 = vsel %vm4844, %v6716, 0
    %6800 = vmatpush.bf16.msra.mxu0 0
    %6801 = vmatpush.bf16.msra.mxu0 0
    %6802 = vmatpush.bf16.msra.mxu0 0
    %6803 = vmatpush.bf16.msra.mxu0 0
    %6804 = vmatpush.bf16.msra.mxu0 %v6777
    %6805 = vmatpush.bf16.msra.mxu0 %v6773
    %6806 = vmatpush.bf16.msra.mxu0 %v6769
    %6807 = vmatpush.bf16.msra.mxu0 %v6765
    %6808 = vmatmul.bf16.gmra.mxu0 %v6798
    %v6809 = vpop.f32.mrf.mxu0
    %v6810 = vadd.f32 0.0, %v6809
    %v6811 = vpop.f32.mrf.mxu0
    %6812 = vdwg.mxu0
    %6813 = vmatpush.bf16.msra.mxu0 0
    %6814 = vmatpush.bf16.msra.mxu0 0
    %6815 = vmatpush.bf16.msra.mxu0 0
    %6816 = vmatpush.bf16.msra.mxu0 0
    %6817 = vmatpush.bf16.msra.mxu0 %v6778
    %6818 = vmatpush.bf16.msra.mxu0 %v6774
    %6819 = vmatpush.bf16.msra.mxu0 %v6770
    %6820 = vmatpush.bf16.msra.mxu0 %v6766
    %6821 = vmatmul.bf16.gmra.mxu0 %v6798
    %v6822 = vpop.f32.mrf.mxu0
    %v6823 = vadd.f32 0.0, %v6822
    %v6824 = vpop.f32.mrf.mxu0
    %6825 = vdwg.mxu0
    %6826 = vmatpush.bf16.msra.mxu0 0
    %6827 = vmatpush.bf16.msra.mxu0 0
    %6828 = vmatpush.bf16.msra.mxu0 0
    %6829 = vmatpush.bf16.msra.mxu0 0
    %6830 = vmatpush.bf16.msra.mxu0 %v6779
    %6831 = vmatpush.bf16.msra.mxu0 %v6775
    %6832 = vmatpush.bf16.msra.mxu0 %v6771
    %6833 = vmatpush.bf16.msra.mxu0 %v6767
    %6834 = vmatmul.bf16.gmra.mxu0 %v6798
    %v6835 = vpop.f32.mrf.mxu0
    %v6836 = vadd.f32 0.0, %v6835
    %v6837 = vpop.f32.mrf.mxu0
    %6838 = vdwg.mxu0
    %6839 = vmatpush.bf16.msra.mxu0 0
    %6840 = vmatpush.bf16.msra.mxu0 0
    %6841 = vmatpush.bf16.msra.mxu0 0
    %6842 = vmatpush.bf16.msra.mxu0 0
    %6843 = vmatpush.bf16.msra.mxu0 %v6780
    %6844 = vmatpush.bf16.msra.mxu0 %v6776
    %6845 = vmatpush.bf16.msra.mxu0 %v6772
    %6846 = vmatpush.bf16.msra.mxu0 %v6768
    %6847 = vmatmul.bf16.gmra.mxu0 %v6798
    %v6848 = vpop.f32.mrf.mxu0
    %v6849 = vadd.f32 0.0, %v6848
    %v6850 = vpop.f32.mrf.mxu0
    %6851 = vdwg.mxu0
    %v6852 = vadd.f32 %v6670, %v6810
    %v6853 = vadd.f32 %v6671, %v6823
    %v6854 = vadd.f32 %v6672, %v6836
    %v6855 = vadd.f32 %v6673, %v6849
    %v6856 = vld [vmem:[%s5 + $0x680] sm:$0xff]
    %v6857 = vld [vmem:[%s5 + $0x688] sm:$0xff]
    %v6858 = vld [vmem:[%s5 + $0x690] sm:$0xff]
    %v6859 = vld [vmem:[%s5 + $0x698] sm:$0xff]
    %v6860 = vld [vmem:[%s5 + $0x6a0] sm:$0xff]
    %v6861 = vld [vmem:[%s5 + $0x6a8] sm:$0xff]
    %v6862 = vld [vmem:[%s5 + $0x6b0] sm:$0xff]
    %v6863 = vld [vmem:[%s5 + $0x6b8] sm:$0xff]
    %v6864 = vld [vmem:[%s5 + $0x6c0] sm:$0xff]
    %v6865 = vld [vmem:[%s5 + $0x6c8] sm:$0xff]
    %v6866 = vld [vmem:[%s5 + $0x6d0] sm:$0xff]
    %v6867 = vld [vmem:[%s5 + $0x6d8] sm:$0xff]
    %v6868 = vld [vmem:[%s5 + $0x6e0] sm:$0xff]
    %v6869 = vld [vmem:[%s5 + $0x6e8] sm:$0xff]
    %v6870 = vld [vmem:[%s5 + $0x6f0] sm:$0xff]
    %v6871 = vld [vmem:[%s5 + $0x6f8] sm:$0xff]
    %v6872 = vrot.slane %v6712, 2
    %v6873 = vrot.slane %v6713, 1
    %v6874 = vsel %vm4761, %v6873, %v6872
    %v6875 = vpack.c.b16 %v6874, %v6874
    %v6892 = vunpack.c.l.b16 %v6856
    %v6893 = vunpack.c.h.b16 %v6856
    %v6894 = vunpack.c.l.b16 %v6857
    %v6895 = vunpack.c.h.b16 %v6857
    %v6896 = vunpack.c.l.b16 %v6858
    %v6897 = vunpack.c.h.b16 %v6858
    %v6898 = vunpack.c.l.b16 %v6859
    %v6899 = vunpack.c.h.b16 %v6859
    %v6900 = vunpack.c.l.b16 %v6860
    %v6901 = vunpack.c.h.b16 %v6860
    %v6902 = vunpack.c.l.b16 %v6861
    %v6903 = vunpack.c.h.b16 %v6861
    %v6904 = vunpack.c.l.b16 %v6862
    %v6905 = vunpack.c.h.b16 %v6862
    %v6906 = vunpack.c.l.b16 %v6863
    %v6907 = vunpack.c.h.b16 %v6863
    %v6908 = vunpack.c.l.b16 %v6864
    %v6909 = vunpack.c.h.b16 %v6864
    %v6910 = vunpack.c.l.b16 %v6865
    %v6911 = vunpack.c.h.b16 %v6865
    %v6912 = vunpack.c.l.b16 %v6866
    %v6913 = vunpack.c.h.b16 %v6866
    %v6914 = vunpack.c.l.b16 %v6867
    %v6915 = vunpack.c.h.b16 %v6867
    %v6916 = vunpack.c.l.b16 %v6868
    %v6917 = vunpack.c.h.b16 %v6868
    %v6918 = vunpack.c.l.b16 %v6869
    %v6919 = vunpack.c.h.b16 %v6869
    %v6920 = vunpack.c.l.b16 %v6870
    %v6921 = vunpack.c.h.b16 %v6870
    %v6922 = vunpack.c.l.b16 %v6871
    %v6923 = vunpack.c.h.b16 %v6871
    %v6924 = vpack.c.b16 %v6896, %v6892
    %v6925 = vpack.c.b16 %v6897, %v6893
    %v6926 = vpack.c.b16 %v6898, %v6894
    %v6927 = vpack.c.b16 %v6899, %v6895
    %v6928 = vpack.c.b16 %v6904, %v6900
    %v6929 = vpack.c.b16 %v6905, %v6901
    %v6930 = vpack.c.b16 %v6906, %v6902
    %v6931 = vpack.c.b16 %v6907, %v6903
    %v6932 = vpack.c.b16 %v6912, %v6908
    %v6933 = vpack.c.b16 %v6913, %v6909
    %v6934 = vpack.c.b16 %v6914, %v6910
    %v6935 = vpack.c.b16 %v6915, %v6911
    %v6936 = vpack.c.b16 %v6920, %v6916
    %v6937 = vpack.c.b16 %v6921, %v6917
    %v6938 = vpack.c.b16 %v6922, %v6918
    %v6939 = vpack.c.b16 %v6923, %v6919
    %v6957 = vsel %vm4844, %v6875, 0
    %6959 = vmatpush.bf16.msra.mxu0 0
    %6960 = vmatpush.bf16.msra.mxu0 0
    %6961 = vmatpush.bf16.msra.mxu0 0
    %6962 = vmatpush.bf16.msra.mxu0 0
    %6963 = vmatpush.bf16.msra.mxu0 %v6936
    %6964 = vmatpush.bf16.msra.mxu0 %v6932
    %6965 = vmatpush.bf16.msra.mxu0 %v6928
    %6966 = vmatpush.bf16.msra.mxu0 %v6924
    %6967 = vmatmul.bf16.gmra.mxu0 %v6957
    %v6968 = vpop.f32.mrf.mxu0
    %v6969 = vadd.f32 0.0, %v6968
    %v6970 = vpop.f32.mrf.mxu0
    %6971 = vdwg.mxu0
    %6972 = vmatpush.bf16.msra.mxu0 0
    %6973 = vmatpush.bf16.msra.mxu0 0
    %6974 = vmatpush.bf16.msra.mxu0 0
    %6975 = vmatpush.bf16.msra.mxu0 0
    %6976 = vmatpush.bf16.msra.mxu0 %v6937
    %6977 = vmatpush.bf16.msra.mxu0 %v6933
    %6978 = vmatpush.bf16.msra.mxu0 %v6929
    %6979 = vmatpush.bf16.msra.mxu0 %v6925
    %6980 = vmatmul.bf16.gmra.mxu0 %v6957
    %v6981 = vpop.f32.mrf.mxu0
    %v6982 = vadd.f32 0.0, %v6981
    %v6983 = vpop.f32.mrf.mxu0
    %6984 = vdwg.mxu0
    %6985 = vmatpush.bf16.msra.mxu0 0
    %6986 = vmatpush.bf16.msra.mxu0 0
    %6987 = vmatpush.bf16.msra.mxu0 0
    %6988 = vmatpush.bf16.msra.mxu0 0
    %6989 = vmatpush.bf16.msra.mxu0 %v6938
    %6990 = vmatpush.bf16.msra.mxu0 %v6934
    %6991 = vmatpush.bf16.msra.mxu0 %v6930
    %6992 = vmatpush.bf16.msra.mxu0 %v6926
    %6993 = vmatmul.bf16.gmra.mxu0 %v6957
    %v6994 = vpop.f32.mrf.mxu0
    %v6995 = vadd.f32 0.0, %v6994
    %v6996 = vpop.f32.mrf.mxu0
    %6997 = vdwg.mxu0
    %6998 = vmatpush.bf16.msra.mxu0 0
    %6999 = vmatpush.bf16.msra.mxu0 0
    %7000 = vmatpush.bf16.msra.mxu0 0
    %7001 = vmatpush.bf16.msra.mxu0 0
    %7002 = vmatpush.bf16.msra.mxu0 %v6939
    %7003 = vmatpush.bf16.msra.mxu0 %v6935
    %7004 = vmatpush.bf16.msra.mxu0 %v6931
    %7005 = vmatpush.bf16.msra.mxu0 %v6927
    %7006 = vmatmul.bf16.gmra.mxu0 %v6957
    %v7007 = vpop.f32.mrf.mxu0
    %v7008 = vadd.f32 0.0, %v7007
    %v7009 = vpop.f32.mrf.mxu0
    %7010 = vdwg.mxu0
    %v7011 = vadd.f32 %v6852, %v6969
    %v7012 = vadd.f32 %v6853, %v6982
    %v7013 = vadd.f32 %v6854, %v6995
    %v7014 = vadd.f32 %v6855, %v7008
    %v7015 = vld [vmem:[%s5 + $0x700] sm:$0xff]
    %v7016 = vld [vmem:[%s5 + $0x708] sm:$0xff]
    %v7017 = vld [vmem:[%s5 + $0x710] sm:$0xff]
    %v7018 = vld [vmem:[%s5 + $0x718] sm:$0xff]
    %v7019 = vld [vmem:[%s5 + $0x720] sm:$0xff]
    %v7020 = vld [vmem:[%s5 + $0x728] sm:$0xff]
    %v7021 = vld [vmem:[%s5 + $0x730] sm:$0xff]
    %v7022 = vld [vmem:[%s5 + $0x738] sm:$0xff]
    %v7023 = vld [vmem:[%s5 + $0x740] sm:$0xff]
    %v7024 = vld [vmem:[%s5 + $0x748] sm:$0xff]
    %v7025 = vld [vmem:[%s5 + $0x750] sm:$0xff]
    %v7026 = vld [vmem:[%s5 + $0x758] sm:$0xff]
    %v7027 = vld [vmem:[%s5 + $0x760] sm:$0xff]
    %v7028 = vld [vmem:[%s5 + $0x768] sm:$0xff]
    %v7029 = vld [vmem:[%s5 + $0x770] sm:$0xff]
    %v7030 = vld [vmem:[%s5 + $0x778] sm:$0xff]
    %v7031 = vrot.slane %v6712, 4
    %v7032 = vrot.slane %v6713, 3
    %v7033 = vsel %vm4761, %v7032, %v7031
    %v7034 = vpack.c.b16 %v7033, %v7033
    %v7051 = vunpack.c.l.b16 %v7015
    %v7052 = vunpack.c.h.b16 %v7015
    %v7053 = vunpack.c.l.b16 %v7016
    %v7054 = vunpack.c.h.b16 %v7016
    %v7055 = vunpack.c.l.b16 %v7017
    %v7056 = vunpack.c.h.b16 %v7017
    %v7057 = vunpack.c.l.b16 %v7018
    %v7058 = vunpack.c.h.b16 %v7018
    %v7059 = vunpack.c.l.b16 %v7019
    %v7060 = vunpack.c.h.b16 %v7019
    %v7061 = vunpack.c.l.b16 %v7020
    %v7062 = vunpack.c.h.b16 %v7020
    %v7063 = vunpack.c.l.b16 %v7021
    %v7064 = vunpack.c.h.b16 %v7021
    %v7065 = vunpack.c.l.b16 %v7022
    %v7066 = vunpack.c.h.b16 %v7022
    %v7067 = vunpack.c.l.b16 %v7023
    %v7068 = vunpack.c.h.b16 %v7023
    %v7069 = vunpack.c.l.b16 %v7024
    %v7070 = vunpack.c.h.b16 %v7024
    %v7071 = vunpack.c.l.b16 %v7025
    %v7072 = vunpack.c.h.b16 %v7025
    %v7073 = vunpack.c.l.b16 %v7026
    %v7074 = vunpack.c.h.b16 %v7026
    %v7075 = vunpack.c.l.b16 %v7027
    %v7076 = vunpack.c.h.b16 %v7027
    %v7077 = vunpack.c.l.b16 %v7028
    %v7078 = vunpack.c.h.b16 %v7028
    %v7079 = vunpack.c.l.b16 %v7029
    %v7080 = vunpack.c.h.b16 %v7029
    %v7081 = vunpack.c.l.b16 %v7030
    %v7082 = vunpack.c.h.b16 %v7030
    %v7083 = vpack.c.b16 %v7055, %v7051
    %v7084 = vpack.c.b16 %v7056, %v7052
    %v7085 = vpack.c.b16 %v7057, %v7053
    %v7086 = vpack.c.b16 %v7058, %v7054
    %v7087 = vpack.c.b16 %v7063, %v7059
    %v7088 = vpack.c.b16 %v7064, %v7060
    %v7089 = vpack.c.b16 %v7065, %v7061
    %v7090 = vpack.c.b16 %v7066, %v7062
    %v7091 = vpack.c.b16 %v7071, %v7067
    %v7092 = vpack.c.b16 %v7072, %v7068
    %v7093 = vpack.c.b16 %v7073, %v7069
    %v7094 = vpack.c.b16 %v7074, %v7070
    %v7095 = vpack.c.b16 %v7079, %v7075
    %v7096 = vpack.c.b16 %v7080, %v7076
    %v7097 = vpack.c.b16 %v7081, %v7077
    %v7098 = vpack.c.b16 %v7082, %v7078
    %v7116 = vsel %vm4844, %v7034, 0
    %7118 = vmatpush.bf16.msra.mxu0 0
    %7119 = vmatpush.bf16.msra.mxu0 0
    %7120 = vmatpush.bf16.msra.mxu0 0
    %7121 = vmatpush.bf16.msra.mxu0 0
    %7122 = vmatpush.bf16.msra.mxu0 %v7095
    %7123 = vmatpush.bf16.msra.mxu0 %v7091
    %7124 = vmatpush.bf16.msra.mxu0 %v7087
    %7125 = vmatpush.bf16.msra.mxu0 %v7083
    %7126 = vmatmul.bf16.gmra.mxu0 %v7116
    %v7127 = vpop.f32.mrf.mxu0
    %v7128 = vadd.f32 0.0, %v7127
    %v7129 = vpop.f32.mrf.mxu0
    %7130 = vdwg.mxu0
    %7131 = vmatpush.bf16.msra.mxu0 0
    %7132 = vmatpush.bf16.msra.mxu0 0
    %7133 = vmatpush.bf16.msra.mxu0 0
    %7134 = vmatpush.bf16.msra.mxu0 0
    %7135 = vmatpush.bf16.msra.mxu0 %v7096
    %7136 = vmatpush.bf16.msra.mxu0 %v7092
    %7137 = vmatpush.bf16.msra.mxu0 %v7088
    %7138 = vmatpush.bf16.msra.mxu0 %v7084
    %7139 = vmatmul.bf16.gmra.mxu0 %v7116
    %v7140 = vpop.f32.mrf.mxu0
    %v7141 = vadd.f32 0.0, %v7140
    %v7142 = vpop.f32.mrf.mxu0
    %7143 = vdwg.mxu0
    %7144 = vmatpush.bf16.msra.mxu0 0
    %7145 = vmatpush.bf16.msra.mxu0 0
    %7146 = vmatpush.bf16.msra.mxu0 0
    %7147 = vmatpush.bf16.msra.mxu0 0
    %7148 = vmatpush.bf16.msra.mxu0 %v7097
    %7149 = vmatpush.bf16.msra.mxu0 %v7093
    %7150 = vmatpush.bf16.msra.mxu0 %v7089
    %7151 = vmatpush.bf16.msra.mxu0 %v7085
    %7152 = vmatmul.bf16.gmra.mxu0 %v7116
    %v7153 = vpop.f32.mrf.mxu0
    %v7154 = vadd.f32 0.0, %v7153
    %v7155 = vpop.f32.mrf.mxu0
    %7156 = vdwg.mxu0
    %7157 = vmatpush.bf16.msra.mxu0 0
    %7158 = vmatpush.bf16.msra.mxu0 0
    %7159 = vmatpush.bf16.msra.mxu0 0
    %7160 = vmatpush.bf16.msra.mxu0 0
    %7161 = vmatpush.bf16.msra.mxu0 %v7098
    %7162 = vmatpush.bf16.msra.mxu0 %v7094
    %7163 = vmatpush.bf16.msra.mxu0 %v7090
    %7164 = vmatpush.bf16.msra.mxu0 %v7086
    %7165 = vmatmul.bf16.gmra.mxu0 %v7116
    %v7166 = vpop.f32.mrf.mxu0
    %v7167 = vadd.f32 0.0, %v7166
    %v7168 = vpop.f32.mrf.mxu0
    %7169 = vdwg.mxu0
    %v7170 = vadd.f32 %v7011, %v7128
    %v7171 = vadd.f32 %v7012, %v7141
    %v7172 = vadd.f32 %v7013, %v7154
    %v7173 = vadd.f32 %v7014, %v7167
    %v7174 = vld [vmem:[%s5 + $0x780] sm:$0xff]
    %v7175 = vld [vmem:[%s5 + $0x788] sm:$0xff]
    %v7176 = vld [vmem:[%s5 + $0x790] sm:$0xff]
    %v7177 = vld [vmem:[%s5 + $0x798] sm:$0xff]
    %v7178 = vld [vmem:[%s5 + $0x7a0] sm:$0xff]
    %v7179 = vld [vmem:[%s5 + $0x7a8] sm:$0xff]
    %v7180 = vld [vmem:[%s5 + $0x7b0] sm:$0xff]
    %v7181 = vld [vmem:[%s5 + $0x7b8] sm:$0xff]
    %v7182 = vld [vmem:[%s5 + $0x7c0] sm:$0xff]
    %v7183 = vld [vmem:[%s5 + $0x7c8] sm:$0xff]
    %v7184 = vld [vmem:[%s5 + $0x7d0] sm:$0xff]
    %v7185 = vld [vmem:[%s5 + $0x7d8] sm:$0xff]
    %v7186 = vld [vmem:[%s5 + $0x7e0] sm:$0xff]
    %v7187 = vld [vmem:[%s5 + $0x7e8] sm:$0xff]
    %v7188 = vld [vmem:[%s5 + $0x7f0] sm:$0xff]
    %v7189 = vld [vmem:[%s5 + $0x7f8] sm:$0xff]
    %v7190 = vrot.slane %v6712, 6
    %v7191 = vrot.slane %v6713, 5
    %v7192 = vsel %vm4761, %v7191, %v7190
    %v7193 = vpack.c.b16 %v7192, %v7192
    %v7210 = vunpack.c.l.b16 %v7174
    %v7211 = vunpack.c.h.b16 %v7174
    %v7212 = vunpack.c.l.b16 %v7175
    %v7213 = vunpack.c.h.b16 %v7175
    %v7214 = vunpack.c.l.b16 %v7176
    %v7215 = vunpack.c.h.b16 %v7176
    %v7216 = vunpack.c.l.b16 %v7177
    %v7217 = vunpack.c.h.b16 %v7177
    %v7218 = vunpack.c.l.b16 %v7178
    %v7219 = vunpack.c.h.b16 %v7178
    %v7220 = vunpack.c.l.b16 %v7179
    %v7221 = vunpack.c.h.b16 %v7179
    %v7222 = vunpack.c.l.b16 %v7180
    %v7223 = vunpack.c.h.b16 %v7180
    %v7224 = vunpack.c.l.b16 %v7181
    %v7225 = vunpack.c.h.b16 %v7181
    %v7226 = vunpack.c.l.b16 %v7182
    %v7227 = vunpack.c.h.b16 %v7182
    %v7228 = vunpack.c.l.b16 %v7183
    %v7229 = vunpack.c.h.b16 %v7183
    %v7230 = vunpack.c.l.b16 %v7184
    %v7231 = vunpack.c.h.b16 %v7184
    %v7232 = vunpack.c.l.b16 %v7185
    %v7233 = vunpack.c.h.b16 %v7185
    %v7234 = vunpack.c.l.b16 %v7186
    %v7235 = vunpack.c.h.b16 %v7186
    %v7236 = vunpack.c.l.b16 %v7187
    %v7237 = vunpack.c.h.b16 %v7187
    %v7238 = vunpack.c.l.b16 %v7188
    %v7239 = vunpack.c.h.b16 %v7188
    %v7240 = vunpack.c.l.b16 %v7189
    %v7241 = vunpack.c.h.b16 %v7189
    %v7242 = vpack.c.b16 %v7214, %v7210
    %v7243 = vpack.c.b16 %v7215, %v7211
    %v7244 = vpack.c.b16 %v7216, %v7212
    %v7245 = vpack.c.b16 %v7217, %v7213
    %v7246 = vpack.c.b16 %v7222, %v7218
    %v7247 = vpack.c.b16 %v7223, %v7219
    %v7248 = vpack.c.b16 %v7224, %v7220
    %v7249 = vpack.c.b16 %v7225, %v7221
    %v7250 = vpack.c.b16 %v7230, %v7226
    %v7251 = vpack.c.b16 %v7231, %v7227
    %v7252 = vpack.c.b16 %v7232, %v7228
    %v7253 = vpack.c.b16 %v7233, %v7229
    %v7254 = vpack.c.b16 %v7238, %v7234
    %v7255 = vpack.c.b16 %v7239, %v7235
    %v7256 = vpack.c.b16 %v7240, %v7236
    %v7257 = vpack.c.b16 %v7241, %v7237
    %v7275 = vsel %vm4844, %v7193, 0
    %7277 = vmatpush.bf16.msra.mxu0 0
    %7278 = vmatpush.bf16.msra.mxu0 0
    %7279 = vmatpush.bf16.msra.mxu0 0
    %7280 = vmatpush.bf16.msra.mxu0 0
    %7281 = vmatpush.bf16.msra.mxu0 %v7254
    %7282 = vmatpush.bf16.msra.mxu0 %v7250
    %7283 = vmatpush.bf16.msra.mxu0 %v7246
    %7284 = vmatpush.bf16.msra.mxu0 %v7242
    %7285 = vmatmul.bf16.gmra.mxu0 %v7275
    %v7286 = vpop.f32.mrf.mxu0
    %v7287 = vadd.f32 0.0, %v7286
    %v7288 = vpop.f32.mrf.mxu0
    %7289 = vdwg.mxu0
    %7290 = vmatpush.bf16.msra.mxu0 0
    %7291 = vmatpush.bf16.msra.mxu0 0
    %7292 = vmatpush.bf16.msra.mxu0 0
    %7293 = vmatpush.bf16.msra.mxu0 0
    %7294 = vmatpush.bf16.msra.mxu0 %v7255
    %7295 = vmatpush.bf16.msra.mxu0 %v7251
    %7296 = vmatpush.bf16.msra.mxu0 %v7247
    %7297 = vmatpush.bf16.msra.mxu0 %v7243
    %7298 = vmatmul.bf16.gmra.mxu0 %v7275
    %v7299 = vpop.f32.mrf.mxu0
    %v7300 = vadd.f32 0.0, %v7299
    %v7301 = vpop.f32.mrf.mxu0
    %7302 = vdwg.mxu0
    %7303 = vmatpush.bf16.msra.mxu0 0
    %7304 = vmatpush.bf16.msra.mxu0 0
    %7305 = vmatpush.bf16.msra.mxu0 0
    %7306 = vmatpush.bf16.msra.mxu0 0
    %7307 = vmatpush.bf16.msra.mxu0 %v7256
    %7308 = vmatpush.bf16.msra.mxu0 %v7252
    %7309 = vmatpush.bf16.msra.mxu0 %v7248
    %7310 = vmatpush.bf16.msra.mxu0 %v7244
    %7311 = vmatmul.bf16.gmra.mxu0 %v7275
    %v7312 = vpop.f32.mrf.mxu0
    %v7313 = vadd.f32 0.0, %v7312
    %v7314 = vpop.f32.mrf.mxu0
    %7315 = vdwg.mxu0
    %7316 = vmatpush.bf16.msra.mxu0 0
    %7317 = vmatpush.bf16.msra.mxu0 0
    %7318 = vmatpush.bf16.msra.mxu0 0
    %7319 = vmatpush.bf16.msra.mxu0 0
    %7320 = vmatpush.bf16.msra.mxu0 %v7257
    %7321 = vmatpush.bf16.msra.mxu0 %v7253
    %7322 = vmatpush.bf16.msra.mxu0 %v7249
    %7323 = vmatpush.bf16.msra.mxu0 %v7245
    %7324 = vmatmul.bf16.gmra.mxu0 %v7275
    %v7325 = vpop.f32.mrf.mxu0
    %v7326 = vadd.f32 0.0, %v7325
    %v7327 = vpop.f32.mrf.mxu0
    %7328 = vdwg.mxu0
    %v7329 = vadd.f32 %v7170, %v7287
    %v7330 = vadd.f32 %v7171, %v7300
    %v7331 = vadd.f32 %v7172, %v7313
    %v7332 = vadd.f32 %v7173, %v7326
    %v7333 = vld [vmem:[%s6] sm:$0xf]
    %v7335 = vperm.slane %v7333, 0
    %v7336 = vperm.slane %v7333, 1
    %v7337 = vperm.slane %v7333, 2
    %v7338 = vperm.slane %v7333, 3
    %v7343 = vadd.f32 %v7329, %v7335
    %v7344 = vadd.f32 %v7330, %v7336
    %v7345 = vadd.f32 %v7331, %v7337
    %v7346 = vadd.f32 %v7332, %v7338
    %v7347 = vmax.f32 %v7343, 0.0
    %v7348 = vmax.f32 %v7344, 0.0
    %v7349 = vmax.f32 %v7345, 0.0
    %v7350 = vmax.f32 %v7346, 0.0
    %v7351 = vpack.c.bf16 %v7347, %v7347
    %v7352 = vpack.c.bf16 %v7348, %v7348
    %v7353 = vpack.c.bf16 %v7349, %v7349
    %v7354 = vpack.c.bf16 %v7350, %v7350
    %v7355 = vld [vmem:[%s7] sm:$0xf]
    %v7356 = vld [vmem:[%s7 + $0x4] sm:$0xf]
    %v7357 = vld [vmem:[%s7 + $0x8] sm:$0xf]
    %v7358 = vld [vmem:[%s7 + $0xc] sm:$0xf]
    %v7359 = vld [vmem:[%s7 + $0x10] sm:$0xf]
    %v7360 = vld [vmem:[%s7 + $0x14] sm:$0xf]
    %v7361 = vld [vmem:[%s7 + $0x18] sm:$0xf]
    %v7362 = vld [vmem:[%s7 + $0x1c] sm:$0xf]
    %v7363 = vld [vmem:[%s7 + $0x20] sm:$0xf]
    %v7364 = vld [vmem:[%s7 + $0x24] sm:$0xf]
    %v7365 = vld [vmem:[%s7 + $0x28] sm:$0xf]
    %v7366 = vld [vmem:[%s7 + $0x2c] sm:$0xf]
    %v7367 = vld [vmem:[%s7 + $0x30] sm:$0xf]
    %v7368 = vld [vmem:[%s7 + $0x34] sm:$0xf]
    %v7369 = vld [vmem:[%s7 + $0x38] sm:$0xf]
    %v7370 = vld [vmem:[%s7 + $0x3c] sm:$0xf]
    %v7371 = vld [vmem:[%s7 + $0x40] sm:$0xf]
    %v7372 = vld [vmem:[%s7 + $0x44] sm:$0xf]
    %v7373 = vld [vmem:[%s7 + $0x48] sm:$0xf]
    %v7374 = vld [vmem:[%s7 + $0x4c] sm:$0xf]
    %v7375 = vld [vmem:[%s7 + $0x50] sm:$0xf]
    %v7376 = vld [vmem:[%s7 + $0x54] sm:$0xf]
    %v7377 = vld [vmem:[%s7 + $0x58] sm:$0xf]
    %v7378 = vld [vmem:[%s7 + $0x5c] sm:$0xf]
    %v7379 = vld [vmem:[%s7 + $0x60] sm:$0xf]
    %v7380 = vld [vmem:[%s7 + $0x64] sm:$0xf]
    %v7381 = vld [vmem:[%s7 + $0x68] sm:$0xf]
    %v7382 = vld [vmem:[%s7 + $0x6c] sm:$0xf]
    %v7383 = vld [vmem:[%s7 + $0x70] sm:$0xf]
    %v7384 = vld [vmem:[%s7 + $0x74] sm:$0xf]
    %v7385 = vld [vmem:[%s7 + $0x78] sm:$0xf]
    %v7386 = vld [vmem:[%s7 + $0x7c] sm:$0xf]
    %v7387 = vld [vmem:[%s7 + $0x80] sm:$0xf]
    %v7388 = vld [vmem:[%s7 + $0x84] sm:$0xf]
    %v7389 = vld [vmem:[%s7 + $0x88] sm:$0xf]
    %v7390 = vld [vmem:[%s7 + $0x8c] sm:$0xf]
    %v7391 = vld [vmem:[%s7 + $0x90] sm:$0xf]
    %v7392 = vld [vmem:[%s7 + $0x94] sm:$0xf]
    %v7393 = vld [vmem:[%s7 + $0x98] sm:$0xf]
    %v7394 = vld [vmem:[%s7 + $0x9c] sm:$0xf]
    %v7395 = vld [vmem:[%s7 + $0xa0] sm:$0xf]
    %v7396 = vld [vmem:[%s7 + $0xa4] sm:$0xf]
    %v7397 = vld [vmem:[%s7 + $0xa8] sm:$0xf]
    %v7398 = vld [vmem:[%s7 + $0xac] sm:$0xf]
    %v7399 = vld [vmem:[%s7 + $0xb0] sm:$0xf]
    %v7400 = vld [vmem:[%s7 + $0xb4] sm:$0xf]
    %v7401 = vld [vmem:[%s7 + $0xb8] sm:$0xf]
    %v7402 = vld [vmem:[%s7 + $0xbc] sm:$0xf]
    %v7403 = vld [vmem:[%s7 + $0xc0] sm:$0xf]
    %v7404 = vld [vmem:[%s7 + $0xc4] sm:$0xf]
    %v7405 = vld [vmem:[%s7 + $0xc8] sm:$0xf]
    %v7406 = vld [vmem:[%s7 + $0xcc] sm:$0xf]
    %v7407 = vld [vmem:[%s7 + $0xd0] sm:$0xf]
    %v7408 = vld [vmem:[%s7 + $0xd4] sm:$0xf]
    %v7409 = vld [vmem:[%s7 + $0xd8] sm:$0xf]
    %v7410 = vld [vmem:[%s7 + $0xdc] sm:$0xf]
    %v7411 = vld [vmem:[%s7 + $0xe0] sm:$0xf]
    %v7412 = vld [vmem:[%s7 + $0xe4] sm:$0xf]
    %v7413 = vld [vmem:[%s7 + $0xe8] sm:$0xf]
    %v7414 = vld [vmem:[%s7 + $0xec] sm:$0xf]
    %v7415 = vld [vmem:[%s7 + $0xf0] sm:$0xf]
    %v7416 = vld [vmem:[%s7 + $0xf4] sm:$0xf]
    %v7417 = vld [vmem:[%s7 + $0xf8] sm:$0xf]
    %v7418 = vld [vmem:[%s7 + $0xfc] sm:$0xf]
    %v7419 = vld [vmem:[%s8] sm:$0x1]
    %v7421 = vperm.slane %v7419, 0
    %v7487 = vunpack.c.l.b16 %v7355
    %v7488 = vunpack.c.l.b16 %v7356
    %v7489 = vunpack.c.l.b16 %v7357
    %v7490 = vunpack.c.l.b16 %v7358
    %v7491 = vunpack.c.l.b16 %v7359
    %v7492 = vunpack.c.l.b16 %v7360
    %v7493 = vunpack.c.l.b16 %v7361
    %v7494 = vunpack.c.l.b16 %v7362
    %v7495 = vunpack.c.l.b16 %v7363
    %v7496 = vunpack.c.l.b16 %v7364
    %v7497 = vunpack.c.l.b16 %v7365
    %v7498 = vunpack.c.l.b16 %v7366
    %v7499 = vunpack.c.l.b16 %v7367
    %v7500 = vunpack.c.l.b16 %v7368
    %v7501 = vunpack.c.l.b16 %v7369
    %v7502 = vunpack.c.l.b16 %v7370
    %v7503 = vunpack.c.l.b16 %v7371
    %v7504 = vunpack.c.l.b16 %v7372
    %v7505 = vunpack.c.l.b16 %v7373
    %v7506 = vunpack.c.l.b16 %v7374
    %v7507 = vunpack.c.l.b16 %v7375
    %v7508 = vunpack.c.l.b16 %v7376
    %v7509 = vunpack.c.l.b16 %v7377
    %v7510 = vunpack.c.l.b16 %v7378
    %v7511 = vunpack.c.l.b16 %v7379
    %v7512 = vunpack.c.l.b16 %v7380
    %v7513 = vunpack.c.l.b16 %v7381
    %v7514 = vunpack.c.l.b16 %v7382
    %v7515 = vunpack.c.l.b16 %v7383
    %v7516 = vunpack.c.l.b16 %v7384
    %v7517 = vunpack.c.l.b16 %v7385
    %v7518 = vunpack.c.l.b16 %v7386
    %v7519 = vunpack.c.l.b16 %v7387
    %v7520 = vunpack.c.l.b16 %v7388
    %v7521 = vunpack.c.l.b16 %v7389
    %v7522 = vunpack.c.l.b16 %v7390
    %v7523 = vunpack.c.l.b16 %v7391
    %v7524 = vunpack.c.l.b16 %v7392
    %v7525 = vunpack.c.l.b16 %v7393
    %v7526 = vunpack.c.l.b16 %v7394
    %v7527 = vunpack.c.l.b16 %v7395
    %v7528 = vunpack.c.l.b16 %v7396
    %v7529 = vunpack.c.l.b16 %v7397
    %v7530 = vunpack.c.l.b16 %v7398
    %v7531 = vunpack.c.l.b16 %v7399
    %v7532 = vunpack.c.l.b16 %v7400
    %v7533 = vunpack.c.l.b16 %v7401
    %v7534 = vunpack.c.l.b16 %v7402
    %v7535 = vunpack.c.l.b16 %v7403
    %v7536 = vunpack.c.l.b16 %v7404
    %v7537 = vunpack.c.l.b16 %v7405
    %v7538 = vunpack.c.l.b16 %v7406
    %v7539 = vunpack.c.l.b16 %v7407
    %v7540 = vunpack.c.l.b16 %v7408
    %v7541 = vunpack.c.l.b16 %v7409
    %v7542 = vunpack.c.l.b16 %v7410
    %v7543 = vunpack.c.l.b16 %v7411
    %v7544 = vunpack.c.l.b16 %v7412
    %v7545 = vunpack.c.l.b16 %v7413
    %v7546 = vunpack.c.l.b16 %v7414
    %v7547 = vunpack.c.l.b16 %v7415
    %v7548 = vunpack.c.l.b16 %v7416
    %v7549 = vunpack.c.l.b16 %v7417
    %v7550 = vunpack.c.l.b16 %v7418
    %v7551 = vpack.c.b16 %v7488, %v7487
    %v7552 = vpack.c.b16 %v7490, %v7489
    %v7553 = vpack.c.b16 %v7492, %v7491
    %v7554 = vpack.c.b16 %v7494, %v7493
    %v7555 = vpack.c.b16 %v7496, %v7495
    %v7556 = vpack.c.b16 %v7498, %v7497
    %v7557 = vpack.c.b16 %v7500, %v7499
    %v7558 = vpack.c.b16 %v7502, %v7501
    %v7559 = vpack.c.b16 %v7504, %v7503
    %v7560 = vpack.c.b16 %v7506, %v7505
    %v7561 = vpack.c.b16 %v7508, %v7507
    %v7562 = vpack.c.b16 %v7510, %v7509
    %v7563 = vpack.c.b16 %v7512, %v7511
    %v7564 = vpack.c.b16 %v7514, %v7513
    %v7565 = vpack.c.b16 %v7516, %v7515
    %v7566 = vpack.c.b16 %v7518, %v7517
    %v7567 = vpack.c.b16 %v7520, %v7519
    %v7568 = vpack.c.b16 %v7522, %v7521
    %v7569 = vpack.c.b16 %v7524, %v7523
    %v7570 = vpack.c.b16 %v7526, %v7525
    %v7571 = vpack.c.b16 %v7528, %v7527
    %v7572 = vpack.c.b16 %v7530, %v7529
    %v7573 = vpack.c.b16 %v7532, %v7531
    %v7574 = vpack.c.b16 %v7534, %v7533
    %v7575 = vpack.c.b16 %v7536, %v7535
    %v7576 = vpack.c.b16 %v7538, %v7537
    %v7577 = vpack.c.b16 %v7540, %v7539
    %v7578 = vpack.c.b16 %v7542, %v7541
    %v7579 = vpack.c.b16 %v7544, %v7543
    %v7580 = vpack.c.b16 %v7546, %v7545
    %v7581 = vpack.c.b16 %v7548, %v7547
    %v7582 = vpack.c.b16 %v7550, %v7549
    %7615 = vmatpush.bf16.msra.mxu0 %v7558
    %7616 = vmatpush.bf16.msra.mxu0 %v7557
    %7617 = vmatpush.bf16.msra.mxu0 %v7556
    %7618 = vmatpush.bf16.msra.mxu0 %v7555
    %7619 = vmatpush.bf16.msra.mxu0 %v7554
    %7620 = vmatpush.bf16.msra.mxu0 %v7553
    %7621 = vmatpush.bf16.msra.mxu0 %v7552
    %7622 = vmatpush.bf16.msra.mxu0 %v7551
    %7623 = vmatmul.bf16.gmra.mxu0 %v7351
    %v7624 = vpop.f32.mrf.mxu0
    %v7625 = vadd.f32 %v7421, %v7624
    %v7626 = vpop.f32.mrf.mxu0
    %7627 = vdwg.mxu0
    %7628 = vmatpush.bf16.msra.mxu0 %v7566
    %7629 = vmatpush.bf16.msra.mxu0 %v7565
    %7630 = vmatpush.bf16.msra.mxu0 %v7564
    %7631 = vmatpush.bf16.msra.mxu0 %v7563
    %7632 = vmatpush.bf16.msra.mxu0 %v7562
    %7633 = vmatpush.bf16.msra.mxu0 %v7561
    %7634 = vmatpush.bf16.msra.mxu0 %v7560
    %7635 = vmatpush.bf16.msra.mxu0 %v7559
    %7636 = vmatmul.bf16.gmra.mxu0 %v7352
    %v7637 = vpop.f32.mrf.mxu0
    %v7638 = vadd.f32 %v7625, %v7637
    %v7639 = vpop.f32.mrf.mxu0
    %7640 = vdwg.mxu0
    %7641 = vmatpush.bf16.msra.mxu0 %v7574
    %7642 = vmatpush.bf16.msra.mxu0 %v7573
    %7643 = vmatpush.bf16.msra.mxu0 %v7572
    %7644 = vmatpush.bf16.msra.mxu0 %v7571
    %7645 = vmatpush.bf16.msra.mxu0 %v7570
    %7646 = vmatpush.bf16.msra.mxu0 %v7569
    %7647 = vmatpush.bf16.msra.mxu0 %v7568
    %7648 = vmatpush.bf16.msra.mxu0 %v7567
    %7649 = vmatmul.bf16.gmra.mxu0 %v7353
    %v7650 = vpop.f32.mrf.mxu0
    %v7651 = vadd.f32 %v7638, %v7650
    %v7652 = vpop.f32.mrf.mxu0
    %7653 = vdwg.mxu0
    %7654 = vmatpush.bf16.msra.mxu0 %v7582
    %7655 = vmatpush.bf16.msra.mxu0 %v7581
    %7656 = vmatpush.bf16.msra.mxu0 %v7580
    %7657 = vmatpush.bf16.msra.mxu0 %v7579
    %7658 = vmatpush.bf16.msra.mxu0 %v7578
    %7659 = vmatpush.bf16.msra.mxu0 %v7577
    %7660 = vmatpush.bf16.msra.mxu0 %v7576
    %7661 = vmatpush.bf16.msra.mxu0 %v7575
    %7662 = vmatmul.bf16.gmra.mxu0 %v7354
    %v7663 = vpop.f32.mrf.mxu0
    %v7664 = vadd.f32 %v7651, %v7663
    %v7665 = vpop.f32.mrf.mxu0
    %7666 = vdwg.mxu0
    %7667 = vst [vmem:[#allocation2] sm:$0x3] %v7664
    // Predicated region
    $region38: #{cnn_forward.1} parent=1 // pred_check
      _
    $region39: #{cnn_forward.1} parent=1 // pred_check_branch
      %7669 = sbr.rel (0) target = $region41
    $region40: #{cnn_forward.1} parent=1 // pred_region
      %7671 = vsyncadd [#allocation3], 0
      %s7673 = sshll.u32 [#allocation2], 4
      %s7674 = int_to_ptr.vmem [resolvable:$true] %s7673
      %s7675 = sshll.u32 %s9, 4
      %s7676 = int_to_ptr.hbm [resolvable:$true] %s7675
      %7678 = dma.vmem_to_hbm [thread:$0]  %s7674, 32, %s7676, [#allocation3]
    $region41: #{cnn_forward.1} parent=1 // pred_fallthru
      _
    // Predicated region
    $region42: #{cnn_forward.1} parent=1 // pred_check
      _
    $region43: #{cnn_forward.1} parent=1 // pred_check_branch
      %7680 = sbr.rel (0) target = $region45
    $region44: #{cnn_forward.1} parent=1 // pred_region
      %7682 = dma.done [#allocation3], 32
    $region45: #{cnn_forward.1} parent=1 // pred_fallthru
      _
    %7683 = vsyncpa [#allocation3], 1

</llo_original>
